<compile_context>
chip_gen: v7x
topology: tpu7x:2x2x1
jax: 0.10.0
libtpu: 0.0.40
codegen_flags: <defaults>
</compile_context>

<pallas_src>
import math
from functools import partial

import jax
import jax.numpy as jnp
from jax.experimental import pallas as pl
from jax.experimental.pallas import tpu as pltpu

LANE = 128


def _round_up(n, m):
    return ((n + m - 1) // m) * m


# Ordered weight names (kernel arg order after src_ids / tgt_ids / pe).
PARAM_ORDER = [
    'emb',
    'enc_wqkv', 'enc_bqkv', 'enc_wo', 'enc_bo',
    'enc_g1', 'enc_b1', 'enc_w1', 'enc_bb1', 'enc_w2', 'enc_bb2', 'enc_g2', 'enc_b2',
    'enc_gf', 'enc_bf',
    'dec_sa_wqkv', 'dec_sa_bqkv', 'dec_sa_wo', 'dec_sa_bo',
    'dec_ca_wq', 'dec_ca_bq', 'dec_ca_wkv', 'dec_ca_bkv', 'dec_ca_wo', 'dec_ca_bo',
    'dec_g1', 'dec_b1', 'dec_g2', 'dec_b2', 'dec_g3', 'dec_b3',
    'dec_w1', 'dec_bb1', 'dec_w2', 'dec_bb2',
    'dec_gf', 'dec_bf',
    'out_w', 'out_b',
]
KERNEL_IN_NAMES = ['src_ids', 'tgt_ids', 'pe'] + PARAM_ORDER


# ---------------------------- fused single kernel ----------------------------

def _fused_kernel(*refs, Ss, St, H, Dh, E, L, eps, emb_scale):
    r = dict(zip(KERNEL_IN_NAMES, refs))
    out_ref = refs[len(KERNEL_IN_NAMES)]

    f32, bf16 = jnp.float32, jnp.bfloat16
    HD = H * Dh
    EP = r['emb'].shape[1]
    VROWS = r['emb'].shape[0]
    scale = 1.0 / math.sqrt(Dh)

    # ---- hoisted constants (built once; JAX does not CSE broadcast_in_dim) ----
    def causal_bias(Sq, Sk):
        qi = jax.lax.broadcasted_iota(jnp.int32, (Sq, Sk), 0)
        kj = jax.lax.broadcasted_iota(jnp.int32, (Sq, Sk), 1)
        return jnp.where(kj <= qi, 0.0, -1e30).astype(f32)

    bias_src = causal_bias(Ss, Ss)          # reference passes a causal src_mask
    bias_tgt = causal_bias(St, St)
    real_cols = jax.lax.broadcasted_iota(jnp.int32, (1, EP), 1) < E

    emb_tbl = r['emb'][...]                 # (VROWS, EP) f32, VMEM resident
    pe_row = r['pe'][...]                   # (1, EP): pe row for THIS batch (reference quirk)

    # ---- building blocks ----
    def embed(ids_ref, S):
        ids = ids_ref[...]                                              # (S, 1) int32
        vocab_iota = jax.lax.broadcasted_iota(jnp.int32, (S, VROWS), 1)
        onehot = (ids == vocab_iota).astype(f32)                        # (S, VROWS)
        return jnp.dot(onehot, emb_tbl, preferred_element_type=f32)     # exact f32 gather

    def layer_norm(z, g, b):
        zm = jnp.where(real_cols, z, 0.0)
        mean = jnp.sum(zm, axis=-1, keepdims=True) * (1.0 / E)
        d = z - mean
        dm = jnp.where(real_cols, d, 0.0)
        var = jnp.sum(dm * dm, axis=-1, keepdims=True) * (1.0 / E)
        # gamma is zero in padded columns -> padded output columns stay exactly zero.
        return d * jax.lax.rsqrt(var + eps) * g + b

    def softmax_av(s, v_bf):
        m = jnp.max(s, axis=-1, keepdims=True)
        p = jnp.exp(s - m)
        denom = jnp.sum(p, axis=-1, keepdims=True)
        o = jnp.dot(p.astype(bf16), v_bf, preferred_element_type=f32)
        return o * pl.reciprocal(denom, approx=True)

    def self_attn(x, wqkv, bqkv, wo, bo, l, bias):
        # one fused lane-dense (S,EP)x(EP,128) matmul for all heads' Q,K,V
        qkv = jnp.dot(x.astype(bf16), wqkv[l], preferred_element_type=f32) + bqkv[l]
        qkv_bf = qkv.astype(bf16)           # single bf16 copy reused for score & PV matmuls
        heads = []
        for h in range(H):
            q = qkv_bf[:, h * Dh:(h + 1) * Dh]
            k = qkv_bf[:, HD + h * Dh:HD + (h + 1) * Dh]
            v = qkv_bf[:, 2 * HD + h * Dh:2 * HD + (h + 1) * Dh]
            s = jnp.einsum('qd,kd->qk', q, k, preferred_element_type=f32) * scale + bias
            heads.append(softmax_av(s, v))
        o_cat = jnp.concatenate(heads, axis=-1).astype(bf16)            # (S, HD)
        return jnp.dot(o_cat, wo[l], preferred_element_type=f32) + bo[l]  # single K=32 matmul

    def cross_attn(x, mem_bf, wq, bq, wkv, bkv, wo, bo, l):
        q_all = (jnp.dot(x.astype(bf16), wq[l], preferred_element_type=f32) + bq[l]).astype(bf16)
        kv_all = (jnp.dot(mem_bf, wkv[l], preferred_element_type=f32) + bkv[l]).astype(bf16)
        heads = []
        for h in range(H):
            q = q_all[:, h * Dh:(h + 1) * Dh]
            k = kv_all[:, h * Dh:(h + 1) * Dh]
            v = kv_all[:, HD + h * Dh:HD + (h + 1) * Dh]
            s = jnp.einsum('qd,kd->qk', q, k, preferred_element_type=f32) * scale
            heads.append(softmax_av(s, v))
        o_cat = jnp.concatenate(heads, axis=-1).astype(bf16)
        return jnp.dot(o_cat, wo[l], preferred_element_type=f32) + bo[l]

    def ffn(w1, b1, w2, b2, x, l):
        h = jnp.dot(x.astype(bf16), w1[l], preferred_element_type=f32) + b1[l]
        h = jnp.maximum(h, 0.0)
        return jnp.dot(h.astype(bf16), w2[l], preferred_element_type=f32) + b2[l]

    # ---- encoder stack (post-norm, causal src mask as in the reference forward) ----
    x = embed(r['src_ids'], Ss) * emb_scale + pe_row
    for l in range(L):
        sa = self_attn(x, r['enc_wqkv'], r['enc_bqkv'], r['enc_wo'], r['enc_bo'], l, bias_src)
        x = layer_norm(x + sa, r['enc_g1'][l], r['enc_b1'][l])
        ff = ffn(r['enc_w1'], r['enc_bb1'], r['enc_w2'], r['enc_bb2'], x, l)
        x = layer_norm(x + ff, r['enc_g2'][l], r['enc_b2'][l])
    mem = layer_norm(x, r['enc_gf'][...], r['enc_bf'][...])     # final encoder LayerNorm
    mem_bf = mem.astype(bf16)                                   # cast once; reused by all layers

    # ---- decoder stack ----
    x = embed(r['tgt_ids'], St) * emb_scale + pe_row
    for l in range(L):
        sa = self_attn(x, r['dec_sa_wqkv'], r['dec_sa_bqkv'], r['dec_sa_wo'], r['dec_sa_bo'],
                       l, bias_tgt)
        x = layer_norm(x + sa, r['dec_g1'][l], r['dec_b1'][l])
        ca = cross_attn(x, mem_bf, r['dec_ca_wq'], r['dec_ca_bq'], r['dec_ca_wkv'],
                        r['dec_ca_bkv'], r['dec_ca_wo'], r['dec_ca_bo'], l)
        x = layer_norm(x + ca, r['dec_g2'][l], r['dec_b2'][l])
        ff = ffn(r['dec_w1'], r['dec_bb1'], r['dec_w2'], r['dec_bb2'], x, l)
        x = layer_norm(x + ff, r['dec_g3'][l], r['dec_b3'][l])
    x = layer_norm(x, r['dec_gf'][...], r['dec_bf'][...])       # final decoder LayerNorm

    # ---- output projection (lane-dense: vocab padded to 128) ----
    logits = jnp.dot(x.astype(bf16), r['out_w'][...], preferred_element_type=f32) + r['out_b'][...]
    out_ref[...] = logits


# ---------------------------- pallas_call wrapper ----------------------------

def _full_spec(shape):
    zeros = (0,) * len(shape)
    return pl.BlockSpec(shape, lambda b, _z=zeros: _z)


def forward(params, src_ids, tgt_ids, *, H, E, L, vocab):
    B, Ss = src_ids.shape
    St = tgt_ids.shape[1]
    Dh = E // H
    EP = params['pe'].shape[2]
    VP = params['out_w'].shape[1]

    src3 = src_ids.reshape(B, Ss, 1).astype(jnp.int32)
    tgt3 = tgt_ids.reshape(B, St, 1).astype(jnp.int32)
    weight_args = [params[k] for k in PARAM_ORDER]

    kernel = partial(_fused_kernel, Ss=Ss, St=St, H=H, Dh=Dh, E=E, L=L,
                     eps=1e-5, emb_scale=math.sqrt(E))

    in_specs = [
        pl.BlockSpec((None, Ss, 1), lambda b: (b, 0, 0)),    # src token ids (per batch)
        pl.BlockSpec((None, St, 1), lambda b: (b, 0, 0)),    # tgt token ids (per batch)
        pl.BlockSpec((None, 1, EP), lambda b: (b, 0, 0)),    # pe row b (reference quirk)
    ] + [_full_spec(a.shape) for a in weight_args]

    # TODO(synk): if this is scaled up (larger B*S / E), re-derive the all-resident VMEM
    # budget and set pltpu.CompilerParams(vmem_limit_bytes=...) explicitly (v7x has 64 MiB).
    logits = pl.pallas_call(
        kernel,
        out_shape=jax.ShapeDtypeStruct((B, St, VP), jnp.float32),
        grid=(B,),
        in_specs=in_specs,
        out_specs=pl.BlockSpec((None, St, VP), lambda b: (b, 0, 0)),
        compiler_params=pltpu.CompilerParams(dimension_semantics=("parallel",)),
    )(src3, tgt3, params['pe'], *weight_args)
    return logits[:, :, :vocab]


# ---------------------------- parameter init (padded / packed) ----------------------------

def make_pe(max_len, d_model, d_pad):
    position = jnp.arange(max_len, dtype=jnp.float32)[:, None]
    div_term = jnp.exp(jnp.arange(0, d_model, 2, dtype=jnp.float32)
                       * -(math.log(10000.0) / d_model))
    pe = jnp.zeros((max_len, d_pad), jnp.float32)
    pe = pe.at[:, 0:d_model:2].set(jnp.sin(position * div_term))
    pe = pe.at[:, 1:d_model:2].set(jnp.cos(position * div_term))
    return pe.reshape(max_len, 1, d_pad)       # padded columns stay exactly zero


def init_params(key, vocab, E, H, L, hidden, max_len=5000):
    Dh = E // H
    HD = H * Dh
    EP = _round_up(E, LANE)
    HIDP = _round_up(hidden, LANE)
    QKVP = _round_up(3 * HD, LANE)
    QP = _round_up(HD, LANE)
    KVP = _round_up(2 * HD, LANE)
    VROWS = _round_up(vocab, 8)
    VP = _round_up(vocab, LANE)

    keys = iter(jax.random.split(key, 4096))

    def w(shape, s=0.02):
        return s * jax.random.normal(next(keys), shape, jnp.float32)

    def pad2(m, rows, cols):
        return jnp.pad(m, ((0, rows - m.shape[0]), (0, cols - m.shape[1])))

    def stackL(make):
        return jnp.stack([make() for _ in range(L)], axis=0)

    ln_g = lambda: pad2(jnp.ones((1, E), jnp.float32), 1, EP)
    zerosL = lambda c: jnp.zeros((L, 1, c), jnp.float32)

    params = dict(
        emb=pad2(0.1 * jax.random.normal(next(keys), (vocab, E), jnp.float32), VROWS, EP),
        pe=make_pe(max_len, E, EP),
        # ---- encoder ----
        enc_wqkv=stackL(lambda: pad2(w((E, 3 * HD)), EP, QKVP)).astype(jnp.bfloat16),
        enc_bqkv=zerosL(QKVP),
        enc_wo=stackL(lambda: pad2(w((HD, E)), HD, EP)).astype(jnp.bfloat16),
        enc_bo=zerosL(EP),
        enc_g1=stackL(ln_g), enc_b1=zerosL(EP),
        enc_w1=stackL(lambda: pad2(w((E, hidden)), EP, HIDP)).astype(jnp.bfloat16),
        enc_bb1=zerosL(HIDP),
        enc_w2=stackL(lambda: pad2(w((hidden, E)), HIDP, EP)).astype(jnp.bfloat16),
        enc_bb2=zerosL(EP),
        enc_g2=stackL(ln_g), enc_b2=zerosL(EP),
        enc_gf=ln_g(), enc_bf=jnp.zeros((1, EP), jnp.float32),
        # ---- decoder self-attention ----
        dec_sa_wqkv=stackL(lambda: pad2(w((E, 3 * HD)), EP, QKVP)).astype(jnp.bfloat16),
        dec_sa_bqkv=zerosL(QKVP),
        dec_sa_wo=stackL(lambda: pad2(w((HD, E)), HD, EP)).astype(jnp.bfloat16),
        dec_sa_bo=zerosL(EP),
        # ---- decoder cross-attention (Q from tgt, K/V from encoder memory) ----
        dec_ca_wq=stackL(lambda: pad2(w((E, HD)), EP, QP)).astype(jnp.bfloat16),
        dec_ca_bq=zerosL(QP),
        dec_ca_wkv=stackL(lambda: pad2(w((E, 2 * HD)), EP, KVP)).astype(jnp.bfloat16),
        dec_ca_bkv=zerosL(KVP),
        dec_ca_wo=stackL(lambda: pad2(w((HD, E)), HD, EP)).astype(jnp.bfloat16),
        dec_ca_bo=zerosL(EP),
        # ---- decoder LayerNorms + FFN ----
        dec_g1=stackL(ln_g), dec_b1=zerosL(EP),
        dec_g2=stackL(ln_g), dec_b2=zerosL(EP),
        dec_g3=stackL(ln_g), dec_b3=zerosL(EP),
        dec_w1=stackL(lambda: pad2(w((E, hidden)), EP, HIDP)).astype(jnp.bfloat16),
        dec_bb1=zerosL(HIDP),
        dec_w2=stackL(lambda: pad2(w((hidden, E)), HIDP, EP)).astype(jnp.bfloat16),
        dec_bb2=zerosL(EP),
        dec_gf=ln_g(), dec_bf=jnp.zeros((1, EP), jnp.float32),
        # ---- output projection ----
        out_w=pad2(w((E, vocab)), EP, VP).astype(jnp.bfloat16),
        out_b=jnp.zeros((1, VP), jnp.float32),
    )
    return params


# ---------------------------- main ----------------------------

if __name__ == "__main__":
    vocab_size, embed_size, num_heads, num_layers, hidden_dim = 50, 32, 4, 2, 64
    B, S_src, S_tgt = 2, 8, 8

    key = jax.random.PRNGKey(0)
    kp, ks, kt = jax.random.split(key, 3)
    params = init_params(kp, vocab_size, embed_size, num_heads, num_layers, hidden_dim)
    src = jax.random.randint(ks, (B, S_src), 0, vocab_size, dtype=jnp.int32)
    tgt = jax.random.randint(kt, (B, S_tgt), 0, vocab_size, dtype=jnp.int32)

    # TODO(synk): dropout layers are identity (inference semantics); training-mode dropout
    # would need pltpu.prng_* in-kernel.
    fwd = jax.jit(partial(forward, H=num_heads, E=embed_size, L=num_layers, vocab=vocab_size))
    out = jax.block_until_ready(fwd(params, src, tgt))
    assert out.shape == (B, S_tgt, vocab_size)
    assert bool(jnp.all(jnp.isfinite(out)))
    print("KERNEL_OK")
</pallas_src>

<mosaic_0001>
module attributes {stable_mosaic.version = 11 : i64} {
  func.func @_fused_kernel(%arg0: i32, %arg1: memref<1x8x1xi32, #tpu.memory_space<vmem>>, %arg2: memref<1x8x1xi32, #tpu.memory_space<vmem>>, %arg3: memref<1x1x128xf32, #tpu.memory_space<vmem>>, %arg4: memref<56x128xf32, #tpu.memory_space<vmem>>, %arg5: memref<2x128x128xbf16, #tpu.memory_space<vmem>>, %arg6: memref<2x1x128xf32, #tpu.memory_space<vmem>>, %arg7: memref<2x32x128xbf16, #tpu.memory_space<vmem>>, %arg8: memref<2x1x128xf32, #tpu.memory_space<vmem>>, %arg9: memref<2x1x128xf32, #tpu.memory_space<vmem>>, %arg10: memref<2x1x128xf32, #tpu.memory_space<vmem>>, %arg11: memref<2x128x128xbf16, #tpu.memory_space<vmem>>, %arg12: memref<2x1x128xf32, #tpu.memory_space<vmem>>, %arg13: memref<2x128x128xbf16, #tpu.memory_space<vmem>>, %arg14: memref<2x1x128xf32, #tpu.memory_space<vmem>>, %arg15: memref<2x1x128xf32, #tpu.memory_space<vmem>>, %arg16: memref<2x1x128xf32, #tpu.memory_space<vmem>>, %arg17: memref<1x128xf32, #tpu.memory_space<vmem>>, %arg18: memref<1x128xf32, #tpu.memory_space<vmem>>, %arg19: memref<2x128x128xbf16, #tpu.memory_space<vmem>>, %arg20: memref<2x1x128xf32, #tpu.memory_space<vmem>>, %arg21: memref<2x32x128xbf16, #tpu.memory_space<vmem>>, %arg22: memref<2x1x128xf32, #tpu.memory_space<vmem>>, %arg23: memref<2x128x128xbf16, #tpu.memory_space<vmem>>, %arg24: memref<2x1x128xf32, #tpu.memory_space<vmem>>, %arg25: memref<2x128x128xbf16, #tpu.memory_space<vmem>>, %arg26: memref<2x1x128xf32, #tpu.memory_space<vmem>>, %arg27: memref<2x32x128xbf16, #tpu.memory_space<vmem>>, %arg28: memref<2x1x128xf32, #tpu.memory_space<vmem>>, %arg29: memref<2x1x128xf32, #tpu.memory_space<vmem>>, %arg30: memref<2x1x128xf32, #tpu.memory_space<vmem>>, %arg31: memref<2x1x128xf32, #tpu.memory_space<vmem>>, %arg32: memref<2x1x128xf32, #tpu.memory_space<vmem>>, %arg33: memref<2x1x128xf32, #tpu.memory_space<vmem>>, %arg34: memref<2x1x128xf32, #tpu.memory_space<vmem>>, %arg35: memref<2x128x128xbf16, #tpu.memory_space<vmem>>, %arg36: memref<2x1x128xf32, #tpu.memory_space<vmem>>, %arg37: memref<2x128x128xbf16, #tpu.memory_space<vmem>>, %arg38: memref<2x1x128xf32, #tpu.memory_space<vmem>>, %arg39: memref<1x128xf32, #tpu.memory_space<vmem>>, %arg40: memref<1x128xf32, #tpu.memory_space<vmem>>, %arg41: memref<128x128xbf16, #tpu.memory_space<vmem>>, %arg42: memref<1x128xf32, #tpu.memory_space<vmem>>, %arg43: memref<1x8x128xf32, #tpu.memory_space<vmem>>) attributes {dimension_semantics = [#tpu.dimension_semantics<parallel>], iteration_bounds = array<i64: 2>, scalar_prefetch = 0 : i64, scratch_operands = 0 : i64, tpu.core_type = #tpu.core_type<tc>, window_params = [{transform_indices = @transform_0, window_bounds = array<i64: 1, 8, 1>}, {transform_indices = @transform_1, window_bounds = array<i64: 1, 8, 1>}, {transform_indices = @transform_2, window_bounds = array<i64: 1, 1, 128>}, {pipeline_mode = #tpu.pipeline_mode<synchronous>, transform_indices = @transform_3, window_bounds = array<i64: 56, 128>}, {pipeline_mode = #tpu.pipeline_mode<synchronous>, transform_indices = @transform_4, window_bounds = array<i64: 2, 128, 128>}, {pipeline_mode = #tpu.pipeline_mode<synchronous>, transform_indices = @transform_5, window_bounds = array<i64: 2, 1, 128>}, {pipeline_mode = #tpu.pipeline_mode<synchronous>, transform_indices = @transform_6, window_bounds = array<i64: 2, 32, 128>}, {pipeline_mode = #tpu.pipeline_mode<synchronous>, transform_indices = @transform_7, window_bounds = array<i64: 2, 1, 128>}, {pipeline_mode = #tpu.pipeline_mode<synchronous>, transform_indices = @transform_8, window_bounds = array<i64: 2, 1, 128>}, {pipeline_mode = #tpu.pipeline_mode<synchronous>, transform_indices = @transform_9, window_bounds = array<i64: 2, 1, 128>}, {pipeline_mode = #tpu.pipeline_mode<synchronous>, transform_indices = @transform_10, window_bounds = array<i64: 2, 128, 128>}, {pipeline_mode = #tpu.pipeline_mode<synchronous>, transform_indices = @transform_11, window_bounds = array<i64: 2, 1, 128>}, {pipeline_mode = #tpu.pipeline_mode<synchronous>, transform_indices = @transform_12, window_bounds = array<i64: 2, 128, 128>}, {pipeline_mode = #tpu.pipeline_mode<synchronous>, transform_indices = @transform_13, window_bounds = array<i64: 2, 1, 128>}, {pipeline_mode = #tpu.pipeline_mode<synchronous>, transform_indices = @transform_14, window_bounds = array<i64: 2, 1, 128>}, {pipeline_mode = #tpu.pipeline_mode<synchronous>, transform_indices = @transform_15, window_bounds = array<i64: 2, 1, 128>}, {pipeline_mode = #tpu.pipeline_mode<synchronous>, transform_indices = @transform_16, window_bounds = array<i64: 1, 128>}, {pipeline_mode = #tpu.pipeline_mode<synchronous>, transform_indices = @transform_17, window_bounds = array<i64: 1, 128>}, {pipeline_mode = #tpu.pipeline_mode<synchronous>, transform_indices = @transform_18, window_bounds = array<i64: 2, 128, 128>}, {pipeline_mode = #tpu.pipeline_mode<synchronous>, transform_indices = @transform_19, window_bounds = array<i64: 2, 1, 128>}, {pipeline_mode = #tpu.pipeline_mode<synchronous>, transform_indices = @transform_20, window_bounds = array<i64: 2, 32, 128>}, {pipeline_mode = #tpu.pipeline_mode<synchronous>, transform_indices = @transform_21, window_bounds = array<i64: 2, 1, 128>}, {pipeline_mode = #tpu.pipeline_mode<synchronous>, transform_indices = @transform_22, window_bounds = array<i64: 2, 128, 128>}, {pipeline_mode = #tpu.pipeline_mode<synchronous>, transform_indices = @transform_23, window_bounds = array<i64: 2, 1, 128>}, {pipeline_mode = #tpu.pipeline_mode<synchronous>, transform_indices = @transform_24, window_bounds = array<i64: 2, 128, 128>}, {pipeline_mode = #tpu.pipeline_mode<synchronous>, transform_indices = @transform_25, window_bounds = array<i64: 2, 1, 128>}, {pipeline_mode = #tpu.pipeline_mode<synchronous>, transform_indices = @transform_26, window_bounds = array<i64: 2, 32, 128>}, {pipeline_mode = #tpu.pipeline_mode<synchronous>, transform_indices = @transform_27, window_bounds = array<i64: 2, 1, 128>}, {pipeline_mode = #tpu.pipeline_mode<synchronous>, transform_indices = @transform_28, window_bounds = array<i64: 2, 1, 128>}, {pipeline_mode = #tpu.pipeline_mode<synchronous>, transform_indices = @transform_29, window_bounds = array<i64: 2, 1, 128>}, {pipeline_mode = #tpu.pipeline_mode<synchronous>, transform_indices = @transform_30, window_bounds = array<i64: 2, 1, 128>}, {pipeline_mode = #tpu.pipeline_mode<synchronous>, transform_indices = @transform_31, window_bounds = array<i64: 2, 1, 128>}, {pipeline_mode = #tpu.pipeline_mode<synchronous>, transform_indices = @transform_32, window_bounds = array<i64: 2, 1, 128>}, {pipeline_mode = #tpu.pipeline_mode<synchronous>, transform_indices = @transform_33, window_bounds = array<i64: 2, 1, 128>}, {pipeline_mode = #tpu.pipeline_mode<synchronous>, transform_indices = @transform_34, window_bounds = array<i64: 2, 128, 128>}, {pipeline_mode = #tpu.pipeline_mode<synchronous>, transform_indices = @transform_35, window_bounds = array<i64: 2, 1, 128>}, {pipeline_mode = #tpu.pipeline_mode<synchronous>, transform_indices = @transform_36, window_bounds = array<i64: 2, 128, 128>}, {pipeline_mode = #tpu.pipeline_mode<synchronous>, transform_indices = @transform_37, window_bounds = array<i64: 2, 1, 128>}, {pipeline_mode = #tpu.pipeline_mode<synchronous>, transform_indices = @transform_38, window_bounds = array<i64: 1, 128>}, {pipeline_mode = #tpu.pipeline_mode<synchronous>, transform_indices = @transform_39, window_bounds = array<i64: 1, 128>}, {pipeline_mode = #tpu.pipeline_mode<synchronous>, transform_indices = @transform_40, window_bounds = array<i64: 128, 128>}, {pipeline_mode = #tpu.pipeline_mode<synchronous>, transform_indices = @transform_41, window_bounds = array<i64: 1, 128>}, {transform_indices = @transform_42, window_bounds = array<i64: 1, 8, 128>}]} {
    %0 = tpu.iota {dimensions = array<i32: 0>} : vector<8x8xi32>
    %1 = tpu.iota {dimensions = array<i32: 1>} : vector<8x8xi32>
    %2 = arith.cmpi sle, %1, %0 : vector<8x8xi32>
    %cst = arith.constant 0.000000e+00 : f32
    %cst_0 = arith.constant -1.000000e+30 : f32
    %3 = vector.broadcast %cst : f32 to vector<8x8xf32>
    %4 = vector.broadcast %cst_0 : f32 to vector<8x8xf32>
    %5 = arith.select %2, %3, %4 : vector<8x8xi1>, vector<8x8xf32>
    %6 = tpu.iota {dimensions = array<i32: 0>} : vector<8x8xi32>
    %7 = tpu.iota {dimensions = array<i32: 1>} : vector<8x8xi32>
    %8 = arith.cmpi sle, %7, %6 : vector<8x8xi32>
    %cst_1 = arith.constant 0.000000e+00 : f32
    %cst_2 = arith.constant -1.000000e+30 : f32
    %9 = vector.broadcast %cst_1 : f32 to vector<8x8xf32>
    %10 = vector.broadcast %cst_2 : f32 to vector<8x8xf32>
    %11 = arith.select %8, %9, %10 : vector<8x8xi1>, vector<8x8xf32>
    %12 = tpu.iota {dimensions = array<i32: 1>} : vector<1x128xi32>
    %c32_i32 = arith.constant 32 : i32
    %13 = vector.broadcast %c32_i32 : i32 to vector<1x128xi32>
    %14 = arith.cmpi slt, %12, %13 : vector<1x128xi32>
    %c0 = arith.constant 0 : index
    %c0_3 = arith.constant 0 : index
    %15 = vector.load %arg4[%c0, %c0_3] : memref<56x128xf32, #tpu.memory_space<vmem>>, vector<56x128xf32>
    %c0_4 = arith.constant 0 : index
    %c0_5 = arith.constant 0 : index
    %c0_6 = arith.constant 0 : index
    %16 = vector.load %arg3[%c0_4, %c0_5, %c0_6] : memref<1x1x128xf32, #tpu.memory_space<vmem>>, vector<1x1x128xf32>
    %17 = vector.shape_cast %16 : vector<1x1x128xf32> to vector<1x128xf32>
    %c0_7 = arith.constant 0 : index
    %c0_8 = arith.constant 0 : index
    %c0_9 = arith.constant 0 : index
    %18 = vector.load %arg1[%c0_7, %c0_8, %c0_9] : memref<1x8x1xi32, #tpu.memory_space<vmem>>, vector<1x8x1xi32>
    %19 = vector.shape_cast %18 : vector<1x8x1xi32> to vector<8x1xi32>
    %20 = tpu.iota {dimensions = array<i32: 1>} : vector<8x56xi32>
    %21 = vector.broadcast %19 : vector<8x1xi32> to vector<8x56xi32>
    %22 = arith.cmpi eq, %21, %20 : vector<8x56xi32>
    %23 = arith.extui %22 : vector<8x56xi1> to vector<8x56xi32>
    %24 = arith.sitofp %23 : vector<8x56xi32> to vector<8x56xf32>
    %cst_10 = arith.constant dense<0.000000e+00> : vector<8x128xf32>
    %25 = tpu.matmul %24, %15, %cst_10 {dimension_numbers = #tpu.dot_dimension_numbers<[1], [0], [0], [1], [0, 0, 1, 1], [], []>} : vector<8x56xf32>, vector<56x128xf32>, vector<8x128xf32> -> vector<8x128xf32>
    %cst_11 = arith.constant 5.65685415 : f32
    %26 = vector.broadcast %cst_11 : f32 to vector<8x128xf32>
    %27 = arith.mulf %25, %26 : vector<8x128xf32>
    %28 = vector.broadcast %17 : vector<1x128xf32> to vector<8x128xf32>
    %29 = arith.addf %27, %28 : vector<8x128xf32>
    %30 = arith.truncf %29 : vector<8x128xf32> to vector<8x128xbf16>
    %c0_12 = arith.constant 0 : index
    %c0_13 = arith.constant 0 : index
    %c0_14 = arith.constant 0 : index
    %31 = vector.load %arg5[%c0_12, %c0_13, %c0_14] : memref<2x128x128xbf16, #tpu.memory_space<vmem>>, vector<1x128x128xbf16>
    %32 = vector.shape_cast %31 : vector<1x128x128xbf16> to vector<128x128xbf16>
    %cst_15 = arith.constant dense<0.000000e+00> : vector<8x128xf32>
    %33 = tpu.matmul %30, %32, %cst_15 {dimension_numbers = #tpu.dot_dimension_numbers<[1], [0], [0], [1], [0, 0, 1, 1], [], []>} : vector<8x128xbf16>, vector<128x128xbf16>, vector<8x128xf32> -> vector<8x128xf32>
    %c0_16 = arith.constant 0 : index
    %c0_17 = arith.constant 0 : index
    %c0_18 = arith.constant 0 : index
    %34 = vector.load %arg6[%c0_16, %c0_17, %c0_18] : memref<2x1x128xf32, #tpu.memory_space<vmem>>, vector<1x1x128xf32>
    %35 = vector.shape_cast %34 : vector<1x1x128xf32> to vector<1x128xf32>
    %36 = vector.broadcast %35 : vector<1x128xf32> to vector<8x128xf32>
    %37 = arith.addf %33, %36 : vector<8x128xf32>
    %38 = arith.truncf %37 : vector<8x128xf32> to vector<8x128xbf16>
    %39 = vector.extract_strided_slice %38 {offsets = [0, 0], sizes = [8, 8], strides = [1, 1]} : vector<8x128xbf16> to vector<8x8xbf16>
    %40 = vector.extract_strided_slice %38 {offsets = [0, 32], sizes = [8, 8], strides = [1, 1]} : vector<8x128xbf16> to vector<8x8xbf16>
    %41 = vector.extract_strided_slice %38 {offsets = [0, 64], sizes = [8, 8], strides = [1, 1]} : vector<8x128xbf16> to vector<8x8xbf16>
    "tpu.trace_start"() <{level = 10 : i32, message = "qd,kd->qk"}> : () -> ()
    %cst_19 = arith.constant dense<0.000000e+00> : vector<8x8xf32>
    %42 = tpu.matmul %39, %40, %cst_19 {dimension_numbers = #tpu.dot_dimension_numbers<[1], [1], [0], [0], [0, 0, 1, 0], [], []>} : vector<8x8xbf16>, vector<8x8xbf16>, vector<8x8xf32> -> vector<8x8xf32>
    "tpu.trace_stop"() : () -> ()
    %cst_20 = arith.constant 0.353553385 : f32
    %43 = vector.broadcast %cst_20 : f32 to vector<8x8xf32>
    %44 = arith.mulf %42, %43 : vector<8x8xf32>
    %45 = arith.addf %44, %5 : vector<8x8xf32>
    %cst_21 = arith.constant dense<0xFF800000> : vector<8xf32>
    %46 = vector.multi_reduction <maximumf>, %45, %cst_21 [1] : vector<8x8xf32> to vector<8xf32>
    %47 = vector.shape_cast %46 : vector<8xf32> to vector<8x1xf32>
    %48 = vector.broadcast %47 : vector<8x1xf32> to vector<8x8xf32>
    %49 = arith.subf %45, %48 : vector<8x8xf32>
    %50 = math.exp %49 : vector<8x8xf32>
    %cst_22 = arith.constant dense<0.000000e+00> : vector<8xf32>
    %51 = vector.multi_reduction <add>, %50, %cst_22 [1] : vector<8x8xf32> to vector<8xf32>
    %52 = vector.shape_cast %51 : vector<8xf32> to vector<8x1xf32>
    %53 = arith.truncf %50 : vector<8x8xf32> to vector<8x8xbf16>
    %cst_23 = arith.constant dense<0.000000e+00> : vector<8x8xf32>
    %54 = tpu.matmul %53, %41, %cst_23 {dimension_numbers = #tpu.dot_dimension_numbers<[1], [0], [0], [1], [0, 0, 1, 1], [], []>} : vector<8x8xbf16>, vector<8x8xbf16>, vector<8x8xf32> -> vector<8x8xf32>
    %55 = tpu.reciprocal %52 {approx = true} : vector<8x1xf32> -> vector<8x1xf32>
    %56 = vector.broadcast %55 : vector<8x1xf32> to vector<8x8xf32>
    %57 = arith.mulf %54, %56 : vector<8x8xf32>
    %58 = vector.extract_strided_slice %38 {offsets = [0, 8], sizes = [8, 8], strides = [1, 1]} : vector<8x128xbf16> to vector<8x8xbf16>
    %59 = vector.extract_strided_slice %38 {offsets = [0, 40], sizes = [8, 8], strides = [1, 1]} : vector<8x128xbf16> to vector<8x8xbf16>
    %60 = vector.extract_strided_slice %38 {offsets = [0, 72], sizes = [8, 8], strides = [1, 1]} : vector<8x128xbf16> to vector<8x8xbf16>
    "tpu.trace_start"() <{level = 10 : i32, message = "qd,kd->qk"}> : () -> ()
    %cst_24 = arith.constant dense<0.000000e+00> : vector<8x8xf32>
    %61 = tpu.matmul %58, %59, %cst_24 {dimension_numbers = #tpu.dot_dimension_numbers<[1], [1], [0], [0], [0, 0, 1, 0], [], []>} : vector<8x8xbf16>, vector<8x8xbf16>, vector<8x8xf32> -> vector<8x8xf32>
    "tpu.trace_stop"() : () -> ()
    %cst_25 = arith.constant 0.353553385 : f32
    %62 = vector.broadcast %cst_25 : f32 to vector<8x8xf32>
    %63 = arith.mulf %61, %62 : vector<8x8xf32>
    %64 = arith.addf %63, %5 : vector<8x8xf32>
    %cst_26 = arith.constant dense<0xFF800000> : vector<8xf32>
    %65 = vector.multi_reduction <maximumf>, %64, %cst_26 [1] : vector<8x8xf32> to vector<8xf32>
    %66 = vector.shape_cast %65 : vector<8xf32> to vector<8x1xf32>
    %67 = vector.broadcast %66 : vector<8x1xf32> to vector<8x8xf32>
    %68 = arith.subf %64, %67 : vector<8x8xf32>
    %69 = math.exp %68 : vector<8x8xf32>
    %cst_27 = arith.constant dense<0.000000e+00> : vector<8xf32>
    %70 = vector.multi_reduction <add>, %69, %cst_27 [1] : vector<8x8xf32> to vector<8xf32>
    %71 = vector.shape_cast %70 : vector<8xf32> to vector<8x1xf32>
    %72 = arith.truncf %69 : vector<8x8xf32> to vector<8x8xbf16>
    %cst_28 = arith.constant dense<0.000000e+00> : vector<8x8xf32>
    %73 = tpu.matmul %72, %60, %cst_28 {dimension_numbers = #tpu.dot_dimension_numbers<[1], [0], [0], [1], [0, 0, 1, 1], [], []>} : vector<8x8xbf16>, vector<8x8xbf16>, vector<8x8xf32> -> vector<8x8xf32>
    %74 = tpu.reciprocal %71 {approx = true} : vector<8x1xf32> -> vector<8x1xf32>
    %75 = vector.broadcast %74 : vector<8x1xf32> to vector<8x8xf32>
    %76 = arith.mulf %73, %75 : vector<8x8xf32>
    %77 = vector.extract_strided_slice %38 {offsets = [0, 16], sizes = [8, 8], strides = [1, 1]} : vector<8x128xbf16> to vector<8x8xbf16>
    %78 = vector.extract_strided_slice %38 {offsets = [0, 48], sizes = [8, 8], strides = [1, 1]} : vector<8x128xbf16> to vector<8x8xbf16>
    %79 = vector.extract_strided_slice %38 {offsets = [0, 80], sizes = [8, 8], strides = [1, 1]} : vector<8x128xbf16> to vector<8x8xbf16>
    "tpu.trace_start"() <{level = 10 : i32, message = "qd,kd->qk"}> : () -> ()
    %cst_29 = arith.constant dense<0.000000e+00> : vector<8x8xf32>
    %80 = tpu.matmul %77, %78, %cst_29 {dimension_numbers = #tpu.dot_dimension_numbers<[1], [1], [0], [0], [0, 0, 1, 0], [], []>} : vector<8x8xbf16>, vector<8x8xbf16>, vector<8x8xf32> -> vector<8x8xf32>
    "tpu.trace_stop"() : () -> ()
    %cst_30 = arith.constant 0.353553385 : f32
    %81 = vector.broadcast %cst_30 : f32 to vector<8x8xf32>
    %82 = arith.mulf %80, %81 : vector<8x8xf32>
    %83 = arith.addf %82, %5 : vector<8x8xf32>
    %cst_31 = arith.constant dense<0xFF800000> : vector<8xf32>
    %84 = vector.multi_reduction <maximumf>, %83, %cst_31 [1] : vector<8x8xf32> to vector<8xf32>
    %85 = vector.shape_cast %84 : vector<8xf32> to vector<8x1xf32>
    %86 = vector.broadcast %85 : vector<8x1xf32> to vector<8x8xf32>
    %87 = arith.subf %83, %86 : vector<8x8xf32>
    %88 = math.exp %87 : vector<8x8xf32>
    %cst_32 = arith.constant dense<0.000000e+00> : vector<8xf32>
    %89 = vector.multi_reduction <add>, %88, %cst_32 [1] : vector<8x8xf32> to vector<8xf32>
    %90 = vector.shape_cast %89 : vector<8xf32> to vector<8x1xf32>
    %91 = arith.truncf %88 : vector<8x8xf32> to vector<8x8xbf16>
    %cst_33 = arith.constant dense<0.000000e+00> : vector<8x8xf32>
    %92 = tpu.matmul %91, %79, %cst_33 {dimension_numbers = #tpu.dot_dimension_numbers<[1], [0], [0], [1], [0, 0, 1, 1], [], []>} : vector<8x8xbf16>, vector<8x8xbf16>, vector<8x8xf32> -> vector<8x8xf32>
    %93 = tpu.reciprocal %90 {approx = true} : vector<8x1xf32> -> vector<8x1xf32>
    %94 = vector.broadcast %93 : vector<8x1xf32> to vector<8x8xf32>
    %95 = arith.mulf %92, %94 : vector<8x8xf32>
    %96 = vector.extract_strided_slice %38 {offsets = [0, 24], sizes = [8, 8], strides = [1, 1]} : vector<8x128xbf16> to vector<8x8xbf16>
    %97 = vector.extract_strided_slice %38 {offsets = [0, 56], sizes = [8, 8], strides = [1, 1]} : vector<8x128xbf16> to vector<8x8xbf16>
    %98 = vector.extract_strided_slice %38 {offsets = [0, 88], sizes = [8, 8], strides = [1, 1]} : vector<8x128xbf16> to vector<8x8xbf16>
    "tpu.trace_start"() <{level = 10 : i32, message = "qd,kd->qk"}> : () -> ()
    %cst_34 = arith.constant dense<0.000000e+00> : vector<8x8xf32>
    %99 = tpu.matmul %96, %97, %cst_34 {dimension_numbers = #tpu.dot_dimension_numbers<[1], [1], [0], [0], [0, 0, 1, 0], [], []>} : vector<8x8xbf16>, vector<8x8xbf16>, vector<8x8xf32> -> vector<8x8xf32>
    "tpu.trace_stop"() : () -> ()
    %cst_35 = arith.constant 0.353553385 : f32
    %100 = vector.broadcast %cst_35 : f32 to vector<8x8xf32>
    %101 = arith.mulf %99, %100 : vector<8x8xf32>
    %102 = arith.addf %101, %5 : vector<8x8xf32>
    %cst_36 = arith.constant dense<0xFF800000> : vector<8xf32>
    %103 = vector.multi_reduction <maximumf>, %102, %cst_36 [1] : vector<8x8xf32> to vector<8xf32>
    %104 = vector.shape_cast %103 : vector<8xf32> to vector<8x1xf32>
    %105 = vector.broadcast %104 : vector<8x1xf32> to vector<8x8xf32>
    %106 = arith.subf %102, %105 : vector<8x8xf32>
    %107 = math.exp %106 : vector<8x8xf32>
    %cst_37 = arith.constant dense<0.000000e+00> : vector<8xf32>
    %108 = vector.multi_reduction <add>, %107, %cst_37 [1] : vector<8x8xf32> to vector<8xf32>
    %109 = vector.shape_cast %108 : vector<8xf32> to vector<8x1xf32>
    %110 = arith.truncf %107 : vector<8x8xf32> to vector<8x8xbf16>
    %cst_38 = arith.constant dense<0.000000e+00> : vector<8x8xf32>
    %111 = tpu.matmul %110, %98, %cst_38 {dimension_numbers = #tpu.dot_dimension_numbers<[1], [0], [0], [1], [0, 0, 1, 1], [], []>} : vector<8x8xbf16>, vector<8x8xbf16>, vector<8x8xf32> -> vector<8x8xf32>
    %112 = tpu.reciprocal %109 {approx = true} : vector<8x1xf32> -> vector<8x1xf32>
    %113 = vector.broadcast %112 : vector<8x1xf32> to vector<8x8xf32>
    %114 = arith.mulf %111, %113 : vector<8x8xf32>
    %115 = tpu.concatenate %57, %76, %95, %114 in 1 : vector<8x8xf32>, vector<8x8xf32>, vector<8x8xf32>, vector<8x8xf32> -> vector<8x32xf32>
    %116 = arith.truncf %115 : vector<8x32xf32> to vector<8x32xbf16>
    %c0_39 = arith.constant 0 : index
    %c0_40 = arith.constant 0 : index
    %c0_41 = arith.constant 0 : index
    %117 = vector.load %arg7[%c0_39, %c0_40, %c0_41] : memref<2x32x128xbf16, #tpu.memory_space<vmem>>, vector<1x32x128xbf16>
    %118 = vector.shape_cast %117 : vector<1x32x128xbf16> to vector<32x128xbf16>
    %cst_42 = arith.constant dense<0.000000e+00> : vector<8x128xf32>
    %119 = tpu.matmul %116, %118, %cst_42 {dimension_numbers = #tpu.dot_dimension_numbers<[1], [0], [0], [1], [0, 0, 1, 1], [], []>} : vector<8x32xbf16>, vector<32x128xbf16>, vector<8x128xf32> -> vector<8x128xf32>
    %c0_43 = arith.constant 0 : index
    %c0_44 = arith.constant 0 : index
    %c0_45 = arith.constant 0 : index
    %120 = vector.load %arg8[%c0_43, %c0_44, %c0_45] : memref<2x1x128xf32, #tpu.memory_space<vmem>>, vector<1x1x128xf32>
    %121 = vector.shape_cast %120 : vector<1x1x128xf32> to vector<1x128xf32>
    %122 = vector.broadcast %121 : vector<1x128xf32> to vector<8x128xf32>
    %123 = arith.addf %119, %122 : vector<8x128xf32>
    %124 = arith.addf %29, %123 : vector<8x128xf32>
    %c0_46 = arith.constant 0 : index
    %c0_47 = arith.constant 0 : index
    %c0_48 = arith.constant 0 : index
    %125 = vector.load %arg9[%c0_46, %c0_47, %c0_48] : memref<2x1x128xf32, #tpu.memory_space<vmem>>, vector<1x1x128xf32>
    %126 = vector.shape_cast %125 : vector<1x1x128xf32> to vector<1x128xf32>
    %c0_49 = arith.constant 0 : index
    %c0_50 = arith.constant 0 : index
    %c0_51 = arith.constant 0 : index
    %127 = vector.load %arg10[%c0_49, %c0_50, %c0_51] : memref<2x1x128xf32, #tpu.memory_space<vmem>>, vector<1x1x128xf32>
    %128 = vector.shape_cast %127 : vector<1x1x128xf32> to vector<1x128xf32>
    %cst_52 = arith.constant 0.000000e+00 : f32
    %129 = vector.shape_cast %14 : vector<1x128xi1> to vector<1x128xi1>
    %130 = vector.broadcast %129 : vector<1x128xi1> to vector<8x128xi1>
    %131 = vector.broadcast %cst_52 : f32 to vector<8x128xf32>
    %132 = arith.select %130, %124, %131 : vector<8x128xi1>, vector<8x128xf32>
    %cst_53 = arith.constant dense<0.000000e+00> : vector<8xf32>
    %133 = vector.multi_reduction <add>, %132, %cst_53 [1] : vector<8x128xf32> to vector<8xf32>
    %134 = vector.shape_cast %133 : vector<8xf32> to vector<8x1xf32>
    %cst_54 = arith.constant 3.125000e-02 : f32
    %135 = vector.broadcast %cst_54 : f32 to vector<8x1xf32>
    %136 = arith.mulf %134, %135 : vector<8x1xf32>
    %137 = vector.broadcast %136 : vector<8x1xf32> to vector<8x128xf32>
    %138 = arith.subf %124, %137 : vector<8x128xf32>
    %cst_55 = arith.constant 0.000000e+00 : f32
    %139 = vector.shape_cast %14 : vector<1x128xi1> to vector<1x128xi1>
    %140 = vector.broadcast %139 : vector<1x128xi1> to vector<8x128xi1>
    %141 = vector.broadcast %cst_55 : f32 to vector<8x128xf32>
    %142 = arith.select %140, %138, %141 : vector<8x128xi1>, vector<8x128xf32>
    %143 = arith.mulf %142, %142 : vector<8x128xf32>
    %cst_56 = arith.constant dense<0.000000e+00> : vector<8xf32>
    %144 = vector.multi_reduction <add>, %143, %cst_56 [1] : vector<8x128xf32> to vector<8xf32>
    %145 = vector.shape_cast %144 : vector<8xf32> to vector<8x1xf32>
    %cst_57 = arith.constant 3.125000e-02 : f32
    %146 = vector.broadcast %cst_57 : f32 to vector<8x1xf32>
    %147 = arith.mulf %145, %146 : vector<8x1xf32>
    %cst_58 = arith.constant 9.99999974E-6 : f32
    %148 = vector.broadcast %cst_58 : f32 to vector<8x1xf32>
    %149 = arith.addf %147, %148 : vector<8x1xf32>
    %150 = math.rsqrt %149 : vector<8x1xf32>
    %151 = vector.broadcast %150 : vector<8x1xf32> to vector<8x128xf32>
    %152 = arith.mulf %138, %151 : vector<8x128xf32>
    %153 = vector.broadcast %126 : vector<1x128xf32> to vector<8x128xf32>
    %154 = arith.mulf %152, %153 : vector<8x128xf32>
    %155 = vector.broadcast %128 : vector<1x128xf32> to vector<8x128xf32>
    %156 = arith.addf %154, %155 : vector<8x128xf32>
    %157 = arith.truncf %156 : vector<8x128xf32> to vector<8x128xbf16>
    %c0_59 = arith.constant 0 : index
    %c0_60 = arith.constant 0 : index
    %c0_61 = arith.constant 0 : index
    %158 = vector.load %arg11[%c0_59, %c0_60, %c0_61] : memref<2x128x128xbf16, #tpu.memory_space<vmem>>, vector<1x128x128xbf16>
    %159 = vector.shape_cast %158 : vector<1x128x128xbf16> to vector<128x128xbf16>
    %cst_62 = arith.constant dense<0.000000e+00> : vector<8x128xf32>
    %160 = tpu.matmul %157, %159, %cst_62 {dimension_numbers = #tpu.dot_dimension_numbers<[1], [0], [0], [1], [0, 0, 1, 1], [], []>} : vector<8x128xbf16>, vector<128x128xbf16>, vector<8x128xf32> -> vector<8x128xf32>
    %c0_63 = arith.constant 0 : index
    %c0_64 = arith.constant 0 : index
    %c0_65 = arith.constant 0 : index
    %161 = vector.load %arg12[%c0_63, %c0_64, %c0_65] : memref<2x1x128xf32, #tpu.memory_space<vmem>>, vector<1x1x128xf32>
    %162 = vector.shape_cast %161 : vector<1x1x128xf32> to vector<1x128xf32>
    %163 = vector.broadcast %162 : vector<1x128xf32> to vector<8x128xf32>
    %164 = arith.addf %160, %163 : vector<8x128xf32>
    %cst_66 = arith.constant 0.000000e+00 : f32
    %165 = vector.broadcast %cst_66 : f32 to vector<8x128xf32>
    %166 = arith.maximumf %164, %165 : vector<8x128xf32>
    %167 = arith.truncf %166 : vector<8x128xf32> to vector<8x128xbf16>
    %c0_67 = arith.constant 0 : index
    %c0_68 = arith.constant 0 : index
    %c0_69 = arith.constant 0 : index
    %168 = vector.load %arg13[%c0_67, %c0_68, %c0_69] : memref<2x128x128xbf16, #tpu.memory_space<vmem>>, vector<1x128x128xbf16>
    %169 = vector.shape_cast %168 : vector<1x128x128xbf16> to vector<128x128xbf16>
    %cst_70 = arith.constant dense<0.000000e+00> : vector<8x128xf32>
    %170 = tpu.matmul %167, %169, %cst_70 {dimension_numbers = #tpu.dot_dimension_numbers<[1], [0], [0], [1], [0, 0, 1, 1], [], []>} : vector<8x128xbf16>, vector<128x128xbf16>, vector<8x128xf32> -> vector<8x128xf32>
    %c0_71 = arith.constant 0 : index
    %c0_72 = arith.constant 0 : index
    %c0_73 = arith.constant 0 : index
    %171 = vector.load %arg14[%c0_71, %c0_72, %c0_73] : memref<2x1x128xf32, #tpu.memory_space<vmem>>, vector<1x1x128xf32>
    %172 = vector.shape_cast %171 : vector<1x1x128xf32> to vector<1x128xf32>
    %173 = vector.broadcast %172 : vector<1x128xf32> to vector<8x128xf32>
    %174 = arith.addf %170, %173 : vector<8x128xf32>
    %175 = arith.addf %156, %174 : vector<8x128xf32>
    %c0_74 = arith.constant 0 : index
    %c0_75 = arith.constant 0 : index
    %c0_76 = arith.constant 0 : index
    %176 = vector.load %arg15[%c0_74, %c0_75, %c0_76] : memref<2x1x128xf32, #tpu.memory_space<vmem>>, vector<1x1x128xf32>
    %177 = vector.shape_cast %176 : vector<1x1x128xf32> to vector<1x128xf32>
    %c0_77 = arith.constant 0 : index
    %c0_78 = arith.constant 0 : index
    %c0_79 = arith.constant 0 : index
    %178 = vector.load %arg16[%c0_77, %c0_78, %c0_79] : memref<2x1x128xf32, #tpu.memory_space<vmem>>, vector<1x1x128xf32>
    %179 = vector.shape_cast %178 : vector<1x1x128xf32> to vector<1x128xf32>
    %cst_80 = arith.constant 0.000000e+00 : f32
    %180 = vector.shape_cast %14 : vector<1x128xi1> to vector<1x128xi1>
    %181 = vector.broadcast %180 : vector<1x128xi1> to vector<8x128xi1>
    %182 = vector.broadcast %cst_80 : f32 to vector<8x128xf32>
    %183 = arith.select %181, %175, %182 : vector<8x128xi1>, vector<8x128xf32>
    %cst_81 = arith.constant dense<0.000000e+00> : vector<8xf32>
    %184 = vector.multi_reduction <add>, %183, %cst_81 [1] : vector<8x128xf32> to vector<8xf32>
    %185 = vector.shape_cast %184 : vector<8xf32> to vector<8x1xf32>
    %cst_82 = arith.constant 3.125000e-02 : f32
    %186 = vector.broadcast %cst_82 : f32 to vector<8x1xf32>
    %187 = arith.mulf %185, %186 : vector<8x1xf32>
    %188 = vector.broadcast %187 : vector<8x1xf32> to vector<8x128xf32>
    %189 = arith.subf %175, %188 : vector<8x128xf32>
    %cst_83 = arith.constant 0.000000e+00 : f32
    %190 = vector.shape_cast %14 : vector<1x128xi1> to vector<1x128xi1>
    %191 = vector.broadcast %190 : vector<1x128xi1> to vector<8x128xi1>
    %192 = vector.broadcast %cst_83 : f32 to vector<8x128xf32>
    %193 = arith.select %191, %189, %192 : vector<8x128xi1>, vector<8x128xf32>
    %194 = arith.mulf %193, %193 : vector<8x128xf32>
    %cst_84 = arith.constant dense<0.000000e+00> : vector<8xf32>
    %195 = vector.multi_reduction <add>, %194, %cst_84 [1] : vector<8x128xf32> to vector<8xf32>
    %196 = vector.shape_cast %195 : vector<8xf32> to vector<8x1xf32>
    %cst_85 = arith.constant 3.125000e-02 : f32
    %197 = vector.broadcast %cst_85 : f32 to vector<8x1xf32>
    %198 = arith.mulf %196, %197 : vector<8x1xf32>
    %cst_86 = arith.constant 9.99999974E-6 : f32
    %199 = vector.broadcast %cst_86 : f32 to vector<8x1xf32>
    %200 = arith.addf %198, %199 : vector<8x1xf32>
    %201 = math.rsqrt %200 : vector<8x1xf32>
    %202 = vector.broadcast %201 : vector<8x1xf32> to vector<8x128xf32>
    %203 = arith.mulf %189, %202 : vector<8x128xf32>
    %204 = vector.broadcast %177 : vector<1x128xf32> to vector<8x128xf32>
    %205 = arith.mulf %203, %204 : vector<8x128xf32>
    %206 = vector.broadcast %179 : vector<1x128xf32> to vector<8x128xf32>
    %207 = arith.addf %205, %206 : vector<8x128xf32>
    %208 = arith.truncf %207 : vector<8x128xf32> to vector<8x128xbf16>
    %c1 = arith.constant 1 : index
    %c0_87 = arith.constant 0 : index
    %c0_88 = arith.constant 0 : index
    %209 = vector.load %arg5[%c1, %c0_87, %c0_88] : memref<2x128x128xbf16, #tpu.memory_space<vmem>>, vector<1x128x128xbf16>
    %210 = vector.shape_cast %209 : vector<1x128x128xbf16> to vector<128x128xbf16>
    %cst_89 = arith.constant dense<0.000000e+00> : vector<8x128xf32>
    %211 = tpu.matmul %208, %210, %cst_89 {dimension_numbers = #tpu.dot_dimension_numbers<[1], [0], [0], [1], [0, 0, 1, 1], [], []>} : vector<8x128xbf16>, vector<128x128xbf16>, vector<8x128xf32> -> vector<8x128xf32>
    %c1_90 = arith.constant 1 : index
    %c0_91 = arith.constant 0 : index
    %c0_92 = arith.constant 0 : index
    %212 = vector.load %arg6[%c1_90, %c0_91, %c0_92] : memref<2x1x128xf32, #tpu.memory_space<vmem>>, vector<1x1x128xf32>
    %213 = vector.shape_cast %212 : vector<1x1x128xf32> to vector<1x128xf32>
    %214 = vector.broadcast %213 : vector<1x128xf32> to vector<8x128xf32>
    %215 = arith.addf %211, %214 : vector<8x128xf32>
    %216 = arith.truncf %215 : vector<8x128xf32> to vector<8x128xbf16>
    %217 = vector.extract_strided_slice %216 {offsets = [0, 0], sizes = [8, 8], strides = [1, 1]} : vector<8x128xbf16> to vector<8x8xbf16>
    %218 = vector.extract_strided_slice %216 {offsets = [0, 32], sizes = [8, 8], strides = [1, 1]} : vector<8x128xbf16> to vector<8x8xbf16>
    %219 = vector.extract_strided_slice %216 {offsets = [0, 64], sizes = [8, 8], strides = [1, 1]} : vector<8x128xbf16> to vector<8x8xbf16>
    "tpu.trace_start"() <{level = 10 : i32, message = "qd,kd->qk"}> : () -> ()
    %cst_93 = arith.constant dense<0.000000e+00> : vector<8x8xf32>
    %220 = tpu.matmul %217, %218, %cst_93 {dimension_numbers = #tpu.dot_dimension_numbers<[1], [1], [0], [0], [0, 0, 1, 0], [], []>} : vector<8x8xbf16>, vector<8x8xbf16>, vector<8x8xf32> -> vector<8x8xf32>
    "tpu.trace_stop"() : () -> ()
    %cst_94 = arith.constant 0.353553385 : f32
    %221 = vector.broadcast %cst_94 : f32 to vector<8x8xf32>
    %222 = arith.mulf %220, %221 : vector<8x8xf32>
    %223 = arith.addf %222, %5 : vector<8x8xf32>
    %cst_95 = arith.constant dense<0xFF800000> : vector<8xf32>
    %224 = vector.multi_reduction <maximumf>, %223, %cst_95 [1] : vector<8x8xf32> to vector<8xf32>
    %225 = vector.shape_cast %224 : vector<8xf32> to vector<8x1xf32>
    %226 = vector.broadcast %225 : vector<8x1xf32> to vector<8x8xf32>
    %227 = arith.subf %223, %226 : vector<8x8xf32>
    %228 = math.exp %227 : vector<8x8xf32>
    %cst_96 = arith.constant dense<0.000000e+00> : vector<8xf32>
    %229 = vector.multi_reduction <add>, %228, %cst_96 [1] : vector<8x8xf32> to vector<8xf32>
    %230 = vector.shape_cast %229 : vector<8xf32> to vector<8x1xf32>
    %231 = arith.truncf %228 : vector<8x8xf32> to vector<8x8xbf16>
    %cst_97 = arith.constant dense<0.000000e+00> : vector<8x8xf32>
    %232 = tpu.matmul %231, %219, %cst_97 {dimension_numbers = #tpu.dot_dimension_numbers<[1], [0], [0], [1], [0, 0, 1, 1], [], []>} : vector<8x8xbf16>, vector<8x8xbf16>, vector<8x8xf32> -> vector<8x8xf32>
    %233 = tpu.reciprocal %230 {approx = true} : vector<8x1xf32> -> vector<8x1xf32>
    %234 = vector.broadcast %233 : vector<8x1xf32> to vector<8x8xf32>
    %235 = arith.mulf %232, %234 : vector<8x8xf32>
    %236 = vector.extract_strided_slice %216 {offsets = [0, 8], sizes = [8, 8], strides = [1, 1]} : vector<8x128xbf16> to vector<8x8xbf16>
    %237 = vector.extract_strided_slice %216 {offsets = [0, 40], sizes = [8, 8], strides = [1, 1]} : vector<8x128xbf16> to vector<8x8xbf16>
    %238 = vector.extract_strided_slice %216 {offsets = [0, 72], sizes = [8, 8], strides = [1, 1]} : vector<8x128xbf16> to vector<8x8xbf16>
    "tpu.trace_start"() <{level = 10 : i32, message = "qd,kd->qk"}> : () -> ()
    %cst_98 = arith.constant dense<0.000000e+00> : vector<8x8xf32>
    %239 = tpu.matmul %236, %237, %cst_98 {dimension_numbers = #tpu.dot_dimension_numbers<[1], [1], [0], [0], [0, 0, 1, 0], [], []>} : vector<8x8xbf16>, vector<8x8xbf16>, vector<8x8xf32> -> vector<8x8xf32>
    "tpu.trace_stop"() : () -> ()
    %cst_99 = arith.constant 0.353553385 : f32
    %240 = vector.broadcast %cst_99 : f32 to vector<8x8xf32>
    %241 = arith.mulf %239, %240 : vector<8x8xf32>
    %242 = arith.addf %241, %5 : vector<8x8xf32>
    %cst_100 = arith.constant dense<0xFF800000> : vector<8xf32>
    %243 = vector.multi_reduction <maximumf>, %242, %cst_100 [1] : vector<8x8xf32> to vector<8xf32>
    %244 = vector.shape_cast %243 : vector<8xf32> to vector<8x1xf32>
    %245 = vector.broadcast %244 : vector<8x1xf32> to vector<8x8xf32>
    %246 = arith.subf %242, %245 : vector<8x8xf32>
    %247 = math.exp %246 : vector<8x8xf32>
    %cst_101 = arith.constant dense<0.000000e+00> : vector<8xf32>
    %248 = vector.multi_reduction <add>, %247, %cst_101 [1] : vector<8x8xf32> to vector<8xf32>
    %249 = vector.shape_cast %248 : vector<8xf32> to vector<8x1xf32>
    %250 = arith.truncf %247 : vector<8x8xf32> to vector<8x8xbf16>
    %cst_102 = arith.constant dense<0.000000e+00> : vector<8x8xf32>
    %251 = tpu.matmul %250, %238, %cst_102 {dimension_numbers = #tpu.dot_dimension_numbers<[1], [0], [0], [1], [0, 0, 1, 1], [], []>} : vector<8x8xbf16>, vector<8x8xbf16>, vector<8x8xf32> -> vector<8x8xf32>
    %252 = tpu.reciprocal %249 {approx = true} : vector<8x1xf32> -> vector<8x1xf32>
    %253 = vector.broadcast %252 : vector<8x1xf32> to vector<8x8xf32>
    %254 = arith.mulf %251, %253 : vector<8x8xf32>
    %255 = vector.extract_strided_slice %216 {offsets = [0, 16], sizes = [8, 8], strides = [1, 1]} : vector<8x128xbf16> to vector<8x8xbf16>
    %256 = vector.extract_strided_slice %216 {offsets = [0, 48], sizes = [8, 8], strides = [1, 1]} : vector<8x128xbf16> to vector<8x8xbf16>
    %257 = vector.extract_strided_slice %216 {offsets = [0, 80], sizes = [8, 8], strides = [1, 1]} : vector<8x128xbf16> to vector<8x8xbf16>
    "tpu.trace_start"() <{level = 10 : i32, message = "qd,kd->qk"}> : () -> ()
    %cst_103 = arith.constant dense<0.000000e+00> : vector<8x8xf32>
    %258 = tpu.matmul %255, %256, %cst_103 {dimension_numbers = #tpu.dot_dimension_numbers<[1], [1], [0], [0], [0, 0, 1, 0], [], []>} : vector<8x8xbf16>, vector<8x8xbf16>, vector<8x8xf32> -> vector<8x8xf32>
    "tpu.trace_stop"() : () -> ()
    %cst_104 = arith.constant 0.353553385 : f32
    %259 = vector.broadcast %cst_104 : f32 to vector<8x8xf32>
    %260 = arith.mulf %258, %259 : vector<8x8xf32>
    %261 = arith.addf %260, %5 : vector<8x8xf32>
    %cst_105 = arith.constant dense<0xFF800000> : vector<8xf32>
    %262 = vector.multi_reduction <maximumf>, %261, %cst_105 [1] : vector<8x8xf32> to vector<8xf32>
    %263 = vector.shape_cast %262 : vector<8xf32> to vector<8x1xf32>
    %264 = vector.broadcast %263 : vector<8x1xf32> to vector<8x8xf32>
    %265 = arith.subf %261, %264 : vector<8x8xf32>
    %266 = math.exp %265 : vector<8x8xf32>
    %cst_106 = arith.constant dense<0.000000e+00> : vector<8xf32>
    %267 = vector.multi_reduction <add>, %266, %cst_106 [1] : vector<8x8xf32> to vector<8xf32>
    %268 = vector.shape_cast %267 : vector<8xf32> to vector<8x1xf32>
    %269 = arith.truncf %266 : vector<8x8xf32> to vector<8x8xbf16>
    %cst_107 = arith.constant dense<0.000000e+00> : vector<8x8xf32>
    %270 = tpu.matmul %269, %257, %cst_107 {dimension_numbers = #tpu.dot_dimension_numbers<[1], [0], [0], [1], [0, 0, 1, 1], [], []>} : vector<8x8xbf16>, vector<8x8xbf16>, vector<8x8xf32> -> vector<8x8xf32>
    %271 = tpu.reciprocal %268 {approx = true} : vector<8x1xf32> -> vector<8x1xf32>
    %272 = vector.broadcast %271 : vector<8x1xf32> to vector<8x8xf32>
    %273 = arith.mulf %270, %272 : vector<8x8xf32>
    %274 = vector.extract_strided_slice %216 {offsets = [0, 24], sizes = [8, 8], strides = [1, 1]} : vector<8x128xbf16> to vector<8x8xbf16>
    %275 = vector.extract_strided_slice %216 {offsets = [0, 56], sizes = [8, 8], strides = [1, 1]} : vector<8x128xbf16> to vector<8x8xbf16>
    %276 = vector.extract_strided_slice %216 {offsets = [0, 88], sizes = [8, 8], strides = [1, 1]} : vector<8x128xbf16> to vector<8x8xbf16>
    "tpu.trace_start"() <{level = 10 : i32, message = "qd,kd->qk"}> : () -> ()
    %cst_108 = arith.constant dense<0.000000e+00> : vector<8x8xf32>
    %277 = tpu.matmul %274, %275, %cst_108 {dimension_numbers = #tpu.dot_dimension_numbers<[1], [1], [0], [0], [0, 0, 1, 0], [], []>} : vector<8x8xbf16>, vector<8x8xbf16>, vector<8x8xf32> -> vector<8x8xf32>
    "tpu.trace_stop"() : () -> ()
    %cst_109 = arith.constant 0.353553385 : f32
    %278 = vector.broadcast %cst_109 : f32 to vector<8x8xf32>
    %279 = arith.mulf %277, %278 : vector<8x8xf32>
    %280 = arith.addf %279, %5 : vector<8x8xf32>
    %cst_110 = arith.constant dense<0xFF800000> : vector<8xf32>
    %281 = vector.multi_reduction <maximumf>, %280, %cst_110 [1] : vector<8x8xf32> to vector<8xf32>
    %282 = vector.shape_cast %281 : vector<8xf32> to vector<8x1xf32>
    %283 = vector.broadcast %282 : vector<8x1xf32> to vector<8x8xf32>
    %284 = arith.subf %280, %283 : vector<8x8xf32>
    %285 = math.exp %284 : vector<8x8xf32>
    %cst_111 = arith.constant dense<0.000000e+00> : vector<8xf32>
    %286 = vector.multi_reduction <add>, %285, %cst_111 [1] : vector<8x8xf32> to vector<8xf32>
    %287 = vector.shape_cast %286 : vector<8xf32> to vector<8x1xf32>
    %288 = arith.truncf %285 : vector<8x8xf32> to vector<8x8xbf16>
    %cst_112 = arith.constant dense<0.000000e+00> : vector<8x8xf32>
    %289 = tpu.matmul %288, %276, %cst_112 {dimension_numbers = #tpu.dot_dimension_numbers<[1], [0], [0], [1], [0, 0, 1, 1], [], []>} : vector<8x8xbf16>, vector<8x8xbf16>, vector<8x8xf32> -> vector<8x8xf32>
    %290 = tpu.reciprocal %287 {approx = true} : vector<8x1xf32> -> vector<8x1xf32>
    %291 = vector.broadcast %290 : vector<8x1xf32> to vector<8x8xf32>
    %292 = arith.mulf %289, %291 : vector<8x8xf32>
    %293 = tpu.concatenate %235, %254, %273, %292 in 1 : vector<8x8xf32>, vector<8x8xf32>, vector<8x8xf32>, vector<8x8xf32> -> vector<8x32xf32>
    %294 = arith.truncf %293 : vector<8x32xf32> to vector<8x32xbf16>
    %c1_113 = arith.constant 1 : index
    %c0_114 = arith.constant 0 : index
    %c0_115 = arith.constant 0 : index
    %295 = vector.load %arg7[%c1_113, %c0_114, %c0_115] : memref<2x32x128xbf16, #tpu.memory_space<vmem>>, vector<1x32x128xbf16>
    %296 = vector.shape_cast %295 : vector<1x32x128xbf16> to vector<32x128xbf16>
    %cst_116 = arith.constant dense<0.000000e+00> : vector<8x128xf32>
    %297 = tpu.matmul %294, %296, %cst_116 {dimension_numbers = #tpu.dot_dimension_numbers<[1], [0], [0], [1], [0, 0, 1, 1], [], []>} : vector<8x32xbf16>, vector<32x128xbf16>, vector<8x128xf32> -> vector<8x128xf32>
    %c1_117 = arith.constant 1 : index
    %c0_118 = arith.constant 0 : index
    %c0_119 = arith.constant 0 : index
    %298 = vector.load %arg8[%c1_117, %c0_118, %c0_119] : memref<2x1x128xf32, #tpu.memory_space<vmem>>, vector<1x1x128xf32>
    %299 = vector.shape_cast %298 : vector<1x1x128xf32> to vector<1x128xf32>
    %300 = vector.broadcast %299 : vector<1x128xf32> to vector<8x128xf32>
    %301 = arith.addf %297, %300 : vector<8x128xf32>
    %302 = arith.addf %207, %301 : vector<8x128xf32>
    %c1_120 = arith.constant 1 : index
    %c0_121 = arith.constant 0 : index
    %c0_122 = arith.constant 0 : index
    %303 = vector.load %arg9[%c1_120, %c0_121, %c0_122] : memref<2x1x128xf32, #tpu.memory_space<vmem>>, vector<1x1x128xf32>
    %304 = vector.shape_cast %303 : vector<1x1x128xf32> to vector<1x128xf32>
    %c1_123 = arith.constant 1 : index
    %c0_124 = arith.constant 0 : index
    %c0_125 = arith.constant 0 : index
    %305 = vector.load %arg10[%c1_123, %c0_124, %c0_125] : memref<2x1x128xf32, #tpu.memory_space<vmem>>, vector<1x1x128xf32>
    %306 = vector.shape_cast %305 : vector<1x1x128xf32> to vector<1x128xf32>
    %cst_126 = arith.constant 0.000000e+00 : f32
    %307 = vector.shape_cast %14 : vector<1x128xi1> to vector<1x128xi1>
    %308 = vector.broadcast %307 : vector<1x128xi1> to vector<8x128xi1>
    %309 = vector.broadcast %cst_126 : f32 to vector<8x128xf32>
    %310 = arith.select %308, %302, %309 : vector<8x128xi1>, vector<8x128xf32>
    %cst_127 = arith.constant dense<0.000000e+00> : vector<8xf32>
    %311 = vector.multi_reduction <add>, %310, %cst_127 [1] : vector<8x128xf32> to vector<8xf32>
    %312 = vector.shape_cast %311 : vector<8xf32> to vector<8x1xf32>
    %cst_128 = arith.constant 3.125000e-02 : f32
    %313 = vector.broadcast %cst_128 : f32 to vector<8x1xf32>
    %314 = arith.mulf %312, %313 : vector<8x1xf32>
    %315 = vector.broadcast %314 : vector<8x1xf32> to vector<8x128xf32>
    %316 = arith.subf %302, %315 : vector<8x128xf32>
    %cst_129 = arith.constant 0.000000e+00 : f32
    %317 = vector.shape_cast %14 : vector<1x128xi1> to vector<1x128xi1>
    %318 = vector.broadcast %317 : vector<1x128xi1> to vector<8x128xi1>
    %319 = vector.broadcast %cst_129 : f32 to vector<8x128xf32>
    %320 = arith.select %318, %316, %319 : vector<8x128xi1>, vector<8x128xf32>
    %321 = arith.mulf %320, %320 : vector<8x128xf32>
    %cst_130 = arith.constant dense<0.000000e+00> : vector<8xf32>
    %322 = vector.multi_reduction <add>, %321, %cst_130 [1] : vector<8x128xf32> to vector<8xf32>
    %323 = vector.shape_cast %322 : vector<8xf32> to vector<8x1xf32>
    %cst_131 = arith.constant 3.125000e-02 : f32
    %324 = vector.broadcast %cst_131 : f32 to vector<8x1xf32>
    %325 = arith.mulf %323, %324 : vector<8x1xf32>
    %cst_132 = arith.constant 9.99999974E-6 : f32
    %326 = vector.broadcast %cst_132 : f32 to vector<8x1xf32>
    %327 = arith.addf %325, %326 : vector<8x1xf32>
    %328 = math.rsqrt %327 : vector<8x1xf32>
    %329 = vector.broadcast %328 : vector<8x1xf32> to vector<8x128xf32>
    %330 = arith.mulf %316, %329 : vector<8x128xf32>
    %331 = vector.broadcast %304 : vector<1x128xf32> to vector<8x128xf32>
    %332 = arith.mulf %330, %331 : vector<8x128xf32>
    %333 = vector.broadcast %306 : vector<1x128xf32> to vector<8x128xf32>
    %334 = arith.addf %332, %333 : vector<8x128xf32>
    %335 = arith.truncf %334 : vector<8x128xf32> to vector<8x128xbf16>
    %c1_133 = arith.constant 1 : index
    %c0_134 = arith.constant 0 : index
    %c0_135 = arith.constant 0 : index
    %336 = vector.load %arg11[%c1_133, %c0_134, %c0_135] : memref<2x128x128xbf16, #tpu.memory_space<vmem>>, vector<1x128x128xbf16>
    %337 = vector.shape_cast %336 : vector<1x128x128xbf16> to vector<128x128xbf16>
    %cst_136 = arith.constant dense<0.000000e+00> : vector<8x128xf32>
    %338 = tpu.matmul %335, %337, %cst_136 {dimension_numbers = #tpu.dot_dimension_numbers<[1], [0], [0], [1], [0, 0, 1, 1], [], []>} : vector<8x128xbf16>, vector<128x128xbf16>, vector<8x128xf32> -> vector<8x128xf32>
    %c1_137 = arith.constant 1 : index
    %c0_138 = arith.constant 0 : index
    %c0_139 = arith.constant 0 : index
    %339 = vector.load %arg12[%c1_137, %c0_138, %c0_139] : memref<2x1x128xf32, #tpu.memory_space<vmem>>, vector<1x1x128xf32>
    %340 = vector.shape_cast %339 : vector<1x1x128xf32> to vector<1x128xf32>
    %341 = vector.broadcast %340 : vector<1x128xf32> to vector<8x128xf32>
    %342 = arith.addf %338, %341 : vector<8x128xf32>
    %cst_140 = arith.constant 0.000000e+00 : f32
    %343 = vector.broadcast %cst_140 : f32 to vector<8x128xf32>
    %344 = arith.maximumf %342, %343 : vector<8x128xf32>
    %345 = arith.truncf %344 : vector<8x128xf32> to vector<8x128xbf16>
    %c1_141 = arith.constant 1 : index
    %c0_142 = arith.constant 0 : index
    %c0_143 = arith.constant 0 : index
    %346 = vector.load %arg13[%c1_141, %c0_142, %c0_143] : memref<2x128x128xbf16, #tpu.memory_space<vmem>>, vector<1x128x128xbf16>
    %347 = vector.shape_cast %346 : vector<1x128x128xbf16> to vector<128x128xbf16>
    %cst_144 = arith.constant dense<0.000000e+00> : vector<8x128xf32>
    %348 = tpu.matmul %345, %347, %cst_144 {dimension_numbers = #tpu.dot_dimension_numbers<[1], [0], [0], [1], [0, 0, 1, 1], [], []>} : vector<8x128xbf16>, vector<128x128xbf16>, vector<8x128xf32> -> vector<8x128xf32>
    %c1_145 = arith.constant 1 : index
    %c0_146 = arith.constant 0 : index
    %c0_147 = arith.constant 0 : index
    %349 = vector.load %arg14[%c1_145, %c0_146, %c0_147] : memref<2x1x128xf32, #tpu.memory_space<vmem>>, vector<1x1x128xf32>
    %350 = vector.shape_cast %349 : vector<1x1x128xf32> to vector<1x128xf32>
    %351 = vector.broadcast %350 : vector<1x128xf32> to vector<8x128xf32>
    %352 = arith.addf %348, %351 : vector<8x128xf32>
    %353 = arith.addf %334, %352 : vector<8x128xf32>
    %c1_148 = arith.constant 1 : index
    %c0_149 = arith.constant 0 : index
    %c0_150 = arith.constant 0 : index
    %354 = vector.load %arg15[%c1_148, %c0_149, %c0_150] : memref<2x1x128xf32, #tpu.memory_space<vmem>>, vector<1x1x128xf32>
    %355 = vector.shape_cast %354 : vector<1x1x128xf32> to vector<1x128xf32>
    %c1_151 = arith.constant 1 : index
    %c0_152 = arith.constant 0 : index
    %c0_153 = arith.constant 0 : index
    %356 = vector.load %arg16[%c1_151, %c0_152, %c0_153] : memref<2x1x128xf32, #tpu.memory_space<vmem>>, vector<1x1x128xf32>
    %357 = vector.shape_cast %356 : vector<1x1x128xf32> to vector<1x128xf32>
    %cst_154 = arith.constant 0.000000e+00 : f32
    %358 = vector.shape_cast %14 : vector<1x128xi1> to vector<1x128xi1>
    %359 = vector.broadcast %358 : vector<1x128xi1> to vector<8x128xi1>
    %360 = vector.broadcast %cst_154 : f32 to vector<8x128xf32>
    %361 = arith.select %359, %353, %360 : vector<8x128xi1>, vector<8x128xf32>
    %cst_155 = arith.constant dense<0.000000e+00> : vector<8xf32>
    %362 = vector.multi_reduction <add>, %361, %cst_155 [1] : vector<8x128xf32> to vector<8xf32>
    %363 = vector.shape_cast %362 : vector<8xf32> to vector<8x1xf32>
    %cst_156 = arith.constant 3.125000e-02 : f32
    %364 = vector.broadcast %cst_156 : f32 to vector<8x1xf32>
    %365 = arith.mulf %363, %364 : vector<8x1xf32>
    %366 = vector.broadcast %365 : vector<8x1xf32> to vector<8x128xf32>
    %367 = arith.subf %353, %366 : vector<8x128xf32>
    %cst_157 = arith.constant 0.000000e+00 : f32
    %368 = vector.shape_cast %14 : vector<1x128xi1> to vector<1x128xi1>
    %369 = vector.broadcast %368 : vector<1x128xi1> to vector<8x128xi1>
    %370 = vector.broadcast %cst_157 : f32 to vector<8x128xf32>
    %371 = arith.select %369, %367, %370 : vector<8x128xi1>, vector<8x128xf32>
    %372 = arith.mulf %371, %371 : vector<8x128xf32>
    %cst_158 = arith.constant dense<0.000000e+00> : vector<8xf32>
    %373 = vector.multi_reduction <add>, %372, %cst_158 [1] : vector<8x128xf32> to vector<8xf32>
    %374 = vector.shape_cast %373 : vector<8xf32> to vector<8x1xf32>
    %cst_159 = arith.constant 3.125000e-02 : f32
    %375 = vector.broadcast %cst_159 : f32 to vector<8x1xf32>
    %376 = arith.mulf %374, %375 : vector<8x1xf32>
    %cst_160 = arith.constant 9.99999974E-6 : f32
    %377 = vector.broadcast %cst_160 : f32 to vector<8x1xf32>
    %378 = arith.addf %376, %377 : vector<8x1xf32>
    %379 = math.rsqrt %378 : vector<8x1xf32>
    %380 = vector.broadcast %379 : vector<8x1xf32> to vector<8x128xf32>
    %381 = arith.mulf %367, %380 : vector<8x128xf32>
    %382 = vector.broadcast %355 : vector<1x128xf32> to vector<8x128xf32>
    %383 = arith.mulf %381, %382 : vector<8x128xf32>
    %384 = vector.broadcast %357 : vector<1x128xf32> to vector<8x128xf32>
    %385 = arith.addf %383, %384 : vector<8x128xf32>
    %c0_161 = arith.constant 0 : index
    %c0_162 = arith.constant 0 : index
    %386 = vector.load %arg17[%c0_161, %c0_162] : memref<1x128xf32, #tpu.memory_space<vmem>>, vector<1x128xf32>
    %c0_163 = arith.constant 0 : index
    %c0_164 = arith.constant 0 : index
    %387 = vector.load %arg18[%c0_163, %c0_164] : memref<1x128xf32, #tpu.memory_space<vmem>>, vector<1x128xf32>
    %cst_165 = arith.constant 0.000000e+00 : f32
    %388 = vector.shape_cast %14 : vector<1x128xi1> to vector<1x128xi1>
    %389 = vector.broadcast %388 : vector<1x128xi1> to vector<8x128xi1>
    %390 = vector.broadcast %cst_165 : f32 to vector<8x128xf32>
    %391 = arith.select %389, %385, %390 : vector<8x128xi1>, vector<8x128xf32>
    %cst_166 = arith.constant dense<0.000000e+00> : vector<8xf32>
    %392 = vector.multi_reduction <add>, %391, %cst_166 [1] : vector<8x128xf32> to vector<8xf32>
    %393 = vector.shape_cast %392 : vector<8xf32> to vector<8x1xf32>
    %cst_167 = arith.constant 3.125000e-02 : f32
    %394 = vector.broadcast %cst_167 : f32 to vector<8x1xf32>
    %395 = arith.mulf %393, %394 : vector<8x1xf32>
    %396 = vector.broadcast %395 : vector<8x1xf32> to vector<8x128xf32>
    %397 = arith.subf %385, %396 : vector<8x128xf32>
    %cst_168 = arith.constant 0.000000e+00 : f32
    %398 = vector.shape_cast %14 : vector<1x128xi1> to vector<1x128xi1>
    %399 = vector.broadcast %398 : vector<1x128xi1> to vector<8x128xi1>
    %400 = vector.broadcast %cst_168 : f32 to vector<8x128xf32>
    %401 = arith.select %399, %397, %400 : vector<8x128xi1>, vector<8x128xf32>
    %402 = arith.mulf %401, %401 : vector<8x128xf32>
    %cst_169 = arith.constant dense<0.000000e+00> : vector<8xf32>
    %403 = vector.multi_reduction <add>, %402, %cst_169 [1] : vector<8x128xf32> to vector<8xf32>
    %404 = vector.shape_cast %403 : vector<8xf32> to vector<8x1xf32>
    %cst_170 = arith.constant 3.125000e-02 : f32
    %405 = vector.broadcast %cst_170 : f32 to vector<8x1xf32>
    %406 = arith.mulf %404, %405 : vector<8x1xf32>
    %cst_171 = arith.constant 9.99999974E-6 : f32
    %407 = vector.broadcast %cst_171 : f32 to vector<8x1xf32>
    %408 = arith.addf %406, %407 : vector<8x1xf32>
    %409 = math.rsqrt %408 : vector<8x1xf32>
    %410 = vector.broadcast %409 : vector<8x1xf32> to vector<8x128xf32>
    %411 = arith.mulf %397, %410 : vector<8x128xf32>
    %412 = vector.broadcast %386 : vector<1x128xf32> to vector<8x128xf32>
    %413 = arith.mulf %411, %412 : vector<8x128xf32>
    %414 = vector.broadcast %387 : vector<1x128xf32> to vector<8x128xf32>
    %415 = arith.addf %413, %414 : vector<8x128xf32>
    %416 = arith.truncf %415 : vector<8x128xf32> to vector<8x128xbf16>
    %c0_172 = arith.constant 0 : index
    %c0_173 = arith.constant 0 : index
    %c0_174 = arith.constant 0 : index
    %417 = vector.load %arg2[%c0_172, %c0_173, %c0_174] : memref<1x8x1xi32, #tpu.memory_space<vmem>>, vector<1x8x1xi32>
    %418 = vector.shape_cast %417 : vector<1x8x1xi32> to vector<8x1xi32>
    %419 = tpu.iota {dimensions = array<i32: 1>} : vector<8x56xi32>
    %420 = vector.broadcast %418 : vector<8x1xi32> to vector<8x56xi32>
    %421 = arith.cmpi eq, %420, %419 : vector<8x56xi32>
    %422 = arith.extui %421 : vector<8x56xi1> to vector<8x56xi32>
    %423 = arith.sitofp %422 : vector<8x56xi32> to vector<8x56xf32>
    %cst_175 = arith.constant dense<0.000000e+00> : vector<8x128xf32>
    %424 = tpu.matmul %423, %15, %cst_175 {dimension_numbers = #tpu.dot_dimension_numbers<[1], [0], [0], [1], [0, 0, 1, 1], [], []>} : vector<8x56xf32>, vector<56x128xf32>, vector<8x128xf32> -> vector<8x128xf32>
    %cst_176 = arith.constant 5.65685415 : f32
    %425 = vector.broadcast %cst_176 : f32 to vector<8x128xf32>
    %426 = arith.mulf %424, %425 : vector<8x128xf32>
    %427 = vector.broadcast %17 : vector<1x128xf32> to vector<8x128xf32>
    %428 = arith.addf %426, %427 : vector<8x128xf32>
    %429 = arith.truncf %428 : vector<8x128xf32> to vector<8x128xbf16>
    %c0_177 = arith.constant 0 : index
    %c0_178 = arith.constant 0 : index
    %c0_179 = arith.constant 0 : index
    %430 = vector.load %arg19[%c0_177, %c0_178, %c0_179] : memref<2x128x128xbf16, #tpu.memory_space<vmem>>, vector<1x128x128xbf16>
    %431 = vector.shape_cast %430 : vector<1x128x128xbf16> to vector<128x128xbf16>
    %cst_180 = arith.constant dense<0.000000e+00> : vector<8x128xf32>
    %432 = tpu.matmul %429, %431, %cst_180 {dimension_numbers = #tpu.dot_dimension_numbers<[1], [0], [0], [1], [0, 0, 1, 1], [], []>} : vector<8x128xbf16>, vector<128x128xbf16>, vector<8x128xf32> -> vector<8x128xf32>
    %c0_181 = arith.constant 0 : index
    %c0_182 = arith.constant 0 : index
    %c0_183 = arith.constant 0 : index
    %433 = vector.load %arg20[%c0_181, %c0_182, %c0_183] : memref<2x1x128xf32, #tpu.memory_space<vmem>>, vector<1x1x128xf32>
    %434 = vector.shape_cast %433 : vector<1x1x128xf32> to vector<1x128xf32>
    %435 = vector.broadcast %434 : vector<1x128xf32> to vector<8x128xf32>
    %436 = arith.addf %432, %435 : vector<8x128xf32>
    %437 = arith.truncf %436 : vector<8x128xf32> to vector<8x128xbf16>
    %438 = vector.extract_strided_slice %437 {offsets = [0, 0], sizes = [8, 8], strides = [1, 1]} : vector<8x128xbf16> to vector<8x8xbf16>
    %439 = vector.extract_strided_slice %437 {offsets = [0, 32], sizes = [8, 8], strides = [1, 1]} : vector<8x128xbf16> to vector<8x8xbf16>
    %440 = vector.extract_strided_slice %437 {offsets = [0, 64], sizes = [8, 8], strides = [1, 1]} : vector<8x128xbf16> to vector<8x8xbf16>
    "tpu.trace_start"() <{level = 10 : i32, message = "qd,kd->qk"}> : () -> ()
    %cst_184 = arith.constant dense<0.000000e+00> : vector<8x8xf32>
    %441 = tpu.matmul %438, %439, %cst_184 {dimension_numbers = #tpu.dot_dimension_numbers<[1], [1], [0], [0], [0, 0, 1, 0], [], []>} : vector<8x8xbf16>, vector<8x8xbf16>, vector<8x8xf32> -> vector<8x8xf32>
    "tpu.trace_stop"() : () -> ()
    %cst_185 = arith.constant 0.353553385 : f32
    %442 = vector.broadcast %cst_185 : f32 to vector<8x8xf32>
    %443 = arith.mulf %441, %442 : vector<8x8xf32>
    %444 = arith.addf %443, %11 : vector<8x8xf32>
    %cst_186 = arith.constant dense<0xFF800000> : vector<8xf32>
    %445 = vector.multi_reduction <maximumf>, %444, %cst_186 [1] : vector<8x8xf32> to vector<8xf32>
    %446 = vector.shape_cast %445 : vector<8xf32> to vector<8x1xf32>
    %447 = vector.broadcast %446 : vector<8x1xf32> to vector<8x8xf32>
    %448 = arith.subf %444, %447 : vector<8x8xf32>
    %449 = math.exp %448 : vector<8x8xf32>
    %cst_187 = arith.constant dense<0.000000e+00> : vector<8xf32>
    %450 = vector.multi_reduction <add>, %449, %cst_187 [1] : vector<8x8xf32> to vector<8xf32>
    %451 = vector.shape_cast %450 : vector<8xf32> to vector<8x1xf32>
    %452 = arith.truncf %449 : vector<8x8xf32> to vector<8x8xbf16>
    %cst_188 = arith.constant dense<0.000000e+00> : vector<8x8xf32>
    %453 = tpu.matmul %452, %440, %cst_188 {dimension_numbers = #tpu.dot_dimension_numbers<[1], [0], [0], [1], [0, 0, 1, 1], [], []>} : vector<8x8xbf16>, vector<8x8xbf16>, vector<8x8xf32> -> vector<8x8xf32>
    %454 = tpu.reciprocal %451 {approx = true} : vector<8x1xf32> -> vector<8x1xf32>
    %455 = vector.broadcast %454 : vector<8x1xf32> to vector<8x8xf32>
    %456 = arith.mulf %453, %455 : vector<8x8xf32>
    %457 = vector.extract_strided_slice %437 {offsets = [0, 8], sizes = [8, 8], strides = [1, 1]} : vector<8x128xbf16> to vector<8x8xbf16>
    %458 = vector.extract_strided_slice %437 {offsets = [0, 40], sizes = [8, 8], strides = [1, 1]} : vector<8x128xbf16> to vector<8x8xbf16>
    %459 = vector.extract_strided_slice %437 {offsets = [0, 72], sizes = [8, 8], strides = [1, 1]} : vector<8x128xbf16> to vector<8x8xbf16>
    "tpu.trace_start"() <{level = 10 : i32, message = "qd,kd->qk"}> : () -> ()
    %cst_189 = arith.constant dense<0.000000e+00> : vector<8x8xf32>
    %460 = tpu.matmul %457, %458, %cst_189 {dimension_numbers = #tpu.dot_dimension_numbers<[1], [1], [0], [0], [0, 0, 1, 0], [], []>} : vector<8x8xbf16>, vector<8x8xbf16>, vector<8x8xf32> -> vector<8x8xf32>
    "tpu.trace_stop"() : () -> ()
    %cst_190 = arith.constant 0.353553385 : f32
    %461 = vector.broadcast %cst_190 : f32 to vector<8x8xf32>
    %462 = arith.mulf %460, %461 : vector<8x8xf32>
    %463 = arith.addf %462, %11 : vector<8x8xf32>
    %cst_191 = arith.constant dense<0xFF800000> : vector<8xf32>
    %464 = vector.multi_reduction <maximumf>, %463, %cst_191 [1] : vector<8x8xf32> to vector<8xf32>
    %465 = vector.shape_cast %464 : vector<8xf32> to vector<8x1xf32>
    %466 = vector.broadcast %465 : vector<8x1xf32> to vector<8x8xf32>
    %467 = arith.subf %463, %466 : vector<8x8xf32>
    %468 = math.exp %467 : vector<8x8xf32>
    %cst_192 = arith.constant dense<0.000000e+00> : vector<8xf32>
    %469 = vector.multi_reduction <add>, %468, %cst_192 [1] : vector<8x8xf32> to vector<8xf32>
    %470 = vector.shape_cast %469 : vector<8xf32> to vector<8x1xf32>
    %471 = arith.truncf %468 : vector<8x8xf32> to vector<8x8xbf16>
    %cst_193 = arith.constant dense<0.000000e+00> : vector<8x8xf32>
    %472 = tpu.matmul %471, %459, %cst_193 {dimension_numbers = #tpu.dot_dimension_numbers<[1], [0], [0], [1], [0, 0, 1, 1], [], []>} : vector<8x8xbf16>, vector<8x8xbf16>, vector<8x8xf32> -> vector<8x8xf32>
    %473 = tpu.reciprocal %470 {approx = true} : vector<8x1xf32> -> vector<8x1xf32>
    %474 = vector.broadcast %473 : vector<8x1xf32> to vector<8x8xf32>
    %475 = arith.mulf %472, %474 : vector<8x8xf32>
    %476 = vector.extract_strided_slice %437 {offsets = [0, 16], sizes = [8, 8], strides = [1, 1]} : vector<8x128xbf16> to vector<8x8xbf16>
    %477 = vector.extract_strided_slice %437 {offsets = [0, 48], sizes = [8, 8], strides = [1, 1]} : vector<8x128xbf16> to vector<8x8xbf16>
    %478 = vector.extract_strided_slice %437 {offsets = [0, 80], sizes = [8, 8], strides = [1, 1]} : vector<8x128xbf16> to vector<8x8xbf16>
    "tpu.trace_start"() <{level = 10 : i32, message = "qd,kd->qk"}> : () -> ()
    %cst_194 = arith.constant dense<0.000000e+00> : vector<8x8xf32>
    %479 = tpu.matmul %476, %477, %cst_194 {dimension_numbers = #tpu.dot_dimension_numbers<[1], [1], [0], [0], [0, 0, 1, 0], [], []>} : vector<8x8xbf16>, vector<8x8xbf16>, vector<8x8xf32> -> vector<8x8xf32>
    "tpu.trace_stop"() : () -> ()
    %cst_195 = arith.constant 0.353553385 : f32
    %480 = vector.broadcast %cst_195 : f32 to vector<8x8xf32>
    %481 = arith.mulf %479, %480 : vector<8x8xf32>
    %482 = arith.addf %481, %11 : vector<8x8xf32>
    %cst_196 = arith.constant dense<0xFF800000> : vector<8xf32>
    %483 = vector.multi_reduction <maximumf>, %482, %cst_196 [1] : vector<8x8xf32> to vector<8xf32>
    %484 = vector.shape_cast %483 : vector<8xf32> to vector<8x1xf32>
    %485 = vector.broadcast %484 : vector<8x1xf32> to vector<8x8xf32>
    %486 = arith.subf %482, %485 : vector<8x8xf32>
    %487 = math.exp %486 : vector<8x8xf32>
    %cst_197 = arith.constant dense<0.000000e+00> : vector<8xf32>
    %488 = vector.multi_reduction <add>, %487, %cst_197 [1] : vector<8x8xf32> to vector<8xf32>
    %489 = vector.shape_cast %488 : vector<8xf32> to vector<8x1xf32>
    %490 = arith.truncf %487 : vector<8x8xf32> to vector<8x8xbf16>
    %cst_198 = arith.constant dense<0.000000e+00> : vector<8x8xf32>
    %491 = tpu.matmul %490, %478, %cst_198 {dimension_numbers = #tpu.dot_dimension_numbers<[1], [0], [0], [1], [0, 0, 1, 1], [], []>} : vector<8x8xbf16>, vector<8x8xbf16>, vector<8x8xf32> -> vector<8x8xf32>
    %492 = tpu.reciprocal %489 {approx = true} : vector<8x1xf32> -> vector<8x1xf32>
    %493 = vector.broadcast %492 : vector<8x1xf32> to vector<8x8xf32>
    %494 = arith.mulf %491, %493 : vector<8x8xf32>
    %495 = vector.extract_strided_slice %437 {offsets = [0, 24], sizes = [8, 8], strides = [1, 1]} : vector<8x128xbf16> to vector<8x8xbf16>
    %496 = vector.extract_strided_slice %437 {offsets = [0, 56], sizes = [8, 8], strides = [1, 1]} : vector<8x128xbf16> to vector<8x8xbf16>
    %497 = vector.extract_strided_slice %437 {offsets = [0, 88], sizes = [8, 8], strides = [1, 1]} : vector<8x128xbf16> to vector<8x8xbf16>
    "tpu.trace_start"() <{level = 10 : i32, message = "qd,kd->qk"}> : () -> ()
    %cst_199 = arith.constant dense<0.000000e+00> : vector<8x8xf32>
    %498 = tpu.matmul %495, %496, %cst_199 {dimension_numbers = #tpu.dot_dimension_numbers<[1], [1], [0], [0], [0, 0, 1, 0], [], []>} : vector<8x8xbf16>, vector<8x8xbf16>, vector<8x8xf32> -> vector<8x8xf32>
    "tpu.trace_stop"() : () -> ()
    %cst_200 = arith.constant 0.353553385 : f32
    %499 = vector.broadcast %cst_200 : f32 to vector<8x8xf32>
    %500 = arith.mulf %498, %499 : vector<8x8xf32>
    %501 = arith.addf %500, %11 : vector<8x8xf32>
    %cst_201 = arith.constant dense<0xFF800000> : vector<8xf32>
    %502 = vector.multi_reduction <maximumf>, %501, %cst_201 [1] : vector<8x8xf32> to vector<8xf32>
    %503 = vector.shape_cast %502 : vector<8xf32> to vector<8x1xf32>
    %504 = vector.broadcast %503 : vector<8x1xf32> to vector<8x8xf32>
    %505 = arith.subf %501, %504 : vector<8x8xf32>
    %506 = math.exp %505 : vector<8x8xf32>
    %cst_202 = arith.constant dense<0.000000e+00> : vector<8xf32>
    %507 = vector.multi_reduction <add>, %506, %cst_202 [1] : vector<8x8xf32> to vector<8xf32>
    %508 = vector.shape_cast %507 : vector<8xf32> to vector<8x1xf32>
    %509 = arith.truncf %506 : vector<8x8xf32> to vector<8x8xbf16>
    %cst_203 = arith.constant dense<0.000000e+00> : vector<8x8xf32>
    %510 = tpu.matmul %509, %497, %cst_203 {dimension_numbers = #tpu.dot_dimension_numbers<[1], [0], [0], [1], [0, 0, 1, 1], [], []>} : vector<8x8xbf16>, vector<8x8xbf16>, vector<8x8xf32> -> vector<8x8xf32>
    %511 = tpu.reciprocal %508 {approx = true} : vector<8x1xf32> -> vector<8x1xf32>
    %512 = vector.broadcast %511 : vector<8x1xf32> to vector<8x8xf32>
    %513 = arith.mulf %510, %512 : vector<8x8xf32>
    %514 = tpu.concatenate %456, %475, %494, %513 in 1 : vector<8x8xf32>, vector<8x8xf32>, vector<8x8xf32>, vector<8x8xf32> -> vector<8x32xf32>
    %515 = arith.truncf %514 : vector<8x32xf32> to vector<8x32xbf16>
    %c0_204 = arith.constant 0 : index
    %c0_205 = arith.constant 0 : index
    %c0_206 = arith.constant 0 : index
    %516 = vector.load %arg21[%c0_204, %c0_205, %c0_206] : memref<2x32x128xbf16, #tpu.memory_space<vmem>>, vector<1x32x128xbf16>
    %517 = vector.shape_cast %516 : vector<1x32x128xbf16> to vector<32x128xbf16>
    %cst_207 = arith.constant dense<0.000000e+00> : vector<8x128xf32>
    %518 = tpu.matmul %515, %517, %cst_207 {dimension_numbers = #tpu.dot_dimension_numbers<[1], [0], [0], [1], [0, 0, 1, 1], [], []>} : vector<8x32xbf16>, vector<32x128xbf16>, vector<8x128xf32> -> vector<8x128xf32>
    %c0_208 = arith.constant 0 : index
    %c0_209 = arith.constant 0 : index
    %c0_210 = arith.constant 0 : index
    %519 = vector.load %arg22[%c0_208, %c0_209, %c0_210] : memref<2x1x128xf32, #tpu.memory_space<vmem>>, vector<1x1x128xf32>
    %520 = vector.shape_cast %519 : vector<1x1x128xf32> to vector<1x128xf32>
    %521 = vector.broadcast %520 : vector<1x128xf32> to vector<8x128xf32>
    %522 = arith.addf %518, %521 : vector<8x128xf32>
    %523 = arith.addf %428, %522 : vector<8x128xf32>
    %c0_211 = arith.constant 0 : index
    %c0_212 = arith.constant 0 : index
    %c0_213 = arith.constant 0 : index
    %524 = vector.load %arg29[%c0_211, %c0_212, %c0_213] : memref<2x1x128xf32, #tpu.memory_space<vmem>>, vector<1x1x128xf32>
    %525 = vector.shape_cast %524 : vector<1x1x128xf32> to vector<1x128xf32>
    %c0_214 = arith.constant 0 : index
    %c0_215 = arith.constant 0 : index
    %c0_216 = arith.constant 0 : index
    %526 = vector.load %arg30[%c0_214, %c0_215, %c0_216] : memref<2x1x128xf32, #tpu.memory_space<vmem>>, vector<1x1x128xf32>
    %527 = vector.shape_cast %526 : vector<1x1x128xf32> to vector<1x128xf32>
    %cst_217 = arith.constant 0.000000e+00 : f32
    %528 = vector.shape_cast %14 : vector<1x128xi1> to vector<1x128xi1>
    %529 = vector.broadcast %528 : vector<1x128xi1> to vector<8x128xi1>
    %530 = vector.broadcast %cst_217 : f32 to vector<8x128xf32>
    %531 = arith.select %529, %523, %530 : vector<8x128xi1>, vector<8x128xf32>
    %cst_218 = arith.constant dense<0.000000e+00> : vector<8xf32>
    %532 = vector.multi_reduction <add>, %531, %cst_218 [1] : vector<8x128xf32> to vector<8xf32>
    %533 = vector.shape_cast %532 : vector<8xf32> to vector<8x1xf32>
    %cst_219 = arith.constant 3.125000e-02 : f32
    %534 = vector.broadcast %cst_219 : f32 to vector<8x1xf32>
    %535 = arith.mulf %533, %534 : vector<8x1xf32>
    %536 = vector.broadcast %535 : vector<8x1xf32> to vector<8x128xf32>
    %537 = arith.subf %523, %536 : vector<8x128xf32>
    %cst_220 = arith.constant 0.000000e+00 : f32
    %538 = vector.shape_cast %14 : vector<1x128xi1> to vector<1x128xi1>
    %539 = vector.broadcast %538 : vector<1x128xi1> to vector<8x128xi1>
    %540 = vector.broadcast %cst_220 : f32 to vector<8x128xf32>
    %541 = arith.select %539, %537, %540 : vector<8x128xi1>, vector<8x128xf32>
    %542 = arith.mulf %541, %541 : vector<8x128xf32>
    %cst_221 = arith.constant dense<0.000000e+00> : vector<8xf32>
    %543 = vector.multi_reduction <add>, %542, %cst_221 [1] : vector<8x128xf32> to vector<8xf32>
    %544 = vector.shape_cast %543 : vector<8xf32> to vector<8x1xf32>
    %cst_222 = arith.constant 3.125000e-02 : f32
    %545 = vector.broadcast %cst_222 : f32 to vector<8x1xf32>
    %546 = arith.mulf %544, %545 : vector<8x1xf32>
    %cst_223 = arith.constant 9.99999974E-6 : f32
    %547 = vector.broadcast %cst_223 : f32 to vector<8x1xf32>
    %548 = arith.addf %546, %547 : vector<8x1xf32>
    %549 = math.rsqrt %548 : vector<8x1xf32>
    %550 = vector.broadcast %549 : vector<8x1xf32> to vector<8x128xf32>
    %551 = arith.mulf %537, %550 : vector<8x128xf32>
    %552 = vector.broadcast %525 : vector<1x128xf32> to vector<8x128xf32>
    %553 = arith.mulf %551, %552 : vector<8x128xf32>
    %554 = vector.broadcast %527 : vector<1x128xf32> to vector<8x128xf32>
    %555 = arith.addf %553, %554 : vector<8x128xf32>
    %556 = arith.truncf %555 : vector<8x128xf32> to vector<8x128xbf16>
    %c0_224 = arith.constant 0 : index
    %c0_225 = arith.constant 0 : index
    %c0_226 = arith.constant 0 : index
    %557 = vector.load %arg23[%c0_224, %c0_225, %c0_226] : memref<2x128x128xbf16, #tpu.memory_space<vmem>>, vector<1x128x128xbf16>
    %558 = vector.shape_cast %557 : vector<1x128x128xbf16> to vector<128x128xbf16>
    %cst_227 = arith.constant dense<0.000000e+00> : vector<8x128xf32>
    %559 = tpu.matmul %556, %558, %cst_227 {dimension_numbers = #tpu.dot_dimension_numbers<[1], [0], [0], [1], [0, 0, 1, 1], [], []>} : vector<8x128xbf16>, vector<128x128xbf16>, vector<8x128xf32> -> vector<8x128xf32>
    %c0_228 = arith.constant 0 : index
    %c0_229 = arith.constant 0 : index
    %c0_230 = arith.constant 0 : index
    %560 = vector.load %arg24[%c0_228, %c0_229, %c0_230] : memref<2x1x128xf32, #tpu.memory_space<vmem>>, vector<1x1x128xf32>
    %561 = vector.shape_cast %560 : vector<1x1x128xf32> to vector<1x128xf32>
    %562 = vector.broadcast %561 : vector<1x128xf32> to vector<8x128xf32>
    %563 = arith.addf %559, %562 : vector<8x128xf32>
    %564 = arith.truncf %563 : vector<8x128xf32> to vector<8x128xbf16>
    %c0_231 = arith.constant 0 : index
    %c0_232 = arith.constant 0 : index
    %c0_233 = arith.constant 0 : index
    %565 = vector.load %arg25[%c0_231, %c0_232, %c0_233] : memref<2x128x128xbf16, #tpu.memory_space<vmem>>, vector<1x128x128xbf16>
    %566 = vector.shape_cast %565 : vector<1x128x128xbf16> to vector<128x128xbf16>
    %cst_234 = arith.constant dense<0.000000e+00> : vector<8x128xf32>
    %567 = tpu.matmul %416, %566, %cst_234 {dimension_numbers = #tpu.dot_dimension_numbers<[1], [0], [0], [1], [0, 0, 1, 1], [], []>} : vector<8x128xbf16>, vector<128x128xbf16>, vector<8x128xf32> -> vector<8x128xf32>
    %c0_235 = arith.constant 0 : index
    %c0_236 = arith.constant 0 : index
    %c0_237 = arith.constant 0 : index
    %568 = vector.load %arg26[%c0_235, %c0_236, %c0_237] : memref<2x1x128xf32, #tpu.memory_space<vmem>>, vector<1x1x128xf32>
    %569 = vector.shape_cast %568 : vector<1x1x128xf32> to vector<1x128xf32>
    %570 = vector.broadcast %569 : vector<1x128xf32> to vector<8x128xf32>
    %571 = arith.addf %567, %570 : vector<8x128xf32>
    %572 = arith.truncf %571 : vector<8x128xf32> to vector<8x128xbf16>
    %573 = vector.extract_strided_slice %564 {offsets = [0, 0], sizes = [8, 8], strides = [1, 1]} : vector<8x128xbf16> to vector<8x8xbf16>
    %574 = vector.extract_strided_slice %572 {offsets = [0, 0], sizes = [8, 8], strides = [1, 1]} : vector<8x128xbf16> to vector<8x8xbf16>
    %575 = vector.extract_strided_slice %572 {offsets = [0, 32], sizes = [8, 8], strides = [1, 1]} : vector<8x128xbf16> to vector<8x8xbf16>
    "tpu.trace_start"() <{level = 10 : i32, message = "qd,kd->qk"}> : () -> ()
    %cst_238 = arith.constant dense<0.000000e+00> : vector<8x8xf32>
    %576 = tpu.matmul %573, %574, %cst_238 {dimension_numbers = #tpu.dot_dimension_numbers<[1], [1], [0], [0], [0, 0, 1, 0], [], []>} : vector<8x8xbf16>, vector<8x8xbf16>, vector<8x8xf32> -> vector<8x8xf32>
    "tpu.trace_stop"() : () -> ()
    %cst_239 = arith.constant 0.353553385 : f32
    %577 = vector.broadcast %cst_239 : f32 to vector<8x8xf32>
    %578 = arith.mulf %576, %577 : vector<8x8xf32>
    %cst_240 = arith.constant dense<0xFF800000> : vector<8xf32>
    %579 = vector.multi_reduction <maximumf>, %578, %cst_240 [1] : vector<8x8xf32> to vector<8xf32>
    %580 = vector.shape_cast %579 : vector<8xf32> to vector<8x1xf32>
    %581 = vector.broadcast %580 : vector<8x1xf32> to vector<8x8xf32>
    %582 = arith.subf %578, %581 : vector<8x8xf32>
    %583 = math.exp %582 : vector<8x8xf32>
    %cst_241 = arith.constant dense<0.000000e+00> : vector<8xf32>
    %584 = vector.multi_reduction <add>, %583, %cst_241 [1] : vector<8x8xf32> to vector<8xf32>
    %585 = vector.shape_cast %584 : vector<8xf32> to vector<8x1xf32>
    %586 = arith.truncf %583 : vector<8x8xf32> to vector<8x8xbf16>
    %cst_242 = arith.constant dense<0.000000e+00> : vector<8x8xf32>
    %587 = tpu.matmul %586, %575, %cst_242 {dimension_numbers = #tpu.dot_dimension_numbers<[1], [0], [0], [1], [0, 0, 1, 1], [], []>} : vector<8x8xbf16>, vector<8x8xbf16>, vector<8x8xf32> -> vector<8x8xf32>
    %588 = tpu.reciprocal %585 {approx = true} : vector<8x1xf32> -> vector<8x1xf32>
    %589 = vector.broadcast %588 : vector<8x1xf32> to vector<8x8xf32>
    %590 = arith.mulf %587, %589 : vector<8x8xf32>
    %591 = vector.extract_strided_slice %564 {offsets = [0, 8], sizes = [8, 8], strides = [1, 1]} : vector<8x128xbf16> to vector<8x8xbf16>
    %592 = vector.extract_strided_slice %572 {offsets = [0, 8], sizes = [8, 8], strides = [1, 1]} : vector<8x128xbf16> to vector<8x8xbf16>
    %593 = vector.extract_strided_slice %572 {offsets = [0, 40], sizes = [8, 8], strides = [1, 1]} : vector<8x128xbf16> to vector<8x8xbf16>
    "tpu.trace_start"() <{level = 10 : i32, message = "qd,kd->qk"}> : () -> ()
    %cst_243 = arith.constant dense<0.000000e+00> : vector<8x8xf32>
    %594 = tpu.matmul %591, %592, %cst_243 {dimension_numbers = #tpu.dot_dimension_numbers<[1], [1], [0], [0], [0, 0, 1, 0], [], []>} : vector<8x8xbf16>, vector<8x8xbf16>, vector<8x8xf32> -> vector<8x8xf32>
    "tpu.trace_stop"() : () -> ()
    %cst_244 = arith.constant 0.353553385 : f32
    %595 = vector.broadcast %cst_244 : f32 to vector<8x8xf32>
    %596 = arith.mulf %594, %595 : vector<8x8xf32>
    %cst_245 = arith.constant dense<0xFF800000> : vector<8xf32>
    %597 = vector.multi_reduction <maximumf>, %596, %cst_245 [1] : vector<8x8xf32> to vector<8xf32>
    %598 = vector.shape_cast %597 : vector<8xf32> to vector<8x1xf32>
    %599 = vector.broadcast %598 : vector<8x1xf32> to vector<8x8xf32>
    %600 = arith.subf %596, %599 : vector<8x8xf32>
    %601 = math.exp %600 : vector<8x8xf32>
    %cst_246 = arith.constant dense<0.000000e+00> : vector<8xf32>
    %602 = vector.multi_reduction <add>, %601, %cst_246 [1] : vector<8x8xf32> to vector<8xf32>
    %603 = vector.shape_cast %602 : vector<8xf32> to vector<8x1xf32>
    %604 = arith.truncf %601 : vector<8x8xf32> to vector<8x8xbf16>
    %cst_247 = arith.constant dense<0.000000e+00> : vector<8x8xf32>
    %605 = tpu.matmul %604, %593, %cst_247 {dimension_numbers = #tpu.dot_dimension_numbers<[1], [0], [0], [1], [0, 0, 1, 1], [], []>} : vector<8x8xbf16>, vector<8x8xbf16>, vector<8x8xf32> -> vector<8x8xf32>
    %606 = tpu.reciprocal %603 {approx = true} : vector<8x1xf32> -> vector<8x1xf32>
    %607 = vector.broadcast %606 : vector<8x1xf32> to vector<8x8xf32>
    %608 = arith.mulf %605, %607 : vector<8x8xf32>
    %609 = vector.extract_strided_slice %564 {offsets = [0, 16], sizes = [8, 8], strides = [1, 1]} : vector<8x128xbf16> to vector<8x8xbf16>
    %610 = vector.extract_strided_slice %572 {offsets = [0, 16], sizes = [8, 8], strides = [1, 1]} : vector<8x128xbf16> to vector<8x8xbf16>
    %611 = vector.extract_strided_slice %572 {offsets = [0, 48], sizes = [8, 8], strides = [1, 1]} : vector<8x128xbf16> to vector<8x8xbf16>
    "tpu.trace_start"() <{level = 10 : i32, message = "qd,kd->qk"}> : () -> ()
    %cst_248 = arith.constant dense<0.000000e+00> : vector<8x8xf32>
    %612 = tpu.matmul %609, %610, %cst_248 {dimension_numbers = #tpu.dot_dimension_numbers<[1], [1], [0], [0], [0, 0, 1, 0], [], []>} : vector<8x8xbf16>, vector<8x8xbf16>, vector<8x8xf32> -> vector<8x8xf32>
    "tpu.trace_stop"() : () -> ()
    %cst_249 = arith.constant 0.353553385 : f32
    %613 = vector.broadcast %cst_249 : f32 to vector<8x8xf32>
    %614 = arith.mulf %612, %613 : vector<8x8xf32>
    %cst_250 = arith.constant dense<0xFF800000> : vector<8xf32>
    %615 = vector.multi_reduction <maximumf>, %614, %cst_250 [1] : vector<8x8xf32> to vector<8xf32>
    %616 = vector.shape_cast %615 : vector<8xf32> to vector<8x1xf32>
    %617 = vector.broadcast %616 : vector<8x1xf32> to vector<8x8xf32>
    %618 = arith.subf %614, %617 : vector<8x8xf32>
    %619 = math.exp %618 : vector<8x8xf32>
    %cst_251 = arith.constant dense<0.000000e+00> : vector<8xf32>
    %620 = vector.multi_reduction <add>, %619, %cst_251 [1] : vector<8x8xf32> to vector<8xf32>
    %621 = vector.shape_cast %620 : vector<8xf32> to vector<8x1xf32>
    %622 = arith.truncf %619 : vector<8x8xf32> to vector<8x8xbf16>
    %cst_252 = arith.constant dense<0.000000e+00> : vector<8x8xf32>
    %623 = tpu.matmul %622, %611, %cst_252 {dimension_numbers = #tpu.dot_dimension_numbers<[1], [0], [0], [1], [0, 0, 1, 1], [], []>} : vector<8x8xbf16>, vector<8x8xbf16>, vector<8x8xf32> -> vector<8x8xf32>
    %624 = tpu.reciprocal %621 {approx = true} : vector<8x1xf32> -> vector<8x1xf32>
    %625 = vector.broadcast %624 : vector<8x1xf32> to vector<8x8xf32>
    %626 = arith.mulf %623, %625 : vector<8x8xf32>
    %627 = vector.extract_strided_slice %564 {offsets = [0, 24], sizes = [8, 8], strides = [1, 1]} : vector<8x128xbf16> to vector<8x8xbf16>
    %628 = vector.extract_strided_slice %572 {offsets = [0, 24], sizes = [8, 8], strides = [1, 1]} : vector<8x128xbf16> to vector<8x8xbf16>
    %629 = vector.extract_strided_slice %572 {offsets = [0, 56], sizes = [8, 8], strides = [1, 1]} : vector<8x128xbf16> to vector<8x8xbf16>
    "tpu.trace_start"() <{level = 10 : i32, message = "qd,kd->qk"}> : () -> ()
    %cst_253 = arith.constant dense<0.000000e+00> : vector<8x8xf32>
    %630 = tpu.matmul %627, %628, %cst_253 {dimension_numbers = #tpu.dot_dimension_numbers<[1], [1], [0], [0], [0, 0, 1, 0], [], []>} : vector<8x8xbf16>, vector<8x8xbf16>, vector<8x8xf32> -> vector<8x8xf32>
    "tpu.trace_stop"() : () -> ()
    %cst_254 = arith.constant 0.353553385 : f32
    %631 = vector.broadcast %cst_254 : f32 to vector<8x8xf32>
    %632 = arith.mulf %630, %631 : vector<8x8xf32>
    %cst_255 = arith.constant dense<0xFF800000> : vector<8xf32>
    %633 = vector.multi_reduction <maximumf>, %632, %cst_255 [1] : vector<8x8xf32> to vector<8xf32>
    %634 = vector.shape_cast %633 : vector<8xf32> to vector<8x1xf32>
    %635 = vector.broadcast %634 : vector<8x1xf32> to vector<8x8xf32>
    %636 = arith.subf %632, %635 : vector<8x8xf32>
    %637 = math.exp %636 : vector<8x8xf32>
    %cst_256 = arith.constant dense<0.000000e+00> : vector<8xf32>
    %638 = vector.multi_reduction <add>, %637, %cst_256 [1] : vector<8x8xf32> to vector<8xf32>
    %639 = vector.shape_cast %638 : vector<8xf32> to vector<8x1xf32>
    %640 = arith.truncf %637 : vector<8x8xf32> to vector<8x8xbf16>
    %cst_257 = arith.constant dense<0.000000e+00> : vector<8x8xf32>
    %641 = tpu.matmul %640, %629, %cst_257 {dimension_numbers = #tpu.dot_dimension_numbers<[1], [0], [0], [1], [0, 0, 1, 1], [], []>} : vector<8x8xbf16>, vector<8x8xbf16>, vector<8x8xf32> -> vector<8x8xf32>
    %642 = tpu.reciprocal %639 {approx = true} : vector<8x1xf32> -> vector<8x1xf32>
    %643 = vector.broadcast %642 : vector<8x1xf32> to vector<8x8xf32>
    %644 = arith.mulf %641, %643 : vector<8x8xf32>
    %645 = tpu.concatenate %590, %608, %626, %644 in 1 : vector<8x8xf32>, vector<8x8xf32>, vector<8x8xf32>, vector<8x8xf32> -> vector<8x32xf32>
    %646 = arith.truncf %645 : vector<8x32xf32> to vector<8x32xbf16>
    %c0_258 = arith.constant 0 : index
    %c0_259 = arith.constant 0 : index
    %c0_260 = arith.constant 0 : index
    %647 = vector.load %arg27[%c0_258, %c0_259, %c0_260] : memref<2x32x128xbf16, #tpu.memory_space<vmem>>, vector<1x32x128xbf16>
    %648 = vector.shape_cast %647 : vector<1x32x128xbf16> to vector<32x128xbf16>
    %cst_261 = arith.constant dense<0.000000e+00> : vector<8x128xf32>
    %649 = tpu.matmul %646, %648, %cst_261 {dimension_numbers = #tpu.dot_dimension_numbers<[1], [0], [0], [1], [0, 0, 1, 1], [], []>} : vector<8x32xbf16>, vector<32x128xbf16>, vector<8x128xf32> -> vector<8x128xf32>
    %c0_262 = arith.constant 0 : index
    %c0_263 = arith.constant 0 : index
    %c0_264 = arith.constant 0 : index
    %650 = vector.load %arg28[%c0_262, %c0_263, %c0_264] : memref<2x1x128xf32, #tpu.memory_space<vmem>>, vector<1x1x128xf32>
    %651 = vector.shape_cast %650 : vector<1x1x128xf32> to vector<1x128xf32>
    %652 = vector.broadcast %651 : vector<1x128xf32> to vector<8x128xf32>
    %653 = arith.addf %649, %652 : vector<8x128xf32>
    %654 = arith.addf %555, %653 : vector<8x128xf32>
    %c0_265 = arith.constant 0 : index
    %c0_266 = arith.constant 0 : index
    %c0_267 = arith.constant 0 : index
    %655 = vector.load %arg31[%c0_265, %c0_266, %c0_267] : memref<2x1x128xf32, #tpu.memory_space<vmem>>, vector<1x1x128xf32>
    %656 = vector.shape_cast %655 : vector<1x1x128xf32> to vector<1x128xf32>
    %c0_268 = arith.constant 0 : index
    %c0_269 = arith.constant 0 : index
    %c0_270 = arith.constant 0 : index
    %657 = vector.load %arg32[%c0_268, %c0_269, %c0_270] : memref<2x1x128xf32, #tpu.memory_space<vmem>>, vector<1x1x128xf32>
    %658 = vector.shape_cast %657 : vector<1x1x128xf32> to vector<1x128xf32>
    %cst_271 = arith.constant 0.000000e+00 : f32
    %659 = vector.shape_cast %14 : vector<1x128xi1> to vector<1x128xi1>
    %660 = vector.broadcast %659 : vector<1x128xi1> to vector<8x128xi1>
    %661 = vector.broadcast %cst_271 : f32 to vector<8x128xf32>
    %662 = arith.select %660, %654, %661 : vector<8x128xi1>, vector<8x128xf32>
    %cst_272 = arith.constant dense<0.000000e+00> : vector<8xf32>
    %663 = vector.multi_reduction <add>, %662, %cst_272 [1] : vector<8x128xf32> to vector<8xf32>
    %664 = vector.shape_cast %663 : vector<8xf32> to vector<8x1xf32>
    %cst_273 = arith.constant 3.125000e-02 : f32
    %665 = vector.broadcast %cst_273 : f32 to vector<8x1xf32>
    %666 = arith.mulf %664, %665 : vector<8x1xf32>
    %667 = vector.broadcast %666 : vector<8x1xf32> to vector<8x128xf32>
    %668 = arith.subf %654, %667 : vector<8x128xf32>
    %cst_274 = arith.constant 0.000000e+00 : f32
    %669 = vector.shape_cast %14 : vector<1x128xi1> to vector<1x128xi1>
    %670 = vector.broadcast %669 : vector<1x128xi1> to vector<8x128xi1>
    %671 = vector.broadcast %cst_274 : f32 to vector<8x128xf32>
    %672 = arith.select %670, %668, %671 : vector<8x128xi1>, vector<8x128xf32>
    %673 = arith.mulf %672, %672 : vector<8x128xf32>
    %cst_275 = arith.constant dense<0.000000e+00> : vector<8xf32>
    %674 = vector.multi_reduction <add>, %673, %cst_275 [1] : vector<8x128xf32> to vector<8xf32>
    %675 = vector.shape_cast %674 : vector<8xf32> to vector<8x1xf32>
    %cst_276 = arith.constant 3.125000e-02 : f32
    %676 = vector.broadcast %cst_276 : f32 to vector<8x1xf32>
    %677 = arith.mulf %675, %676 : vector<8x1xf32>
    %cst_277 = arith.constant 9.99999974E-6 : f32
    %678 = vector.broadcast %cst_277 : f32 to vector<8x1xf32>
    %679 = arith.addf %677, %678 : vector<8x1xf32>
    %680 = math.rsqrt %679 : vector<8x1xf32>
    %681 = vector.broadcast %680 : vector<8x1xf32> to vector<8x128xf32>
    %682 = arith.mulf %668, %681 : vector<8x128xf32>
    %683 = vector.broadcast %656 : vector<1x128xf32> to vector<8x128xf32>
    %684 = arith.mulf %682, %683 : vector<8x128xf32>
    %685 = vector.broadcast %658 : vector<1x128xf32> to vector<8x128xf32>
    %686 = arith.addf %684, %685 : vector<8x128xf32>
    %687 = arith.truncf %686 : vector<8x128xf32> to vector<8x128xbf16>
    %c0_278 = arith.constant 0 : index
    %c0_279 = arith.constant 0 : index
    %c0_280 = arith.constant 0 : index
    %688 = vector.load %arg35[%c0_278, %c0_279, %c0_280] : memref<2x128x128xbf16, #tpu.memory_space<vmem>>, vector<1x128x128xbf16>
    %689 = vector.shape_cast %688 : vector<1x128x128xbf16> to vector<128x128xbf16>
    %cst_281 = arith.constant dense<0.000000e+00> : vector<8x128xf32>
    %690 = tpu.matmul %687, %689, %cst_281 {dimension_numbers = #tpu.dot_dimension_numbers<[1], [0], [0], [1], [0, 0, 1, 1], [], []>} : vector<8x128xbf16>, vector<128x128xbf16>, vector<8x128xf32> -> vector<8x128xf32>
    %c0_282 = arith.constant 0 : index
    %c0_283 = arith.constant 0 : index
    %c0_284 = arith.constant 0 : index
    %691 = vector.load %arg36[%c0_282, %c0_283, %c0_284] : memref<2x1x128xf32, #tpu.memory_space<vmem>>, vector<1x1x128xf32>
    %692 = vector.shape_cast %691 : vector<1x1x128xf32> to vector<1x128xf32>
    %693 = vector.broadcast %692 : vector<1x128xf32> to vector<8x128xf32>
    %694 = arith.addf %690, %693 : vector<8x128xf32>
    %cst_285 = arith.constant 0.000000e+00 : f32
    %695 = vector.broadcast %cst_285 : f32 to vector<8x128xf32>
    %696 = arith.maximumf %694, %695 : vector<8x128xf32>
    %697 = arith.truncf %696 : vector<8x128xf32> to vector<8x128xbf16>
    %c0_286 = arith.constant 0 : index
    %c0_287 = arith.constant 0 : index
    %c0_288 = arith.constant 0 : index
    %698 = vector.load %arg37[%c0_286, %c0_287, %c0_288] : memref<2x128x128xbf16, #tpu.memory_space<vmem>>, vector<1x128x128xbf16>
    %699 = vector.shape_cast %698 : vector<1x128x128xbf16> to vector<128x128xbf16>
    %cst_289 = arith.constant dense<0.000000e+00> : vector<8x128xf32>
    %700 = tpu.matmul %697, %699, %cst_289 {dimension_numbers = #tpu.dot_dimension_numbers<[1], [0], [0], [1], [0, 0, 1, 1], [], []>} : vector<8x128xbf16>, vector<128x128xbf16>, vector<8x128xf32> -> vector<8x128xf32>
    %c0_290 = arith.constant 0 : index
    %c0_291 = arith.constant 0 : index
    %c0_292 = arith.constant 0 : index
    %701 = vector.load %arg38[%c0_290, %c0_291, %c0_292] : memref<2x1x128xf32, #tpu.memory_space<vmem>>, vector<1x1x128xf32>
    %702 = vector.shape_cast %701 : vector<1x1x128xf32> to vector<1x128xf32>
    %703 = vector.broadcast %702 : vector<1x128xf32> to vector<8x128xf32>
    %704 = arith.addf %700, %703 : vector<8x128xf32>
    %705 = arith.addf %686, %704 : vector<8x128xf32>
    %c0_293 = arith.constant 0 : index
    %c0_294 = arith.constant 0 : index
    %c0_295 = arith.constant 0 : index
    %706 = vector.load %arg33[%c0_293, %c0_294, %c0_295] : memref<2x1x128xf32, #tpu.memory_space<vmem>>, vector<1x1x128xf32>
    %707 = vector.shape_cast %706 : vector<1x1x128xf32> to vector<1x128xf32>
    %c0_296 = arith.constant 0 : index
    %c0_297 = arith.constant 0 : index
    %c0_298 = arith.constant 0 : index
    %708 = vector.load %arg34[%c0_296, %c0_297, %c0_298] : memref<2x1x128xf32, #tpu.memory_space<vmem>>, vector<1x1x128xf32>
    %709 = vector.shape_cast %708 : vector<1x1x128xf32> to vector<1x128xf32>
    %cst_299 = arith.constant 0.000000e+00 : f32
    %710 = vector.shape_cast %14 : vector<1x128xi1> to vector<1x128xi1>
    %711 = vector.broadcast %710 : vector<1x128xi1> to vector<8x128xi1>
    %712 = vector.broadcast %cst_299 : f32 to vector<8x128xf32>
    %713 = arith.select %711, %705, %712 : vector<8x128xi1>, vector<8x128xf32>
    %cst_300 = arith.constant dense<0.000000e+00> : vector<8xf32>
    %714 = vector.multi_reduction <add>, %713, %cst_300 [1] : vector<8x128xf32> to vector<8xf32>
    %715 = vector.shape_cast %714 : vector<8xf32> to vector<8x1xf32>
    %cst_301 = arith.constant 3.125000e-02 : f32
    %716 = vector.broadcast %cst_301 : f32 to vector<8x1xf32>
    %717 = arith.mulf %715, %716 : vector<8x1xf32>
    %718 = vector.broadcast %717 : vector<8x1xf32> to vector<8x128xf32>
    %719 = arith.subf %705, %718 : vector<8x128xf32>
    %cst_302 = arith.constant 0.000000e+00 : f32
    %720 = vector.shape_cast %14 : vector<1x128xi1> to vector<1x128xi1>
    %721 = vector.broadcast %720 : vector<1x128xi1> to vector<8x128xi1>
    %722 = vector.broadcast %cst_302 : f32 to vector<8x128xf32>
    %723 = arith.select %721, %719, %722 : vector<8x128xi1>, vector<8x128xf32>
    %724 = arith.mulf %723, %723 : vector<8x128xf32>
    %cst_303 = arith.constant dense<0.000000e+00> : vector<8xf32>
    %725 = vector.multi_reduction <add>, %724, %cst_303 [1] : vector<8x128xf32> to vector<8xf32>
    %726 = vector.shape_cast %725 : vector<8xf32> to vector<8x1xf32>
    %cst_304 = arith.constant 3.125000e-02 : f32
    %727 = vector.broadcast %cst_304 : f32 to vector<8x1xf32>
    %728 = arith.mulf %726, %727 : vector<8x1xf32>
    %cst_305 = arith.constant 9.99999974E-6 : f32
    %729 = vector.broadcast %cst_305 : f32 to vector<8x1xf32>
    %730 = arith.addf %728, %729 : vector<8x1xf32>
    %731 = math.rsqrt %730 : vector<8x1xf32>
    %732 = vector.broadcast %731 : vector<8x1xf32> to vector<8x128xf32>
    %733 = arith.mulf %719, %732 : vector<8x128xf32>
    %734 = vector.broadcast %707 : vector<1x128xf32> to vector<8x128xf32>
    %735 = arith.mulf %733, %734 : vector<8x128xf32>
    %736 = vector.broadcast %709 : vector<1x128xf32> to vector<8x128xf32>
    %737 = arith.addf %735, %736 : vector<8x128xf32>
    %738 = arith.truncf %737 : vector<8x128xf32> to vector<8x128xbf16>
    %c1_306 = arith.constant 1 : index
    %c0_307 = arith.constant 0 : index
    %c0_308 = arith.constant 0 : index
    %739 = vector.load %arg19[%c1_306, %c0_307, %c0_308] : memref<2x128x128xbf16, #tpu.memory_space<vmem>>, vector<1x128x128xbf16>
    %740 = vector.shape_cast %739 : vector<1x128x128xbf16> to vector<128x128xbf16>
    %cst_309 = arith.constant dense<0.000000e+00> : vector<8x128xf32>
    %741 = tpu.matmul %738, %740, %cst_309 {dimension_numbers = #tpu.dot_dimension_numbers<[1], [0], [0], [1], [0, 0, 1, 1], [], []>} : vector<8x128xbf16>, vector<128x128xbf16>, vector<8x128xf32> -> vector<8x128xf32>
    %c1_310 = arith.constant 1 : index
    %c0_311 = arith.constant 0 : index
    %c0_312 = arith.constant 0 : index
    %742 = vector.load %arg20[%c1_310, %c0_311, %c0_312] : memref<2x1x128xf32, #tpu.memory_space<vmem>>, vector<1x1x128xf32>
    %743 = vector.shape_cast %742 : vector<1x1x128xf32> to vector<1x128xf32>
    %744 = vector.broadcast %743 : vector<1x128xf32> to vector<8x128xf32>
    %745 = arith.addf %741, %744 : vector<8x128xf32>
    %746 = arith.truncf %745 : vector<8x128xf32> to vector<8x128xbf16>
    %747 = vector.extract_strided_slice %746 {offsets = [0, 0], sizes = [8, 8], strides = [1, 1]} : vector<8x128xbf16> to vector<8x8xbf16>
    %748 = vector.extract_strided_slice %746 {offsets = [0, 32], sizes = [8, 8], strides = [1, 1]} : vector<8x128xbf16> to vector<8x8xbf16>
    %749 = vector.extract_strided_slice %746 {offsets = [0, 64], sizes = [8, 8], strides = [1, 1]} : vector<8x128xbf16> to vector<8x8xbf16>
    "tpu.trace_start"() <{level = 10 : i32, message = "qd,kd->qk"}> : () -> ()
    %cst_313 = arith.constant dense<0.000000e+00> : vector<8x8xf32>
    %750 = tpu.matmul %747, %748, %cst_313 {dimension_numbers = #tpu.dot_dimension_numbers<[1], [1], [0], [0], [0, 0, 1, 0], [], []>} : vector<8x8xbf16>, vector<8x8xbf16>, vector<8x8xf32> -> vector<8x8xf32>
    "tpu.trace_stop"() : () -> ()
    %cst_314 = arith.constant 0.353553385 : f32
    %751 = vector.broadcast %cst_314 : f32 to vector<8x8xf32>
    %752 = arith.mulf %750, %751 : vector<8x8xf32>
    %753 = arith.addf %752, %11 : vector<8x8xf32>
    %cst_315 = arith.constant dense<0xFF800000> : vector<8xf32>
    %754 = vector.multi_reduction <maximumf>, %753, %cst_315 [1] : vector<8x8xf32> to vector<8xf32>
    %755 = vector.shape_cast %754 : vector<8xf32> to vector<8x1xf32>
    %756 = vector.broadcast %755 : vector<8x1xf32> to vector<8x8xf32>
    %757 = arith.subf %753, %756 : vector<8x8xf32>
    %758 = math.exp %757 : vector<8x8xf32>
    %cst_316 = arith.constant dense<0.000000e+00> : vector<8xf32>
    %759 = vector.multi_reduction <add>, %758, %cst_316 [1] : vector<8x8xf32> to vector<8xf32>
    %760 = vector.shape_cast %759 : vector<8xf32> to vector<8x1xf32>
    %761 = arith.truncf %758 : vector<8x8xf32> to vector<8x8xbf16>
    %cst_317 = arith.constant dense<0.000000e+00> : vector<8x8xf32>
    %762 = tpu.matmul %761, %749, %cst_317 {dimension_numbers = #tpu.dot_dimension_numbers<[1], [0], [0], [1], [0, 0, 1, 1], [], []>} : vector<8x8xbf16>, vector<8x8xbf16>, vector<8x8xf32> -> vector<8x8xf32>
    %763 = tpu.reciprocal %760 {approx = true} : vector<8x1xf32> -> vector<8x1xf32>
    %764 = vector.broadcast %763 : vector<8x1xf32> to vector<8x8xf32>
    %765 = arith.mulf %762, %764 : vector<8x8xf32>
    %766 = vector.extract_strided_slice %746 {offsets = [0, 8], sizes = [8, 8], strides = [1, 1]} : vector<8x128xbf16> to vector<8x8xbf16>
    %767 = vector.extract_strided_slice %746 {offsets = [0, 40], sizes = [8, 8], strides = [1, 1]} : vector<8x128xbf16> to vector<8x8xbf16>
    %768 = vector.extract_strided_slice %746 {offsets = [0, 72], sizes = [8, 8], strides = [1, 1]} : vector<8x128xbf16> to vector<8x8xbf16>
    "tpu.trace_start"() <{level = 10 : i32, message = "qd,kd->qk"}> : () -> ()
    %cst_318 = arith.constant dense<0.000000e+00> : vector<8x8xf32>
    %769 = tpu.matmul %766, %767, %cst_318 {dimension_numbers = #tpu.dot_dimension_numbers<[1], [1], [0], [0], [0, 0, 1, 0], [], []>} : vector<8x8xbf16>, vector<8x8xbf16>, vector<8x8xf32> -> vector<8x8xf32>
    "tpu.trace_stop"() : () -> ()
    %cst_319 = arith.constant 0.353553385 : f32
    %770 = vector.broadcast %cst_319 : f32 to vector<8x8xf32>
    %771 = arith.mulf %769, %770 : vector<8x8xf32>
    %772 = arith.addf %771, %11 : vector<8x8xf32>
    %cst_320 = arith.constant dense<0xFF800000> : vector<8xf32>
    %773 = vector.multi_reduction <maximumf>, %772, %cst_320 [1] : vector<8x8xf32> to vector<8xf32>
    %774 = vector.shape_cast %773 : vector<8xf32> to vector<8x1xf32>
    %775 = vector.broadcast %774 : vector<8x1xf32> to vector<8x8xf32>
    %776 = arith.subf %772, %775 : vector<8x8xf32>
    %777 = math.exp %776 : vector<8x8xf32>
    %cst_321 = arith.constant dense<0.000000e+00> : vector<8xf32>
    %778 = vector.multi_reduction <add>, %777, %cst_321 [1] : vector<8x8xf32> to vector<8xf32>
    %779 = vector.shape_cast %778 : vector<8xf32> to vector<8x1xf32>
    %780 = arith.truncf %777 : vector<8x8xf32> to vector<8x8xbf16>
    %cst_322 = arith.constant dense<0.000000e+00> : vector<8x8xf32>
    %781 = tpu.matmul %780, %768, %cst_322 {dimension_numbers = #tpu.dot_dimension_numbers<[1], [0], [0], [1], [0, 0, 1, 1], [], []>} : vector<8x8xbf16>, vector<8x8xbf16>, vector<8x8xf32> -> vector<8x8xf32>
    %782 = tpu.reciprocal %779 {approx = true} : vector<8x1xf32> -> vector<8x1xf32>
    %783 = vector.broadcast %782 : vector<8x1xf32> to vector<8x8xf32>
    %784 = arith.mulf %781, %783 : vector<8x8xf32>
    %785 = vector.extract_strided_slice %746 {offsets = [0, 16], sizes = [8, 8], strides = [1, 1]} : vector<8x128xbf16> to vector<8x8xbf16>
    %786 = vector.extract_strided_slice %746 {offsets = [0, 48], sizes = [8, 8], strides = [1, 1]} : vector<8x128xbf16> to vector<8x8xbf16>
    %787 = vector.extract_strided_slice %746 {offsets = [0, 80], sizes = [8, 8], strides = [1, 1]} : vector<8x128xbf16> to vector<8x8xbf16>
    "tpu.trace_start"() <{level = 10 : i32, message = "qd,kd->qk"}> : () -> ()
    %cst_323 = arith.constant dense<0.000000e+00> : vector<8x8xf32>
    %788 = tpu.matmul %785, %786, %cst_323 {dimension_numbers = #tpu.dot_dimension_numbers<[1], [1], [0], [0], [0, 0, 1, 0], [], []>} : vector<8x8xbf16>, vector<8x8xbf16>, vector<8x8xf32> -> vector<8x8xf32>
    "tpu.trace_stop"() : () -> ()
    %cst_324 = arith.constant 0.353553385 : f32
    %789 = vector.broadcast %cst_324 : f32 to vector<8x8xf32>
    %790 = arith.mulf %788, %789 : vector<8x8xf32>
    %791 = arith.addf %790, %11 : vector<8x8xf32>
    %cst_325 = arith.constant dense<0xFF800000> : vector<8xf32>
    %792 = vector.multi_reduction <maximumf>, %791, %cst_325 [1] : vector<8x8xf32> to vector<8xf32>
    %793 = vector.shape_cast %792 : vector<8xf32> to vector<8x1xf32>
    %794 = vector.broadcast %793 : vector<8x1xf32> to vector<8x8xf32>
    %795 = arith.subf %791, %794 : vector<8x8xf32>
    %796 = math.exp %795 : vector<8x8xf32>
    %cst_326 = arith.constant dense<0.000000e+00> : vector<8xf32>
    %797 = vector.multi_reduction <add>, %796, %cst_326 [1] : vector<8x8xf32> to vector<8xf32>
    %798 = vector.shape_cast %797 : vector<8xf32> to vector<8x1xf32>
    %799 = arith.truncf %796 : vector<8x8xf32> to vector<8x8xbf16>
    %cst_327 = arith.constant dense<0.000000e+00> : vector<8x8xf32>
    %800 = tpu.matmul %799, %787, %cst_327 {dimension_numbers = #tpu.dot_dimension_numbers<[1], [0], [0], [1], [0, 0, 1, 1], [], []>} : vector<8x8xbf16>, vector<8x8xbf16>, vector<8x8xf32> -> vector<8x8xf32>
    %801 = tpu.reciprocal %798 {approx = true} : vector<8x1xf32> -> vector<8x1xf32>
    %802 = vector.broadcast %801 : vector<8x1xf32> to vector<8x8xf32>
    %803 = arith.mulf %800, %802 : vector<8x8xf32>
    %804 = vector.extract_strided_slice %746 {offsets = [0, 24], sizes = [8, 8], strides = [1, 1]} : vector<8x128xbf16> to vector<8x8xbf16>
    %805 = vector.extract_strided_slice %746 {offsets = [0, 56], sizes = [8, 8], strides = [1, 1]} : vector<8x128xbf16> to vector<8x8xbf16>
    %806 = vector.extract_strided_slice %746 {offsets = [0, 88], sizes = [8, 8], strides = [1, 1]} : vector<8x128xbf16> to vector<8x8xbf16>
    "tpu.trace_start"() <{level = 10 : i32, message = "qd,kd->qk"}> : () -> ()
    %cst_328 = arith.constant dense<0.000000e+00> : vector<8x8xf32>
    %807 = tpu.matmul %804, %805, %cst_328 {dimension_numbers = #tpu.dot_dimension_numbers<[1], [1], [0], [0], [0, 0, 1, 0], [], []>} : vector<8x8xbf16>, vector<8x8xbf16>, vector<8x8xf32> -> vector<8x8xf32>
    "tpu.trace_stop"() : () -> ()
    %cst_329 = arith.constant 0.353553385 : f32
    %808 = vector.broadcast %cst_329 : f32 to vector<8x8xf32>
    %809 = arith.mulf %807, %808 : vector<8x8xf32>
    %810 = arith.addf %809, %11 : vector<8x8xf32>
    %cst_330 = arith.constant dense<0xFF800000> : vector<8xf32>
    %811 = vector.multi_reduction <maximumf>, %810, %cst_330 [1] : vector<8x8xf32> to vector<8xf32>
    %812 = vector.shape_cast %811 : vector<8xf32> to vector<8x1xf32>
    %813 = vector.broadcast %812 : vector<8x1xf32> to vector<8x8xf32>
    %814 = arith.subf %810, %813 : vector<8x8xf32>
    %815 = math.exp %814 : vector<8x8xf32>
    %cst_331 = arith.constant dense<0.000000e+00> : vector<8xf32>
    %816 = vector.multi_reduction <add>, %815, %cst_331 [1] : vector<8x8xf32> to vector<8xf32>
    %817 = vector.shape_cast %816 : vector<8xf32> to vector<8x1xf32>
    %818 = arith.truncf %815 : vector<8x8xf32> to vector<8x8xbf16>
    %cst_332 = arith.constant dense<0.000000e+00> : vector<8x8xf32>
    %819 = tpu.matmul %818, %806, %cst_332 {dimension_numbers = #tpu.dot_dimension_numbers<[1], [0], [0], [1], [0, 0, 1, 1], [], []>} : vector<8x8xbf16>, vector<8x8xbf16>, vector<8x8xf32> -> vector<8x8xf32>
    %820 = tpu.reciprocal %817 {approx = true} : vector<8x1xf32> -> vector<8x1xf32>
    %821 = vector.broadcast %820 : vector<8x1xf32> to vector<8x8xf32>
    %822 = arith.mulf %819, %821 : vector<8x8xf32>
    %823 = tpu.concatenate %765, %784, %803, %822 in 1 : vector<8x8xf32>, vector<8x8xf32>, vector<8x8xf32>, vector<8x8xf32> -> vector<8x32xf32>
    %824 = arith.truncf %823 : vector<8x32xf32> to vector<8x32xbf16>
    %c1_333 = arith.constant 1 : index
    %c0_334 = arith.constant 0 : index
    %c0_335 = arith.constant 0 : index
    %825 = vector.load %arg21[%c1_333, %c0_334, %c0_335] : memref<2x32x128xbf16, #tpu.memory_space<vmem>>, vector<1x32x128xbf16>
    %826 = vector.shape_cast %825 : vector<1x32x128xbf16> to vector<32x128xbf16>
    %cst_336 = arith.constant dense<0.000000e+00> : vector<8x128xf32>
    %827 = tpu.matmul %824, %826, %cst_336 {dimension_numbers = #tpu.dot_dimension_numbers<[1], [0], [0], [1], [0, 0, 1, 1], [], []>} : vector<8x32xbf16>, vector<32x128xbf16>, vector<8x128xf32> -> vector<8x128xf32>
    %c1_337 = arith.constant 1 : index
    %c0_338 = arith.constant 0 : index
    %c0_339 = arith.constant 0 : index
    %828 = vector.load %arg22[%c1_337, %c0_338, %c0_339] : memref<2x1x128xf32, #tpu.memory_space<vmem>>, vector<1x1x128xf32>
    %829 = vector.shape_cast %828 : vector<1x1x128xf32> to vector<1x128xf32>
    %830 = vector.broadcast %829 : vector<1x128xf32> to vector<8x128xf32>
    %831 = arith.addf %827, %830 : vector<8x128xf32>
    %832 = arith.addf %737, %831 : vector<8x128xf32>
    %c1_340 = arith.constant 1 : index
    %c0_341 = arith.constant 0 : index
    %c0_342 = arith.constant 0 : index
    %833 = vector.load %arg29[%c1_340, %c0_341, %c0_342] : memref<2x1x128xf32, #tpu.memory_space<vmem>>, vector<1x1x128xf32>
    %834 = vector.shape_cast %833 : vector<1x1x128xf32> to vector<1x128xf32>
    %c1_343 = arith.constant 1 : index
    %c0_344 = arith.constant 0 : index
    %c0_345 = arith.constant 0 : index
    %835 = vector.load %arg30[%c1_343, %c0_344, %c0_345] : memref<2x1x128xf32, #tpu.memory_space<vmem>>, vector<1x1x128xf32>
    %836 = vector.shape_cast %835 : vector<1x1x128xf32> to vector<1x128xf32>
    %cst_346 = arith.constant 0.000000e+00 : f32
    %837 = vector.shape_cast %14 : vector<1x128xi1> to vector<1x128xi1>
    %838 = vector.broadcast %837 : vector<1x128xi1> to vector<8x128xi1>
    %839 = vector.broadcast %cst_346 : f32 to vector<8x128xf32>
    %840 = arith.select %838, %832, %839 : vector<8x128xi1>, vector<8x128xf32>
    %cst_347 = arith.constant dense<0.000000e+00> : vector<8xf32>
    %841 = vector.multi_reduction <add>, %840, %cst_347 [1] : vector<8x128xf32> to vector<8xf32>
    %842 = vector.shape_cast %841 : vector<8xf32> to vector<8x1xf32>
    %cst_348 = arith.constant 3.125000e-02 : f32
    %843 = vector.broadcast %cst_348 : f32 to vector<8x1xf32>
    %844 = arith.mulf %842, %843 : vector<8x1xf32>
    %845 = vector.broadcast %844 : vector<8x1xf32> to vector<8x128xf32>
    %846 = arith.subf %832, %845 : vector<8x128xf32>
    %cst_349 = arith.constant 0.000000e+00 : f32
    %847 = vector.shape_cast %14 : vector<1x128xi1> to vector<1x128xi1>
    %848 = vector.broadcast %847 : vector<1x128xi1> to vector<8x128xi1>
    %849 = vector.broadcast %cst_349 : f32 to vector<8x128xf32>
    %850 = arith.select %848, %846, %849 : vector<8x128xi1>, vector<8x128xf32>
    %851 = arith.mulf %850, %850 : vector<8x128xf32>
    %cst_350 = arith.constant dense<0.000000e+00> : vector<8xf32>
    %852 = vector.multi_reduction <add>, %851, %cst_350 [1] : vector<8x128xf32> to vector<8xf32>
    %853 = vector.shape_cast %852 : vector<8xf32> to vector<8x1xf32>
    %cst_351 = arith.constant 3.125000e-02 : f32
    %854 = vector.broadcast %cst_351 : f32 to vector<8x1xf32>
    %855 = arith.mulf %853, %854 : vector<8x1xf32>
    %cst_352 = arith.constant 9.99999974E-6 : f32
    %856 = vector.broadcast %cst_352 : f32 to vector<8x1xf32>
    %857 = arith.addf %855, %856 : vector<8x1xf32>
    %858 = math.rsqrt %857 : vector<8x1xf32>
    %859 = vector.broadcast %858 : vector<8x1xf32> to vector<8x128xf32>
    %860 = arith.mulf %846, %859 : vector<8x128xf32>
    %861 = vector.broadcast %834 : vector<1x128xf32> to vector<8x128xf32>
    %862 = arith.mulf %860, %861 : vector<8x128xf32>
    %863 = vector.broadcast %836 : vector<1x128xf32> to vector<8x128xf32>
    %864 = arith.addf %862, %863 : vector<8x128xf32>
    %865 = arith.truncf %864 : vector<8x128xf32> to vector<8x128xbf16>
    %c1_353 = arith.constant 1 : index
    %c0_354 = arith.constant 0 : index
    %c0_355 = arith.constant 0 : index
    %866 = vector.load %arg23[%c1_353, %c0_354, %c0_355] : memref<2x128x128xbf16, #tpu.memory_space<vmem>>, vector<1x128x128xbf16>
    %867 = vector.shape_cast %866 : vector<1x128x128xbf16> to vector<128x128xbf16>
    %cst_356 = arith.constant dense<0.000000e+00> : vector<8x128xf32>
    %868 = tpu.matmul %865, %867, %cst_356 {dimension_numbers = #tpu.dot_dimension_numbers<[1], [0], [0], [1], [0, 0, 1, 1], [], []>} : vector<8x128xbf16>, vector<128x128xbf16>, vector<8x128xf32> -> vector<8x128xf32>
    %c1_357 = arith.constant 1 : index
    %c0_358 = arith.constant 0 : index
    %c0_359 = arith.constant 0 : index
    %869 = vector.load %arg24[%c1_357, %c0_358, %c0_359] : memref<2x1x128xf32, #tpu.memory_space<vmem>>, vector<1x1x128xf32>
    %870 = vector.shape_cast %869 : vector<1x1x128xf32> to vector<1x128xf32>
    %871 = vector.broadcast %870 : vector<1x128xf32> to vector<8x128xf32>
    %872 = arith.addf %868, %871 : vector<8x128xf32>
    %873 = arith.truncf %872 : vector<8x128xf32> to vector<8x128xbf16>
    %c1_360 = arith.constant 1 : index
    %c0_361 = arith.constant 0 : index
    %c0_362 = arith.constant 0 : index
    %874 = vector.load %arg25[%c1_360, %c0_361, %c0_362] : memref<2x128x128xbf16, #tpu.memory_space<vmem>>, vector<1x128x128xbf16>
    %875 = vector.shape_cast %874 : vector<1x128x128xbf16> to vector<128x128xbf16>
    %cst_363 = arith.constant dense<0.000000e+00> : vector<8x128xf32>
    %876 = tpu.matmul %416, %875, %cst_363 {dimension_numbers = #tpu.dot_dimension_numbers<[1], [0], [0], [1], [0, 0, 1, 1], [], []>} : vector<8x128xbf16>, vector<128x128xbf16>, vector<8x128xf32> -> vector<8x128xf32>
    %c1_364 = arith.constant 1 : index
    %c0_365 = arith.constant 0 : index
    %c0_366 = arith.constant 0 : index
    %877 = vector.load %arg26[%c1_364, %c0_365, %c0_366] : memref<2x1x128xf32, #tpu.memory_space<vmem>>, vector<1x1x128xf32>
    %878 = vector.shape_cast %877 : vector<1x1x128xf32> to vector<1x128xf32>
    %879 = vector.broadcast %878 : vector<1x128xf32> to vector<8x128xf32>
    %880 = arith.addf %876, %879 : vector<8x128xf32>
    %881 = arith.truncf %880 : vector<8x128xf32> to vector<8x128xbf16>
    %882 = vector.extract_strided_slice %873 {offsets = [0, 0], sizes = [8, 8], strides = [1, 1]} : vector<8x128xbf16> to vector<8x8xbf16>
    %883 = vector.extract_strided_slice %881 {offsets = [0, 0], sizes = [8, 8], strides = [1, 1]} : vector<8x128xbf16> to vector<8x8xbf16>
    %884 = vector.extract_strided_slice %881 {offsets = [0, 32], sizes = [8, 8], strides = [1, 1]} : vector<8x128xbf16> to vector<8x8xbf16>
    "tpu.trace_start"() <{level = 10 : i32, message = "qd,kd->qk"}> : () -> ()
    %cst_367 = arith.constant dense<0.000000e+00> : vector<8x8xf32>
    %885 = tpu.matmul %882, %883, %cst_367 {dimension_numbers = #tpu.dot_dimension_numbers<[1], [1], [0], [0], [0, 0, 1, 0], [], []>} : vector<8x8xbf16>, vector<8x8xbf16>, vector<8x8xf32> -> vector<8x8xf32>
    "tpu.trace_stop"() : () -> ()
    %cst_368 = arith.constant 0.353553385 : f32
    %886 = vector.broadcast %cst_368 : f32 to vector<8x8xf32>
    %887 = arith.mulf %885, %886 : vector<8x8xf32>
    %cst_369 = arith.constant dense<0xFF800000> : vector<8xf32>
    %888 = vector.multi_reduction <maximumf>, %887, %cst_369 [1] : vector<8x8xf32> to vector<8xf32>
    %889 = vector.shape_cast %888 : vector<8xf32> to vector<8x1xf32>
    %890 = vector.broadcast %889 : vector<8x1xf32> to vector<8x8xf32>
    %891 = arith.subf %887, %890 : vector<8x8xf32>
    %892 = math.exp %891 : vector<8x8xf32>
    %cst_370 = arith.constant dense<0.000000e+00> : vector<8xf32>
    %893 = vector.multi_reduction <add>, %892, %cst_370 [1] : vector<8x8xf32> to vector<8xf32>
    %894 = vector.shape_cast %893 : vector<8xf32> to vector<8x1xf32>
    %895 = arith.truncf %892 : vector<8x8xf32> to vector<8x8xbf16>
    %cst_371 = arith.constant dense<0.000000e+00> : vector<8x8xf32>
    %896 = tpu.matmul %895, %884, %cst_371 {dimension_numbers = #tpu.dot_dimension_numbers<[1], [0], [0], [1], [0, 0, 1, 1], [], []>} : vector<8x8xbf16>, vector<8x8xbf16>, vector<8x8xf32> -> vector<8x8xf32>
    %897 = tpu.reciprocal %894 {approx = true} : vector<8x1xf32> -> vector<8x1xf32>
    %898 = vector.broadcast %897 : vector<8x1xf32> to vector<8x8xf32>
    %899 = arith.mulf %896, %898 : vector<8x8xf32>
    %900 = vector.extract_strided_slice %873 {offsets = [0, 8], sizes = [8, 8], strides = [1, 1]} : vector<8x128xbf16> to vector<8x8xbf16>
    %901 = vector.extract_strided_slice %881 {offsets = [0, 8], sizes = [8, 8], strides = [1, 1]} : vector<8x128xbf16> to vector<8x8xbf16>
    %902 = vector.extract_strided_slice %881 {offsets = [0, 40], sizes = [8, 8], strides = [1, 1]} : vector<8x128xbf16> to vector<8x8xbf16>
    "tpu.trace_start"() <{level = 10 : i32, message = "qd,kd->qk"}> : () -> ()
    %cst_372 = arith.constant dense<0.000000e+00> : vector<8x8xf32>
    %903 = tpu.matmul %900, %901, %cst_372 {dimension_numbers = #tpu.dot_dimension_numbers<[1], [1], [0], [0], [0, 0, 1, 0], [], []>} : vector<8x8xbf16>, vector<8x8xbf16>, vector<8x8xf32> -> vector<8x8xf32>
    "tpu.trace_stop"() : () -> ()
    %cst_373 = arith.constant 0.353553385 : f32
    %904 = vector.broadcast %cst_373 : f32 to vector<8x8xf32>
    %905 = arith.mulf %903, %904 : vector<8x8xf32>
    %cst_374 = arith.constant dense<0xFF800000> : vector<8xf32>
    %906 = vector.multi_reduction <maximumf>, %905, %cst_374 [1] : vector<8x8xf32> to vector<8xf32>
    %907 = vector.shape_cast %906 : vector<8xf32> to vector<8x1xf32>
    %908 = vector.broadcast %907 : vector<8x1xf32> to vector<8x8xf32>
    %909 = arith.subf %905, %908 : vector<8x8xf32>
    %910 = math.exp %909 : vector<8x8xf32>
    %cst_375 = arith.constant dense<0.000000e+00> : vector<8xf32>
    %911 = vector.multi_reduction <add>, %910, %cst_375 [1] : vector<8x8xf32> to vector<8xf32>
    %912 = vector.shape_cast %911 : vector<8xf32> to vector<8x1xf32>
    %913 = arith.truncf %910 : vector<8x8xf32> to vector<8x8xbf16>
    %cst_376 = arith.constant dense<0.000000e+00> : vector<8x8xf32>
    %914 = tpu.matmul %913, %902, %cst_376 {dimension_numbers = #tpu.dot_dimension_numbers<[1], [0], [0], [1], [0, 0, 1, 1], [], []>} : vector<8x8xbf16>, vector<8x8xbf16>, vector<8x8xf32> -> vector<8x8xf32>
    %915 = tpu.reciprocal %912 {approx = true} : vector<8x1xf32> -> vector<8x1xf32>
    %916 = vector.broadcast %915 : vector<8x1xf32> to vector<8x8xf32>
    %917 = arith.mulf %914, %916 : vector<8x8xf32>
    %918 = vector.extract_strided_slice %873 {offsets = [0, 16], sizes = [8, 8], strides = [1, 1]} : vector<8x128xbf16> to vector<8x8xbf16>
    %919 = vector.extract_strided_slice %881 {offsets = [0, 16], sizes = [8, 8], strides = [1, 1]} : vector<8x128xbf16> to vector<8x8xbf16>
    %920 = vector.extract_strided_slice %881 {offsets = [0, 48], sizes = [8, 8], strides = [1, 1]} : vector<8x128xbf16> to vector<8x8xbf16>
    "tpu.trace_start"() <{level = 10 : i32, message = "qd,kd->qk"}> : () -> ()
    %cst_377 = arith.constant dense<0.000000e+00> : vector<8x8xf32>
    %921 = tpu.matmul %918, %919, %cst_377 {dimension_numbers = #tpu.dot_dimension_numbers<[1], [1], [0], [0], [0, 0, 1, 0], [], []>} : vector<8x8xbf16>, vector<8x8xbf16>, vector<8x8xf32> -> vector<8x8xf32>
    "tpu.trace_stop"() : () -> ()
    %cst_378 = arith.constant 0.353553385 : f32
    %922 = vector.broadcast %cst_378 : f32 to vector<8x8xf32>
    %923 = arith.mulf %921, %922 : vector<8x8xf32>
    %cst_379 = arith.constant dense<0xFF800000> : vector<8xf32>
    %924 = vector.multi_reduction <maximumf>, %923, %cst_379 [1] : vector<8x8xf32> to vector<8xf32>
    %925 = vector.shape_cast %924 : vector<8xf32> to vector<8x1xf32>
    %926 = vector.broadcast %925 : vector<8x1xf32> to vector<8x8xf32>
    %927 = arith.subf %923, %926 : vector<8x8xf32>
    %928 = math.exp %927 : vector<8x8xf32>
    %cst_380 = arith.constant dense<0.000000e+00> : vector<8xf32>
    %929 = vector.multi_reduction <add>, %928, %cst_380 [1] : vector<8x8xf32> to vector<8xf32>
    %930 = vector.shape_cast %929 : vector<8xf32> to vector<8x1xf32>
    %931 = arith.truncf %928 : vector<8x8xf32> to vector<8x8xbf16>
    %cst_381 = arith.constant dense<0.000000e+00> : vector<8x8xf32>
    %932 = tpu.matmul %931, %920, %cst_381 {dimension_numbers = #tpu.dot_dimension_numbers<[1], [0], [0], [1], [0, 0, 1, 1], [], []>} : vector<8x8xbf16>, vector<8x8xbf16>, vector<8x8xf32> -> vector<8x8xf32>
    %933 = tpu.reciprocal %930 {approx = true} : vector<8x1xf32> -> vector<8x1xf32>
    %934 = vector.broadcast %933 : vector<8x1xf32> to vector<8x8xf32>
    %935 = arith.mulf %932, %934 : vector<8x8xf32>
    %936 = vector.extract_strided_slice %873 {offsets = [0, 24], sizes = [8, 8], strides = [1, 1]} : vector<8x128xbf16> to vector<8x8xbf16>
    %937 = vector.extract_strided_slice %881 {offsets = [0, 24], sizes = [8, 8], strides = [1, 1]} : vector<8x128xbf16> to vector<8x8xbf16>
    %938 = vector.extract_strided_slice %881 {offsets = [0, 56], sizes = [8, 8], strides = [1, 1]} : vector<8x128xbf16> to vector<8x8xbf16>
    "tpu.trace_start"() <{level = 10 : i32, message = "qd,kd->qk"}> : () -> ()
    %cst_382 = arith.constant dense<0.000000e+00> : vector<8x8xf32>
    %939 = tpu.matmul %936, %937, %cst_382 {dimension_numbers = #tpu.dot_dimension_numbers<[1], [1], [0], [0], [0, 0, 1, 0], [], []>} : vector<8x8xbf16>, vector<8x8xbf16>, vector<8x8xf32> -> vector<8x8xf32>
    "tpu.trace_stop"() : () -> ()
    %cst_383 = arith.constant 0.353553385 : f32
    %940 = vector.broadcast %cst_383 : f32 to vector<8x8xf32>
    %941 = arith.mulf %939, %940 : vector<8x8xf32>
    %cst_384 = arith.constant dense<0xFF800000> : vector<8xf32>
    %942 = vector.multi_reduction <maximumf>, %941, %cst_384 [1] : vector<8x8xf32> to vector<8xf32>
    %943 = vector.shape_cast %942 : vector<8xf32> to vector<8x1xf32>
    %944 = vector.broadcast %943 : vector<8x1xf32> to vector<8x8xf32>
    %945 = arith.subf %941, %944 : vector<8x8xf32>
    %946 = math.exp %945 : vector<8x8xf32>
    %cst_385 = arith.constant dense<0.000000e+00> : vector<8xf32>
    %947 = vector.multi_reduction <add>, %946, %cst_385 [1] : vector<8x8xf32> to vector<8xf32>
    %948 = vector.shape_cast %947 : vector<8xf32> to vector<8x1xf32>
    %949 = arith.truncf %946 : vector<8x8xf32> to vector<8x8xbf16>
    %cst_386 = arith.constant dense<0.000000e+00> : vector<8x8xf32>
    %950 = tpu.matmul %949, %938, %cst_386 {dimension_numbers = #tpu.dot_dimension_numbers<[1], [0], [0], [1], [0, 0, 1, 1], [], []>} : vector<8x8xbf16>, vector<8x8xbf16>, vector<8x8xf32> -> vector<8x8xf32>
    %951 = tpu.reciprocal %948 {approx = true} : vector<8x1xf32> -> vector<8x1xf32>
    %952 = vector.broadcast %951 : vector<8x1xf32> to vector<8x8xf32>
    %953 = arith.mulf %950, %952 : vector<8x8xf32>
    %954 = tpu.concatenate %899, %917, %935, %953 in 1 : vector<8x8xf32>, vector<8x8xf32>, vector<8x8xf32>, vector<8x8xf32> -> vector<8x32xf32>
    %955 = arith.truncf %954 : vector<8x32xf32> to vector<8x32xbf16>
    %c1_387 = arith.constant 1 : index
    %c0_388 = arith.constant 0 : index
    %c0_389 = arith.constant 0 : index
    %956 = vector.load %arg27[%c1_387, %c0_388, %c0_389] : memref<2x32x128xbf16, #tpu.memory_space<vmem>>, vector<1x32x128xbf16>
    %957 = vector.shape_cast %956 : vector<1x32x128xbf16> to vector<32x128xbf16>
    %cst_390 = arith.constant dense<0.000000e+00> : vector<8x128xf32>
    %958 = tpu.matmul %955, %957, %cst_390 {dimension_numbers = #tpu.dot_dimension_numbers<[1], [0], [0], [1], [0, 0, 1, 1], [], []>} : vector<8x32xbf16>, vector<32x128xbf16>, vector<8x128xf32> -> vector<8x128xf32>
    %c1_391 = arith.constant 1 : index
    %c0_392 = arith.constant 0 : index
    %c0_393 = arith.constant 0 : index
    %959 = vector.load %arg28[%c1_391, %c0_392, %c0_393] : memref<2x1x128xf32, #tpu.memory_space<vmem>>, vector<1x1x128xf32>
    %960 = vector.shape_cast %959 : vector<1x1x128xf32> to vector<1x128xf32>
    %961 = vector.broadcast %960 : vector<1x128xf32> to vector<8x128xf32>
    %962 = arith.addf %958, %961 : vector<8x128xf32>
    %963 = arith.addf %864, %962 : vector<8x128xf32>
    %c1_394 = arith.constant 1 : index
    %c0_395 = arith.constant 0 : index
    %c0_396 = arith.constant 0 : index
    %964 = vector.load %arg31[%c1_394, %c0_395, %c0_396] : memref<2x1x128xf32, #tpu.memory_space<vmem>>, vector<1x1x128xf32>
    %965 = vector.shape_cast %964 : vector<1x1x128xf32> to vector<1x128xf32>
    %c1_397 = arith.constant 1 : index
    %c0_398 = arith.constant 0 : index
    %c0_399 = arith.constant 0 : index
    %966 = vector.load %arg32[%c1_397, %c0_398, %c0_399] : memref<2x1x128xf32, #tpu.memory_space<vmem>>, vector<1x1x128xf32>
    %967 = vector.shape_cast %966 : vector<1x1x128xf32> to vector<1x128xf32>
    %cst_400 = arith.constant 0.000000e+00 : f32
    %968 = vector.shape_cast %14 : vector<1x128xi1> to vector<1x128xi1>
    %969 = vector.broadcast %968 : vector<1x128xi1> to vector<8x128xi1>
    %970 = vector.broadcast %cst_400 : f32 to vector<8x128xf32>
    %971 = arith.select %969, %963, %970 : vector<8x128xi1>, vector<8x128xf32>
    %cst_401 = arith.constant dense<0.000000e+00> : vector<8xf32>
    %972 = vector.multi_reduction <add>, %971, %cst_401 [1] : vector<8x128xf32> to vector<8xf32>
    %973 = vector.shape_cast %972 : vector<8xf32> to vector<8x1xf32>
    %cst_402 = arith.constant 3.125000e-02 : f32
    %974 = vector.broadcast %cst_402 : f32 to vector<8x1xf32>
    %975 = arith.mulf %973, %974 : vector<8x1xf32>
    %976 = vector.broadcast %975 : vector<8x1xf32> to vector<8x128xf32>
    %977 = arith.subf %963, %976 : vector<8x128xf32>
    %cst_403 = arith.constant 0.000000e+00 : f32
    %978 = vector.shape_cast %14 : vector<1x128xi1> to vector<1x128xi1>
    %979 = vector.broadcast %978 : vector<1x128xi1> to vector<8x128xi1>
    %980 = vector.broadcast %cst_403 : f32 to vector<8x128xf32>
    %981 = arith.select %979, %977, %980 : vector<8x128xi1>, vector<8x128xf32>
    %982 = arith.mulf %981, %981 : vector<8x128xf32>
    %cst_404 = arith.constant dense<0.000000e+00> : vector<8xf32>
    %983 = vector.multi_reduction <add>, %982, %cst_404 [1] : vector<8x128xf32> to vector<8xf32>
    %984 = vector.shape_cast %983 : vector<8xf32> to vector<8x1xf32>
    %cst_405 = arith.constant 3.125000e-02 : f32
    %985 = vector.broadcast %cst_405 : f32 to vector<8x1xf32>
    %986 = arith.mulf %984, %985 : vector<8x1xf32>
    %cst_406 = arith.constant 9.99999974E-6 : f32
    %987 = vector.broadcast %cst_406 : f32 to vector<8x1xf32>
    %988 = arith.addf %986, %987 : vector<8x1xf32>
    %989 = math.rsqrt %988 : vector<8x1xf32>
    %990 = vector.broadcast %989 : vector<8x1xf32> to vector<8x128xf32>
    %991 = arith.mulf %977, %990 : vector<8x128xf32>
    %992 = vector.broadcast %965 : vector<1x128xf32> to vector<8x128xf32>
    %993 = arith.mulf %991, %992 : vector<8x128xf32>
    %994 = vector.broadcast %967 : vector<1x128xf32> to vector<8x128xf32>
    %995 = arith.addf %993, %994 : vector<8x128xf32>
    %996 = arith.truncf %995 : vector<8x128xf32> to vector<8x128xbf16>
    %c1_407 = arith.constant 1 : index
    %c0_408 = arith.constant 0 : index
    %c0_409 = arith.constant 0 : index
    %997 = vector.load %arg35[%c1_407, %c0_408, %c0_409] : memref<2x128x128xbf16, #tpu.memory_space<vmem>>, vector<1x128x128xbf16>
    %998 = vector.shape_cast %997 : vector<1x128x128xbf16> to vector<128x128xbf16>
    %cst_410 = arith.constant dense<0.000000e+00> : vector<8x128xf32>
    %999 = tpu.matmul %996, %998, %cst_410 {dimension_numbers = #tpu.dot_dimension_numbers<[1], [0], [0], [1], [0, 0, 1, 1], [], []>} : vector<8x128xbf16>, vector<128x128xbf16>, vector<8x128xf32> -> vector<8x128xf32>
    %c1_411 = arith.constant 1 : index
    %c0_412 = arith.constant 0 : index
    %c0_413 = arith.constant 0 : index
    %1000 = vector.load %arg36[%c1_411, %c0_412, %c0_413] : memref<2x1x128xf32, #tpu.memory_space<vmem>>, vector<1x1x128xf32>
    %1001 = vector.shape_cast %1000 : vector<1x1x128xf32> to vector<1x128xf32>
    %1002 = vector.broadcast %1001 : vector<1x128xf32> to vector<8x128xf32>
    %1003 = arith.addf %999, %1002 : vector<8x128xf32>
    %cst_414 = arith.constant 0.000000e+00 : f32
    %1004 = vector.broadcast %cst_414 : f32 to vector<8x128xf32>
    %1005 = arith.maximumf %1003, %1004 : vector<8x128xf32>
    %1006 = arith.truncf %1005 : vector<8x128xf32> to vector<8x128xbf16>
    %c1_415 = arith.constant 1 : index
    %c0_416 = arith.constant 0 : index
    %c0_417 = arith.constant 0 : index
    %1007 = vector.load %arg37[%c1_415, %c0_416, %c0_417] : memref<2x128x128xbf16, #tpu.memory_space<vmem>>, vector<1x128x128xbf16>
    %1008 = vector.shape_cast %1007 : vector<1x128x128xbf16> to vector<128x128xbf16>
    %cst_418 = arith.constant dense<0.000000e+00> : vector<8x128xf32>
    %1009 = tpu.matmul %1006, %1008, %cst_418 {dimension_numbers = #tpu.dot_dimension_numbers<[1], [0], [0], [1], [0, 0, 1, 1], [], []>} : vector<8x128xbf16>, vector<128x128xbf16>, vector<8x128xf32> -> vector<8x128xf32>
    %c1_419 = arith.constant 1 : index
    %c0_420 = arith.constant 0 : index
    %c0_421 = arith.constant 0 : index
    %1010 = vector.load %arg38[%c1_419, %c0_420, %c0_421] : memref<2x1x128xf32, #tpu.memory_space<vmem>>, vector<1x1x128xf32>
    %1011 = vector.shape_cast %1010 : vector<1x1x128xf32> to vector<1x128xf32>
    %1012 = vector.broadcast %1011 : vector<1x128xf32> to vector<8x128xf32>
    %1013 = arith.addf %1009, %1012 : vector<8x128xf32>
    %1014 = arith.addf %995, %1013 : vector<8x128xf32>
    %c1_422 = arith.constant 1 : index
    %c0_423 = arith.constant 0 : index
    %c0_424 = arith.constant 0 : index
    %1015 = vector.load %arg33[%c1_422, %c0_423, %c0_424] : memref<2x1x128xf32, #tpu.memory_space<vmem>>, vector<1x1x128xf32>
    %1016 = vector.shape_cast %1015 : vector<1x1x128xf32> to vector<1x128xf32>
    %c1_425 = arith.constant 1 : index
    %c0_426 = arith.constant 0 : index
    %c0_427 = arith.constant 0 : index
    %1017 = vector.load %arg34[%c1_425, %c0_426, %c0_427] : memref<2x1x128xf32, #tpu.memory_space<vmem>>, vector<1x1x128xf32>
    %1018 = vector.shape_cast %1017 : vector<1x1x128xf32> to vector<1x128xf32>
    %cst_428 = arith.constant 0.000000e+00 : f32
    %1019 = vector.shape_cast %14 : vector<1x128xi1> to vector<1x128xi1>
    %1020 = vector.broadcast %1019 : vector<1x128xi1> to vector<8x128xi1>
    %1021 = vector.broadcast %cst_428 : f32 to vector<8x128xf32>
    %1022 = arith.select %1020, %1014, %1021 : vector<8x128xi1>, vector<8x128xf32>
    %cst_429 = arith.constant dense<0.000000e+00> : vector<8xf32>
    %1023 = vector.multi_reduction <add>, %1022, %cst_429 [1] : vector<8x128xf32> to vector<8xf32>
    %1024 = vector.shape_cast %1023 : vector<8xf32> to vector<8x1xf32>
    %cst_430 = arith.constant 3.125000e-02 : f32
    %1025 = vector.broadcast %cst_430 : f32 to vector<8x1xf32>
    %1026 = arith.mulf %1024, %1025 : vector<8x1xf32>
    %1027 = vector.broadcast %1026 : vector<8x1xf32> to vector<8x128xf32>
    %1028 = arith.subf %1014, %1027 : vector<8x128xf32>
    %cst_431 = arith.constant 0.000000e+00 : f32
    %1029 = vector.shape_cast %14 : vector<1x128xi1> to vector<1x128xi1>
    %1030 = vector.broadcast %1029 : vector<1x128xi1> to vector<8x128xi1>
    %1031 = vector.broadcast %cst_431 : f32 to vector<8x128xf32>
    %1032 = arith.select %1030, %1028, %1031 : vector<8x128xi1>, vector<8x128xf32>
    %1033 = arith.mulf %1032, %1032 : vector<8x128xf32>
    %cst_432 = arith.constant dense<0.000000e+00> : vector<8xf32>
    %1034 = vector.multi_reduction <add>, %1033, %cst_432 [1] : vector<8x128xf32> to vector<8xf32>
    %1035 = vector.shape_cast %1034 : vector<8xf32> to vector<8x1xf32>
    %cst_433 = arith.constant 3.125000e-02 : f32
    %1036 = vector.broadcast %cst_433 : f32 to vector<8x1xf32>
    %1037 = arith.mulf %1035, %1036 : vector<8x1xf32>
    %cst_434 = arith.constant 9.99999974E-6 : f32
    %1038 = vector.broadcast %cst_434 : f32 to vector<8x1xf32>
    %1039 = arith.addf %1037, %1038 : vector<8x1xf32>
    %1040 = math.rsqrt %1039 : vector<8x1xf32>
    %1041 = vector.broadcast %1040 : vector<8x1xf32> to vector<8x128xf32>
    %1042 = arith.mulf %1028, %1041 : vector<8x128xf32>
    %1043 = vector.broadcast %1016 : vector<1x128xf32> to vector<8x128xf32>
    %1044 = arith.mulf %1042, %1043 : vector<8x128xf32>
    %1045 = vector.broadcast %1018 : vector<1x128xf32> to vector<8x128xf32>
    %1046 = arith.addf %1044, %1045 : vector<8x128xf32>
    %c0_435 = arith.constant 0 : index
    %c0_436 = arith.constant 0 : index
    %1047 = vector.load %arg39[%c0_435, %c0_436] : memref<1x128xf32, #tpu.memory_space<vmem>>, vector<1x128xf32>
    %c0_437 = arith.constant 0 : index
    %c0_438 = arith.constant 0 : index
    %1048 = vector.load %arg40[%c0_437, %c0_438] : memref<1x128xf32, #tpu.memory_space<vmem>>, vector<1x128xf32>
    %cst_439 = arith.constant 0.000000e+00 : f32
    %1049 = vector.shape_cast %14 : vector<1x128xi1> to vector<1x128xi1>
    %1050 = vector.broadcast %1049 : vector<1x128xi1> to vector<8x128xi1>
    %1051 = vector.broadcast %cst_439 : f32 to vector<8x128xf32>
    %1052 = arith.select %1050, %1046, %1051 : vector<8x128xi1>, vector<8x128xf32>
    %cst_440 = arith.constant dense<0.000000e+00> : vector<8xf32>
    %1053 = vector.multi_reduction <add>, %1052, %cst_440 [1] : vector<8x128xf32> to vector<8xf32>
    %1054 = vector.shape_cast %1053 : vector<8xf32> to vector<8x1xf32>
    %cst_441 = arith.constant 3.125000e-02 : f32
    %1055 = vector.broadcast %cst_441 : f32 to vector<8x1xf32>
    %1056 = arith.mulf %1054, %1055 : vector<8x1xf32>
    %1057 = vector.broadcast %1056 : vector<8x1xf32> to vector<8x128xf32>
    %1058 = arith.subf %1046, %1057 : vector<8x128xf32>
    %cst_442 = arith.constant 0.000000e+00 : f32
    %1059 = vector.shape_cast %14 : vector<1x128xi1> to vector<1x128xi1>
    %1060 = vector.broadcast %1059 : vector<1x128xi1> to vector<8x128xi1>
    %1061 = vector.broadcast %cst_442 : f32 to vector<8x128xf32>
    %1062 = arith.select %1060, %1058, %1061 : vector<8x128xi1>, vector<8x128xf32>
    %1063 = arith.mulf %1062, %1062 : vector<8x128xf32>
    %cst_443 = arith.constant dense<0.000000e+00> : vector<8xf32>
    %1064 = vector.multi_reduction <add>, %1063, %cst_443 [1] : vector<8x128xf32> to vector<8xf32>
    %1065 = vector.shape_cast %1064 : vector<8xf32> to vector<8x1xf32>
    %cst_444 = arith.constant 3.125000e-02 : f32
    %1066 = vector.broadcast %cst_444 : f32 to vector<8x1xf32>
    %1067 = arith.mulf %1065, %1066 : vector<8x1xf32>
    %cst_445 = arith.constant 9.99999974E-6 : f32
    %1068 = vector.broadcast %cst_445 : f32 to vector<8x1xf32>
    %1069 = arith.addf %1067, %1068 : vector<8x1xf32>
    %1070 = math.rsqrt %1069 : vector<8x1xf32>
    %1071 = vector.broadcast %1070 : vector<8x1xf32> to vector<8x128xf32>
    %1072 = arith.mulf %1058, %1071 : vector<8x128xf32>
    %1073 = vector.broadcast %1047 : vector<1x128xf32> to vector<8x128xf32>
    %1074 = arith.mulf %1072, %1073 : vector<8x128xf32>
    %1075 = vector.broadcast %1048 : vector<1x128xf32> to vector<8x128xf32>
    %1076 = arith.addf %1074, %1075 : vector<8x128xf32>
    %1077 = arith.truncf %1076 : vector<8x128xf32> to vector<8x128xbf16>
    %c0_446 = arith.constant 0 : index
    %c0_447 = arith.constant 0 : index
    %1078 = vector.load %arg41[%c0_446, %c0_447] : memref<128x128xbf16, #tpu.memory_space<vmem>>, vector<128x128xbf16>
    %cst_448 = arith.constant dense<0.000000e+00> : vector<8x128xf32>
    %1079 = tpu.matmul %1077, %1078, %cst_448 {dimension_numbers = #tpu.dot_dimension_numbers<[1], [0], [0], [1], [0, 0, 1, 1], [], []>} : vector<8x128xbf16>, vector<128x128xbf16>, vector<8x128xf32> -> vector<8x128xf32>
    %c0_449 = arith.constant 0 : index
    %c0_450 = arith.constant 0 : index
    %1080 = vector.load %arg42[%c0_449, %c0_450] : memref<1x128xf32, #tpu.memory_space<vmem>>, vector<1x128xf32>
    %1081 = vector.broadcast %1080 : vector<1x128xf32> to vector<8x128xf32>
    %1082 = arith.addf %1079, %1081 : vector<8x128xf32>
    %c0_451 = arith.constant 0 : index
    %c0_452 = arith.constant 0 : index
    %c0_453 = arith.constant 0 : index
    %1083 = vector.load %arg43[%c0_451, %c0_452, %c0_453] : memref<1x8x128xf32, #tpu.memory_space<vmem>>, vector<1x8x128xf32>
    %1084 = vector.shape_cast %1083 : vector<1x8x128xf32> to vector<8x128xf32>
    %1085 = vector.shape_cast %1082 : vector<8x128xf32> to vector<1x8x128xf32>
    tpu.vector_store %arg43[%c0_451, %c0_452, %c0_453], %1085 {strides = array<i32>} : memref<1x8x128xf32, #tpu.memory_space<vmem>>, vector<1x8x128xf32>,
    return
  }
  func.func @transform_0(%arg0: i32) -> (i32, i32, i32) {
    %c0_i32 = arith.constant 0 : i32
    %c0_i32_0 = arith.constant 0 : i32
    %c0_i32_1 = arith.constant 0 : i32
    return %arg0, %c0_i32, %c0_i32_0 : i32, i32, i32
  }
  func.func @transform_1(%arg0: i32) -> (i32, i32, i32) {
    %c0_i32 = arith.constant 0 : i32
    %c0_i32_0 = arith.constant 0 : i32
    %c0_i32_1 = arith.constant 0 : i32
    return %arg0, %c0_i32, %c0_i32_0 : i32, i32, i32
  }
  func.func @transform_2(%arg0: i32) -> (i32, i32, i32) {
    %c0_i32 = arith.constant 0 : i32
    %c0_i32_0 = arith.constant 0 : i32
    %c0_i32_1 = arith.constant 0 : i32
    return %arg0, %c0_i32, %c0_i32_0 : i32, i32, i32
  }
  func.func @transform_3(%arg0: i32) -> (i32, i32) {
    %c0_i32 = arith.constant 0 : i32
    %c0_i32_0 = arith.constant 0 : i32
    %c0_i32_1 = arith.constant 0 : i32
    return %c0_i32, %c0_i32_0 : i32, i32
  }
  func.func @transform_4(%arg0: i32) -> (i32, i32, i32) {
    %c0_i32 = arith.constant 0 : i32
    %c0_i32_0 = arith.constant 0 : i32
    %c0_i32_1 = arith.constant 0 : i32
    %c0_i32_2 = arith.constant 0 : i32
    return %c0_i32, %c0_i32_0, %c0_i32_1 : i32, i32, i32
  }
  func.func @transform_5(%arg0: i32) -> (i32, i32, i32) {
    %c0_i32 = arith.constant 0 : i32
    %c0_i32_0 = arith.constant 0 : i32
    %c0_i32_1 = arith.constant 0 : i32
    %c0_i32_2 = arith.constant 0 : i32
    return %c0_i32, %c0_i32_0, %c0_i32_1 : i32, i32, i32
  }
  func.func @transform_6(%arg0: i32) -> (i32, i32, i32) {
    %c0_i32 = arith.constant 0 : i32
    %c0_i32_0 = arith.constant 0 : i32
    %c0_i32_1 = arith.constant 0 : i32
    %c0_i32_2 = arith.constant 0 : i32
    return %c0_i32, %c0_i32_0, %c0_i32_1 : i32, i32, i32
  }
  func.func @transform_7(%arg0: i32) -> (i32, i32, i32) {
    %c0_i32 = arith.constant 0 : i32
    %c0_i32_0 = arith.constant 0 : i32
    %c0_i32_1 = arith.constant 0 : i32
    %c0_i32_2 = arith.constant 0 : i32
    return %c0_i32, %c0_i32_0, %c0_i32_1 : i32, i32, i32
  }
  func.func @transform_8(%arg0: i32) -> (i32, i32, i32) {
    %c0_i32 = arith.constant 0 : i32
    %c0_i32_0 = arith.constant 0 : i32
    %c0_i32_1 = arith.constant 0 : i32
    %c0_i32_2 = arith.constant 0 : i32
    return %c0_i32, %c0_i32_0, %c0_i32_1 : i32, i32, i32
  }
  func.func @transform_9(%arg0: i32) -> (i32, i32, i32) {
    %c0_i32 = arith.constant 0 : i32
    %c0_i32_0 = arith.constant 0 : i32
    %c0_i32_1 = arith.constant 0 : i32
    %c0_i32_2 = arith.constant 0 : i32
    return %c0_i32, %c0_i32_0, %c0_i32_1 : i32, i32, i32
  }
  func.func @transform_10(%arg0: i32) -> (i32, i32, i32) {
    %c0_i32 = arith.constant 0 : i32
    %c0_i32_0 = arith.constant 0 : i32
    %c0_i32_1 = arith.constant 0 : i32
    %c0_i32_2 = arith.constant 0 : i32
    return %c0_i32, %c0_i32_0, %c0_i32_1 : i32, i32, i32
  }
  func.func @transform_11(%arg0: i32) -> (i32, i32, i32) {
    %c0_i32 = arith.constant 0 : i32
    %c0_i32_0 = arith.constant 0 : i32
    %c0_i32_1 = arith.constant 0 : i32
    %c0_i32_2 = arith.constant 0 : i32
    return %c0_i32, %c0_i32_0, %c0_i32_1 : i32, i32, i32
  }
  func.func @transform_12(%arg0: i32) -> (i32, i32, i32) {
    %c0_i32 = arith.constant 0 : i32
    %c0_i32_0 = arith.constant 0 : i32
    %c0_i32_1 = arith.constant 0 : i32
    %c0_i32_2 = arith.constant 0 : i32
    return %c0_i32, %c0_i32_0, %c0_i32_1 : i32, i32, i32
  }
  func.func @transform_13(%arg0: i32) -> (i32, i32, i32) {
    %c0_i32 = arith.constant 0 : i32
    %c0_i32_0 = arith.constant 0 : i32
    %c0_i32_1 = arith.constant 0 : i32
    %c0_i32_2 = arith.constant 0 : i32
    return %c0_i32, %c0_i32_0, %c0_i32_1 : i32, i32, i32
  }
  func.func @transform_14(%arg0: i32) -> (i32, i32, i32) {
    %c0_i32 = arith.constant 0 : i32
    %c0_i32_0 = arith.constant 0 : i32
    %c0_i32_1 = arith.constant 0 : i32
    %c0_i32_2 = arith.constant 0 : i32
    return %c0_i32, %c0_i32_0, %c0_i32_1 : i32, i32, i32
  }
  func.func @transform_15(%arg0: i32) -> (i32, i32, i32) {
    %c0_i32 = arith.constant 0 : i32
    %c0_i32_0 = arith.constant 0 : i32
    %c0_i32_1 = arith.constant 0 : i32
    %c0_i32_2 = arith.constant 0 : i32
    return %c0_i32, %c0_i32_0, %c0_i32_1 : i32, i32, i32
  }
  func.func @transform_16(%arg0: i32) -> (i32, i32) {
    %c0_i32 = arith.constant 0 : i32
    %c0_i32_0 = arith.constant 0 : i32
    %c0_i32_1 = arith.constant 0 : i32
    return %c0_i32, %c0_i32_0 : i32, i32
  }
  func.func @transform_17(%arg0: i32) -> (i32, i32) {
    %c0_i32 = arith.constant 0 : i32
    %c0_i32_0 = arith.constant 0 : i32
    %c0_i32_1 = arith.constant 0 : i32
    return %c0_i32, %c0_i32_0 : i32, i32
  }
  func.func @transform_18(%arg0: i32) -> (i32, i32, i32) {
    %c0_i32 = arith.constant 0 : i32
    %c0_i32_0 = arith.constant 0 : i32
    %c0_i32_1 = arith.constant 0 : i32
    %c0_i32_2 = arith.constant 0 : i32
    return %c0_i32, %c0_i32_0, %c0_i32_1 : i32, i32, i32
  }
  func.func @transform_19(%arg0: i32) -> (i32, i32, i32) {
    %c0_i32 = arith.constant 0 : i32
    %c0_i32_0 = arith.constant 0 : i32
    %c0_i32_1 = arith.constant 0 : i32
    %c0_i32_2 = arith.constant 0 : i32
    return %c0_i32, %c0_i32_0, %c0_i32_1 : i32, i32, i32
  }
  func.func @transform_20(%arg0: i32) -> (i32, i32, i32) {
    %c0_i32 = arith.constant 0 : i32
    %c0_i32_0 = arith.constant 0 : i32
    %c0_i32_1 = arith.constant 0 : i32
    %c0_i32_2 = arith.constant 0 : i32
    return %c0_i32, %c0_i32_0, %c0_i32_1 : i32, i32, i32
  }
  func.func @transform_21(%arg0: i32) -> (i32, i32, i32) {
    %c0_i32 = arith.constant 0 : i32
    %c0_i32_0 = arith.constant 0 : i32
    %c0_i32_1 = arith.constant 0 : i32
    %c0_i32_2 = arith.constant 0 : i32
    return %c0_i32, %c0_i32_0, %c0_i32_1 : i32, i32, i32
  }
  func.func @transform_22(%arg0: i32) -> (i32, i32, i32) {
    %c0_i32 = arith.constant 0 : i32
    %c0_i32_0 = arith.constant 0 : i32
    %c0_i32_1 = arith.constant 0 : i32
    %c0_i32_2 = arith.constant 0 : i32
    return %c0_i32, %c0_i32_0, %c0_i32_1 : i32, i32, i32
  }
  func.func @transform_23(%arg0: i32) -> (i32, i32, i32) {
    %c0_i32 = arith.constant 0 : i32
    %c0_i32_0 = arith.constant 0 : i32
    %c0_i32_1 = arith.constant 0 : i32
    %c0_i32_2 = arith.constant 0 : i32
    return %c0_i32, %c0_i32_0, %c0_i32_1 : i32, i32, i32
  }
  func.func @transform_24(%arg0: i32) -> (i32, i32, i32) {
    %c0_i32 = arith.constant 0 : i32
    %c0_i32_0 = arith.constant 0 : i32
    %c0_i32_1 = arith.constant 0 : i32
    %c0_i32_2 = arith.constant 0 : i32
    return %c0_i32, %c0_i32_0, %c0_i32_1 : i32, i32, i32
  }
  func.func @transform_25(%arg0: i32) -> (i32, i32, i32) {
    %c0_i32 = arith.constant 0 : i32
    %c0_i32_0 = arith.constant 0 : i32
    %c0_i32_1 = arith.constant 0 : i32
    %c0_i32_2 = arith.constant 0 : i32
    return %c0_i32, %c0_i32_0, %c0_i32_1 : i32, i32, i32
  }
  func.func @transform_26(%arg0: i32) -> (i32, i32, i32) {
    %c0_i32 = arith.constant 0 : i32
    %c0_i32_0 = arith.constant 0 : i32
    %c0_i32_1 = arith.constant 0 : i32
    %c0_i32_2 = arith.constant 0 : i32
    return %c0_i32, %c0_i32_0, %c0_i32_1 : i32, i32, i32
  }
  func.func @transform_27(%arg0: i32) -> (i32, i32, i32) {
    %c0_i32 = arith.constant 0 : i32
    %c0_i32_0 = arith.constant 0 : i32
    %c0_i32_1 = arith.constant 0 : i32
    %c0_i32_2 = arith.constant 0 : i32
    return %c0_i32, %c0_i32_0, %c0_i32_1 : i32, i32, i32
  }
  func.func @transform_28(%arg0: i32) -> (i32, i32, i32) {
    %c0_i32 = arith.constant 0 : i32
    %c0_i32_0 = arith.constant 0 : i32
    %c0_i32_1 = arith.constant 0 : i32
    %c0_i32_2 = arith.constant 0 : i32
    return %c0_i32, %c0_i32_0, %c0_i32_1 : i32, i32, i32
  }
  func.func @transform_29(%arg0: i32) -> (i32, i32, i32) {
    %c0_i32 = arith.constant 0 : i32
    %c0_i32_0 = arith.constant 0 : i32
    %c0_i32_1 = arith.constant 0 : i32
    %c0_i32_2 = arith.constant 0 : i32
    return %c0_i32, %c0_i32_0, %c0_i32_1 : i32, i32, i32
  }
  func.func @transform_30(%arg0: i32) -> (i32, i32, i32) {
    %c0_i32 = arith.constant 0 : i32
    %c0_i32_0 = arith.constant 0 : i32
    %c0_i32_1 = arith.constant 0 : i32
    %c0_i32_2 = arith.constant 0 : i32
    return %c0_i32, %c0_i32_0, %c0_i32_1 : i32, i32, i32
  }
  func.func @transform_31(%arg0: i32) -> (i32, i32, i32) {
    %c0_i32 = arith.constant 0 : i32
    %c0_i32_0 = arith.constant 0 : i32
    %c0_i32_1 = arith.constant 0 : i32
    %c0_i32_2 = arith.constant 0 : i32
    return %c0_i32, %c0_i32_0, %c0_i32_1 : i32, i32, i32
  }
  func.func @transform_32(%arg0: i32) -> (i32, i32, i32) {
    %c0_i32 = arith.constant 0 : i32
    %c0_i32_0 = arith.constant 0 : i32
    %c0_i32_1 = arith.constant 0 : i32
    %c0_i32_2 = arith.constant 0 : i32
    return %c0_i32, %c0_i32_0, %c0_i32_1 : i32, i32, i32
  }
  func.func @transform_33(%arg0: i32) -> (i32, i32, i32) {
    %c0_i32 = arith.constant 0 : i32
    %c0_i32_0 = arith.constant 0 : i32
    %c0_i32_1 = arith.constant 0 : i32
    %c0_i32_2 = arith.constant 0 : i32
    return %c0_i32, %c0_i32_0, %c0_i32_1 : i32, i32, i32
  }
  func.func @transform_34(%arg0: i32) -> (i32, i32, i32) {
    %c0_i32 = arith.constant 0 : i32
    %c0_i32_0 = arith.constant 0 : i32
    %c0_i32_1 = arith.constant 0 : i32
    %c0_i32_2 = arith.constant 0 : i32
    return %c0_i32, %c0_i32_0, %c0_i32_1 : i32, i32, i32
  }
  func.func @transform_35(%arg0: i32) -> (i32, i32, i32) {
    %c0_i32 = arith.constant 0 : i32
    %c0_i32_0 = arith.constant 0 : i32
    %c0_i32_1 = arith.constant 0 : i32
    %c0_i32_2 = arith.constant 0 : i32
    return %c0_i32, %c0_i32_0, %c0_i32_1 : i32, i32, i32
  }
  func.func @transform_36(%arg0: i32) -> (i32, i32, i32) {
    %c0_i32 = arith.constant 0 : i32
    %c0_i32_0 = arith.constant 0 : i32
    %c0_i32_1 = arith.constant 0 : i32
    %c0_i32_2 = arith.constant 0 : i32
    return %c0_i32, %c0_i32_0, %c0_i32_1 : i32, i32, i32
  }
  func.func @transform_37(%arg0: i32) -> (i32, i32, i32) {
    %c0_i32 = arith.constant 0 : i32
    %c0_i32_0 = arith.constant 0 : i32
    %c0_i32_1 = arith.constant 0 : i32
    %c0_i32_2 = arith.constant 0 : i32
    return %c0_i32, %c0_i32_0, %c0_i32_1 : i32, i32, i32
  }
  func.func @transform_38(%arg0: i32) -> (i32, i32) {
    %c0_i32 = arith.constant 0 : i32
    %c0_i32_0 = arith.constant 0 : i32
    %c0_i32_1 = arith.constant 0 : i32
    return %c0_i32, %c0_i32_0 : i32, i32
  }
  func.func @transform_39(%arg0: i32) -> (i32, i32) {
    %c0_i32 = arith.constant 0 : i32
    %c0_i32_0 = arith.constant 0 : i32
    %c0_i32_1 = arith.constant 0 : i32
    return %c0_i32, %c0_i32_0 : i32, i32
  }
  func.func @transform_40(%arg0: i32) -> (i32, i32) {
    %c0_i32 = arith.constant 0 : i32
    %c0_i32_0 = arith.constant 0 : i32
    %c0_i32_1 = arith.constant 0 : i32
    return %c0_i32, %c0_i32_0 : i32, i32
  }
  func.func @transform_41(%arg0: i32) -> (i32, i32) {
    %c0_i32 = arith.constant 0 : i32
    %c0_i32_0 = arith.constant 0 : i32
    %c0_i32_1 = arith.constant 0 : i32
    return %c0_i32, %c0_i32_0 : i32, i32
  }
  func.func @transform_42(%arg0: i32) -> (i32, i32, i32) {
    %c0_i32 = arith.constant 0 : i32
    %c0_i32_0 = arith.constant 0 : i32
    %c0_i32_1 = arith.constant 0 : i32
    return %arg0, %c0_i32, %c0_i32_0 : i32, i32, i32
  }
}

</mosaic_0001>

<llo_original>
// kernel: forward.1
$region0: #{forward.1}
  #allocation0 [shape = 'u32[]', space=smem, size = 0x4, offset = 0x4, fixed_abs, tag = 'smem constant byte address 0x4 - core index']
  #allocation1 [shape = 'u32[144,128]{1,0:T(1,128)}', space=vmem, size = 0x12000, scoped, tag = 'internal scratch']
  %s0 = inlined_call_operand.smem [shape: u32[43], index: -1, kind: input, shape index: {}]
  %s1 = sld [smem:[%s0]]
  %s2 = scalar_lea.smem %s0, 1
  %s3 = sld [smem:[%s2]]
  %s4 = scalar_lea.smem %s0, 2
  %s5 = sld [smem:[%s4]]
  %s6 = scalar_lea.smem %s0, 3
  %s7 = sld [smem:[%s6]]
  %s8 = scalar_lea.smem %s0, 4
  %s9 = sld [smem:[%s8]]
  %s10 = scalar_lea.smem %s0, 5
  %s11 = sld [smem:[%s10]]
  %s12 = scalar_lea.smem %s0, 6
  %s13 = sld [smem:[%s12]]
  %s14 = scalar_lea.smem %s0, 7
  %s15 = sld [smem:[%s14]]
  %s16 = scalar_lea.smem %s0, 8
  %s17 = sld [smem:[%s16]]
  %s18 = scalar_lea.smem %s0, 9
  %s19 = sld [smem:[%s18]]
  %s20 = scalar_lea.smem %s0, 10
  %s21 = sld [smem:[%s20]]
  %s22 = scalar_lea.smem %s0, 11
  %s23 = sld [smem:[%s22]]
  %s24 = scalar_lea.smem %s0, 12
  %s25 = sld [smem:[%s24]]
  %s26 = scalar_lea.smem %s0, 13
  %s27 = sld [smem:[%s26]]
  %s28 = scalar_lea.smem %s0, 14
  %s29 = sld [smem:[%s28]]
  %s30 = scalar_lea.smem %s0, 15
  %s31 = sld [smem:[%s30]]
  %s32 = scalar_lea.smem %s0, 16
  %s33 = sld [smem:[%s32]]
  %s34 = scalar_lea.smem %s0, 17
  %s35 = sld [smem:[%s34]]
  %s36 = scalar_lea.smem %s0, 18
  %s37 = sld [smem:[%s36]]
  %s38 = scalar_lea.smem %s0, 19
  %s39 = sld [smem:[%s38]]
  %s40 = scalar_lea.smem %s0, 20
  %s41 = sld [smem:[%s40]]
  %s42 = scalar_lea.smem %s0, 21
  %s43 = sld [smem:[%s42]]
  %s44 = scalar_lea.smem %s0, 22
  %s45 = sld [smem:[%s44]]
  %s46 = scalar_lea.smem %s0, 23
  %s47 = sld [smem:[%s46]]
  %s48 = scalar_lea.smem %s0, 24
  %s49 = sld [smem:[%s48]]
  %s50 = scalar_lea.smem %s0, 25
  %s51 = sld [smem:[%s50]]
  %s52 = scalar_lea.smem %s0, 26
  %s53 = sld [smem:[%s52]]
  %s54 = scalar_lea.smem %s0, 27
  %s55 = sld [smem:[%s54]]
  %s56 = scalar_lea.smem %s0, 28
  %s57 = sld [smem:[%s56]]
  %s58 = scalar_lea.smem %s0, 29
  %s59 = sld [smem:[%s58]]
  %s60 = scalar_lea.smem %s0, 30
  %s61 = sld [smem:[%s60]]
  %s62 = scalar_lea.smem %s0, 31
  %s63 = sld [smem:[%s62]]
  %s64 = scalar_lea.smem %s0, 32
  %s65 = sld [smem:[%s64]]
  %s66 = scalar_lea.smem %s0, 33
  %s67 = sld [smem:[%s66]]
  %s68 = scalar_lea.smem %s0, 34
  %s69 = sld [smem:[%s68]]
  %s70 = scalar_lea.smem %s0, 35
  %s71 = sld [smem:[%s70]]
  %s72 = scalar_lea.smem %s0, 36
  %s73 = sld [smem:[%s72]]
  %s74 = scalar_lea.smem %s0, 37
  %s75 = sld [smem:[%s74]]
  %s76 = scalar_lea.smem %s0, 38
  %s77 = sld [smem:[%s76]]
  %s78 = scalar_lea.smem %s0, 39
  %s79 = sld [smem:[%s78]]
  %s80 = scalar_lea.smem %s0, 40
  %s81 = sld [smem:[%s80]]
  %s82 = scalar_lea.smem %s0, 41
  %s83 = sld [smem:[%s82]]
  %s84 = scalar_lea.smem %s0, 42
  %s85 = sld [smem:[%s84]]
  %s86 = sld [smem:[#allocation0]]
  $region361: #{forward.1} parent=0
    _
  %s88 = ssub.s32 1, %s86
  %s89 = scalar_select 0, %s88, %s86
  $region1: #{forward.1} parent=0
    #allocation2 [shape = 'u8[1024]{0}', space=vmem, size = 0x400, scoped, tag = 'input window, operand 2']
    #allocation3 [shape = 's32[2]{0}', space=sflag, size = 0x8, scoped, tag = 'scoped memory for forward.1']
    #allocation4 [shape = 's32[2]{0}', space=sflag, size = 0x8, scoped, tag = 'scoped memory for forward.1']
    #allocation5 [shape = 'u8[28672]{0}', space=vmem, size = 0x7000, scoped, tag = 'input window, operand 3, single buffered']
    #allocation6 [shape = 's32[1]{0}', space=sflag, size = 0x4, scoped, tag = 'scoped memory for forward.1']
    #allocation7 [shape = 'u8[65536]{0}', space=vmem, size = 0x10000, scoped, tag = 'input window, operand 4, single buffered']
    #allocation8 [shape = 'u8[1024]{0}', space=vmem, size = 0x400, scoped, tag = 'input window, operand 5, single buffered']
    #allocation9 [shape = 's32[1]{0}', space=sflag, size = 0x4, scoped, tag = 'scoped memory for forward.1']
    #allocation10 [shape = 'u8[16384]{0}', space=vmem, size = 0x4000, scoped, tag = 'input window, operand 6, single buffered']
    #allocation11 [shape = 'u8[1024]{0}', space=vmem, size = 0x400, scoped, tag = 'input window, operand 7, single buffered']
    #allocation12 [shape = 's32[1]{0}', space=sflag, size = 0x4, scoped, tag = 'scoped memory for forward.1']
    #allocation13 [shape = 'u8[1024]{0}', space=vmem, size = 0x400, scoped, tag = 'input window, operand 8, single buffered']
    #allocation14 [shape = 'u8[1024]{0}', space=vmem, size = 0x400, scoped, tag = 'input window, operand 9, single buffered']
    #allocation15 [shape = 's32[1]{0}', space=sflag, size = 0x4, scoped, tag = 'scoped memory for forward.1']
    #allocation16 [shape = 'u8[65536]{0}', space=vmem, size = 0x10000, scoped, tag = 'input window, operand 10, single buffered']
    #allocation17 [shape = 'u8[1024]{0}', space=vmem, size = 0x400, scoped, tag = 'input window, operand 11, single buffered']
    #allocation18 [shape = 's32[1]{0}', space=sflag, size = 0x4, scoped, tag = 'scoped memory for forward.1']
    #allocation19 [shape = 'u8[65536]{0}', space=vmem, size = 0x10000, scoped, tag = 'input window, operand 12, single buffered']
    #allocation20 [shape = 'u8[1024]{0}', space=vmem, size = 0x400, scoped, tag = 'input window, operand 13, single buffered']
    #allocation21 [shape = 's32[1]{0}', space=sflag, size = 0x4, scoped, tag = 'scoped memory for forward.1']
    #allocation22 [shape = 'u8[1024]{0}', space=vmem, size = 0x400, scoped, tag = 'input window, operand 14, single buffered']
    #allocation23 [shape = 'u8[1024]{0}', space=vmem, size = 0x400, scoped, tag = 'input window, operand 15, single buffered']
    #allocation24 [shape = 's32[1]{0}', space=sflag, size = 0x4, scoped, tag = 'scoped memory for forward.1']
    #allocation25 [shape = 'u8[512]{0}', space=vmem, size = 0x400, scoped, tag = 'input window, operand 16, single buffered']
    #allocation26 [shape = 'u8[512]{0}', space=vmem, size = 0x400, scoped, tag = 'input window, operand 17, single buffered']
    #allocation27 [shape = 's32[1]{0}', space=sflag, size = 0x4, scoped, tag = 'scoped memory for forward.1']
    #allocation28 [shape = 'u8[65536]{0}', space=vmem, size = 0x10000, scoped, tag = 'input window, operand 18, single buffered']
    #allocation29 [shape = 'u8[1024]{0}', space=vmem, size = 0x400, scoped, tag = 'input window, operand 19, single buffered']
    #allocation30 [shape = 's32[1]{0}', space=sflag, size = 0x4, scoped, tag = 'scoped memory for forward.1']
    #allocation31 [shape = 'u8[16384]{0}', space=vmem, size = 0x4000, scoped, tag = 'input window, operand 20, single buffered']
    #allocation32 [shape = 'u8[1024]{0}', space=vmem, size = 0x400, scoped, tag = 'input window, operand 21, single buffered']
    #allocation33 [shape = 's32[1]{0}', space=sflag, size = 0x4, scoped, tag = 'scoped memory for forward.1']
    #allocation34 [shape = 'u8[65536]{0}', space=vmem, size = 0x10000, scoped, tag = 'input window, operand 22, single buffered']
    #allocation35 [shape = 'u8[1024]{0}', space=vmem, size = 0x400, scoped, tag = 'input window, operand 23, single buffered']
    #allocation36 [shape = 's32[1]{0}', space=sflag, size = 0x4, scoped, tag = 'scoped memory for forward.1']
    #allocation37 [shape = 'u8[65536]{0}', space=vmem, size = 0x10000, scoped, tag = 'input window, operand 24, single buffered']
    #allocation38 [shape = 'u8[1024]{0}', space=vmem, size = 0x400, scoped, tag = 'input window, operand 25, single buffered']
    #allocation39 [shape = 's32[1]{0}', space=sflag, size = 0x4, scoped, tag = 'scoped memory for forward.1']
    #allocation40 [shape = 'u8[16384]{0}', space=vmem, size = 0x4000, scoped, tag = 'input window, operand 26, single buffered']
    #allocation41 [shape = 'u8[1024]{0}', space=vmem, size = 0x400, scoped, tag = 'input window, operand 27, single buffered']
    #allocation42 [shape = 's32[1]{0}', space=sflag, size = 0x4, scoped, tag = 'scoped memory for forward.1']
    #allocation43 [shape = 'u8[1024]{0}', space=vmem, size = 0x400, scoped, tag = 'input window, operand 28, single buffered']
    #allocation44 [shape = 'u8[1024]{0}', space=vmem, size = 0x400, scoped, tag = 'input window, operand 29, single buffered']
    #allocation45 [shape = 's32[1]{0}', space=sflag, size = 0x4, scoped, tag = 'scoped memory for forward.1']
    #allocation46 [shape = 'u8[1024]{0}', space=vmem, size = 0x400, scoped, tag = 'input window, operand 30, single buffered']
    #allocation47 [shape = 'u8[1024]{0}', space=vmem, size = 0x400, scoped, tag = 'input window, operand 31, single buffered']
    #allocation48 [shape = 's32[1]{0}', space=sflag, size = 0x4, scoped, tag = 'scoped memory for forward.1']
    #allocation49 [shape = 'u8[1024]{0}', space=vmem, size = 0x400, scoped, tag = 'input window, operand 32, single buffered']
    #allocation50 [shape = 'u8[1024]{0}', space=vmem, size = 0x400, scoped, tag = 'input window, operand 33, single buffered']
    #allocation51 [shape = 's32[1]{0}', space=sflag, size = 0x4, scoped, tag = 'scoped memory for forward.1']
    #allocation52 [shape = 'u8[65536]{0}', space=vmem, size = 0x10000, scoped, tag = 'input window, operand 34, single buffered']
    #allocation53 [shape = 'u8[1024]{0}', space=vmem, size = 0x400, scoped, tag = 'input window, operand 35, single buffered']
    #allocation54 [shape = 's32[1]{0}', space=sflag, size = 0x4, scoped, tag = 'scoped memory for forward.1']
    #allocation55 [shape = 'u8[65536]{0}', space=vmem, size = 0x10000, scoped, tag = 'input window, operand 36, single buffered']
    #allocation56 [shape = 'u8[1024]{0}', space=vmem, size = 0x400, scoped, tag = 'input window, operand 37, single buffered']
    #allocation57 [shape = 's32[1]{0}', space=sflag, size = 0x4, scoped, tag = 'scoped memory for forward.1']
    #allocation58 [shape = 'u8[512]{0}', space=vmem, size = 0x400, scoped, tag = 'input window, operand 38, single buffered']
    #allocation59 [shape = 'u8[512]{0}', space=vmem, size = 0x400, scoped, tag = 'input window, operand 39, single buffered']
    #allocation60 [shape = 's32[1]{0}', space=sflag, size = 0x4, scoped, tag = 'scoped memory for forward.1']
    #allocation61 [shape = 'u8[32768]{0}', space=vmem, size = 0x8000, scoped, tag = 'input window, operand 40, single buffered']
    #allocation62 [shape = 'u8[512]{0}', space=vmem, size = 0x400, scoped, tag = 'input window, operand 41, single buffered']
    #allocation63 [shape = 's32[1]{0}', space=sflag, size = 0x4, scoped, tag = 'scoped memory for forward.1']
    #allocation64 [shape = 'u8[8192]{0}', space=vmem, size = 0x2000, scoped, tag = 'output window, operand 0']
    %90 = vsyncpa [#allocation3], 0
    %s91 = scalar_lea.sflag [#allocation3], 1
    %92 = vsyncpa %s91, 0
    %93 = vsyncpa [#allocation6], 0
    %94 = vsyncpa [#allocation9], 0
    %95 = vsyncpa [#allocation12], 0
    %96 = vsyncpa [#allocation15], 0
    %97 = vsyncpa [#allocation18], 0
    %98 = vsyncpa [#allocation21], 0
    %99 = vsyncpa [#allocation24], 0
    %100 = vsyncpa [#allocation27], 0
    %101 = vsyncpa [#allocation30], 0
    %102 = vsyncpa [#allocation33], 0
    %103 = vsyncpa [#allocation36], 0
    %104 = vsyncpa [#allocation39], 0
    %105 = vsyncpa [#allocation42], 0
    %106 = vsyncpa [#allocation45], 0
    %107 = vsyncpa [#allocation48], 0
    %108 = vsyncpa [#allocation51], 0
    %109 = vsyncpa [#allocation54], 0
    %110 = vsyncpa [#allocation57], 0
    %111 = vsyncpa [#allocation60], 0
    %112 = vsyncpa [#allocation63], 0
    %113 = vsyncpa [#allocation4], 0
    %s114 = scalar_lea.sflag [#allocation4], 1
    %115 = vsyncpa %s114, 0
    loop: start=0, step=1, limit=4
    $region2: #{forward.1} parent=1 // loop_pre_header
      _
    $region3: #{forward.1} parent=1 // loop_header
      %s117 = sphi 0, %s121
      %p118 = scmp.ge.s32.totalorder %s117, 4
      %s127 = sphi 0, %s129
      %s130 = sphi 0, %s127
      %s131 = sphi 0, %s130
      %s147 = sphi 0, %s131
      %s153 = sphi 0, %s155
      %s156 = sphi 0, %s153
      %s157 = sphi 0, %s156
      %s173 = sphi 0, %s157
      %s179 = sphi 0, %s181
      %s182 = sphi 0, %s179
      %s183 = sphi 0, %s182
      %s199 = sphi 0, %s183
      %s203 = sphi 0, %s203
      %s205 = sphi 0, %s203
      %s206 = sphi 0, %s205
      %s220 = sphi 0, %s206
      %s224 = sphi 0, %s224
      %s226 = sphi 0, %s224
      %s227 = sphi 0, %s226
      %s241 = sphi 0, %s227
      %s245 = sphi 0, %s245
      %s247 = sphi 0, %s245
      %s248 = sphi 0, %s247
      %s262 = sphi 0, %s248
      %s266 = sphi 0, %s266
      %s268 = sphi 0, %s266
      %s269 = sphi 0, %s268
      %s283 = sphi 0, %s269
      %s287 = sphi 0, %s287
      %s289 = sphi 0, %s287
      %s290 = sphi 0, %s289
      %s304 = sphi 0, %s290
      %s308 = sphi 0, %s308
      %s310 = sphi 0, %s308
      %s311 = sphi 0, %s310
      %s325 = sphi 0, %s311
      %s329 = sphi 0, %s329
      %s331 = sphi 0, %s329
      %s332 = sphi 0, %s331
      %s346 = sphi 0, %s332
      %s350 = sphi 0, %s350
      %s352 = sphi 0, %s350
      %s353 = sphi 0, %s352
      %s367 = sphi 0, %s353
      %s371 = sphi 0, %s371
      %s373 = sphi 0, %s371
      %s374 = sphi 0, %s373
      %s388 = sphi 0, %s374
      %s392 = sphi 0, %s392
      %s394 = sphi 0, %s392
      %s395 = sphi 0, %s394
      %s409 = sphi 0, %s395
      %s413 = sphi 0, %s413
      %s415 = sphi 0, %s413
      %s416 = sphi 0, %s415
      %s430 = sphi 0, %s416
      %s434 = sphi 0, %s434
      %s436 = sphi 0, %s434
      %s437 = sphi 0, %s436
      %s451 = sphi 0, %s437
      %s455 = sphi 0, %s455
      %s457 = sphi 0, %s455
      %s458 = sphi 0, %s457
      %s472 = sphi 0, %s458
      %s476 = sphi 0, %s476
      %s478 = sphi 0, %s476
      %s479 = sphi 0, %s478
      %s493 = sphi 0, %s479
      %s497 = sphi 0, %s497
      %s499 = sphi 0, %s497
      %s500 = sphi 0, %s499
      %s514 = sphi 0, %s500
      %s518 = sphi 0, %s518
      %s520 = sphi 0, %s518
      %s521 = sphi 0, %s520
      %s535 = sphi 0, %s521
      %s539 = sphi 0, %s539
      %s541 = sphi 0, %s539
      %s542 = sphi 0, %s541
      %s556 = sphi 0, %s542
      %s560 = sphi 0, %s560
      %s562 = sphi 0, %s560
      %s563 = sphi 0, %s562
      %s577 = sphi 0, %s563
      %s581 = sphi 0, %s581
      %s583 = sphi 0, %s581
      %s584 = sphi 0, %s583
      %s598 = sphi 0, %s584
      %s602 = sphi 0, %s602
      %s604 = sphi 0, %s602
      %s605 = sphi 0, %s604
      %s619 = sphi 0, %s605
      %s623 = sphi 0, %s623
      %s625 = sphi 0, %s623
      %s626 = sphi 0, %s625
      %s640 = sphi 0, %s626
      %s644 = sphi 0, %s644
      %s646 = sphi 0, %s644
      %s647 = sphi 0, %s646
      %s661 = sphi 0, %s647
      %s665 = sphi 0, %s665
      %s667 = sphi 0, %s665
      %s668 = sphi 0, %s667
      %s682 = sphi 0, %s668
      %s686 = sphi 0, %s686
      %s688 = sphi 0, %s686
      %s689 = sphi 0, %s688
      %s703 = sphi 0, %s689
      %s707 = sphi 0, %s707
      %s709 = sphi 0, %s707
      %s710 = sphi 0, %s709
      %s724 = sphi 0, %s710
      %s728 = sphi 0, %s728
      %s730 = sphi 0, %s728
      %s731 = sphi 0, %s730
      %s745 = sphi 0, %s731
      %s749 = sphi 0, %s749
      %s751 = sphi 0, %s749
      %s752 = sphi 0, %s751
      %s766 = sphi 0, %s752
      %s770 = sphi 0, %s770
      %s772 = sphi 0, %s770
      %s773 = sphi 0, %s772
      %s787 = sphi 0, %s773
      %s791 = sphi 0, %s791
      %s793 = sphi 0, %s791
      %s794 = sphi 0, %s793
      %s808 = sphi 0, %s794
      %s812 = sphi 0, %s812
      %s814 = sphi 0, %s812
      %s815 = sphi 0, %s814
      %s829 = sphi 0, %s815
      %s833 = sphi 0, %s833
      %s835 = sphi 0, %s833
      %s836 = sphi 0, %s835
      %s850 = sphi 0, %s836
      %s854 = sphi 0, %s854
      %s856 = sphi 0, %s854
      %s857 = sphi 0, %s856
      %s871 = sphi 0, %s857
      %s875 = sphi 0, %s875
      %s877 = sphi 0, %s875
      %s878 = sphi 0, %s877
      %s892 = sphi 0, %s878
      %s896 = sphi 0, %s896
      %s898 = sphi 0, %s896
      %s899 = sphi 0, %s898
      %s913 = sphi 0, %s899
      %s917 = sphi 0, %s917
      %s919 = sphi 0, %s917
      %s920 = sphi 0, %s919
      %s934 = sphi 0, %s920
      %s938 = sphi 0, %s938
      %s940 = sphi 0, %s938
      %s941 = sphi 0, %s940
      %s955 = sphi 0, %s941
      %s959 = sphi 0, %s959
      %s961 = sphi 0, %s959
      %s962 = sphi 0, %s961
      %s976 = sphi 0, %s962
      %s980 = sphi 0, %s980
      %s982 = sphi 0, %s980
      %s983 = sphi 0, %s982
      %s997 = sphi 0, %s983
      %s1001 = sphi 0, %s1001
      %s1003 = sphi 0, %s1001
      %s1004 = sphi 0, %s1003
      %s1018 = sphi 0, %s1004
      %s1024 = sphi 0, %s1026
      %s1027 = sphi 0, %s1024
      %s1028 = sphi 0, %s1027
      %s1044 = sphi 0, %s1028
    $region4: #{forward.1} parent=1 // loop_header_branch
      %120 = sbr.rel (%p118) target = $region8
    $region5: #{forward.1} parent=1 // loop_body
      %s122 = ssub.s32 %s117, 1
      %s123 = ssub.s32 %s117, 2
      %s124 = sadd.s32 %s117, 1
      %s125 = ssub.s32 %s117, %s124
      %p126 = scmp.eq.s32.totalorder %s125, 0
      %s128 = sadd.s32 %s127, 1
      %s129 = scalar_select %p126, %s127, %s128
      %p132 = pneg %p126
      %p133 = scmp.eq.s32.totalorder %s117, 1
      %p134 = por %p132, %p133
      %p135 = scmp.ne.s32.totalorder %s127, %s130
      %p136 = scmp.eq.s32.totalorder %s117, 0
      %p137 = por %p135, %p136
      %p138 = scmp.ne.s32.totalorder %s127, %s130
      %p139 = scmp.eq.s32.totalorder %s122, 1
      %p140 = por %p138, %p139
      %p141 = scmp.ne.s32.totalorder %s130, %s131
      %p142 = scmp.eq.s32.totalorder %s122, 0
      %p143 = por %p141, %p142
      %p144 = scmp.ne.s32.totalorder %s130, %s131
      %p145 = scmp.eq.s32.totalorder %s123, 1
      %p146 = por %p144, %p145
      %p148 = scmp.ne.s32.totalorder %s131, %s147
      %p149 = scmp.eq.s32.totalorder %s123, 0
      %p150 = por %p148, %p149
      %s151 = ssub.s32 %s117, %s124
      %p152 = scmp.eq.s32.totalorder %s151, 0
      %s154 = sadd.s32 %s153, 1
      %s155 = scalar_select %p152, %s153, %s154
      %p158 = pneg %p152
      %p159 = scmp.eq.s32.totalorder %s117, 1
      %p160 = por %p158, %p159
      %p161 = scmp.ne.s32.totalorder %s153, %s156
      %p162 = scmp.eq.s32.totalorder %s117, 0
      %p163 = por %p161, %p162
      %p164 = scmp.ne.s32.totalorder %s153, %s156
      %p165 = scmp.eq.s32.totalorder %s122, 1
      %p166 = por %p164, %p165
      %p167 = scmp.ne.s32.totalorder %s156, %s157
      %p168 = scmp.eq.s32.totalorder %s122, 0
      %p169 = por %p167, %p168
      %p170 = scmp.ne.s32.totalorder %s156, %s157
      %p171 = scmp.eq.s32.totalorder %s123, 1
      %p172 = por %p170, %p171
      %p174 = scmp.ne.s32.totalorder %s157, %s173
      %p175 = scmp.eq.s32.totalorder %s123, 0
      %p176 = por %p174, %p175
      %s177 = ssub.s32 %s117, %s124
      %p178 = scmp.eq.s32.totalorder %s177, 0
      %s180 = sadd.s32 %s179, 1
      %s181 = scalar_select %p178, %s179, %s180
      %p184 = pneg %p178
      %p185 = scmp.eq.s32.totalorder %s117, 1
      %p186 = por %p184, %p185
      %p187 = scmp.ne.s32.totalorder %s179, %s182
      %p188 = scmp.eq.s32.totalorder %s117, 0
      %p189 = por %p187, %p188
      %p190 = scmp.ne.s32.totalorder %s179, %s182
      %p191 = scmp.eq.s32.totalorder %s122, 1
      %p192 = por %p190, %p191
      %p193 = scmp.ne.s32.totalorder %s182, %s183
      %p194 = scmp.eq.s32.totalorder %s122, 0
      %p195 = por %p193, %p194
      %p196 = scmp.ne.s32.totalorder %s182, %s183
      %p197 = scmp.eq.s32.totalorder %s123, 1
      %p198 = por %p196, %p197
      %p200 = scmp.ne.s32.totalorder %s183, %s199
      %p201 = scmp.eq.s32.totalorder %s123, 0
      %p202 = por %p200, %p201
      %s204 = sadd.s32 %s203, 1
      %p207 = scmp.eq.s32.totalorder %s117, 1
      %p208 = scmp.ne.s32.totalorder %s203, %s205
      %p209 = scmp.eq.s32.totalorder %s117, 0
      %p210 = por %p208, %p209
      %p211 = scmp.ne.s32.totalorder %s203, %s205
      %p212 = scmp.eq.s32.totalorder %s122, 1
      %p213 = por %p211, %p212
      %p214 = scmp.ne.s32.totalorder %s205, %s206
      %p215 = scmp.eq.s32.totalorder %s122, 0
      %p216 = por %p214, %p215
      %p217 = scmp.ne.s32.totalorder %s205, %s206
      %p218 = scmp.eq.s32.totalorder %s123, 1
      %p219 = por %p217, %p218
      %p221 = scmp.ne.s32.totalorder %s206, %s220
      %p222 = scmp.eq.s32.totalorder %s123, 0
      %p223 = por %p221, %p222
      %s225 = sadd.s32 %s224, 1
      %p228 = scmp.eq.s32.totalorder %s117, 1
      %p229 = scmp.ne.s32.totalorder %s224, %s226
      %p230 = scmp.eq.s32.totalorder %s117, 0
      %p231 = por %p229, %p230
      %p232 = scmp.ne.s32.totalorder %s224, %s226
      %p233 = scmp.eq.s32.totalorder %s122, 1
      %p234 = por %p232, %p233
      %p235 = scmp.ne.s32.totalorder %s226, %s227
      %p236 = scmp.eq.s32.totalorder %s122, 0
      %p237 = por %p235, %p236
      %p238 = scmp.ne.s32.totalorder %s226, %s227
      %p239 = scmp.eq.s32.totalorder %s123, 1
      %p240 = por %p238, %p239
      %p242 = scmp.ne.s32.totalorder %s227, %s241
      %p243 = scmp.eq.s32.totalorder %s123, 0
      %p244 = por %p242, %p243
      %s246 = sadd.s32 %s245, 1
      %p249 = scmp.eq.s32.totalorder %s117, 1
      %p250 = scmp.ne.s32.totalorder %s245, %s247
      %p251 = scmp.eq.s32.totalorder %s117, 0
      %p252 = por %p250, %p251
      %p253 = scmp.ne.s32.totalorder %s245, %s247
      %p254 = scmp.eq.s32.totalorder %s122, 1
      %p255 = por %p253, %p254
      %p256 = scmp.ne.s32.totalorder %s247, %s248
      %p257 = scmp.eq.s32.totalorder %s122, 0
      %p258 = por %p256, %p257
      %p259 = scmp.ne.s32.totalorder %s247, %s248
      %p260 = scmp.eq.s32.totalorder %s123, 1
      %p261 = por %p259, %p260
      %p263 = scmp.ne.s32.totalorder %s248, %s262
      %p264 = scmp.eq.s32.totalorder %s123, 0
      %p265 = por %p263, %p264
      %s267 = sadd.s32 %s266, 1
      %p270 = scmp.eq.s32.totalorder %s117, 1
      %p271 = scmp.ne.s32.totalorder %s266, %s268
      %p272 = scmp.eq.s32.totalorder %s117, 0
      %p273 = por %p271, %p272
      %p274 = scmp.ne.s32.totalorder %s266, %s268
      %p275 = scmp.eq.s32.totalorder %s122, 1
      %p276 = por %p274, %p275
      %p277 = scmp.ne.s32.totalorder %s268, %s269
      %p278 = scmp.eq.s32.totalorder %s122, 0
      %p279 = por %p277, %p278
      %p280 = scmp.ne.s32.totalorder %s268, %s269
      %p281 = scmp.eq.s32.totalorder %s123, 1
      %p282 = por %p280, %p281
      %p284 = scmp.ne.s32.totalorder %s269, %s283
      %p285 = scmp.eq.s32.totalorder %s123, 0
      %p286 = por %p284, %p285
      %s288 = sadd.s32 %s287, 1
      %p291 = scmp.eq.s32.totalorder %s117, 1
      %p292 = scmp.ne.s32.totalorder %s287, %s289
      %p293 = scmp.eq.s32.totalorder %s117, 0
      %p294 = por %p292, %p293
      %p295 = scmp.ne.s32.totalorder %s287, %s289
      %p296 = scmp.eq.s32.totalorder %s122, 1
      %p297 = por %p295, %p296
      %p298 = scmp.ne.s32.totalorder %s289, %s290
      %p299 = scmp.eq.s32.totalorder %s122, 0
      %p300 = por %p298, %p299
      %p301 = scmp.ne.s32.totalorder %s289, %s290
      %p302 = scmp.eq.s32.totalorder %s123, 1
      %p303 = por %p301, %p302
      %p305 = scmp.ne.s32.totalorder %s290, %s304
      %p306 = scmp.eq.s32.totalorder %s123, 0
      %p307 = por %p305, %p306
      %s309 = sadd.s32 %s308, 1
      %p312 = scmp.eq.s32.totalorder %s117, 1
      %p313 = scmp.ne.s32.totalorder %s308, %s310
      %p314 = scmp.eq.s32.totalorder %s117, 0
      %p315 = por %p313, %p314
      %p316 = scmp.ne.s32.totalorder %s308, %s310
      %p317 = scmp.eq.s32.totalorder %s122, 1
      %p318 = por %p316, %p317
      %p319 = scmp.ne.s32.totalorder %s310, %s311
      %p320 = scmp.eq.s32.totalorder %s122, 0
      %p321 = por %p319, %p320
      %p322 = scmp.ne.s32.totalorder %s310, %s311
      %p323 = scmp.eq.s32.totalorder %s123, 1
      %p324 = por %p322, %p323
      %p326 = scmp.ne.s32.totalorder %s311, %s325
      %p327 = scmp.eq.s32.totalorder %s123, 0
      %p328 = por %p326, %p327
      %s330 = sadd.s32 %s329, 1
      %p333 = scmp.eq.s32.totalorder %s117, 1
      %p334 = scmp.ne.s32.totalorder %s329, %s331
      %p335 = scmp.eq.s32.totalorder %s117, 0
      %p336 = por %p334, %p335
      %p337 = scmp.ne.s32.totalorder %s329, %s331
      %p338 = scmp.eq.s32.totalorder %s122, 1
      %p339 = por %p337, %p338
      %p340 = scmp.ne.s32.totalorder %s331, %s332
      %p341 = scmp.eq.s32.totalorder %s122, 0
      %p342 = por %p340, %p341
      %p343 = scmp.ne.s32.totalorder %s331, %s332
      %p344 = scmp.eq.s32.totalorder %s123, 1
      %p345 = por %p343, %p344
      %p347 = scmp.ne.s32.totalorder %s332, %s346
      %p348 = scmp.eq.s32.totalorder %s123, 0
      %p349 = por %p347, %p348
      %s351 = sadd.s32 %s350, 1
      %p354 = scmp.eq.s32.totalorder %s117, 1
      %p355 = scmp.ne.s32.totalorder %s350, %s352
      %p356 = scmp.eq.s32.totalorder %s117, 0
      %p357 = por %p355, %p356
      %p358 = scmp.ne.s32.totalorder %s350, %s352
      %p359 = scmp.eq.s32.totalorder %s122, 1
      %p360 = por %p358, %p359
      %p361 = scmp.ne.s32.totalorder %s352, %s353
      %p362 = scmp.eq.s32.totalorder %s122, 0
      %p363 = por %p361, %p362
      %p364 = scmp.ne.s32.totalorder %s352, %s353
      %p365 = scmp.eq.s32.totalorder %s123, 1
      %p366 = por %p364, %p365
      %p368 = scmp.ne.s32.totalorder %s353, %s367
      %p369 = scmp.eq.s32.totalorder %s123, 0
      %p370 = por %p368, %p369
      %s372 = sadd.s32 %s371, 1
      %p375 = scmp.eq.s32.totalorder %s117, 1
      %p376 = scmp.ne.s32.totalorder %s371, %s373
      %p377 = scmp.eq.s32.totalorder %s117, 0
      %p378 = por %p376, %p377
      %p379 = scmp.ne.s32.totalorder %s371, %s373
      %p380 = scmp.eq.s32.totalorder %s122, 1
      %p381 = por %p379, %p380
      %p382 = scmp.ne.s32.totalorder %s373, %s374
      %p383 = scmp.eq.s32.totalorder %s122, 0
      %p384 = por %p382, %p383
      %p385 = scmp.ne.s32.totalorder %s373, %s374
      %p386 = scmp.eq.s32.totalorder %s123, 1
      %p387 = por %p385, %p386
      %p389 = scmp.ne.s32.totalorder %s374, %s388
      %p390 = scmp.eq.s32.totalorder %s123, 0
      %p391 = por %p389, %p390
      %s393 = sadd.s32 %s392, 1
      %p396 = scmp.eq.s32.totalorder %s117, 1
      %p397 = scmp.ne.s32.totalorder %s392, %s394
      %p398 = scmp.eq.s32.totalorder %s117, 0
      %p399 = por %p397, %p398
      %p400 = scmp.ne.s32.totalorder %s392, %s394
      %p401 = scmp.eq.s32.totalorder %s122, 1
      %p402 = por %p400, %p401
      %p403 = scmp.ne.s32.totalorder %s394, %s395
      %p404 = scmp.eq.s32.totalorder %s122, 0
      %p405 = por %p403, %p404
      %p406 = scmp.ne.s32.totalorder %s394, %s395
      %p407 = scmp.eq.s32.totalorder %s123, 1
      %p408 = por %p406, %p407
      %p410 = scmp.ne.s32.totalorder %s395, %s409
      %p411 = scmp.eq.s32.totalorder %s123, 0
      %p412 = por %p410, %p411
      %s414 = sadd.s32 %s413, 1
      %p417 = scmp.eq.s32.totalorder %s117, 1
      %p418 = scmp.ne.s32.totalorder %s413, %s415
      %p419 = scmp.eq.s32.totalorder %s117, 0
      %p420 = por %p418, %p419
      %p421 = scmp.ne.s32.totalorder %s413, %s415
      %p422 = scmp.eq.s32.totalorder %s122, 1
      %p423 = por %p421, %p422
      %p424 = scmp.ne.s32.totalorder %s415, %s416
      %p425 = scmp.eq.s32.totalorder %s122, 0
      %p426 = por %p424, %p425
      %p427 = scmp.ne.s32.totalorder %s415, %s416
      %p428 = scmp.eq.s32.totalorder %s123, 1
      %p429 = por %p427, %p428
      %p431 = scmp.ne.s32.totalorder %s416, %s430
      %p432 = scmp.eq.s32.totalorder %s123, 0
      %p433 = por %p431, %p432
      %s435 = sadd.s32 %s434, 1
      %p438 = scmp.eq.s32.totalorder %s117, 1
      %p439 = scmp.ne.s32.totalorder %s434, %s436
      %p440 = scmp.eq.s32.totalorder %s117, 0
      %p441 = por %p439, %p440
      %p442 = scmp.ne.s32.totalorder %s434, %s436
      %p443 = scmp.eq.s32.totalorder %s122, 1
      %p444 = por %p442, %p443
      %p445 = scmp.ne.s32.totalorder %s436, %s437
      %p446 = scmp.eq.s32.totalorder %s122, 0
      %p447 = por %p445, %p446
      %p448 = scmp.ne.s32.totalorder %s436, %s437
      %p449 = scmp.eq.s32.totalorder %s123, 1
      %p450 = por %p448, %p449
      %p452 = scmp.ne.s32.totalorder %s437, %s451
      %p453 = scmp.eq.s32.totalorder %s123, 0
      %p454 = por %p452, %p453
      %s456 = sadd.s32 %s455, 1
      %p459 = scmp.eq.s32.totalorder %s117, 1
      %p460 = scmp.ne.s32.totalorder %s455, %s457
      %p461 = scmp.eq.s32.totalorder %s117, 0
      %p462 = por %p460, %p461
      %p463 = scmp.ne.s32.totalorder %s455, %s457
      %p464 = scmp.eq.s32.totalorder %s122, 1
      %p465 = por %p463, %p464
      %p466 = scmp.ne.s32.totalorder %s457, %s458
      %p467 = scmp.eq.s32.totalorder %s122, 0
      %p468 = por %p466, %p467
      %p469 = scmp.ne.s32.totalorder %s457, %s458
      %p470 = scmp.eq.s32.totalorder %s123, 1
      %p471 = por %p469, %p470
      %p473 = scmp.ne.s32.totalorder %s458, %s472
      %p474 = scmp.eq.s32.totalorder %s123, 0
      %p475 = por %p473, %p474
      %s477 = sadd.s32 %s476, 1
      %p480 = scmp.eq.s32.totalorder %s117, 1
      %p481 = scmp.ne.s32.totalorder %s476, %s478
      %p482 = scmp.eq.s32.totalorder %s117, 0
      %p483 = por %p481, %p482
      %p484 = scmp.ne.s32.totalorder %s476, %s478
      %p485 = scmp.eq.s32.totalorder %s122, 1
      %p486 = por %p484, %p485
      %p487 = scmp.ne.s32.totalorder %s478, %s479
      %p488 = scmp.eq.s32.totalorder %s122, 0
      %p489 = por %p487, %p488
      %p490 = scmp.ne.s32.totalorder %s478, %s479
      %p491 = scmp.eq.s32.totalorder %s123, 1
      %p492 = por %p490, %p491
      %p494 = scmp.ne.s32.totalorder %s479, %s493
      %p495 = scmp.eq.s32.totalorder %s123, 0
      %p496 = por %p494, %p495
      %s498 = sadd.s32 %s497, 1
      %p501 = scmp.eq.s32.totalorder %s117, 1
      %p502 = scmp.ne.s32.totalorder %s497, %s499
      %p503 = scmp.eq.s32.totalorder %s117, 0
      %p504 = por %p502, %p503
      %p505 = scmp.ne.s32.totalorder %s497, %s499
      %p506 = scmp.eq.s32.totalorder %s122, 1
      %p507 = por %p505, %p506
      %p508 = scmp.ne.s32.totalorder %s499, %s500
      %p509 = scmp.eq.s32.totalorder %s122, 0
      %p510 = por %p508, %p509
      %p511 = scmp.ne.s32.totalorder %s499, %s500
      %p512 = scmp.eq.s32.totalorder %s123, 1
      %p513 = por %p511, %p512
      %p515 = scmp.ne.s32.totalorder %s500, %s514
      %p516 = scmp.eq.s32.totalorder %s123, 0
      %p517 = por %p515, %p516
      %s519 = sadd.s32 %s518, 1
      %p522 = scmp.eq.s32.totalorder %s117, 1
      %p523 = scmp.ne.s32.totalorder %s518, %s520
      %p524 = scmp.eq.s32.totalorder %s117, 0
      %p525 = por %p523, %p524
      %p526 = scmp.ne.s32.totalorder %s518, %s520
      %p527 = scmp.eq.s32.totalorder %s122, 1
      %p528 = por %p526, %p527
      %p529 = scmp.ne.s32.totalorder %s520, %s521
      %p530 = scmp.eq.s32.totalorder %s122, 0
      %p531 = por %p529, %p530
      %p532 = scmp.ne.s32.totalorder %s520, %s521
      %p533 = scmp.eq.s32.totalorder %s123, 1
      %p534 = por %p532, %p533
      %p536 = scmp.ne.s32.totalorder %s521, %s535
      %p537 = scmp.eq.s32.totalorder %s123, 0
      %p538 = por %p536, %p537
      %s540 = sadd.s32 %s539, 1
      %p543 = scmp.eq.s32.totalorder %s117, 1
      %p544 = scmp.ne.s32.totalorder %s539, %s541
      %p545 = scmp.eq.s32.totalorder %s117, 0
      %p546 = por %p544, %p545
      %p547 = scmp.ne.s32.totalorder %s539, %s541
      %p548 = scmp.eq.s32.totalorder %s122, 1
      %p549 = por %p547, %p548
      %p550 = scmp.ne.s32.totalorder %s541, %s542
      %p551 = scmp.eq.s32.totalorder %s122, 0
      %p552 = por %p550, %p551
      %p553 = scmp.ne.s32.totalorder %s541, %s542
      %p554 = scmp.eq.s32.totalorder %s123, 1
      %p555 = por %p553, %p554
      %p557 = scmp.ne.s32.totalorder %s542, %s556
      %p558 = scmp.eq.s32.totalorder %s123, 0
      %p559 = por %p557, %p558
      %s561 = sadd.s32 %s560, 1
      %p564 = scmp.eq.s32.totalorder %s117, 1
      %p565 = scmp.ne.s32.totalorder %s560, %s562
      %p566 = scmp.eq.s32.totalorder %s117, 0
      %p567 = por %p565, %p566
      %p568 = scmp.ne.s32.totalorder %s560, %s562
      %p569 = scmp.eq.s32.totalorder %s122, 1
      %p570 = por %p568, %p569
      %p571 = scmp.ne.s32.totalorder %s562, %s563
      %p572 = scmp.eq.s32.totalorder %s122, 0
      %p573 = por %p571, %p572
      %p574 = scmp.ne.s32.totalorder %s562, %s563
      %p575 = scmp.eq.s32.totalorder %s123, 1
      %p576 = por %p574, %p575
      %p578 = scmp.ne.s32.totalorder %s563, %s577
      %p579 = scmp.eq.s32.totalorder %s123, 0
      %p580 = por %p578, %p579
      %s582 = sadd.s32 %s581, 1
      %p585 = scmp.eq.s32.totalorder %s117, 1
      %p586 = scmp.ne.s32.totalorder %s581, %s583
      %p587 = scmp.eq.s32.totalorder %s117, 0
      %p588 = por %p586, %p587
      %p589 = scmp.ne.s32.totalorder %s581, %s583
      %p590 = scmp.eq.s32.totalorder %s122, 1
      %p591 = por %p589, %p590
      %p592 = scmp.ne.s32.totalorder %s583, %s584
      %p593 = scmp.eq.s32.totalorder %s122, 0
      %p594 = por %p592, %p593
      %p595 = scmp.ne.s32.totalorder %s583, %s584
      %p596 = scmp.eq.s32.totalorder %s123, 1
      %p597 = por %p595, %p596
      %p599 = scmp.ne.s32.totalorder %s584, %s598
      %p600 = scmp.eq.s32.totalorder %s123, 0
      %p601 = por %p599, %p600
      %s603 = sadd.s32 %s602, 1
      %p606 = scmp.eq.s32.totalorder %s117, 1
      %p607 = scmp.ne.s32.totalorder %s602, %s604
      %p608 = scmp.eq.s32.totalorder %s117, 0
      %p609 = por %p607, %p608
      %p610 = scmp.ne.s32.totalorder %s602, %s604
      %p611 = scmp.eq.s32.totalorder %s122, 1
      %p612 = por %p610, %p611
      %p613 = scmp.ne.s32.totalorder %s604, %s605
      %p614 = scmp.eq.s32.totalorder %s122, 0
      %p615 = por %p613, %p614
      %p616 = scmp.ne.s32.totalorder %s604, %s605
      %p617 = scmp.eq.s32.totalorder %s123, 1
      %p618 = por %p616, %p617
      %p620 = scmp.ne.s32.totalorder %s605, %s619
      %p621 = scmp.eq.s32.totalorder %s123, 0
      %p622 = por %p620, %p621
      %s624 = sadd.s32 %s623, 1
      %p627 = scmp.eq.s32.totalorder %s117, 1
      %p628 = scmp.ne.s32.totalorder %s623, %s625
      %p629 = scmp.eq.s32.totalorder %s117, 0
      %p630 = por %p628, %p629
      %p631 = scmp.ne.s32.totalorder %s623, %s625
      %p632 = scmp.eq.s32.totalorder %s122, 1
      %p633 = por %p631, %p632
      %p634 = scmp.ne.s32.totalorder %s625, %s626
      %p635 = scmp.eq.s32.totalorder %s122, 0
      %p636 = por %p634, %p635
      %p637 = scmp.ne.s32.totalorder %s625, %s626
      %p638 = scmp.eq.s32.totalorder %s123, 1
      %p639 = por %p637, %p638
      %p641 = scmp.ne.s32.totalorder %s626, %s640
      %p642 = scmp.eq.s32.totalorder %s123, 0
      %p643 = por %p641, %p642
      %s645 = sadd.s32 %s644, 1
      %p648 = scmp.eq.s32.totalorder %s117, 1
      %p649 = scmp.ne.s32.totalorder %s644, %s646
      %p650 = scmp.eq.s32.totalorder %s117, 0
      %p651 = por %p649, %p650
      %p652 = scmp.ne.s32.totalorder %s644, %s646
      %p653 = scmp.eq.s32.totalorder %s122, 1
      %p654 = por %p652, %p653
      %p655 = scmp.ne.s32.totalorder %s646, %s647
      %p656 = scmp.eq.s32.totalorder %s122, 0
      %p657 = por %p655, %p656
      %p658 = scmp.ne.s32.totalorder %s646, %s647
      %p659 = scmp.eq.s32.totalorder %s123, 1
      %p660 = por %p658, %p659
      %p662 = scmp.ne.s32.totalorder %s647, %s661
      %p663 = scmp.eq.s32.totalorder %s123, 0
      %p664 = por %p662, %p663
      %s666 = sadd.s32 %s665, 1
      %p669 = scmp.eq.s32.totalorder %s117, 1
      %p670 = scmp.ne.s32.totalorder %s665, %s667
      %p671 = scmp.eq.s32.totalorder %s117, 0
      %p672 = por %p670, %p671
      %p673 = scmp.ne.s32.totalorder %s665, %s667
      %p674 = scmp.eq.s32.totalorder %s122, 1
      %p675 = por %p673, %p674
      %p676 = scmp.ne.s32.totalorder %s667, %s668
      %p677 = scmp.eq.s32.totalorder %s122, 0
      %p678 = por %p676, %p677
      %p679 = scmp.ne.s32.totalorder %s667, %s668
      %p680 = scmp.eq.s32.totalorder %s123, 1
      %p681 = por %p679, %p680
      %p683 = scmp.ne.s32.totalorder %s668, %s682
      %p684 = scmp.eq.s32.totalorder %s123, 0
      %p685 = por %p683, %p684
      %s687 = sadd.s32 %s686, 1
      %p690 = scmp.eq.s32.totalorder %s117, 1
      %p691 = scmp.ne.s32.totalorder %s686, %s688
      %p692 = scmp.eq.s32.totalorder %s117, 0
      %p693 = por %p691, %p692
      %p694 = scmp.ne.s32.totalorder %s686, %s688
      %p695 = scmp.eq.s32.totalorder %s122, 1
      %p696 = por %p694, %p695
      %p697 = scmp.ne.s32.totalorder %s688, %s689
      %p698 = scmp.eq.s32.totalorder %s122, 0
      %p699 = por %p697, %p698
      %p700 = scmp.ne.s32.totalorder %s688, %s689
      %p701 = scmp.eq.s32.totalorder %s123, 1
      %p702 = por %p700, %p701
      %p704 = scmp.ne.s32.totalorder %s689, %s703
      %p705 = scmp.eq.s32.totalorder %s123, 0
      %p706 = por %p704, %p705
      %s708 = sadd.s32 %s707, 1
      %p711 = scmp.eq.s32.totalorder %s117, 1
      %p712 = scmp.ne.s32.totalorder %s707, %s709
      %p713 = scmp.eq.s32.totalorder %s117, 0
      %p714 = por %p712, %p713
      %p715 = scmp.ne.s32.totalorder %s707, %s709
      %p716 = scmp.eq.s32.totalorder %s122, 1
      %p717 = por %p715, %p716
      %p718 = scmp.ne.s32.totalorder %s709, %s710
      %p719 = scmp.eq.s32.totalorder %s122, 0
      %p720 = por %p718, %p719
      %p721 = scmp.ne.s32.totalorder %s709, %s710
      %p722 = scmp.eq.s32.totalorder %s123, 1
      %p723 = por %p721, %p722
      %p725 = scmp.ne.s32.totalorder %s710, %s724
      %p726 = scmp.eq.s32.totalorder %s123, 0
      %p727 = por %p725, %p726
      %s729 = sadd.s32 %s728, 1
      %p732 = scmp.eq.s32.totalorder %s117, 1
      %p733 = scmp.ne.s32.totalorder %s728, %s730
      %p734 = scmp.eq.s32.totalorder %s117, 0
      %p735 = por %p733, %p734
      %p736 = scmp.ne.s32.totalorder %s728, %s730
      %p737 = scmp.eq.s32.totalorder %s122, 1
      %p738 = por %p736, %p737
      %p739 = scmp.ne.s32.totalorder %s730, %s731
      %p740 = scmp.eq.s32.totalorder %s122, 0
      %p741 = por %p739, %p740
      %p742 = scmp.ne.s32.totalorder %s730, %s731
      %p743 = scmp.eq.s32.totalorder %s123, 1
      %p744 = por %p742, %p743
      %p746 = scmp.ne.s32.totalorder %s731, %s745
      %p747 = scmp.eq.s32.totalorder %s123, 0
      %p748 = por %p746, %p747
      %s750 = sadd.s32 %s749, 1
      %p753 = scmp.eq.s32.totalorder %s117, 1
      %p754 = scmp.ne.s32.totalorder %s749, %s751
      %p755 = scmp.eq.s32.totalorder %s117, 0
      %p756 = por %p754, %p755
      %p757 = scmp.ne.s32.totalorder %s749, %s751
      %p758 = scmp.eq.s32.totalorder %s122, 1
      %p759 = por %p757, %p758
      %p760 = scmp.ne.s32.totalorder %s751, %s752
      %p761 = scmp.eq.s32.totalorder %s122, 0
      %p762 = por %p760, %p761
      %p763 = scmp.ne.s32.totalorder %s751, %s752
      %p764 = scmp.eq.s32.totalorder %s123, 1
      %p765 = por %p763, %p764
      %p767 = scmp.ne.s32.totalorder %s752, %s766
      %p768 = scmp.eq.s32.totalorder %s123, 0
      %p769 = por %p767, %p768
      %s771 = sadd.s32 %s770, 1
      %p774 = scmp.eq.s32.totalorder %s117, 1
      %p775 = scmp.ne.s32.totalorder %s770, %s772
      %p776 = scmp.eq.s32.totalorder %s117, 0
      %p777 = por %p775, %p776
      %p778 = scmp.ne.s32.totalorder %s770, %s772
      %p779 = scmp.eq.s32.totalorder %s122, 1
      %p780 = por %p778, %p779
      %p781 = scmp.ne.s32.totalorder %s772, %s773
      %p782 = scmp.eq.s32.totalorder %s122, 0
      %p783 = por %p781, %p782
      %p784 = scmp.ne.s32.totalorder %s772, %s773
      %p785 = scmp.eq.s32.totalorder %s123, 1
      %p786 = por %p784, %p785
      %p788 = scmp.ne.s32.totalorder %s773, %s787
      %p789 = scmp.eq.s32.totalorder %s123, 0
      %p790 = por %p788, %p789
      %s792 = sadd.s32 %s791, 1
      %p795 = scmp.eq.s32.totalorder %s117, 1
      %p796 = scmp.ne.s32.totalorder %s791, %s793
      %p797 = scmp.eq.s32.totalorder %s117, 0
      %p798 = por %p796, %p797
      %p799 = scmp.ne.s32.totalorder %s791, %s793
      %p800 = scmp.eq.s32.totalorder %s122, 1
      %p801 = por %p799, %p800
      %p802 = scmp.ne.s32.totalorder %s793, %s794
      %p803 = scmp.eq.s32.totalorder %s122, 0
      %p804 = por %p802, %p803
      %p805 = scmp.ne.s32.totalorder %s793, %s794
      %p806 = scmp.eq.s32.totalorder %s123, 1
      %p807 = por %p805, %p806
      %p809 = scmp.ne.s32.totalorder %s794, %s808
      %p810 = scmp.eq.s32.totalorder %s123, 0
      %p811 = por %p809, %p810
      %s813 = sadd.s32 %s812, 1
      %p816 = scmp.eq.s32.totalorder %s117, 1
      %p817 = scmp.ne.s32.totalorder %s812, %s814
      %p818 = scmp.eq.s32.totalorder %s117, 0
      %p819 = por %p817, %p818
      %p820 = scmp.ne.s32.totalorder %s812, %s814
      %p821 = scmp.eq.s32.totalorder %s122, 1
      %p822 = por %p820, %p821
      %p823 = scmp.ne.s32.totalorder %s814, %s815
      %p824 = scmp.eq.s32.totalorder %s122, 0
      %p825 = por %p823, %p824
      %p826 = scmp.ne.s32.totalorder %s814, %s815
      %p827 = scmp.eq.s32.totalorder %s123, 1
      %p828 = por %p826, %p827
      %p830 = scmp.ne.s32.totalorder %s815, %s829
      %p831 = scmp.eq.s32.totalorder %s123, 0
      %p832 = por %p830, %p831
      %s834 = sadd.s32 %s833, 1
      %p837 = scmp.eq.s32.totalorder %s117, 1
      %p838 = scmp.ne.s32.totalorder %s833, %s835
      %p839 = scmp.eq.s32.totalorder %s117, 0
      %p840 = por %p838, %p839
      %p841 = scmp.ne.s32.totalorder %s833, %s835
      %p842 = scmp.eq.s32.totalorder %s122, 1
      %p843 = por %p841, %p842
      %p844 = scmp.ne.s32.totalorder %s835, %s836
      %p845 = scmp.eq.s32.totalorder %s122, 0
      %p846 = por %p844, %p845
      %p847 = scmp.ne.s32.totalorder %s835, %s836
      %p848 = scmp.eq.s32.totalorder %s123, 1
      %p849 = por %p847, %p848
      %p851 = scmp.ne.s32.totalorder %s836, %s850
      %p852 = scmp.eq.s32.totalorder %s123, 0
      %p853 = por %p851, %p852
      %s855 = sadd.s32 %s854, 1
      %p858 = scmp.eq.s32.totalorder %s117, 1
      %p859 = scmp.ne.s32.totalorder %s854, %s856
      %p860 = scmp.eq.s32.totalorder %s117, 0
      %p861 = por %p859, %p860
      %p862 = scmp.ne.s32.totalorder %s854, %s856
      %p863 = scmp.eq.s32.totalorder %s122, 1
      %p864 = por %p862, %p863
      %p865 = scmp.ne.s32.totalorder %s856, %s857
      %p866 = scmp.eq.s32.totalorder %s122, 0
      %p867 = por %p865, %p866
      %p868 = scmp.ne.s32.totalorder %s856, %s857
      %p869 = scmp.eq.s32.totalorder %s123, 1
      %p870 = por %p868, %p869
      %p872 = scmp.ne.s32.totalorder %s857, %s871
      %p873 = scmp.eq.s32.totalorder %s123, 0
      %p874 = por %p872, %p873
      %s876 = sadd.s32 %s875, 1
      %p879 = scmp.eq.s32.totalorder %s117, 1
      %p880 = scmp.ne.s32.totalorder %s875, %s877
      %p881 = scmp.eq.s32.totalorder %s117, 0
      %p882 = por %p880, %p881
      %p883 = scmp.ne.s32.totalorder %s875, %s877
      %p884 = scmp.eq.s32.totalorder %s122, 1
      %p885 = por %p883, %p884
      %p886 = scmp.ne.s32.totalorder %s877, %s878
      %p887 = scmp.eq.s32.totalorder %s122, 0
      %p888 = por %p886, %p887
      %p889 = scmp.ne.s32.totalorder %s877, %s878
      %p890 = scmp.eq.s32.totalorder %s123, 1
      %p891 = por %p889, %p890
      %p893 = scmp.ne.s32.totalorder %s878, %s892
      %p894 = scmp.eq.s32.totalorder %s123, 0
      %p895 = por %p893, %p894
      %s897 = sadd.s32 %s896, 1
      %p900 = scmp.eq.s32.totalorder %s117, 1
      %p901 = scmp.ne.s32.totalorder %s896, %s898
      %p902 = scmp.eq.s32.totalorder %s117, 0
      %p903 = por %p901, %p902
      %p904 = scmp.ne.s32.totalorder %s896, %s898
      %p905 = scmp.eq.s32.totalorder %s122, 1
      %p906 = por %p904, %p905
      %p907 = scmp.ne.s32.totalorder %s898, %s899
      %p908 = scmp.eq.s32.totalorder %s122, 0
      %p909 = por %p907, %p908
      %p910 = scmp.ne.s32.totalorder %s898, %s899
      %p911 = scmp.eq.s32.totalorder %s123, 1
      %p912 = por %p910, %p911
      %p914 = scmp.ne.s32.totalorder %s899, %s913
      %p915 = scmp.eq.s32.totalorder %s123, 0
      %p916 = por %p914, %p915
      %s918 = sadd.s32 %s917, 1
      %p921 = scmp.eq.s32.totalorder %s117, 1
      %p922 = scmp.ne.s32.totalorder %s917, %s919
      %p923 = scmp.eq.s32.totalorder %s117, 0
      %p924 = por %p922, %p923
      %p925 = scmp.ne.s32.totalorder %s917, %s919
      %p926 = scmp.eq.s32.totalorder %s122, 1
      %p927 = por %p925, %p926
      %p928 = scmp.ne.s32.totalorder %s919, %s920
      %p929 = scmp.eq.s32.totalorder %s122, 0
      %p930 = por %p928, %p929
      %p931 = scmp.ne.s32.totalorder %s919, %s920
      %p932 = scmp.eq.s32.totalorder %s123, 1
      %p933 = por %p931, %p932
      %p935 = scmp.ne.s32.totalorder %s920, %s934
      %p936 = scmp.eq.s32.totalorder %s123, 0
      %p937 = por %p935, %p936
      %s939 = sadd.s32 %s938, 1
      %p942 = scmp.eq.s32.totalorder %s117, 1
      %p943 = scmp.ne.s32.totalorder %s938, %s940
      %p944 = scmp.eq.s32.totalorder %s117, 0
      %p945 = por %p943, %p944
      %p946 = scmp.ne.s32.totalorder %s938, %s940
      %p947 = scmp.eq.s32.totalorder %s122, 1
      %p948 = por %p946, %p947
      %p949 = scmp.ne.s32.totalorder %s940, %s941
      %p950 = scmp.eq.s32.totalorder %s122, 0
      %p951 = por %p949, %p950
      %p952 = scmp.ne.s32.totalorder %s940, %s941
      %p953 = scmp.eq.s32.totalorder %s123, 1
      %p954 = por %p952, %p953
      %p956 = scmp.ne.s32.totalorder %s941, %s955
      %p957 = scmp.eq.s32.totalorder %s123, 0
      %p958 = por %p956, %p957
      %s960 = sadd.s32 %s959, 1
      %p963 = scmp.eq.s32.totalorder %s117, 1
      %p964 = scmp.ne.s32.totalorder %s959, %s961
      %p965 = scmp.eq.s32.totalorder %s117, 0
      %p966 = por %p964, %p965
      %p967 = scmp.ne.s32.totalorder %s959, %s961
      %p968 = scmp.eq.s32.totalorder %s122, 1
      %p969 = por %p967, %p968
      %p970 = scmp.ne.s32.totalorder %s961, %s962
      %p971 = scmp.eq.s32.totalorder %s122, 0
      %p972 = por %p970, %p971
      %p973 = scmp.ne.s32.totalorder %s961, %s962
      %p974 = scmp.eq.s32.totalorder %s123, 1
      %p975 = por %p973, %p974
      %p977 = scmp.ne.s32.totalorder %s962, %s976
      %p978 = scmp.eq.s32.totalorder %s123, 0
      %p979 = por %p977, %p978
      %s981 = sadd.s32 %s980, 1
      %p984 = scmp.eq.s32.totalorder %s117, 1
      %p985 = scmp.ne.s32.totalorder %s980, %s982
      %p986 = scmp.eq.s32.totalorder %s117, 0
      %p987 = por %p985, %p986
      %p988 = scmp.ne.s32.totalorder %s980, %s982
      %p989 = scmp.eq.s32.totalorder %s122, 1
      %p990 = por %p988, %p989
      %p991 = scmp.ne.s32.totalorder %s982, %s983
      %p992 = scmp.eq.s32.totalorder %s122, 0
      %p993 = por %p991, %p992
      %p994 = scmp.ne.s32.totalorder %s982, %s983
      %p995 = scmp.eq.s32.totalorder %s123, 1
      %p996 = por %p994, %p995
      %p998 = scmp.ne.s32.totalorder %s983, %s997
      %p999 = scmp.eq.s32.totalorder %s123, 0
      %p1000 = por %p998, %p999
      %s1002 = sadd.s32 %s1001, 1
      %p1005 = scmp.eq.s32.totalorder %s117, 1
      %p1006 = scmp.ne.s32.totalorder %s1001, %s1003
      %p1007 = scmp.eq.s32.totalorder %s117, 0
      %p1008 = por %p1006, %p1007
      %p1009 = scmp.ne.s32.totalorder %s1001, %s1003
      %p1010 = scmp.eq.s32.totalorder %s122, 1
      %p1011 = por %p1009, %p1010
      %p1012 = scmp.ne.s32.totalorder %s1003, %s1004
      %p1013 = scmp.eq.s32.totalorder %s122, 0
      %p1014 = por %p1012, %p1013
      %p1015 = scmp.ne.s32.totalorder %s1003, %s1004
      %p1016 = scmp.eq.s32.totalorder %s123, 1
      %p1017 = por %p1015, %p1016
      %p1019 = scmp.ne.s32.totalorder %s1004, %s1018
      %p1020 = scmp.eq.s32.totalorder %s123, 0
      %p1021 = por %p1019, %p1020
      %s1022 = ssub.s32 %s117, %s124
      %p1023 = scmp.eq.s32.totalorder %s1022, 0
      %s1025 = sadd.s32 %s1024, 1
      %s1026 = scalar_select %p1023, %s1024, %s1025
      %p1029 = pneg %p1023
      %p1030 = scmp.eq.s32.totalorder %s117, 1
      %p1031 = por %p1029, %p1030
      %p1032 = scmp.ne.s32.totalorder %s1024, %s1027
      %p1033 = scmp.eq.s32.totalorder %s117, 0
      %p1034 = por %p1032, %p1033
      %p1035 = scmp.ne.s32.totalorder %s1024, %s1027
      %p1036 = scmp.eq.s32.totalorder %s122, 1
      %p1037 = por %p1035, %p1036
      %p1038 = scmp.ne.s32.totalorder %s1027, %s1028
      %p1039 = scmp.eq.s32.totalorder %s122, 0
      %p1040 = por %p1038, %p1039
      %p1041 = scmp.ne.s32.totalorder %s1027, %s1028
      %p1042 = scmp.eq.s32.totalorder %s123, 1
      %p1043 = por %p1041, %p1042
      %p1045 = scmp.ne.s32.totalorder %s1028, %s1044
      %p1046 = scmp.eq.s32.totalorder %s123, 0
      %p1047 = por %p1045, %p1046
      %p1048 = scmp.le.s32.totalorder 1, %s117
      %p1049 = scmp.lt.s32.totalorder %s117, 3
      %p1050 = pnand %p1048, %p1049
      %p1051 = pneg %p1050
      // Predicated region
      $region9: #{forward.1} parent=5 // pred_check
        _
      $region10: #{forward.1} parent=5 // pred_check_branch
        %1053 = sbr.rel (%p1050) target = $region12
      $region11: #{forward.1} parent=5 // pred_region
        %s1054 = ssub.s32 %s117, 1
        // Predicated region
        $region13: #{forward.1} parent=11 // pred_check
          %p1055 = pneg %p216
        $region14: #{forward.1} parent=11 // pred_check_branch
          %1057 = sbr.rel (%p1055) target = $region16
        $region15: #{forward.1} parent=11 // pred_region
          %s1059 = ssub.s32 896, 896
          %1060 = vsyncadd [#allocation6], %s1059
          %s1061 = sshll.u32 [#allocation5], 4
          %s1062 = int_to_ptr.vmem [resolvable:$true] %s1061
          %1067 = dma.hbm_to_vmem [thread:$0]  %s7, 896, %s1062, [#allocation6], 128, 128, 8
        $region16: #{forward.1} parent=11 // pred_fallthru
          _
        // Predicated region
        $region17: #{forward.1} parent=11 // pred_check
          %p1068 = pneg %p237
        $region18: #{forward.1} parent=11 // pred_check_branch
          %1070 = sbr.rel (%p1068) target = $region20
        $region19: #{forward.1} parent=11 // pred_region
          %s1072 = ssub.s32 2048, 2048
          %1073 = vsyncadd [#allocation6], %s1072
          %s1074 = sshll.u32 [#allocation7], 4
          %s1075 = int_to_ptr.vmem [resolvable:$true] %s1074
          %1080 = dma.hbm_to_vmem [thread:$0]  %s9, 2048, %s1075, [#allocation6], 64, 64, 4
        $region20: #{forward.1} parent=11 // pred_fallthru
          _
        // Predicated region
        $region21: #{forward.1} parent=11 // pred_check
          %p1081 = pneg %p258
        $region22: #{forward.1} parent=11 // pred_check_branch
          %1083 = sbr.rel (%p1081) target = $region24
        $region23: #{forward.1} parent=11 // pred_region
          %s1085 = ssub.s32 32, 32
          %1086 = vsyncadd [#allocation9], %s1085
          %s1087 = sshll.u32 [#allocation8], 4
          %s1088 = int_to_ptr.vmem [resolvable:$true] %s1087
          %1093 = dma.hbm_to_vmem [thread:$0]  %s11, 32, %s1088, [#allocation9], 16, 16, 1
        $region24: #{forward.1} parent=11 // pred_fallthru
          _
        // Predicated region
        $region25: #{forward.1} parent=11 // pred_check
          %p1094 = pneg %p279
        $region26: #{forward.1} parent=11 // pred_check_branch
          %1096 = sbr.rel (%p1094) target = $region28
        $region27: #{forward.1} parent=11 // pred_region
          %s1098 = ssub.s32 512, 512
          %1099 = vsyncadd [#allocation9], %s1098
          %s1100 = sshll.u32 [#allocation10], 4
          %s1101 = int_to_ptr.vmem [resolvable:$true] %s1100
          %1106 = dma.hbm_to_vmem [thread:$0]  %s13, 512, %s1101, [#allocation9], 64, 64, 4
        $region28: #{forward.1} parent=11 // pred_fallthru
          _
        // Predicated region
        $region29: #{forward.1} parent=11 // pred_check
          %p1107 = pneg %p300
        $region30: #{forward.1} parent=11 // pred_check_branch
          %1109 = sbr.rel (%p1107) target = $region32
        $region31: #{forward.1} parent=11 // pred_region
          %s1111 = ssub.s32 32, 32
          %1112 = vsyncadd [#allocation12], %s1111
          %s1113 = sshll.u32 [#allocation11], 4
          %s1114 = int_to_ptr.vmem [resolvable:$true] %s1113
          %1119 = dma.hbm_to_vmem [thread:$0]  %s15, 32, %s1114, [#allocation12], 16, 16, 1
        $region32: #{forward.1} parent=11 // pred_fallthru
          _
        // Predicated region
        $region33: #{forward.1} parent=11 // pred_check
          %p1120 = pneg %p321
        $region34: #{forward.1} parent=11 // pred_check_branch
          %1122 = sbr.rel (%p1120) target = $region36
        $region35: #{forward.1} parent=11 // pred_region
          %s1124 = ssub.s32 32, 32
          %1125 = vsyncadd [#allocation12], %s1124
          %s1126 = sshll.u32 [#allocation13], 4
          %s1127 = int_to_ptr.vmem [resolvable:$true] %s1126
          %1132 = dma.hbm_to_vmem [thread:$0]  %s17, 32, %s1127, [#allocation12], 16, 16, 1
        $region36: #{forward.1} parent=11 // pred_fallthru
          _
        // Predicated region
        $region37: #{forward.1} parent=11 // pred_check
          %p1133 = pneg %p342
        $region38: #{forward.1} parent=11 // pred_check_branch
          %1135 = sbr.rel (%p1133) target = $region40
        $region39: #{forward.1} parent=11 // pred_region
          %s1137 = ssub.s32 32, 32
          %1138 = vsyncadd [#allocation15], %s1137
          %s1139 = sshll.u32 [#allocation14], 4
          %s1140 = int_to_ptr.vmem [resolvable:$true] %s1139
          %1145 = dma.hbm_to_vmem [thread:$0]  %s19, 32, %s1140, [#allocation15], 16, 16, 1
        $region40: #{forward.1} parent=11 // pred_fallthru
          _
        // Predicated region
        $region41: #{forward.1} parent=11 // pred_check
          %p1146 = pneg %p363
        $region42: #{forward.1} parent=11 // pred_check_branch
          %1148 = sbr.rel (%p1146) target = $region44
        $region43: #{forward.1} parent=11 // pred_region
          %s1150 = ssub.s32 2048, 2048
          %1151 = vsyncadd [#allocation15], %s1150
          %s1152 = sshll.u32 [#allocation16], 4
          %s1153 = int_to_ptr.vmem [resolvable:$true] %s1152
          %1158 = dma.hbm_to_vmem [thread:$0]  %s21, 2048, %s1153, [#allocation15], 64, 64, 4
        $region44: #{forward.1} parent=11 // pred_fallthru
          _
        // Predicated region
        $region45: #{forward.1} parent=11 // pred_check
          %p1159 = pneg %p384
        $region46: #{forward.1} parent=11 // pred_check_branch
          %1161 = sbr.rel (%p1159) target = $region48
        $region47: #{forward.1} parent=11 // pred_region
          %s1163 = ssub.s32 32, 32
          %1164 = vsyncadd [#allocation18], %s1163
          %s1165 = sshll.u32 [#allocation17], 4
          %s1166 = int_to_ptr.vmem [resolvable:$true] %s1165
          %1171 = dma.hbm_to_vmem [thread:$0]  %s23, 32, %s1166, [#allocation18], 16, 16, 1
        $region48: #{forward.1} parent=11 // pred_fallthru
          _
        // Predicated region
        $region49: #{forward.1} parent=11 // pred_check
          %p1172 = pneg %p405
        $region50: #{forward.1} parent=11 // pred_check_branch
          %1174 = sbr.rel (%p1172) target = $region52
        $region51: #{forward.1} parent=11 // pred_region
          %s1176 = ssub.s32 2048, 2048
          %1177 = vsyncadd [#allocation18], %s1176
          %s1178 = sshll.u32 [#allocation19], 4
          %s1179 = int_to_ptr.vmem [resolvable:$true] %s1178
          %1184 = dma.hbm_to_vmem [thread:$0]  %s25, 2048, %s1179, [#allocation18], 64, 64, 4
        $region52: #{forward.1} parent=11 // pred_fallthru
          _
        // Predicated region
        $region53: #{forward.1} parent=11 // pred_check
          %p1185 = pneg %p426
        $region54: #{forward.1} parent=11 // pred_check_branch
          %1187 = sbr.rel (%p1185) target = $region56
        $region55: #{forward.1} parent=11 // pred_region
          %s1189 = ssub.s32 32, 32
          %1190 = vsyncadd [#allocation21], %s1189
          %s1191 = sshll.u32 [#allocation20], 4
          %s1192 = int_to_ptr.vmem [resolvable:$true] %s1191
          %1197 = dma.hbm_to_vmem [thread:$0]  %s27, 32, %s1192, [#allocation21], 16, 16, 1
        $region56: #{forward.1} parent=11 // pred_fallthru
          _
        // Predicated region
        $region57: #{forward.1} parent=11 // pred_check
          %p1198 = pneg %p447
        $region58: #{forward.1} parent=11 // pred_check_branch
          %1200 = sbr.rel (%p1198) target = $region60
        $region59: #{forward.1} parent=11 // pred_region
          %s1202 = ssub.s32 32, 32
          %1203 = vsyncadd [#allocation21], %s1202
          %s1204 = sshll.u32 [#allocation22], 4
          %s1205 = int_to_ptr.vmem [resolvable:$true] %s1204
          %1210 = dma.hbm_to_vmem [thread:$0]  %s29, 32, %s1205, [#allocation21], 16, 16, 1
        $region60: #{forward.1} parent=11 // pred_fallthru
          _
        // Predicated region
        $region61: #{forward.1} parent=11 // pred_check
          %p1211 = pneg %p468
        $region62: #{forward.1} parent=11 // pred_check_branch
          %1213 = sbr.rel (%p1211) target = $region64
        $region63: #{forward.1} parent=11 // pred_region
          %s1215 = ssub.s32 32, 32
          %1216 = vsyncadd [#allocation24], %s1215
          %s1217 = sshll.u32 [#allocation23], 4
          %s1218 = int_to_ptr.vmem [resolvable:$true] %s1217
          %1223 = dma.hbm_to_vmem [thread:$0]  %s31, 32, %s1218, [#allocation24], 16, 16, 1
        $region64: #{forward.1} parent=11 // pred_fallthru
          _
        // Predicated region
        $region65: #{forward.1} parent=11 // pred_check
          %p1224 = pneg %p489
        $region66: #{forward.1} parent=11 // pred_check_branch
          %1226 = sbr.rel (%p1224) target = $region68
        $region67: #{forward.1} parent=11 // pred_region
          %s1228 = ssub.s32 16, 16
          %1229 = vsyncadd [#allocation24], %s1228
          %s1231 = sshll.u32 [#allocation25], 4
          %s1232 = int_to_ptr.vmem [resolvable:$true] %s1231
          %1234 = dma.hbm_to_vmem [thread:$0]  %s33, 16, %s1232, [#allocation24]
        $region68: #{forward.1} parent=11 // pred_fallthru
          _
        // Predicated region
        $region69: #{forward.1} parent=11 // pred_check
          %p1235 = pneg %p510
        $region70: #{forward.1} parent=11 // pred_check_branch
          %1237 = sbr.rel (%p1235) target = $region72
        $region71: #{forward.1} parent=11 // pred_region
          %s1239 = ssub.s32 16, 16
          %1240 = vsyncadd [#allocation27], %s1239
          %s1242 = sshll.u32 [#allocation26], 4
          %s1243 = int_to_ptr.vmem [resolvable:$true] %s1242
          %1245 = dma.hbm_to_vmem [thread:$0]  %s35, 16, %s1243, [#allocation27]
        $region72: #{forward.1} parent=11 // pred_fallthru
          _
        // Predicated region
        $region73: #{forward.1} parent=11 // pred_check
          %p1246 = pneg %p531
        $region74: #{forward.1} parent=11 // pred_check_branch
          %1248 = sbr.rel (%p1246) target = $region76
        $region75: #{forward.1} parent=11 // pred_region
          %s1250 = ssub.s32 2048, 2048
          %1251 = vsyncadd [#allocation27], %s1250
          %s1252 = sshll.u32 [#allocation28], 4
          %s1253 = int_to_ptr.vmem [resolvable:$true] %s1252
          %1258 = dma.hbm_to_vmem [thread:$0]  %s37, 2048, %s1253, [#allocation27], 64, 64, 4
        $region76: #{forward.1} parent=11 // pred_fallthru
          _
        // Predicated region
        $region77: #{forward.1} parent=11 // pred_check
          %p1259 = pneg %p552
        $region78: #{forward.1} parent=11 // pred_check_branch
          %1261 = sbr.rel (%p1259) target = $region80
        $region79: #{forward.1} parent=11 // pred_region
          %s1263 = ssub.s32 32, 32
          %1264 = vsyncadd [#allocation30], %s1263
          %s1265 = sshll.u32 [#allocation29], 4
          %s1266 = int_to_ptr.vmem [resolvable:$true] %s1265
          %1271 = dma.hbm_to_vmem [thread:$0]  %s39, 32, %s1266, [#allocation30], 16, 16, 1
        $region80: #{forward.1} parent=11 // pred_fallthru
          _
        // Predicated region
        $region81: #{forward.1} parent=11 // pred_check
          %p1272 = pneg %p573
        $region82: #{forward.1} parent=11 // pred_check_branch
          %1274 = sbr.rel (%p1272) target = $region84
        $region83: #{forward.1} parent=11 // pred_region
          %s1276 = ssub.s32 512, 512
          %1277 = vsyncadd [#allocation30], %s1276
          %s1278 = sshll.u32 [#allocation31], 4
          %s1279 = int_to_ptr.vmem [resolvable:$true] %s1278
          %1284 = dma.hbm_to_vmem [thread:$0]  %s41, 512, %s1279, [#allocation30], 64, 64, 4
        $region84: #{forward.1} parent=11 // pred_fallthru
          _
        // Predicated region
        $region85: #{forward.1} parent=11 // pred_check
          %p1285 = pneg %p594
        $region86: #{forward.1} parent=11 // pred_check_branch
          %1287 = sbr.rel (%p1285) target = $region88
        $region87: #{forward.1} parent=11 // pred_region
          %s1289 = ssub.s32 32, 32
          %1290 = vsyncadd [#allocation33], %s1289
          %s1291 = sshll.u32 [#allocation32], 4
          %s1292 = int_to_ptr.vmem [resolvable:$true] %s1291
          %1297 = dma.hbm_to_vmem [thread:$0]  %s43, 32, %s1292, [#allocation33], 16, 16, 1
        $region88: #{forward.1} parent=11 // pred_fallthru
          _
        // Predicated region
        $region89: #{forward.1} parent=11 // pred_check
          %p1298 = pneg %p615
        $region90: #{forward.1} parent=11 // pred_check_branch
          %1300 = sbr.rel (%p1298) target = $region92
        $region91: #{forward.1} parent=11 // pred_region
          %s1302 = ssub.s32 2048, 2048
          %1303 = vsyncadd [#allocation33], %s1302
          %s1304 = sshll.u32 [#allocation34], 4
          %s1305 = int_to_ptr.vmem [resolvable:$true] %s1304
          %1310 = dma.hbm_to_vmem [thread:$0]  %s45, 2048, %s1305, [#allocation33], 64, 64, 4
        $region92: #{forward.1} parent=11 // pred_fallthru
          _
        // Predicated region
        $region93: #{forward.1} parent=11 // pred_check
          %p1311 = pneg %p636
        $region94: #{forward.1} parent=11 // pred_check_branch
          %1313 = sbr.rel (%p1311) target = $region96
        $region95: #{forward.1} parent=11 // pred_region
          %s1315 = ssub.s32 32, 32
          %1316 = vsyncadd [#allocation36], %s1315
          %s1317 = sshll.u32 [#allocation35], 4
          %s1318 = int_to_ptr.vmem [resolvable:$true] %s1317
          %1323 = dma.hbm_to_vmem [thread:$0]  %s47, 32, %s1318, [#allocation36], 16, 16, 1
        $region96: #{forward.1} parent=11 // pred_fallthru
          _
        // Predicated region
        $region97: #{forward.1} parent=11 // pred_check
          %p1324 = pneg %p657
        $region98: #{forward.1} parent=11 // pred_check_branch
          %1326 = sbr.rel (%p1324) target = $region100
        $region99: #{forward.1} parent=11 // pred_region
          %s1328 = ssub.s32 2048, 2048
          %1329 = vsyncadd [#allocation36], %s1328
          %s1330 = sshll.u32 [#allocation37], 4
          %s1331 = int_to_ptr.vmem [resolvable:$true] %s1330
          %1336 = dma.hbm_to_vmem [thread:$0]  %s49, 2048, %s1331, [#allocation36], 64, 64, 4
        $region100: #{forward.1} parent=11 // pred_fallthru
          _
        // Predicated region
        $region101: #{forward.1} parent=11 // pred_check
          %p1337 = pneg %p678
        $region102: #{forward.1} parent=11 // pred_check_branch
          %1339 = sbr.rel (%p1337) target = $region104
        $region103: #{forward.1} parent=11 // pred_region
          %s1341 = ssub.s32 32, 32
          %1342 = vsyncadd [#allocation39], %s1341
          %s1343 = sshll.u32 [#allocation38], 4
          %s1344 = int_to_ptr.vmem [resolvable:$true] %s1343
          %1349 = dma.hbm_to_vmem [thread:$0]  %s51, 32, %s1344, [#allocation39], 16, 16, 1
        $region104: #{forward.1} parent=11 // pred_fallthru
          _
        // Predicated region
        $region105: #{forward.1} parent=11 // pred_check
          %p1350 = pneg %p699
        $region106: #{forward.1} parent=11 // pred_check_branch
          %1352 = sbr.rel (%p1350) target = $region108
        $region107: #{forward.1} parent=11 // pred_region
          %s1354 = ssub.s32 512, 512
          %1355 = vsyncadd [#allocation39], %s1354
          %s1356 = sshll.u32 [#allocation40], 4
          %s1357 = int_to_ptr.vmem [resolvable:$true] %s1356
          %1362 = dma.hbm_to_vmem [thread:$0]  %s53, 512, %s1357, [#allocation39], 64, 64, 4
        $region108: #{forward.1} parent=11 // pred_fallthru
          _
        // Predicated region
        $region109: #{forward.1} parent=11 // pred_check
          %p1363 = pneg %p720
        $region110: #{forward.1} parent=11 // pred_check_branch
          %1365 = sbr.rel (%p1363) target = $region112
        $region111: #{forward.1} parent=11 // pred_region
          %s1367 = ssub.s32 32, 32
          %1368 = vsyncadd [#allocation42], %s1367
          %s1369 = sshll.u32 [#allocation41], 4
          %s1370 = int_to_ptr.vmem [resolvable:$true] %s1369
          %1375 = dma.hbm_to_vmem [thread:$0]  %s55, 32, %s1370, [#allocation42], 16, 16, 1
        $region112: #{forward.1} parent=11 // pred_fallthru
          _
        // Predicated region
        $region113: #{forward.1} parent=11 // pred_check
          %p1376 = pneg %p741
        $region114: #{forward.1} parent=11 // pred_check_branch
          %1378 = sbr.rel (%p1376) target = $region116
        $region115: #{forward.1} parent=11 // pred_region
          %s1380 = ssub.s32 32, 32
          %1381 = vsyncadd [#allocation42], %s1380
          %s1382 = sshll.u32 [#allocation43], 4
          %s1383 = int_to_ptr.vmem [resolvable:$true] %s1382
          %1388 = dma.hbm_to_vmem [thread:$0]  %s57, 32, %s1383, [#allocation42], 16, 16, 1
        $region116: #{forward.1} parent=11 // pred_fallthru
          _
        // Predicated region
        $region117: #{forward.1} parent=11 // pred_check
          %p1389 = pneg %p762
        $region118: #{forward.1} parent=11 // pred_check_branch
          %1391 = sbr.rel (%p1389) target = $region120
        $region119: #{forward.1} parent=11 // pred_region
          %s1393 = ssub.s32 32, 32
          %1394 = vsyncadd [#allocation45], %s1393
          %s1395 = sshll.u32 [#allocation44], 4
          %s1396 = int_to_ptr.vmem [resolvable:$true] %s1395
          %1401 = dma.hbm_to_vmem [thread:$0]  %s59, 32, %s1396, [#allocation45], 16, 16, 1
        $region120: #{forward.1} parent=11 // pred_fallthru
          _
        // Predicated region
        $region121: #{forward.1} parent=11 // pred_check
          %p1402 = pneg %p783
        $region122: #{forward.1} parent=11 // pred_check_branch
          %1404 = sbr.rel (%p1402) target = $region124
        $region123: #{forward.1} parent=11 // pred_region
          %s1406 = ssub.s32 32, 32
          %1407 = vsyncadd [#allocation45], %s1406
          %s1408 = sshll.u32 [#allocation46], 4
          %s1409 = int_to_ptr.vmem [resolvable:$true] %s1408
          %1414 = dma.hbm_to_vmem [thread:$0]  %s61, 32, %s1409, [#allocation45], 16, 16, 1
        $region124: #{forward.1} parent=11 // pred_fallthru
          _
        // Predicated region
        $region125: #{forward.1} parent=11 // pred_check
          %p1415 = pneg %p804
        $region126: #{forward.1} parent=11 // pred_check_branch
          %1417 = sbr.rel (%p1415) target = $region128
        $region127: #{forward.1} parent=11 // pred_region
          %s1419 = ssub.s32 32, 32
          %1420 = vsyncadd [#allocation48], %s1419
          %s1421 = sshll.u32 [#allocation47], 4
          %s1422 = int_to_ptr.vmem [resolvable:$true] %s1421
          %1427 = dma.hbm_to_vmem [thread:$0]  %s63, 32, %s1422, [#allocation48], 16, 16, 1
        $region128: #{forward.1} parent=11 // pred_fallthru
          _
        // Predicated region
        $region129: #{forward.1} parent=11 // pred_check
          %p1428 = pneg %p825
        $region130: #{forward.1} parent=11 // pred_check_branch
          %1430 = sbr.rel (%p1428) target = $region132
        $region131: #{forward.1} parent=11 // pred_region
          %s1432 = ssub.s32 32, 32
          %1433 = vsyncadd [#allocation48], %s1432
          %s1434 = sshll.u32 [#allocation49], 4
          %s1435 = int_to_ptr.vmem [resolvable:$true] %s1434
          %1440 = dma.hbm_to_vmem [thread:$0]  %s65, 32, %s1435, [#allocation48], 16, 16, 1
        $region132: #{forward.1} parent=11 // pred_fallthru
          _
        // Predicated region
        $region133: #{forward.1} parent=11 // pred_check
          %p1441 = pneg %p846
        $region134: #{forward.1} parent=11 // pred_check_branch
          %1443 = sbr.rel (%p1441) target = $region136
        $region135: #{forward.1} parent=11 // pred_region
          %s1445 = ssub.s32 32, 32
          %1446 = vsyncadd [#allocation51], %s1445
          %s1447 = sshll.u32 [#allocation50], 4
          %s1448 = int_to_ptr.vmem [resolvable:$true] %s1447
          %1453 = dma.hbm_to_vmem [thread:$0]  %s67, 32, %s1448, [#allocation51], 16, 16, 1
        $region136: #{forward.1} parent=11 // pred_fallthru
          _
        // Predicated region
        $region137: #{forward.1} parent=11 // pred_check
          %p1454 = pneg %p867
        $region138: #{forward.1} parent=11 // pred_check_branch
          %1456 = sbr.rel (%p1454) target = $region140
        $region139: #{forward.1} parent=11 // pred_region
          %s1458 = ssub.s32 2048, 2048
          %1459 = vsyncadd [#allocation51], %s1458
          %s1460 = sshll.u32 [#allocation52], 4
          %s1461 = int_to_ptr.vmem [resolvable:$true] %s1460
          %1466 = dma.hbm_to_vmem [thread:$0]  %s69, 2048, %s1461, [#allocation51], 64, 64, 4
        $region140: #{forward.1} parent=11 // pred_fallthru
          _
        // Predicated region
        $region141: #{forward.1} parent=11 // pred_check
          %p1467 = pneg %p888
        $region142: #{forward.1} parent=11 // pred_check_branch
          %1469 = sbr.rel (%p1467) target = $region144
        $region143: #{forward.1} parent=11 // pred_region
          %s1471 = ssub.s32 32, 32
          %1472 = vsyncadd [#allocation54], %s1471
          %s1473 = sshll.u32 [#allocation53], 4
          %s1474 = int_to_ptr.vmem [resolvable:$true] %s1473
          %1479 = dma.hbm_to_vmem [thread:$0]  %s71, 32, %s1474, [#allocation54], 16, 16, 1
        $region144: #{forward.1} parent=11 // pred_fallthru
          _
        // Predicated region
        $region145: #{forward.1} parent=11 // pred_check
          %p1480 = pneg %p909
        $region146: #{forward.1} parent=11 // pred_check_branch
          %1482 = sbr.rel (%p1480) target = $region148
        $region147: #{forward.1} parent=11 // pred_region
          %s1484 = ssub.s32 2048, 2048
          %1485 = vsyncadd [#allocation54], %s1484
          %s1486 = sshll.u32 [#allocation55], 4
          %s1487 = int_to_ptr.vmem [resolvable:$true] %s1486
          %1492 = dma.hbm_to_vmem [thread:$0]  %s73, 2048, %s1487, [#allocation54], 64, 64, 4
        $region148: #{forward.1} parent=11 // pred_fallthru
          _
        // Predicated region
        $region149: #{forward.1} parent=11 // pred_check
          %p1493 = pneg %p930
        $region150: #{forward.1} parent=11 // pred_check_branch
          %1495 = sbr.rel (%p1493) target = $region152
        $region151: #{forward.1} parent=11 // pred_region
          %s1497 = ssub.s32 32, 32
          %1498 = vsyncadd [#allocation57], %s1497
          %s1499 = sshll.u32 [#allocation56], 4
          %s1500 = int_to_ptr.vmem [resolvable:$true] %s1499
          %1505 = dma.hbm_to_vmem [thread:$0]  %s75, 32, %s1500, [#allocation57], 16, 16, 1
        $region152: #{forward.1} parent=11 // pred_fallthru
          _
        // Predicated region
        $region153: #{forward.1} parent=11 // pred_check
          %p1506 = pneg %p951
        $region154: #{forward.1} parent=11 // pred_check_branch
          %1508 = sbr.rel (%p1506) target = $region156
        $region155: #{forward.1} parent=11 // pred_region
          %s1510 = ssub.s32 16, 16
          %1511 = vsyncadd [#allocation57], %s1510
          %s1513 = sshll.u32 [#allocation58], 4
          %s1514 = int_to_ptr.vmem [resolvable:$true] %s1513
          %1516 = dma.hbm_to_vmem [thread:$0]  %s77, 16, %s1514, [#allocation57]
        $region156: #{forward.1} parent=11 // pred_fallthru
          _
        // Predicated region
        $region157: #{forward.1} parent=11 // pred_check
          %p1517 = pneg %p972
        $region158: #{forward.1} parent=11 // pred_check_branch
          %1519 = sbr.rel (%p1517) target = $region160
        $region159: #{forward.1} parent=11 // pred_region
          %s1521 = ssub.s32 16, 16
          %1522 = vsyncadd [#allocation60], %s1521
          %s1524 = sshll.u32 [#allocation59], 4
          %s1525 = int_to_ptr.vmem [resolvable:$true] %s1524
          %1527 = dma.hbm_to_vmem [thread:$0]  %s79, 16, %s1525, [#allocation60]
        $region160: #{forward.1} parent=11 // pred_fallthru
          _
        // Predicated region
        $region161: #{forward.1} parent=11 // pred_check
          %p1528 = pneg %p993
        $region162: #{forward.1} parent=11 // pred_check_branch
          %1530 = sbr.rel (%p1528) target = $region164
        $region163: #{forward.1} parent=11 // pred_region
          %s1532 = ssub.s32 1024, 1024
          %1533 = vsyncadd [#allocation60], %s1532
          %s1534 = sshll.u32 [#allocation61], 4
          %s1535 = int_to_ptr.vmem [resolvable:$true] %s1534
          %1540 = dma.hbm_to_vmem [thread:$0]  %s81, 1024, %s1535, [#allocation60], 64, 64, 4
        $region164: #{forward.1} parent=11 // pred_fallthru
          _
        // Predicated region
        $region165: #{forward.1} parent=11 // pred_check
          %p1541 = pneg %p1014
        $region166: #{forward.1} parent=11 // pred_check_branch
          %1543 = sbr.rel (%p1541) target = $region168
        $region167: #{forward.1} parent=11 // pred_region
          %s1545 = ssub.s32 16, 16
          %1546 = vsyncadd [#allocation63], %s1545
          %s1548 = sshll.u32 [#allocation62], 4
          %s1549 = int_to_ptr.vmem [resolvable:$true] %s1548
          %1551 = dma.hbm_to_vmem [thread:$0]  %s83, 16, %s1549, [#allocation63]
        $region168: #{forward.1} parent=11 // pred_fallthru
          _
      $region12: #{forward.1} parent=5 // pred_fallthru
        _
      %p1552 = scmp.lt.s32.totalorder %s117, 2
      // Predicated region
      $region169: #{forward.1} parent=5 // pred_check
        %p1553 = pneg %p1552
      $region170: #{forward.1} parent=5 // pred_check_branch
        %1555 = sbr.rel (%p1553) target = $region172
      $region171: #{forward.1} parent=5 // pred_region
        // Predicated region
        $region173: #{forward.1} parent=171 // pred_check
          %p1556 = pneg %p137
        $region174: #{forward.1} parent=171 // pred_check_branch
          %1558 = sbr.rel (%p1556) target = $region176
        $region175: #{forward.1} parent=171 // pred_region
          %p1559 = scmp.lt.s32.totalorder %s117, 1
          %s1560 = scalar_select %p1559, %s117, 1
          %s1561 = smul.addr %s1560, 8
          %s1562 = scalar_lea.vmem %s1, %s1561
        $region176: #{forward.1} parent=171 // pred_fallthru
          _
        // Predicated region
        $region177: #{forward.1} parent=171 // pred_check
          %p1563 = pneg %p163
        $region178: #{forward.1} parent=171 // pred_check_branch
          %1565 = sbr.rel (%p1563) target = $region180
        $region179: #{forward.1} parent=171 // pred_region
          %p1566 = scmp.lt.s32.totalorder %s117, 1
          %s1567 = scalar_select %p1566, %s117, 1
          %s1568 = smul.addr %s1567, 8
          %s1569 = scalar_lea.vmem %s3, %s1568
        $region180: #{forward.1} parent=171 // pred_fallthru
          _
        // Predicated region
        $region181: #{forward.1} parent=171 // pred_check
          %p1570 = pneg %p189
        $region182: #{forward.1} parent=171 // pred_check_branch
          %1572 = sbr.rel (%p1570) target = $region184
        $region183: #{forward.1} parent=171 // pred_region
          %s1573 = sand.u32 %s179, 1
          %s1574 = scalar_lea.sflag [#allocation3], %s1573
          %s1575 = sand.u32 %s179, 1
          %s1576 = scalar_lea.vmem [#allocation2], %s1575
          %s1578 = ssub.s32 16, 16
          %1579 = vsyncadd %s1574, %s1578
          %s1580 = smul.addr %s117, 16
          %s1581 = scalar_lea.hbm %s5, %s1580
          %s1583 = sshll.u32 %s1576, 4
          %s1584 = int_to_ptr.vmem [resolvable:$true] %s1583
          %1586 = dma.hbm_to_vmem [thread:$0]  %s1581, 16, %s1584, %s1574
        $region184: #{forward.1} parent=171 // pred_fallthru
          _
      $region172: #{forward.1} parent=5 // pred_fallthru
        _
      %p1587 = scmp.le.s32.totalorder 1, %s117
      %p1588 = scmp.lt.s32.totalorder %s117, 3
      %p1589 = pnand %p1587, %p1588
      %p1590 = pneg %p1589
      // Predicated region
      $region185: #{forward.1} parent=5 // pred_check
        _
      $region186: #{forward.1} parent=5 // pred_check_branch
        %1592 = sbr.rel (%p1589) target = $region188
      $region187: #{forward.1} parent=5 // pred_region
        %s1593 = ssub.s32 %s117, 1
        %s1594 = sand.u32 %s182, 1
        %s1595 = scalar_lea.sflag [#allocation3], %s1594
        %s1596 = sand.u32 %s182, 1
        %s1597 = scalar_lea.vmem [#allocation2], %s1596
        // Predicated region
        $region189: #{forward.1} parent=187 // pred_check
          %p1598 = pneg %p195
        $region190: #{forward.1} parent=187 // pred_check_branch
          %1600 = sbr.rel (%p1598) target = $region192
        $region191: #{forward.1} parent=187 // pred_region
          %1601 = dma.done %s1595, 16
        $region192: #{forward.1} parent=187 // pred_fallthru
          _
        // Predicated region
        $region193: #{forward.1} parent=187 // pred_check
          %p1602 = pneg %p216
        $region194: #{forward.1} parent=187 // pred_check_branch
          %1604 = sbr.rel (%p1602) target = $region196
        $region195: #{forward.1} parent=187 // pred_region
          %1605 = dma.done [#allocation6], 896
        $region196: #{forward.1} parent=187 // pred_fallthru
          _
        // Predicated region
        $region197: #{forward.1} parent=187 // pred_check
          %p1606 = pneg %p237
        $region198: #{forward.1} parent=187 // pred_check_branch
          %1608 = sbr.rel (%p1606) target = $region200
        $region199: #{forward.1} parent=187 // pred_region
          %1609 = dma.done [#allocation6], 2048
        $region200: #{forward.1} parent=187 // pred_fallthru
          _
        // Predicated region
        $region201: #{forward.1} parent=187 // pred_check
          %p1610 = pneg %p258
        $region202: #{forward.1} parent=187 // pred_check_branch
          %1612 = sbr.rel (%p1610) target = $region204
        $region203: #{forward.1} parent=187 // pred_region
          %1613 = dma.done [#allocation9], 32
        $region204: #{forward.1} parent=187 // pred_fallthru
          _
        // Predicated region
        $region205: #{forward.1} parent=187 // pred_check
          %p1614 = pneg %p279
        $region206: #{forward.1} parent=187 // pred_check_branch
          %1616 = sbr.rel (%p1614) target = $region208
        $region207: #{forward.1} parent=187 // pred_region
          %1617 = dma.done [#allocation9], 512
        $region208: #{forward.1} parent=187 // pred_fallthru
          _
        // Predicated region
        $region209: #{forward.1} parent=187 // pred_check
          %p1618 = pneg %p300
        $region210: #{forward.1} parent=187 // pred_check_branch
          %1620 = sbr.rel (%p1618) target = $region212
        $region211: #{forward.1} parent=187 // pred_region
          %1621 = dma.done [#allocation12], 32
        $region212: #{forward.1} parent=187 // pred_fallthru
          _
        // Predicated region
        $region213: #{forward.1} parent=187 // pred_check
          %p1622 = pneg %p321
        $region214: #{forward.1} parent=187 // pred_check_branch
          %1624 = sbr.rel (%p1622) target = $region216
        $region215: #{forward.1} parent=187 // pred_region
          %1625 = dma.done [#allocation12], 32
        $region216: #{forward.1} parent=187 // pred_fallthru
          _
        // Predicated region
        $region217: #{forward.1} parent=187 // pred_check
          %p1626 = pneg %p342
        $region218: #{forward.1} parent=187 // pred_check_branch
          %1628 = sbr.rel (%p1626) target = $region220
        $region219: #{forward.1} parent=187 // pred_region
          %1629 = dma.done [#allocation15], 32
        $region220: #{forward.1} parent=187 // pred_fallthru
          _
        // Predicated region
        $region221: #{forward.1} parent=187 // pred_check
          %p1630 = pneg %p363
        $region222: #{forward.1} parent=187 // pred_check_branch
          %1632 = sbr.rel (%p1630) target = $region224
        $region223: #{forward.1} parent=187 // pred_region
          %1633 = dma.done [#allocation15], 2048
        $region224: #{forward.1} parent=187 // pred_fallthru
          _
        // Predicated region
        $region225: #{forward.1} parent=187 // pred_check
          %p1634 = pneg %p384
        $region226: #{forward.1} parent=187 // pred_check_branch
          %1636 = sbr.rel (%p1634) target = $region228
        $region227: #{forward.1} parent=187 // pred_region
          %1637 = dma.done [#allocation18], 32
        $region228: #{forward.1} parent=187 // pred_fallthru
          _
        // Predicated region
        $region229: #{forward.1} parent=187 // pred_check
          %p1638 = pneg %p405
        $region230: #{forward.1} parent=187 // pred_check_branch
          %1640 = sbr.rel (%p1638) target = $region232
        $region231: #{forward.1} parent=187 // pred_region
          %1641 = dma.done [#allocation18], 2048
        $region232: #{forward.1} parent=187 // pred_fallthru
          _
        // Predicated region
        $region233: #{forward.1} parent=187 // pred_check
          %p1642 = pneg %p426
        $region234: #{forward.1} parent=187 // pred_check_branch
          %1644 = sbr.rel (%p1642) target = $region236
        $region235: #{forward.1} parent=187 // pred_region
          %1645 = dma.done [#allocation21], 32
        $region236: #{forward.1} parent=187 // pred_fallthru
          _
        // Predicated region
        $region237: #{forward.1} parent=187 // pred_check
          %p1646 = pneg %p447
        $region238: #{forward.1} parent=187 // pred_check_branch
          %1648 = sbr.rel (%p1646) target = $region240
        $region239: #{forward.1} parent=187 // pred_region
          %1649 = dma.done [#allocation21], 32
        $region240: #{forward.1} parent=187 // pred_fallthru
          _
        // Predicated region
        $region241: #{forward.1} parent=187 // pred_check
          %p1650 = pneg %p468
        $region242: #{forward.1} parent=187 // pred_check_branch
          %1652 = sbr.rel (%p1650) target = $region244
        $region243: #{forward.1} parent=187 // pred_region
          %1653 = dma.done [#allocation24], 32
        $region244: #{forward.1} parent=187 // pred_fallthru
          _
        // Predicated region
        $region245: #{forward.1} parent=187 // pred_check
          %p1654 = pneg %p489
        $region246: #{forward.1} parent=187 // pred_check_branch
          %1656 = sbr.rel (%p1654) target = $region248
        $region247: #{forward.1} parent=187 // pred_region
          %1657 = dma.done [#allocation24], 16
        $region248: #{forward.1} parent=187 // pred_fallthru
          _
        // Predicated region
        $region249: #{forward.1} parent=187 // pred_check
          %p1658 = pneg %p510
        $region250: #{forward.1} parent=187 // pred_check_branch
          %1660 = sbr.rel (%p1658) target = $region252
        $region251: #{forward.1} parent=187 // pred_region
          %1661 = dma.done [#allocation27], 16
        $region252: #{forward.1} parent=187 // pred_fallthru
          _
        // Predicated region
        $region253: #{forward.1} parent=187 // pred_check
          %p1662 = pneg %p531
        $region254: #{forward.1} parent=187 // pred_check_branch
          %1664 = sbr.rel (%p1662) target = $region256
        $region255: #{forward.1} parent=187 // pred_region
          %1665 = dma.done [#allocation27], 2048
        $region256: #{forward.1} parent=187 // pred_fallthru
          _
        // Predicated region
        $region257: #{forward.1} parent=187 // pred_check
          %p1666 = pneg %p552
        $region258: #{forward.1} parent=187 // pred_check_branch
          %1668 = sbr.rel (%p1666) target = $region260
        $region259: #{forward.1} parent=187 // pred_region
          %1669 = dma.done [#allocation30], 32
        $region260: #{forward.1} parent=187 // pred_fallthru
          _
        // Predicated region
        $region261: #{forward.1} parent=187 // pred_check
          %p1670 = pneg %p573
        $region262: #{forward.1} parent=187 // pred_check_branch
          %1672 = sbr.rel (%p1670) target = $region264
        $region263: #{forward.1} parent=187 // pred_region
          %1673 = dma.done [#allocation30], 512
        $region264: #{forward.1} parent=187 // pred_fallthru
          _
        // Predicated region
        $region265: #{forward.1} parent=187 // pred_check
          %p1674 = pneg %p594
        $region266: #{forward.1} parent=187 // pred_check_branch
          %1676 = sbr.rel (%p1674) target = $region268
        $region267: #{forward.1} parent=187 // pred_region
          %1677 = dma.done [#allocation33], 32
        $region268: #{forward.1} parent=187 // pred_fallthru
          _
        // Predicated region
        $region269: #{forward.1} parent=187 // pred_check
          %p1678 = pneg %p615
        $region270: #{forward.1} parent=187 // pred_check_branch
          %1680 = sbr.rel (%p1678) target = $region272
        $region271: #{forward.1} parent=187 // pred_region
          %1681 = dma.done [#allocation33], 2048
        $region272: #{forward.1} parent=187 // pred_fallthru
          _
        // Predicated region
        $region273: #{forward.1} parent=187 // pred_check
          %p1682 = pneg %p636
        $region274: #{forward.1} parent=187 // pred_check_branch
          %1684 = sbr.rel (%p1682) target = $region276
        $region275: #{forward.1} parent=187 // pred_region
          %1685 = dma.done [#allocation36], 32
        $region276: #{forward.1} parent=187 // pred_fallthru
          _
        // Predicated region
        $region277: #{forward.1} parent=187 // pred_check
          %p1686 = pneg %p657
        $region278: #{forward.1} parent=187 // pred_check_branch
          %1688 = sbr.rel (%p1686) target = $region280
        $region279: #{forward.1} parent=187 // pred_region
          %1689 = dma.done [#allocation36], 2048
        $region280: #{forward.1} parent=187 // pred_fallthru
          _
        // Predicated region
        $region281: #{forward.1} parent=187 // pred_check
          %p1690 = pneg %p678
        $region282: #{forward.1} parent=187 // pred_check_branch
          %1692 = sbr.rel (%p1690) target = $region284
        $region283: #{forward.1} parent=187 // pred_region
          %1693 = dma.done [#allocation39], 32
        $region284: #{forward.1} parent=187 // pred_fallthru
          _
        // Predicated region
        $region285: #{forward.1} parent=187 // pred_check
          %p1694 = pneg %p699
        $region286: #{forward.1} parent=187 // pred_check_branch
          %1696 = sbr.rel (%p1694) target = $region288
        $region287: #{forward.1} parent=187 // pred_region
          %1697 = dma.done [#allocation39], 512
        $region288: #{forward.1} parent=187 // pred_fallthru
          _
        // Predicated region
        $region289: #{forward.1} parent=187 // pred_check
          %p1698 = pneg %p720
        $region290: #{forward.1} parent=187 // pred_check_branch
          %1700 = sbr.rel (%p1698) target = $region292
        $region291: #{forward.1} parent=187 // pred_region
          %1701 = dma.done [#allocation42], 32
        $region292: #{forward.1} parent=187 // pred_fallthru
          _
        // Predicated region
        $region293: #{forward.1} parent=187 // pred_check
          %p1702 = pneg %p741
        $region294: #{forward.1} parent=187 // pred_check_branch
          %1704 = sbr.rel (%p1702) target = $region296
        $region295: #{forward.1} parent=187 // pred_region
          %1705 = dma.done [#allocation42], 32
        $region296: #{forward.1} parent=187 // pred_fallthru
          _
        // Predicated region
        $region297: #{forward.1} parent=187 // pred_check
          %p1706 = pneg %p762
        $region298: #{forward.1} parent=187 // pred_check_branch
          %1708 = sbr.rel (%p1706) target = $region300
        $region299: #{forward.1} parent=187 // pred_region
          %1709 = dma.done [#allocation45], 32
        $region300: #{forward.1} parent=187 // pred_fallthru
          _
        // Predicated region
        $region301: #{forward.1} parent=187 // pred_check
          %p1710 = pneg %p783
        $region302: #{forward.1} parent=187 // pred_check_branch
          %1712 = sbr.rel (%p1710) target = $region304
        $region303: #{forward.1} parent=187 // pred_region
          %1713 = dma.done [#allocation45], 32
        $region304: #{forward.1} parent=187 // pred_fallthru
          _
        // Predicated region
        $region305: #{forward.1} parent=187 // pred_check
          %p1714 = pneg %p804
        $region306: #{forward.1} parent=187 // pred_check_branch
          %1716 = sbr.rel (%p1714) target = $region308
        $region307: #{forward.1} parent=187 // pred_region
          %1717 = dma.done [#allocation48], 32
        $region308: #{forward.1} parent=187 // pred_fallthru
          _
        // Predicated region
        $region309: #{forward.1} parent=187 // pred_check
          %p1718 = pneg %p825
        $region310: #{forward.1} parent=187 // pred_check_branch
          %1720 = sbr.rel (%p1718) target = $region312
        $region311: #{forward.1} parent=187 // pred_region
          %1721 = dma.done [#allocation48], 32
        $region312: #{forward.1} parent=187 // pred_fallthru
          _
        // Predicated region
        $region313: #{forward.1} parent=187 // pred_check
          %p1722 = pneg %p846
        $region314: #{forward.1} parent=187 // pred_check_branch
          %1724 = sbr.rel (%p1722) target = $region316
        $region315: #{forward.1} parent=187 // pred_region
          %1725 = dma.done [#allocation51], 32
        $region316: #{forward.1} parent=187 // pred_fallthru
          _
        // Predicated region
        $region317: #{forward.1} parent=187 // pred_check
          %p1726 = pneg %p867
        $region318: #{forward.1} parent=187 // pred_check_branch
          %1728 = sbr.rel (%p1726) target = $region320
        $region319: #{forward.1} parent=187 // pred_region
          %1729 = dma.done [#allocation51], 2048
        $region320: #{forward.1} parent=187 // pred_fallthru
          _
        // Predicated region
        $region321: #{forward.1} parent=187 // pred_check
          %p1730 = pneg %p888
        $region322: #{forward.1} parent=187 // pred_check_branch
          %1732 = sbr.rel (%p1730) target = $region324
        $region323: #{forward.1} parent=187 // pred_region
          %1733 = dma.done [#allocation54], 32
        $region324: #{forward.1} parent=187 // pred_fallthru
          _
        // Predicated region
        $region325: #{forward.1} parent=187 // pred_check
          %p1734 = pneg %p909
        $region326: #{forward.1} parent=187 // pred_check_branch
          %1736 = sbr.rel (%p1734) target = $region328
        $region327: #{forward.1} parent=187 // pred_region
          %1737 = dma.done [#allocation54], 2048
        $region328: #{forward.1} parent=187 // pred_fallthru
          _
        // Predicated region
        $region329: #{forward.1} parent=187 // pred_check
          %p1738 = pneg %p930
        $region330: #{forward.1} parent=187 // pred_check_branch
          %1740 = sbr.rel (%p1738) target = $region332
        $region331: #{forward.1} parent=187 // pred_region
          %1741 = dma.done [#allocation57], 32
        $region332: #{forward.1} parent=187 // pred_fallthru
          _
        // Predicated region
        $region333: #{forward.1} parent=187 // pred_check
          %p1742 = pneg %p951
        $region334: #{forward.1} parent=187 // pred_check_branch
          %1744 = sbr.rel (%p1742) target = $region336
        $region335: #{forward.1} parent=187 // pred_region
          %1745 = dma.done [#allocation57], 16
        $region336: #{forward.1} parent=187 // pred_fallthru
          _
        // Predicated region
        $region337: #{forward.1} parent=187 // pred_check
          %p1746 = pneg %p972
        $region338: #{forward.1} parent=187 // pred_check_branch
          %1748 = sbr.rel (%p1746) target = $region340
        $region339: #{forward.1} parent=187 // pred_region
          %1749 = dma.done [#allocation60], 16
        $region340: #{forward.1} parent=187 // pred_fallthru
          _
        // Predicated region
        $region341: #{forward.1} parent=187 // pred_check
          %p1750 = pneg %p993
        $region342: #{forward.1} parent=187 // pred_check_branch
          %1752 = sbr.rel (%p1750) target = $region344
        $region343: #{forward.1} parent=187 // pred_region
          %1753 = dma.done [#allocation60], 1024
        $region344: #{forward.1} parent=187 // pred_fallthru
          _
        // Predicated region
        $region345: #{forward.1} parent=187 // pred_check
          %p1754 = pneg %p1014
        $region346: #{forward.1} parent=187 // pred_check_branch
          %1756 = sbr.rel (%p1754) target = $region348
        $region347: #{forward.1} parent=187 // pred_region
          %1757 = dma.done [#allocation63], 16
        $region348: #{forward.1} parent=187 // pred_fallthru
          _
        %p1758 = scmp.lt.s32.totalorder %s122, 1
        %s1759 = scalar_select %p1758, %s122, 1
        %s1760 = smul.addr %s1759, 8
        %s1761 = scalar_lea.vmem %s1, %s1760
        %p1762 = pneg %p143
        %p1763 = pneg %p140
        %p1764 = scmp.lt.s32.totalorder %s122, 1
        %s1765 = scalar_select %p1764, %s122, 1
        %s1766 = smul.addr %s1765, 8
        %s1767 = scalar_lea.vmem %s3, %s1766
        %p1768 = pneg %p169
        %p1769 = pneg %p166
        %s1770 = sand.u32 %s182, 1
        %s1771 = scalar_lea.sflag [#allocation3], %s1770
        %s1772 = sand.u32 %s182, 1
        %s1773 = scalar_lea.vmem [#allocation2], %s1772
        %p1774 = pneg %p195
        %p1775 = pneg %p192
        %p1776 = pneg %p216
        %p1777 = pneg %p213
        %p1778 = pneg %p237
        %p1779 = pneg %p234
        %p1780 = pneg %p258
        %p1781 = pneg %p255
        %p1782 = pneg %p279
        %p1783 = pneg %p276
        %p1784 = pneg %p300
        %p1785 = pneg %p297
        %p1786 = pneg %p321
        %p1787 = pneg %p318
        %p1788 = pneg %p342
        %p1789 = pneg %p339
        %p1790 = pneg %p363
        %p1791 = pneg %p360
        %p1792 = pneg %p384
        %p1793 = pneg %p381
        %p1794 = pneg %p405
        %p1795 = pneg %p402
        %p1796 = pneg %p426
        %p1797 = pneg %p423
        %p1798 = pneg %p447
        %p1799 = pneg %p444
        %p1800 = pneg %p468
        %p1801 = pneg %p465
        %p1802 = pneg %p489
        %p1803 = pneg %p486
        %p1804 = pneg %p510
        %p1805 = pneg %p507
        %p1806 = pneg %p531
        %p1807 = pneg %p528
        %p1808 = pneg %p552
        %p1809 = pneg %p549
        %p1810 = pneg %p573
        %p1811 = pneg %p570
        %p1812 = pneg %p594
        %p1813 = pneg %p591
        %p1814 = pneg %p615
        %p1815 = pneg %p612
        %p1816 = pneg %p636
        %p1817 = pneg %p633
        %p1818 = pneg %p657
        %p1819 = pneg %p654
        %p1820 = pneg %p678
        %p1821 = pneg %p675
        %p1822 = pneg %p699
        %p1823 = pneg %p696
        %p1824 = pneg %p720
        %p1825 = pneg %p717
        %p1826 = pneg %p741
        %p1827 = pneg %p738
        %p1828 = pneg %p762
        %p1829 = pneg %p759
        %p1830 = pneg %p783
        %p1831 = pneg %p780
        %p1832 = pneg %p804
        %p1833 = pneg %p801
        %p1834 = pneg %p825
        %p1835 = pneg %p822
        %p1836 = pneg %p846
        %p1837 = pneg %p843
        %p1838 = pneg %p867
        %p1839 = pneg %p864
        %p1840 = pneg %p888
        %p1841 = pneg %p885
        %p1842 = pneg %p909
        %p1843 = pneg %p906
        %p1844 = pneg %p930
        %p1845 = pneg %p927
        %p1846 = pneg %p951
        %p1847 = pneg %p948
        %p1848 = pneg %p972
        %p1849 = pneg %p969
        %p1850 = pneg %p993
        %p1851 = pneg %p990
        %p1852 = pneg %p1014
        %p1853 = pneg %p1011
        %p1854 = pneg %p1040
        %p1855 = pneg %p1037
        %s1856 = sand.u32 %s1027, 1
        %s1857 = scalar_lea.sflag [#allocation4], %s1856
        %s1858 = sand.u32 %s1027, 1
        %s1859 = smul.addr %s1858, 8
        %s1860 = scalar_lea.vmem [#allocation64], %s1859
        %p1861 = scmp.lt.s32.totalorder %s122, 1
        %s1862 = scalar_select %p1861, %s122, 1
        %s1863 = smul.addr %s1862, 8
        %s1864 = scalar_lea.vmem %s1, %s1863
        %p1865 = scmp.lt.s32.totalorder %s122, 1
        %s1866 = scalar_select %p1865, %s122, 1
        %s1867 = smul.addr %s1866, 8
        %s1868 = scalar_lea.vmem %s3, %s1867
        %v1870 = vlaneseq
        %v1871 = vshrl.u32 %v1870, 7
        %v1872 = vlaneseq
        %v1873 = vand.u32 %v1872, 127
        %vm1874 = vcmp.le.s32.totalorder %v1873, %v1871
        %v1875 = vsel %vm1874, 0.0, -1e+30
        %vm1876 = vcmp.lt.s32.totalorder %v1873, 32
        %v1877 = vld [vmem:[#allocation5] sm:$0xff]
        %v1878 = vld [vmem:[#allocation5 + $0x8] sm:$0xff]
        %v1879 = vld [vmem:[#allocation5 + $0x10] sm:$0xff]
        %v1880 = vld [vmem:[#allocation5 + $0x18] sm:$0xff]
        %v1881 = vld [vmem:[#allocation5 + $0x20] sm:$0xff]
        %v1882 = vld [vmem:[#allocation5 + $0x28] sm:$0xff]
        %v1883 = vld [vmem:[#allocation5 + $0x30] sm:$0xff]
        %v1884 = vld [vmem:[%s1597] sm:$0x1]
        %v1885 = vld [vmem:[%s1864] sm:$0xff]
        %1886 = vset.pattern.permute.xlu0 0
        %1887 = vperm.xlu0 %1886, %v1885
        %v1888 = vpop.permute.xlu0 %1887
        %vm1889 = vcmp.eq.s32.totalorder %v1888, %v1873
        %v1890 = vsel %vm1889, 1, 0
        %v1891 = vcvt.s32.f32 %v1890
        %vm1892 = vcmask 457728
        %v1894 = vsel %vm1892, %v1891, 0
        %1896 = vmatprep.subr.mxu0 0.0
        %1897 = vmatpush1.msra.mxu0 %v1877
        %1898 = vmatprep.subr.mxu0 0.0
        %1899 = vmatpush1.msra.mxu0 %v1878
        %1900 = vmatprep.subr.mxu0 0.0
        %1901 = vmatpush1.msra.mxu0 %v1879
        %1902 = vmatprep.subr.mxu0 0.0
        %1903 = vmatpush1.msra.mxu0 %v1880
        %1904 = vmatprep.subr.mxu0 0.0
        %1905 = vmatpush1.msra.mxu0 %v1881
        %1906 = vmatprep.subr.mxu0 0.0
        %1907 = vmatpush1.msra.mxu0 %v1882
        %1908 = vmatprep.subr.mxu0 0.0
        %1909 = vmatpush1.msra.mxu0 %v1883
        %1910 = vmatprep.subr.mxu0 0.0
        %1911 = vmatpush1.msra.mxu0 0.0
        %1912 = vmatprep.subr.mxu0 0.0
        %1913 = vmatpush1.msra.mxu0 0.0
        %1914 = vmatprep.subr.mxu0 0.0
        %1915 = vmatpush1.msra.mxu0 0.0
        %1916 = vmatprep.subr.mxu0 0.0
        %1917 = vmatpush1.msra.mxu0 0.0
        %1918 = vmatprep.subr.mxu0 0.0
        %1919 = vmatpush1.msra.mxu0 0.0
        %1920 = vmatprep.subr.mxu0 0.0
        %1921 = vmatpush1.msra.mxu0 0.0
        %1922 = vmatprep.subr.mxu0 0.0
        %1923 = vmatpush1.msra.mxu0 0.0
        %1924 = vmatprep.subr.mxu0 0.0
        %1925 = vmatpush1.msra.mxu0 0.0
        %1926 = vmatprep.subr.mxu0 0.0
        %1927 = vmatpush1.msra.mxu0 0.0
        %1928 = vmatprep.subr.mxu0 0.0
        %1929 = vmatpush1.msra.mxu0 0.0
        %1930 = vmatprep.subr.mxu0 0.0
        %1931 = vmatpush1.msra.mxu0 0.0
        %1932 = vmatprep.subr.mxu0 0.0
        %1933 = vmatpush1.msra.mxu0 0.0
        %1934 = vmatprep.subr.mxu0 0.0
        %1935 = vmatpush1.msra.mxu0 0.0
        %1936 = vmatprep.subr.mxu0 0.0
        %1937 = vmatpush1.msra.mxu0 0.0
        %1938 = vmatprep.subr.mxu0 0.0
        %1939 = vmatpush1.msra.mxu0 0.0
        %1940 = vmatprep.subr.mxu0 0.0
        %1941 = vmatpush1.msra.mxu0 0.0
        %1942 = vmatprep.subr.mxu0 0.0
        %1943 = vmatpush1.msra.mxu0 0.0
        %1944 = vmatprep.subr.mxu0 0.0
        %1945 = vmatpush1.msra.mxu0 0.0
        %1946 = vmatprep.subr.mxu0 0.0
        %1947 = vmatpush1.msra.mxu0 0.0
        %1948 = vmatprep.subr.mxu0 0.0
        %1949 = vmatpush1.msra.mxu0 0.0
        %1950 = vmatprep.subr.mxu0 0.0
        %1951 = vmatpush1.msra.mxu0 0.0
        %1952 = vmatprep.subr.mxu0 0.0
        %1953 = vmatpush1.msra.mxu0 0.0
        %1954 = vmatprep.subr.mxu0 0.0
        %1955 = vmatpush1.msra.mxu0 0.0
        %1956 = vmatprep.subr.mxu0 0.0
        %1957 = vmatpush1.msra.mxu0 0.0
        %1958 = vmatprep.subr.mxu0 0.0
        %1959 = vmatpush1.msra.mxu0 0.0
        %1960 = vmatprep.mubr.f32.mxu0 0.0
        %1961 = vmatmul.mubr.f32.gmra.mrb[0].mxu0 %v1894
        %v1962 = vpop.f32.mrb[0].mxu0
        %v1963 = vadd.f32 0.0, %v1962
        %v1964 = vpop.f32.mrb[0].mxu0
        %1965 = vdwg.mxu0
        %v1966 = vmul.f32 %v1963, 5.656854
        %v1968 = vlaneseq
        %v1969 = vshrl.u32 %v1968, 7
        %v1970 = vsub.s32 0, %v1969
        %v1971 = vrot.slane %v1884, %v1970
        %v1973 = vadd.f32 %v1966, %v1971
        %v1974 = vpack.c.bf16 %v1973, %v1973
        %v1975 = vld [vmem:[#allocation7] sm:$0xf]
        %v1976 = vld [vmem:[#allocation7 + $0x4] sm:$0xf]
        %v1977 = vld [vmem:[#allocation7 + $0x8] sm:$0xf]
        %v1978 = vld [vmem:[#allocation7 + $0xc] sm:$0xf]
        %v1979 = vld [vmem:[#allocation7 + $0x10] sm:$0xf]
        %v1980 = vld [vmem:[#allocation7 + $0x14] sm:$0xf]
        %v1981 = vld [vmem:[#allocation7 + $0x18] sm:$0xf]
        %v1982 = vld [vmem:[#allocation7 + $0x1c] sm:$0xf]
        %v1983 = vld [vmem:[#allocation7 + $0x20] sm:$0xf]
        %v1984 = vld [vmem:[#allocation7 + $0x24] sm:$0xf]
        %v1985 = vld [vmem:[#allocation7 + $0x28] sm:$0xf]
        %v1986 = vld [vmem:[#allocation7 + $0x2c] sm:$0xf]
        %v1987 = vld [vmem:[#allocation7 + $0x30] sm:$0xf]
        %v1988 = vld [vmem:[#allocation7 + $0x34] sm:$0xf]
        %v1989 = vld [vmem:[#allocation7 + $0x38] sm:$0xf]
        %v1990 = vld [vmem:[#allocation7 + $0x3c] sm:$0xf]
        %v1991 = vld [vmem:[#allocation8] sm:$0x1]
        %v1993 = vlaneseq
        %v1994 = vshrl.u32 %v1993, 7
        %v1995 = vsub.s32 0, %v1994
        %v1996 = vrot.slane %v1991, %v1995
        %v2014 = vunpack.c.l.b16 %v1975
        %v2015 = vunpack.c.l.b16 %v1976
        %v2016 = vunpack.c.l.b16 %v1977
        %v2017 = vunpack.c.l.b16 %v1978
        %v2018 = vunpack.c.l.b16 %v1979
        %v2019 = vunpack.c.l.b16 %v1980
        %v2020 = vunpack.c.l.b16 %v1981
        %v2021 = vunpack.c.l.b16 %v1982
        %v2022 = vunpack.c.l.b16 %v1983
        %v2023 = vunpack.c.l.b16 %v1984
        %v2024 = vunpack.c.l.b16 %v1985
        %v2025 = vunpack.c.l.b16 %v1986
        %v2026 = vunpack.c.l.b16 %v1987
        %v2027 = vunpack.c.l.b16 %v1988
        %v2028 = vunpack.c.l.b16 %v1989
        %v2029 = vunpack.c.l.b16 %v1990
        %v2030 = vpack.c.b16 %v2015, %v2014
        %v2031 = vpack.c.b16 %v2017, %v2016
        %v2032 = vpack.c.b16 %v2019, %v2018
        %v2033 = vpack.c.b16 %v2021, %v2020
        %v2034 = vpack.c.b16 %v2023, %v2022
        %v2035 = vpack.c.b16 %v2025, %v2024
        %v2036 = vpack.c.b16 %v2027, %v2026
        %v2037 = vpack.c.b16 %v2029, %v2028
        %2046 = vmatprep.subr.bf16.mxu0 0
        %2047 = vmatpush1.bf16.msra.mxu0 %v2030
        %2048 = vmatprep.subr.bf16.mxu0 0
        %2049 = vmatpush1.bf16.msra.mxu0 %v2031
        %2050 = vmatprep.subr.bf16.mxu0 0
        %2051 = vmatpush1.bf16.msra.mxu0 %v2032
        %2052 = vmatprep.subr.bf16.mxu0 0
        %2053 = vmatpush1.bf16.msra.mxu0 %v2033
        %2054 = vmatprep.subr.bf16.mxu0 0
        %2055 = vmatpush1.bf16.msra.mxu0 %v2034
        %2056 = vmatprep.subr.bf16.mxu0 0
        %2057 = vmatpush1.bf16.msra.mxu0 %v2035
        %2058 = vmatprep.subr.bf16.mxu0 0
        %2059 = vmatpush1.bf16.msra.mxu0 %v2036
        %2060 = vmatprep.subr.bf16.mxu0 0
        %2061 = vmatpush1.bf16.msra.mxu0 %v2037
        %2062 = vmatprep.subr.bf16.mxu0 0
        %2063 = vmatpush1.bf16.msra.mxu0 0
        %2064 = vmatprep.subr.bf16.mxu0 0
        %2065 = vmatpush1.bf16.msra.mxu0 0
        %2066 = vmatprep.subr.bf16.mxu0 0
        %2067 = vmatpush1.bf16.msra.mxu0 0
        %2068 = vmatprep.subr.bf16.mxu0 0
        %2069 = vmatpush1.bf16.msra.mxu0 0
        %2070 = vmatprep.subr.bf16.mxu0 0
        %2071 = vmatpush1.bf16.msra.mxu0 0
        %2072 = vmatprep.subr.bf16.mxu0 0
        %2073 = vmatpush1.bf16.msra.mxu0 0
        %2074 = vmatprep.subr.bf16.mxu0 0
        %2075 = vmatpush1.bf16.msra.mxu0 0
        %2076 = vmatprep.subr.bf16.mxu0 0
        %2077 = vmatpush1.bf16.msra.mxu0 0
        %2078 = vmatprep.mubr.bf16.mxu0 0
        %2079 = vmatmul.mubr.bf16.gmra.mrb[0].mxu0 %v1974
        %v2080 = vpop.f32.mrb[0].mxu0
        %v2081 = vadd.f32 %v1996, %v2080
        %v2082 = vpop.f32.mrb[0].mxu0
        %v2083 = vpop.f32.mrb[0].mxu0
        %v2084 = vpop.f32.mrb[0].mxu0
        %2085 = vdwg.mxu0
        %v2086 = vpack.c.bf16 %v2081, %v2081
        %2088 = vrot.lane.b32.xlu0 %v2086, 96
        %v2089 = vpop.permute.xlu0 %2088
        %vm2090 = vcmask 64512
        %v2092 = vsel %vm2090, %v2086, 0
        %v2095 = vsel %vm2090, %v2089, 0
        %2097 = vmatprep.subr.bf16.mxu0 0
        %2098 = vmatpush1.bf16.xpose.msra.mxu0 %v2095
        %2099 = vmatprep.subr.bf16.mxu0 0
        %2100 = vmatpush1.bf16.xpose.msra.mxu0 0
        %2101 = vmatprep.subr.bf16.mxu0 0
        %2102 = vmatpush1.bf16.xpose.msra.mxu0 0
        %2103 = vmatprep.subr.bf16.mxu0 0
        %2104 = vmatpush1.bf16.xpose.msra.mxu0 0
        %2105 = vmatprep.subr.bf16.mxu0 0
        %2106 = vmatpush1.bf16.xpose.msra.mxu0 0
        %2107 = vmatprep.subr.bf16.mxu0 0
        %2108 = vmatpush1.bf16.xpose.msra.mxu0 0
        %2109 = vmatprep.subr.bf16.mxu0 0
        %2110 = vmatpush1.bf16.xpose.msra.mxu0 0
        %2111 = vmatprep.subr.bf16.mxu0 0
        %2112 = vmatpush1.bf16.xpose.msra.mxu0 0
        %2113 = vmatprep.subr.bf16.mxu0 0
        %2114 = vmatpush1.bf16.xpose.msra.mxu0 0
        %2115 = vmatprep.subr.bf16.mxu0 0
        %2116 = vmatpush1.bf16.xpose.msra.mxu0 0
        %2117 = vmatprep.subr.bf16.mxu0 0
        %2118 = vmatpush1.bf16.xpose.msra.mxu0 0
        %2119 = vmatprep.subr.bf16.mxu0 0
        %2120 = vmatpush1.bf16.xpose.msra.mxu0 0
        %2121 = vmatprep.subr.bf16.mxu0 0
        %2122 = vmatpush1.bf16.xpose.msra.mxu0 0
        %2123 = vmatprep.subr.bf16.mxu0 0
        %2124 = vmatpush1.bf16.xpose.msra.mxu0 0
        %2125 = vmatprep.subr.bf16.mxu0 0
        %2126 = vmatpush1.bf16.xpose.msra.mxu0 0
        %2127 = vmatprep.subr.bf16.mxu0 0
        %2128 = vmatpush1.bf16.xpose.msra.mxu0 0
        %2129 = vmatprep.mubr.bf16.mxu0 0
        %2130 = vmatmul.mubr.bf16.gmra.mrb[0].mxu0 %v2092
        %v2131 = vpop.f32.mrb[0].mxu0
        %v2132 = vadd.f32 0.0, %v2131
        %v2133 = vpop.f32.mrb[0].mxu0
        %v2134 = vpop.f32.mrb[0].mxu0
        %v2135 = vpop.f32.mrb[0].mxu0
        %2136 = vdwg.mxu0
        %v2137 = vmul.f32 %v2132, 0.35355338
        %v2138 = vadd.f32 %v2137, %v1875
        %v2139 = vsel %vm2090, %v2138, -inf
        %2140 = vmax.xlane.f32.xlu0 %v2139
        %v2141 = vpop.xlane.xlu0 %2140
        %v2142 = vsub.f32 %v2138, %v2141
        %v2143 = vmul.f32 %v2142, 1.442695
        %v2144 = vpow.pop %v2143
        %v2145 = vsel %vm2090, %v2144, 0.0
        %2146 = vadd.xlane.f32.xlu0 %v2145
        %v2147 = vpop.xlane.xlu0 %2146
        %v2148 = vpack.c.bf16 %v2144, %v2144
        %2149 = vrot.lane.b32.xlu0 %v2086, 64
        %v2150 = vpop.permute.xlu0 %2149
        %v2152 = vsel %vm2090, %v2148, 0
        %vm2154 = vcmask 1043456
        %v2156 = vsel %vm2154, %v2150, 0
        %2158 = vmatprep.subr.bf16.mxu0 0
        %2159 = vmatpush1.bf16.msra.mxu0 %v2156
        %2160 = vmatprep.subr.bf16.mxu0 0
        %2161 = vmatpush1.bf16.msra.mxu0 0
        %2162 = vmatprep.subr.bf16.mxu0 0
        %2163 = vmatpush1.bf16.msra.mxu0 0
        %2164 = vmatprep.subr.bf16.mxu0 0
        %2165 = vmatpush1.bf16.msra.mxu0 0
        %2166 = vmatprep.subr.bf16.mxu0 0
        %2167 = vmatpush1.bf16.msra.mxu0 0
        %2168 = vmatprep.subr.bf16.mxu0 0
        %2169 = vmatpush1.bf16.msra.mxu0 0
        %2170 = vmatprep.subr.bf16.mxu0 0
        %2171 = vmatpush1.bf16.msra.mxu0 0
        %2172 = vmatprep.subr.bf16.mxu0 0
        %2173 = vmatpush1.bf16.msra.mxu0 0
        %2174 = vmatprep.subr.bf16.mxu0 0
        %2175 = vmatpush1.bf16.msra.mxu0 0
        %2176 = vmatprep.subr.bf16.mxu0 0
        %2177 = vmatpush1.bf16.msra.mxu0 0
        %2178 = vmatprep.subr.bf16.mxu0 0
        %2179 = vmatpush1.bf16.msra.mxu0 0
        %2180 = vmatprep.subr.bf16.mxu0 0
        %2181 = vmatpush1.bf16.msra.mxu0 0
        %2182 = vmatprep.subr.bf16.mxu0 0
        %2183 = vmatpush1.bf16.msra.mxu0 0
        %2184 = vmatprep.subr.bf16.mxu0 0
        %2185 = vmatpush1.bf16.msra.mxu0 0
        %2186 = vmatprep.subr.bf16.mxu0 0
        %2187 = vmatpush1.bf16.msra.mxu0 0
        %2188 = vmatprep.subr.bf16.mxu0 0
        %2189 = vmatpush1.bf16.msra.mxu0 0
        %2190 = vmatprep.mubr.bf16.mxu0 0
        %2191 = vmatmul.mubr.bf16.gmra.mrb[0].mxu0 %v2152
        %v2192 = vpop.f32.mrb[0].mxu0
        %v2193 = vadd.f32 0.0, %v2192
        %v2194 = vpop.f32.mrb[0].mxu0
        %v2195 = vpop.f32.mrb[0].mxu0
        %v2196 = vpop.f32.mrb[0].mxu0
        %2197 = vdwg.mxu0
        %v2198 = vrcp.pop %v2147
        %v2199 = vmul.f32 %v2193, %v2198
        %2200 = vrot.lane.b32.xlu0 %v2086, 120
        %v2201 = vpop.permute.xlu0 %2200
        %2202 = vrot.lane.b32.xlu0 %v2086, 88
        %v2203 = vpop.permute.xlu0 %2202
        %v2205 = vsel %vm2090, %v2201, 0
        %v2208 = vsel %vm2090, %v2203, 0
        %2210 = vmatprep.subr.bf16.mxu0 0
        %2211 = vmatpush1.bf16.xpose.msra.mxu0 %v2208
        %2212 = vmatprep.subr.bf16.mxu0 0
        %2213 = vmatpush1.bf16.xpose.msra.mxu0 0
        %2214 = vmatprep.subr.bf16.mxu0 0
        %2215 = vmatpush1.bf16.xpose.msra.mxu0 0
        %2216 = vmatprep.subr.bf16.mxu0 0
        %2217 = vmatpush1.bf16.xpose.msra.mxu0 0
        %2218 = vmatprep.subr.bf16.mxu0 0
        %2219 = vmatpush1.bf16.xpose.msra.mxu0 0
        %2220 = vmatprep.subr.bf16.mxu0 0
        %2221 = vmatpush1.bf16.xpose.msra.mxu0 0
        %2222 = vmatprep.subr.bf16.mxu0 0
        %2223 = vmatpush1.bf16.xpose.msra.mxu0 0
        %2224 = vmatprep.subr.bf16.mxu0 0
        %2225 = vmatpush1.bf16.xpose.msra.mxu0 0
        %2226 = vmatprep.subr.bf16.mxu0 0
        %2227 = vmatpush1.bf16.xpose.msra.mxu0 0
        %2228 = vmatprep.subr.bf16.mxu0 0
        %2229 = vmatpush1.bf16.xpose.msra.mxu0 0
        %2230 = vmatprep.subr.bf16.mxu0 0
        %2231 = vmatpush1.bf16.xpose.msra.mxu0 0
        %2232 = vmatprep.subr.bf16.mxu0 0
        %2233 = vmatpush1.bf16.xpose.msra.mxu0 0
        %2234 = vmatprep.subr.bf16.mxu0 0
        %2235 = vmatpush1.bf16.xpose.msra.mxu0 0
        %2236 = vmatprep.subr.bf16.mxu0 0
        %2237 = vmatpush1.bf16.xpose.msra.mxu0 0
        %2238 = vmatprep.subr.bf16.mxu0 0
        %2239 = vmatpush1.bf16.xpose.msra.mxu0 0
        %2240 = vmatprep.subr.bf16.mxu0 0
        %2241 = vmatpush1.bf16.xpose.msra.mxu0 0
        %2242 = vmatprep.mubr.bf16.mxu0 0
        %2243 = vmatmul.mubr.bf16.gmra.mrb[0].mxu0 %v2205
        %v2244 = vpop.f32.mrb[0].mxu0
        %v2245 = vadd.f32 0.0, %v2244
        %v2246 = vpop.f32.mrb[0].mxu0
        %v2247 = vpop.f32.mrb[0].mxu0
        %v2248 = vpop.f32.mrb[0].mxu0
        %2249 = vdwg.mxu0
        %v2250 = vmul.f32 %v2245, 0.35355338
        %v2251 = vadd.f32 %v2250, %v1875
        %v2252 = vsel %vm2090, %v2251, -inf
        %2253 = vmax.xlane.f32.xlu0 %v2252
        %v2254 = vpop.xlane.xlu0 %2253
        %v2255 = vsub.f32 %v2251, %v2254
        %v2256 = vmul.f32 %v2255, 1.442695
        %v2257 = vpow.pop %v2256
        %v2258 = vsel %vm2090, %v2257, 0.0
        %2259 = vadd.xlane.f32.xlu0 %v2258
        %v2260 = vpop.xlane.xlu0 %2259
        %v2261 = vpack.c.bf16 %v2257, %v2257
        %2262 = vrot.lane.b32.xlu0 %v2086, 56
        %v2263 = vpop.permute.xlu0 %2262
        %v2265 = vsel %vm2090, %v2261, 0
        %v2268 = vsel %vm2154, %v2263, 0
        %2270 = vmatprep.subr.bf16.mxu0 0
        %2271 = vmatpush1.bf16.msra.mxu0 %v2268
        %2272 = vmatprep.subr.bf16.mxu0 0
        %2273 = vmatpush1.bf16.msra.mxu0 0
        %2274 = vmatprep.subr.bf16.mxu0 0
        %2275 = vmatpush1.bf16.msra.mxu0 0
        %2276 = vmatprep.subr.bf16.mxu0 0
        %2277 = vmatpush1.bf16.msra.mxu0 0
        %2278 = vmatprep.subr.bf16.mxu0 0
        %2279 = vmatpush1.bf16.msra.mxu0 0
        %2280 = vmatprep.subr.bf16.mxu0 0
        %2281 = vmatpush1.bf16.msra.mxu0 0
        %2282 = vmatprep.subr.bf16.mxu0 0
        %2283 = vmatpush1.bf16.msra.mxu0 0
        %2284 = vmatprep.subr.bf16.mxu0 0
        %2285 = vmatpush1.bf16.msra.mxu0 0
        %2286 = vmatprep.subr.bf16.mxu0 0
        %2287 = vmatpush1.bf16.msra.mxu0 0
        %2288 = vmatprep.subr.bf16.mxu0 0
        %2289 = vmatpush1.bf16.msra.mxu0 0
        %2290 = vmatprep.subr.bf16.mxu0 0
        %2291 = vmatpush1.bf16.msra.mxu0 0
        %2292 = vmatprep.subr.bf16.mxu0 0
        %2293 = vmatpush1.bf16.msra.mxu0 0
        %2294 = vmatprep.subr.bf16.mxu0 0
        %2295 = vmatpush1.bf16.msra.mxu0 0
        %2296 = vmatprep.subr.bf16.mxu0 0
        %2297 = vmatpush1.bf16.msra.mxu0 0
        %2298 = vmatprep.subr.bf16.mxu0 0
        %2299 = vmatpush1.bf16.msra.mxu0 0
        %2300 = vmatprep.subr.bf16.mxu0 0
        %2301 = vmatpush1.bf16.msra.mxu0 0
        %2302 = vmatprep.mubr.bf16.mxu0 0
        %2303 = vmatmul.mubr.bf16.gmra.mrb[0].mxu0 %v2265
        %v2304 = vpop.f32.mrb[0].mxu0
        %v2305 = vadd.f32 0.0, %v2304
        %v2306 = vpop.f32.mrb[0].mxu0
        %v2307 = vpop.f32.mrb[0].mxu0
        %v2308 = vpop.f32.mrb[0].mxu0
        %2309 = vdwg.mxu0
        %v2310 = vrcp.pop %v2260
        %v2311 = vmul.f32 %v2305, %v2310
        %2312 = vrot.lane.b32.xlu0 %v2086, 112
        %v2313 = vpop.permute.xlu0 %2312
        %2314 = vrot.lane.b32.xlu0 %v2086, 80
        %v2315 = vpop.permute.xlu0 %2314
        %v2317 = vsel %vm2090, %v2313, 0
        %v2320 = vsel %vm2090, %v2315, 0
        %2322 = vmatprep.subr.bf16.mxu0 0
        %2323 = vmatpush1.bf16.xpose.msra.mxu0 %v2320
        %2324 = vmatprep.subr.bf16.mxu0 0
        %2325 = vmatpush1.bf16.xpose.msra.mxu0 0
        %2326 = vmatprep.subr.bf16.mxu0 0
        %2327 = vmatpush1.bf16.xpose.msra.mxu0 0
        %2328 = vmatprep.subr.bf16.mxu0 0
        %2329 = vmatpush1.bf16.xpose.msra.mxu0 0
        %2330 = vmatprep.subr.bf16.mxu0 0
        %2331 = vmatpush1.bf16.xpose.msra.mxu0 0
        %2332 = vmatprep.subr.bf16.mxu0 0
        %2333 = vmatpush1.bf16.xpose.msra.mxu0 0
        %2334 = vmatprep.subr.bf16.mxu0 0
        %2335 = vmatpush1.bf16.xpose.msra.mxu0 0
        %2336 = vmatprep.subr.bf16.mxu0 0
        %2337 = vmatpush1.bf16.xpose.msra.mxu0 0
        %2338 = vmatprep.subr.bf16.mxu0 0
        %2339 = vmatpush1.bf16.xpose.msra.mxu0 0
        %2340 = vmatprep.subr.bf16.mxu0 0
        %2341 = vmatpush1.bf16.xpose.msra.mxu0 0
        %2342 = vmatprep.subr.bf16.mxu0 0
        %2343 = vmatpush1.bf16.xpose.msra.mxu0 0
        %2344 = vmatprep.subr.bf16.mxu0 0
        %2345 = vmatpush1.bf16.xpose.msra.mxu0 0
        %2346 = vmatprep.subr.bf16.mxu0 0
        %2347 = vmatpush1.bf16.xpose.msra.mxu0 0
        %2348 = vmatprep.subr.bf16.mxu0 0
        %2349 = vmatpush1.bf16.xpose.msra.mxu0 0
        %2350 = vmatprep.subr.bf16.mxu0 0
        %2351 = vmatpush1.bf16.xpose.msra.mxu0 0
        %2352 = vmatprep.subr.bf16.mxu0 0
        %2353 = vmatpush1.bf16.xpose.msra.mxu0 0
        %2354 = vmatprep.mubr.bf16.mxu0 0
        %2355 = vmatmul.mubr.bf16.gmra.mrb[0].mxu0 %v2317
        %v2356 = vpop.f32.mrb[0].mxu0
        %v2357 = vadd.f32 0.0, %v2356
        %v2358 = vpop.f32.mrb[0].mxu0
        %v2359 = vpop.f32.mrb[0].mxu0
        %v2360 = vpop.f32.mrb[0].mxu0
        %2361 = vdwg.mxu0
        %v2362 = vmul.f32 %v2357, 0.35355338
        %v2363 = vadd.f32 %v2362, %v1875
        %v2364 = vsel %vm2090, %v2363, -inf
        %2365 = vmax.xlane.f32.xlu0 %v2364
        %v2366 = vpop.xlane.xlu0 %2365
        %v2367 = vsub.f32 %v2363, %v2366
        %v2368 = vmul.f32 %v2367, 1.442695
        %v2369 = vpow.pop %v2368
        %v2370 = vsel %vm2090, %v2369, 0.0
        %2371 = vadd.xlane.f32.xlu0 %v2370
        %v2372 = vpop.xlane.xlu0 %2371
        %v2373 = vpack.c.bf16 %v2369, %v2369
        %2374 = vrot.lane.b32.xlu0 %v2086, 48
        %v2375 = vpop.permute.xlu0 %2374
        %v2377 = vsel %vm2090, %v2373, 0
        %v2380 = vsel %vm2154, %v2375, 0
        %2382 = vmatprep.subr.bf16.mxu0 0
        %2383 = vmatpush1.bf16.msra.mxu0 %v2380
        %2384 = vmatprep.subr.bf16.mxu0 0
        %2385 = vmatpush1.bf16.msra.mxu0 0
        %2386 = vmatprep.subr.bf16.mxu0 0
        %2387 = vmatpush1.bf16.msra.mxu0 0
        %2388 = vmatprep.subr.bf16.mxu0 0
        %2389 = vmatpush1.bf16.msra.mxu0 0
        %2390 = vmatprep.subr.bf16.mxu0 0
        %2391 = vmatpush1.bf16.msra.mxu0 0
        %2392 = vmatprep.subr.bf16.mxu0 0
        %2393 = vmatpush1.bf16.msra.mxu0 0
        %2394 = vmatprep.subr.bf16.mxu0 0
        %2395 = vmatpush1.bf16.msra.mxu0 0
        %2396 = vmatprep.subr.bf16.mxu0 0
        %2397 = vmatpush1.bf16.msra.mxu0 0
        %2398 = vmatprep.subr.bf16.mxu0 0
        %2399 = vmatpush1.bf16.msra.mxu0 0
        %2400 = vmatprep.subr.bf16.mxu0 0
        %2401 = vmatpush1.bf16.msra.mxu0 0
        %2402 = vmatprep.subr.bf16.mxu0 0
        %2403 = vmatpush1.bf16.msra.mxu0 0
        %2404 = vmatprep.subr.bf16.mxu0 0
        %2405 = vmatpush1.bf16.msra.mxu0 0
        %2406 = vmatprep.subr.bf16.mxu0 0
        %2407 = vmatpush1.bf16.msra.mxu0 0
        %2408 = vmatprep.subr.bf16.mxu0 0
        %2409 = vmatpush1.bf16.msra.mxu0 0
        %2410 = vmatprep.subr.bf16.mxu0 0
        %2411 = vmatpush1.bf16.msra.mxu0 0
        %2412 = vmatprep.subr.bf16.mxu0 0
        %2413 = vmatpush1.bf16.msra.mxu0 0
        %2414 = vmatprep.mubr.bf16.mxu0 0
        %2415 = vmatmul.mubr.bf16.gmra.mrb[0].mxu0 %v2377
        %v2416 = vpop.f32.mrb[0].mxu0
        %v2417 = vadd.f32 0.0, %v2416
        %v2418 = vpop.f32.mrb[0].mxu0
        %v2419 = vpop.f32.mrb[0].mxu0
        %v2420 = vpop.f32.mrb[0].mxu0
        %2421 = vdwg.mxu0
        %v2422 = vrcp.pop %v2372
        %v2423 = vmul.f32 %v2417, %v2422
        %2424 = vrot.lane.b32.xlu0 %v2086, 104
        %v2425 = vpop.permute.xlu0 %2424
        %2426 = vrot.lane.b32.xlu0 %v2086, 72
        %v2427 = vpop.permute.xlu0 %2426
        %v2429 = vsel %vm2090, %v2425, 0
        %v2432 = vsel %vm2090, %v2427, 0
        %2434 = vmatprep.subr.bf16.mxu0 0
        %2435 = vmatpush1.bf16.xpose.msra.mxu0 %v2432
        %2436 = vmatprep.subr.bf16.mxu0 0
        %2437 = vmatpush1.bf16.xpose.msra.mxu0 0
        %2438 = vmatprep.subr.bf16.mxu0 0
        %2439 = vmatpush1.bf16.xpose.msra.mxu0 0
        %2440 = vmatprep.subr.bf16.mxu0 0
        %2441 = vmatpush1.bf16.xpose.msra.mxu0 0
        %2442 = vmatprep.subr.bf16.mxu0 0
        %2443 = vmatpush1.bf16.xpose.msra.mxu0 0
        %2444 = vmatprep.subr.bf16.mxu0 0
        %2445 = vmatpush1.bf16.xpose.msra.mxu0 0
        %2446 = vmatprep.subr.bf16.mxu0 0
        %2447 = vmatpush1.bf16.xpose.msra.mxu0 0
        %2448 = vmatprep.subr.bf16.mxu0 0
        %2449 = vmatpush1.bf16.xpose.msra.mxu0 0
        %2450 = vmatprep.subr.bf16.mxu0 0
        %2451 = vmatpush1.bf16.xpose.msra.mxu0 0
        %2452 = vmatprep.subr.bf16.mxu0 0
        %2453 = vmatpush1.bf16.xpose.msra.mxu0 0
        %2454 = vmatprep.subr.bf16.mxu0 0
        %2455 = vmatpush1.bf16.xpose.msra.mxu0 0
        %2456 = vmatprep.subr.bf16.mxu0 0
        %2457 = vmatpush1.bf16.xpose.msra.mxu0 0
        %2458 = vmatprep.subr.bf16.mxu0 0
        %2459 = vmatpush1.bf16.xpose.msra.mxu0 0
        %2460 = vmatprep.subr.bf16.mxu0 0
        %2461 = vmatpush1.bf16.xpose.msra.mxu0 0
        %2462 = vmatprep.subr.bf16.mxu0 0
        %2463 = vmatpush1.bf16.xpose.msra.mxu0 0
        %2464 = vmatprep.subr.bf16.mxu0 0
        %2465 = vmatpush1.bf16.xpose.msra.mxu0 0
        %2466 = vmatprep.mubr.bf16.mxu0 0
        %2467 = vmatmul.mubr.bf16.gmra.mrb[0].mxu0 %v2429
        %v2468 = vpop.f32.mrb[0].mxu0
        %v2469 = vadd.f32 0.0, %v2468
        %v2470 = vpop.f32.mrb[0].mxu0
        %v2471 = vpop.f32.mrb[0].mxu0
        %v2472 = vpop.f32.mrb[0].mxu0
        %2473 = vdwg.mxu0
        %v2474 = vmul.f32 %v2469, 0.35355338
        %v2475 = vadd.f32 %v2474, %v1875
        %v2476 = vsel %vm2090, %v2475, -inf
        %2477 = vmax.xlane.f32.xlu0 %v2476
        %v2478 = vpop.xlane.xlu0 %2477
        %v2479 = vsub.f32 %v2475, %v2478
        %v2480 = vmul.f32 %v2479, 1.442695
        %v2481 = vpow.pop %v2480
        %v2482 = vsel %vm2090, %v2481, 0.0
        %2483 = vadd.xlane.f32.xlu0 %v2482
        %v2484 = vpop.xlane.xlu0 %2483
        %v2485 = vpack.c.bf16 %v2481, %v2481
        %2486 = vrot.lane.b32.xlu0 %v2086, 40
        %v2487 = vpop.permute.xlu0 %2486
        %v2489 = vsel %vm2090, %v2485, 0
        %v2492 = vsel %vm2154, %v2487, 0
        %2494 = vmatprep.subr.bf16.mxu0 0
        %2495 = vmatpush1.bf16.msra.mxu0 %v2492
        %2496 = vmatprep.subr.bf16.mxu0 0
        %2497 = vmatpush1.bf16.msra.mxu0 0
        %2498 = vmatprep.subr.bf16.mxu0 0
        %2499 = vmatpush1.bf16.msra.mxu0 0
        %2500 = vmatprep.subr.bf16.mxu0 0
        %2501 = vmatpush1.bf16.msra.mxu0 0
        %2502 = vmatprep.subr.bf16.mxu0 0
        %2503 = vmatpush1.bf16.msra.mxu0 0
        %2504 = vmatprep.subr.bf16.mxu0 0
        %2505 = vmatpush1.bf16.msra.mxu0 0
        %2506 = vmatprep.subr.bf16.mxu0 0
        %2507 = vmatpush1.bf16.msra.mxu0 0
        %2508 = vmatprep.subr.bf16.mxu0 0
        %2509 = vmatpush1.bf16.msra.mxu0 0
        %2510 = vmatprep.subr.bf16.mxu0 0
        %2511 = vmatpush1.bf16.msra.mxu0 0
        %2512 = vmatprep.subr.bf16.mxu0 0
        %2513 = vmatpush1.bf16.msra.mxu0 0
        %2514 = vmatprep.subr.bf16.mxu0 0
        %2515 = vmatpush1.bf16.msra.mxu0 0
        %2516 = vmatprep.subr.bf16.mxu0 0
        %2517 = vmatpush1.bf16.msra.mxu0 0
        %2518 = vmatprep.subr.bf16.mxu0 0
        %2519 = vmatpush1.bf16.msra.mxu0 0
        %2520 = vmatprep.subr.bf16.mxu0 0
        %2521 = vmatpush1.bf16.msra.mxu0 0
        %2522 = vmatprep.subr.bf16.mxu0 0
        %2523 = vmatpush1.bf16.msra.mxu0 0
        %2524 = vmatprep.subr.bf16.mxu0 0
        %2525 = vmatpush1.bf16.msra.mxu0 0
        %2526 = vmatprep.mubr.bf16.mxu0 0
        %2527 = vmatmul.mubr.bf16.gmra.mrb[0].mxu0 %v2489
        %v2528 = vpop.f32.mrb[0].mxu0
        %v2529 = vadd.f32 0.0, %v2528
        %v2530 = vpop.f32.mrb[0].mxu0
        %v2531 = vpop.f32.mrb[0].mxu0
        %v2532 = vpop.f32.mrb[0].mxu0
        %2533 = vdwg.mxu0
        %v2534 = vrcp.pop %v2484
        %v2535 = vmul.f32 %v2529, %v2534
        %2537 = vrot.lane.b32.xlu0 %v2311, 8
        %v2538 = vpop.permute.xlu0 %2537
        %2541 = vrot.lane.b32.xlu0 %v2423, 16
        %v2542 = vpop.permute.xlu0 %2541
        %2545 = vrot.lane.b32.xlu0 %v2535, 24
        %v2546 = vpop.permute.xlu0 %2545
        %v2548 = vsel %vm2090, %v2199, %v2538
        %vm2549 = vcmask 130048
        %v2550 = vsel %vm2549, %v2548, %v2542
        %vm2551 = vcmask 195584
        %v2552 = vsel %vm2551, %v2550, %v2546
        %v2553 = vpack.c.bf16 %v2552, %v2552
        %v2554 = vld [vmem:[#allocation10] sm:$0xf]
        %v2555 = vld [vmem:[#allocation10 + $0x4] sm:$0xf]
        %v2556 = vld [vmem:[#allocation10 + $0x8] sm:$0xf]
        %v2557 = vld [vmem:[#allocation10 + $0xc] sm:$0xf]
        %v2558 = vld [vmem:[#allocation11] sm:$0x1]
        %v2560 = vlaneseq
        %v2561 = vshrl.u32 %v2560, 7
        %v2562 = vsub.s32 0, %v2561
        %v2563 = vrot.slane %v2558, %v2562
        %v2569 = vunpack.c.l.b16 %v2554
        %v2570 = vunpack.c.l.b16 %v2555
        %v2571 = vunpack.c.l.b16 %v2556
        %v2572 = vunpack.c.l.b16 %v2557
        %v2573 = vpack.c.b16 %v2570, %v2569
        %v2574 = vpack.c.b16 %v2572, %v2571
        %vm2577 = vcmask 261120
        %v2579 = vsel %vm2577, %v2553, 0
        %2581 = vmatprep.subr.bf16.mxu0 0
        %2582 = vmatpush1.bf16.msra.mxu0 %v2573
        %2583 = vmatprep.subr.bf16.mxu0 0
        %2584 = vmatpush1.bf16.msra.mxu0 %v2574
        %2585 = vmatprep.subr.bf16.mxu0 0
        %2586 = vmatpush1.bf16.msra.mxu0 0
        %2587 = vmatprep.subr.bf16.mxu0 0
        %2588 = vmatpush1.bf16.msra.mxu0 0
        %2589 = vmatprep.subr.bf16.mxu0 0
        %2590 = vmatpush1.bf16.msra.mxu0 0
        %2591 = vmatprep.subr.bf16.mxu0 0
        %2592 = vmatpush1.bf16.msra.mxu0 0
        %2593 = vmatprep.subr.bf16.mxu0 0
        %2594 = vmatpush1.bf16.msra.mxu0 0
        %2595 = vmatprep.subr.bf16.mxu0 0
        %2596 = vmatpush1.bf16.msra.mxu0 0
        %2597 = vmatprep.subr.bf16.mxu0 0
        %2598 = vmatpush1.bf16.msra.mxu0 0
        %2599 = vmatprep.subr.bf16.mxu0 0
        %2600 = vmatpush1.bf16.msra.mxu0 0
        %2601 = vmatprep.subr.bf16.mxu0 0
        %2602 = vmatpush1.bf16.msra.mxu0 0
        %2603 = vmatprep.subr.bf16.mxu0 0
        %2604 = vmatpush1.bf16.msra.mxu0 0
        %2605 = vmatprep.subr.bf16.mxu0 0
        %2606 = vmatpush1.bf16.msra.mxu0 0
        %2607 = vmatprep.subr.bf16.mxu0 0
        %2608 = vmatpush1.bf16.msra.mxu0 0
        %2609 = vmatprep.subr.bf16.mxu0 0
        %2610 = vmatpush1.bf16.msra.mxu0 0
        %2611 = vmatprep.subr.bf16.mxu0 0
        %2612 = vmatpush1.bf16.msra.mxu0 0
        %2613 = vmatprep.mubr.bf16.mxu0 0
        %2614 = vmatmul.mubr.bf16.gmra.mrb[0].mxu0 %v2579
        %v2615 = vpop.f32.mrb[0].mxu0
        %v2616 = vadd.f32 %v2563, %v2615
        %v2617 = vpop.f32.mrb[0].mxu0
        %v2618 = vpop.f32.mrb[0].mxu0
        %v2619 = vpop.f32.mrb[0].mxu0
        %2620 = vdwg.mxu0
        %v2621 = vadd.f32 %v1973, %v2616
        %v2622 = vld [vmem:[#allocation13] sm:$0x1]
        %v2623 = vld [vmem:[#allocation14] sm:$0x1]
        %v2624 = vsel %vm1876, 1, 0
        %vm2625 = vcmp.eq.s32.totalorder %v2624, 1
        %v2626 = vsel %vm2625, %v2621, 0.0
        %2627 = vadd.xlane.f32.xlu0 %v2626
        %v2628 = vpop.xlane.xlu0 %2627
        %v2629 = vmul.f32 %v2628, 0.03125
        %v2630 = vsub.f32 %v2621, %v2629
        %v2631 = vsel %vm2625, %v2630, 0.0
        %v2632 = vmul.f32 %v2631, %v2631
        %2633 = vadd.xlane.f32.xlu0 %v2632
        %v2634 = vpop.xlane.xlu0 %2633
        %v2635 = vmul.f32 %v2634, 0.03125
        %v2636 = vadd.f32 %v2635, 1e-05
        %v2637 = vrsqrt.pop %v2636
        %v2638 = vmul.f32 %v2630, %v2637
        %v2640 = vlaneseq
        %v2641 = vshrl.u32 %v2640, 7
        %v2642 = vsub.s32 0, %v2641
        %v2643 = vrot.slane %v2622, %v2642
        %v2645 = vmul.f32 %v2638, %v2643
        %v2647 = vlaneseq
        %v2648 = vshrl.u32 %v2647, 7
        %v2649 = vsub.s32 0, %v2648
        %v2650 = vrot.slane %v2623, %v2649
        %v2652 = vadd.f32 %v2645, %v2650
        %v2653 = vpack.c.bf16 %v2652, %v2652
        %v2654 = vld [vmem:[#allocation16] sm:$0xf]
        %v2655 = vld [vmem:[#allocation16 + $0x4] sm:$0xf]
        %v2656 = vld [vmem:[#allocation16 + $0x8] sm:$0xf]
        %v2657 = vld [vmem:[#allocation16 + $0xc] sm:$0xf]
        %v2658 = vld [vmem:[#allocation16 + $0x10] sm:$0xf]
        %v2659 = vld [vmem:[#allocation16 + $0x14] sm:$0xf]
        %v2660 = vld [vmem:[#allocation16 + $0x18] sm:$0xf]
        %v2661 = vld [vmem:[#allocation16 + $0x1c] sm:$0xf]
        %v2662 = vld [vmem:[#allocation16 + $0x20] sm:$0xf]
        %v2663 = vld [vmem:[#allocation16 + $0x24] sm:$0xf]
        %v2664 = vld [vmem:[#allocation16 + $0x28] sm:$0xf]
        %v2665 = vld [vmem:[#allocation16 + $0x2c] sm:$0xf]
        %v2666 = vld [vmem:[#allocation16 + $0x30] sm:$0xf]
        %v2667 = vld [vmem:[#allocation16 + $0x34] sm:$0xf]
        %v2668 = vld [vmem:[#allocation16 + $0x38] sm:$0xf]
        %v2669 = vld [vmem:[#allocation16 + $0x3c] sm:$0xf]
        %v2670 = vld [vmem:[#allocation17] sm:$0x1]
        %v2672 = vlaneseq
        %v2673 = vshrl.u32 %v2672, 7
        %v2674 = vsub.s32 0, %v2673
        %v2675 = vrot.slane %v2670, %v2674
        %v2693 = vunpack.c.l.b16 %v2654
        %v2694 = vunpack.c.l.b16 %v2655
        %v2695 = vunpack.c.l.b16 %v2656
        %v2696 = vunpack.c.l.b16 %v2657
        %v2697 = vunpack.c.l.b16 %v2658
        %v2698 = vunpack.c.l.b16 %v2659
        %v2699 = vunpack.c.l.b16 %v2660
        %v2700 = vunpack.c.l.b16 %v2661
        %v2701 = vunpack.c.l.b16 %v2662
        %v2702 = vunpack.c.l.b16 %v2663
        %v2703 = vunpack.c.l.b16 %v2664
        %v2704 = vunpack.c.l.b16 %v2665
        %v2705 = vunpack.c.l.b16 %v2666
        %v2706 = vunpack.c.l.b16 %v2667
        %v2707 = vunpack.c.l.b16 %v2668
        %v2708 = vunpack.c.l.b16 %v2669
        %v2709 = vpack.c.b16 %v2694, %v2693
        %v2710 = vpack.c.b16 %v2696, %v2695
        %v2711 = vpack.c.b16 %v2698, %v2697
        %v2712 = vpack.c.b16 %v2700, %v2699
        %v2713 = vpack.c.b16 %v2702, %v2701
        %v2714 = vpack.c.b16 %v2704, %v2703
        %v2715 = vpack.c.b16 %v2706, %v2705
        %v2716 = vpack.c.b16 %v2708, %v2707
        %2725 = vmatprep.subr.bf16.mxu0 0
        %2726 = vmatpush1.bf16.msra.mxu0 %v2709
        %2727 = vmatprep.subr.bf16.mxu0 0
        %2728 = vmatpush1.bf16.msra.mxu0 %v2710
        %2729 = vmatprep.subr.bf16.mxu0 0
        %2730 = vmatpush1.bf16.msra.mxu0 %v2711
        %2731 = vmatprep.subr.bf16.mxu0 0
        %2732 = vmatpush1.bf16.msra.mxu0 %v2712
        %2733 = vmatprep.subr.bf16.mxu0 0
        %2734 = vmatpush1.bf16.msra.mxu0 %v2713
        %2735 = vmatprep.subr.bf16.mxu0 0
        %2736 = vmatpush1.bf16.msra.mxu0 %v2714
        %2737 = vmatprep.subr.bf16.mxu0 0
        %2738 = vmatpush1.bf16.msra.mxu0 %v2715
        %2739 = vmatprep.subr.bf16.mxu0 0
        %2740 = vmatpush1.bf16.msra.mxu0 %v2716
        %2741 = vmatprep.subr.bf16.mxu0 0
        %2742 = vmatpush1.bf16.msra.mxu0 0
        %2743 = vmatprep.subr.bf16.mxu0 0
        %2744 = vmatpush1.bf16.msra.mxu0 0
        %2745 = vmatprep.subr.bf16.mxu0 0
        %2746 = vmatpush1.bf16.msra.mxu0 0
        %2747 = vmatprep.subr.bf16.mxu0 0
        %2748 = vmatpush1.bf16.msra.mxu0 0
        %2749 = vmatprep.subr.bf16.mxu0 0
        %2750 = vmatpush1.bf16.msra.mxu0 0
        %2751 = vmatprep.subr.bf16.mxu0 0
        %2752 = vmatpush1.bf16.msra.mxu0 0
        %2753 = vmatprep.subr.bf16.mxu0 0
        %2754 = vmatpush1.bf16.msra.mxu0 0
        %2755 = vmatprep.subr.bf16.mxu0 0
        %2756 = vmatpush1.bf16.msra.mxu0 0
        %2757 = vmatprep.mubr.bf16.mxu0 0
        %2758 = vmatmul.mubr.bf16.gmra.mrb[0].mxu0 %v2653
        %v2759 = vpop.f32.mrb[0].mxu0
        %v2760 = vadd.f32 %v2675, %v2759
        %v2761 = vpop.f32.mrb[0].mxu0
        %v2762 = vpop.f32.mrb[0].mxu0
        %v2763 = vpop.f32.mrb[0].mxu0
        %2764 = vdwg.mxu0
        %v2765 = vmax.f32 %v2760, 0.0
        %v2766 = vpack.c.bf16 %v2765, %v2765
        %v2767 = vld [vmem:[#allocation19] sm:$0xf]
        %v2768 = vld [vmem:[#allocation19 + $0x4] sm:$0xf]
        %v2769 = vld [vmem:[#allocation19 + $0x8] sm:$0xf]
        %v2770 = vld [vmem:[#allocation19 + $0xc] sm:$0xf]
        %v2771 = vld [vmem:[#allocation19 + $0x10] sm:$0xf]
        %v2772 = vld [vmem:[#allocation19 + $0x14] sm:$0xf]
        %v2773 = vld [vmem:[#allocation19 + $0x18] sm:$0xf]
        %v2774 = vld [vmem:[#allocation19 + $0x1c] sm:$0xf]
        %v2775 = vld [vmem:[#allocation19 + $0x20] sm:$0xf]
        %v2776 = vld [vmem:[#allocation19 + $0x24] sm:$0xf]
        %v2777 = vld [vmem:[#allocation19 + $0x28] sm:$0xf]
        %v2778 = vld [vmem:[#allocation19 + $0x2c] sm:$0xf]
        %v2779 = vld [vmem:[#allocation19 + $0x30] sm:$0xf]
        %v2780 = vld [vmem:[#allocation19 + $0x34] sm:$0xf]
        %v2781 = vld [vmem:[#allocation19 + $0x38] sm:$0xf]
        %v2782 = vld [vmem:[#allocation19 + $0x3c] sm:$0xf]
        %v2783 = vld [vmem:[#allocation20] sm:$0x1]
        %v2785 = vlaneseq
        %v2786 = vshrl.u32 %v2785, 7
        %v2787 = vsub.s32 0, %v2786
        %v2788 = vrot.slane %v2783, %v2787
        %v2806 = vunpack.c.l.b16 %v2767
        %v2807 = vunpack.c.l.b16 %v2768
        %v2808 = vunpack.c.l.b16 %v2769
        %v2809 = vunpack.c.l.b16 %v2770
        %v2810 = vunpack.c.l.b16 %v2771
        %v2811 = vunpack.c.l.b16 %v2772
        %v2812 = vunpack.c.l.b16 %v2773
        %v2813 = vunpack.c.l.b16 %v2774
        %v2814 = vunpack.c.l.b16 %v2775
        %v2815 = vunpack.c.l.b16 %v2776
        %v2816 = vunpack.c.l.b16 %v2777
        %v2817 = vunpack.c.l.b16 %v2778
        %v2818 = vunpack.c.l.b16 %v2779
        %v2819 = vunpack.c.l.b16 %v2780
        %v2820 = vunpack.c.l.b16 %v2781
        %v2821 = vunpack.c.l.b16 %v2782
        %v2822 = vpack.c.b16 %v2807, %v2806
        %v2823 = vpack.c.b16 %v2809, %v2808
        %v2824 = vpack.c.b16 %v2811, %v2810
        %v2825 = vpack.c.b16 %v2813, %v2812
        %v2826 = vpack.c.b16 %v2815, %v2814
        %v2827 = vpack.c.b16 %v2817, %v2816
        %v2828 = vpack.c.b16 %v2819, %v2818
        %v2829 = vpack.c.b16 %v2821, %v2820
        %2838 = vmatprep.subr.bf16.mxu0 0
        %2839 = vmatpush1.bf16.msra.mxu0 %v2822
        %2840 = vmatprep.subr.bf16.mxu0 0
        %2841 = vmatpush1.bf16.msra.mxu0 %v2823
        %2842 = vmatprep.subr.bf16.mxu0 0
        %2843 = vmatpush1.bf16.msra.mxu0 %v2824
        %2844 = vmatprep.subr.bf16.mxu0 0
        %2845 = vmatpush1.bf16.msra.mxu0 %v2825
        %2846 = vmatprep.subr.bf16.mxu0 0
        %2847 = vmatpush1.bf16.msra.mxu0 %v2826
        %2848 = vmatprep.subr.bf16.mxu0 0
        %2849 = vmatpush1.bf16.msra.mxu0 %v2827
        %2850 = vmatprep.subr.bf16.mxu0 0
        %2851 = vmatpush1.bf16.msra.mxu0 %v2828
        %2852 = vmatprep.subr.bf16.mxu0 0
        %2853 = vmatpush1.bf16.msra.mxu0 %v2829
        %2854 = vmatprep.subr.bf16.mxu0 0
        %2855 = vmatpush1.bf16.msra.mxu0 0
        %2856 = vmatprep.subr.bf16.mxu0 0
        %2857 = vmatpush1.bf16.msra.mxu0 0
        %2858 = vmatprep.subr.bf16.mxu0 0
        %2859 = vmatpush1.bf16.msra.mxu0 0
        %2860 = vmatprep.subr.bf16.mxu0 0
        %2861 = vmatpush1.bf16.msra.mxu0 0
        %2862 = vmatprep.subr.bf16.mxu0 0
        %2863 = vmatpush1.bf16.msra.mxu0 0
        %2864 = vmatprep.subr.bf16.mxu0 0
        %2865 = vmatpush1.bf16.msra.mxu0 0
        %2866 = vmatprep.subr.bf16.mxu0 0
        %2867 = vmatpush1.bf16.msra.mxu0 0
        %2868 = vmatprep.subr.bf16.mxu0 0
        %2869 = vmatpush1.bf16.msra.mxu0 0
        %2870 = vmatprep.mubr.bf16.mxu0 0
        %2871 = vmatmul.mubr.bf16.gmra.mrb[0].mxu0 %v2766
        %v2872 = vpop.f32.mrb[0].mxu0
        %v2873 = vadd.f32 %v2788, %v2872
        %v2874 = vpop.f32.mrb[0].mxu0
        %v2875 = vpop.f32.mrb[0].mxu0
        %v2876 = vpop.f32.mrb[0].mxu0
        %2877 = vdwg.mxu0
        %v2878 = vadd.f32 %v2652, %v2873
        %v2879 = vld [vmem:[#allocation22] sm:$0x1]
        %v2880 = vld [vmem:[#allocation23] sm:$0x1]
        %v2881 = vsel %vm2625, %v2878, 0.0
        %2882 = vadd.xlane.f32.xlu0 %v2881
        %v2883 = vpop.xlane.xlu0 %2882
        %v2884 = vmul.f32 %v2883, 0.03125
        %v2885 = vsub.f32 %v2878, %v2884
        %v2886 = vsel %vm2625, %v2885, 0.0
        %v2887 = vmul.f32 %v2886, %v2886
        %2888 = vadd.xlane.f32.xlu0 %v2887
        %v2889 = vpop.xlane.xlu0 %2888
        %v2890 = vmul.f32 %v2889, 0.03125
        %v2891 = vadd.f32 %v2890, 1e-05
        %v2892 = vrsqrt.pop %v2891
        %v2893 = vmul.f32 %v2885, %v2892
        %v2895 = vlaneseq
        %v2896 = vshrl.u32 %v2895, 7
        %v2897 = vsub.s32 0, %v2896
        %v2898 = vrot.slane %v2879, %v2897
        %v2900 = vmul.f32 %v2893, %v2898
        %v2902 = vlaneseq
        %v2903 = vshrl.u32 %v2902, 7
        %v2904 = vsub.s32 0, %v2903
        %v2905 = vrot.slane %v2880, %v2904
        %v2907 = vadd.f32 %v2900, %v2905
        %v2908 = vpack.c.bf16 %v2907, %v2907
        %s2909 = scalar_lea.vmem [#allocation7], 64
        %v2910 = vld [vmem:[%s2909] sm:$0xf]
        %v2911 = vld [vmem:[%s2909 + $0x4] sm:$0xf]
        %v2912 = vld [vmem:[%s2909 + $0x8] sm:$0xf]
        %v2913 = vld [vmem:[%s2909 + $0xc] sm:$0xf]
        %v2914 = vld [vmem:[%s2909 + $0x10] sm:$0xf]
        %v2915 = vld [vmem:[%s2909 + $0x14] sm:$0xf]
        %v2916 = vld [vmem:[%s2909 + $0x18] sm:$0xf]
        %v2917 = vld [vmem:[%s2909 + $0x1c] sm:$0xf]
        %v2918 = vld [vmem:[%s2909 + $0x20] sm:$0xf]
        %v2919 = vld [vmem:[%s2909 + $0x24] sm:$0xf]
        %v2920 = vld [vmem:[%s2909 + $0x28] sm:$0xf]
        %v2921 = vld [vmem:[%s2909 + $0x2c] sm:$0xf]
        %v2922 = vld [vmem:[%s2909 + $0x30] sm:$0xf]
        %v2923 = vld [vmem:[%s2909 + $0x34] sm:$0xf]
        %v2924 = vld [vmem:[%s2909 + $0x38] sm:$0xf]
        %v2925 = vld [vmem:[%s2909 + $0x3c] sm:$0xf]
        %s2926 = scalar_lea.vmem [#allocation8], 1
        %v2927 = vld [vmem:[%s2926] sm:$0x1]
        %v2929 = vlaneseq
        %v2930 = vshrl.u32 %v2929, 7
        %v2931 = vsub.s32 0, %v2930
        %v2932 = vrot.slane %v2927, %v2931
        %v2950 = vunpack.c.l.b16 %v2910
        %v2951 = vunpack.c.l.b16 %v2911
        %v2952 = vunpack.c.l.b16 %v2912
        %v2953 = vunpack.c.l.b16 %v2913
        %v2954 = vunpack.c.l.b16 %v2914
        %v2955 = vunpack.c.l.b16 %v2915
        %v2956 = vunpack.c.l.b16 %v2916
        %v2957 = vunpack.c.l.b16 %v2917
        %v2958 = vunpack.c.l.b16 %v2918
        %v2959 = vunpack.c.l.b16 %v2919
        %v2960 = vunpack.c.l.b16 %v2920
        %v2961 = vunpack.c.l.b16 %v2921
        %v2962 = vunpack.c.l.b16 %v2922
        %v2963 = vunpack.c.l.b16 %v2923
        %v2964 = vunpack.c.l.b16 %v2924
        %v2965 = vunpack.c.l.b16 %v2925
        %v2966 = vpack.c.b16 %v2951, %v2950
        %v2967 = vpack.c.b16 %v2953, %v2952
        %v2968 = vpack.c.b16 %v2955, %v2954
        %v2969 = vpack.c.b16 %v2957, %v2956
        %v2970 = vpack.c.b16 %v2959, %v2958
        %v2971 = vpack.c.b16 %v2961, %v2960
        %v2972 = vpack.c.b16 %v2963, %v2962
        %v2973 = vpack.c.b16 %v2965, %v2964
        %2982 = vmatprep.subr.bf16.mxu0 0
        %2983 = vmatpush1.bf16.msra.mxu0 %v2966
        %2984 = vmatprep.subr.bf16.mxu0 0
        %2985 = vmatpush1.bf16.msra.mxu0 %v2967
        %2986 = vmatprep.subr.bf16.mxu0 0
        %2987 = vmatpush1.bf16.msra.mxu0 %v2968
        %2988 = vmatprep.subr.bf16.mxu0 0
        %2989 = vmatpush1.bf16.msra.mxu0 %v2969
        %2990 = vmatprep.subr.bf16.mxu0 0
        %2991 = vmatpush1.bf16.msra.mxu0 %v2970
        %2992 = vmatprep.subr.bf16.mxu0 0
        %2993 = vmatpush1.bf16.msra.mxu0 %v2971
        %2994 = vmatprep.subr.bf16.mxu0 0
        %2995 = vmatpush1.bf16.msra.mxu0 %v2972
        %2996 = vmatprep.subr.bf16.mxu0 0
        %2997 = vmatpush1.bf16.msra.mxu0 %v2973
        %2998 = vmatprep.subr.bf16.mxu0 0
        %2999 = vmatpush1.bf16.msra.mxu0 0
        %3000 = vmatprep.subr.bf16.mxu0 0
        %3001 = vmatpush1.bf16.msra.mxu0 0
        %3002 = vmatprep.subr.bf16.mxu0 0
        %3003 = vmatpush1.bf16.msra.mxu0 0
        %3004 = vmatprep.subr.bf16.mxu0 0
        %3005 = vmatpush1.bf16.msra.mxu0 0
        %3006 = vmatprep.subr.bf16.mxu0 0
        %3007 = vmatpush1.bf16.msra.mxu0 0
        %3008 = vmatprep.subr.bf16.mxu0 0
        %3009 = vmatpush1.bf16.msra.mxu0 0
        %3010 = vmatprep.subr.bf16.mxu0 0
        %3011 = vmatpush1.bf16.msra.mxu0 0
        %3012 = vmatprep.subr.bf16.mxu0 0
        %3013 = vmatpush1.bf16.msra.mxu0 0
        %3014 = vmatprep.mubr.bf16.mxu0 0
        %3015 = vmatmul.mubr.bf16.gmra.mrb[0].mxu0 %v2908
        %v3016 = vpop.f32.mrb[0].mxu0
        %v3017 = vadd.f32 %v2932, %v3016
        %v3018 = vpop.f32.mrb[0].mxu0
        %v3019 = vpop.f32.mrb[0].mxu0
        %v3020 = vpop.f32.mrb[0].mxu0
        %3021 = vdwg.mxu0
        %v3022 = vpack.c.bf16 %v3017, %v3017
        %3024 = vrot.lane.b32.xlu0 %v3022, 96
        %v3025 = vpop.permute.xlu0 %3024
        %v3027 = vsel %vm2090, %v3022, 0
        %v3030 = vsel %vm2090, %v3025, 0
        %3032 = vmatprep.subr.bf16.mxu0 0
        %3033 = vmatpush1.bf16.xpose.msra.mxu0 %v3030
        %3034 = vmatprep.subr.bf16.mxu0 0
        %3035 = vmatpush1.bf16.xpose.msra.mxu0 0
        %3036 = vmatprep.subr.bf16.mxu0 0
        %3037 = vmatpush1.bf16.xpose.msra.mxu0 0
        %3038 = vmatprep.subr.bf16.mxu0 0
        %3039 = vmatpush1.bf16.xpose.msra.mxu0 0
        %3040 = vmatprep.subr.bf16.mxu0 0
        %3041 = vmatpush1.bf16.xpose.msra.mxu0 0
        %3042 = vmatprep.subr.bf16.mxu0 0
        %3043 = vmatpush1.bf16.xpose.msra.mxu0 0
        %3044 = vmatprep.subr.bf16.mxu0 0
        %3045 = vmatpush1.bf16.xpose.msra.mxu0 0
        %3046 = vmatprep.subr.bf16.mxu0 0
        %3047 = vmatpush1.bf16.xpose.msra.mxu0 0
        %3048 = vmatprep.subr.bf16.mxu0 0
        %3049 = vmatpush1.bf16.xpose.msra.mxu0 0
        %3050 = vmatprep.subr.bf16.mxu0 0
        %3051 = vmatpush1.bf16.xpose.msra.mxu0 0
        %3052 = vmatprep.subr.bf16.mxu0 0
        %3053 = vmatpush1.bf16.xpose.msra.mxu0 0
        %3054 = vmatprep.subr.bf16.mxu0 0
        %3055 = vmatpush1.bf16.xpose.msra.mxu0 0
        %3056 = vmatprep.subr.bf16.mxu0 0
        %3057 = vmatpush1.bf16.xpose.msra.mxu0 0
        %3058 = vmatprep.subr.bf16.mxu0 0
        %3059 = vmatpush1.bf16.xpose.msra.mxu0 0
        %3060 = vmatprep.subr.bf16.mxu0 0
        %3061 = vmatpush1.bf16.xpose.msra.mxu0 0
        %3062 = vmatprep.subr.bf16.mxu0 0
        %3063 = vmatpush1.bf16.xpose.msra.mxu0 0
        %3064 = vmatprep.mubr.bf16.mxu0 0
        %3065 = vmatmul.mubr.bf16.gmra.mrb[0].mxu0 %v3027
        %v3066 = vpop.f32.mrb[0].mxu0
        %v3067 = vadd.f32 0.0, %v3066
        %v3068 = vpop.f32.mrb[0].mxu0
        %v3069 = vpop.f32.mrb[0].mxu0
        %v3070 = vpop.f32.mrb[0].mxu0
        %3071 = vdwg.mxu0
        %v3072 = vmul.f32 %v3067, 0.35355338
        %v3073 = vadd.f32 %v3072, %v1875
        %v3074 = vsel %vm2090, %v3073, -inf
        %3075 = vmax.xlane.f32.xlu0 %v3074
        %v3076 = vpop.xlane.xlu0 %3075
        %v3077 = vsub.f32 %v3073, %v3076
        %v3078 = vmul.f32 %v3077, 1.442695
        %v3079 = vpow.pop %v3078
        %v3080 = vsel %vm2090, %v3079, 0.0
        %3081 = vadd.xlane.f32.xlu0 %v3080
        %v3082 = vpop.xlane.xlu0 %3081
        %v3083 = vpack.c.bf16 %v3079, %v3079
        %3084 = vrot.lane.b32.xlu0 %v3022, 64
        %v3085 = vpop.permute.xlu0 %3084
        %v3087 = vsel %vm2090, %v3083, 0
        %v3090 = vsel %vm2154, %v3085, 0
        %3092 = vmatprep.subr.bf16.mxu0 0
        %3093 = vmatpush1.bf16.msra.mxu0 %v3090
        %3094 = vmatprep.subr.bf16.mxu0 0
        %3095 = vmatpush1.bf16.msra.mxu0 0
        %3096 = vmatprep.subr.bf16.mxu0 0
        %3097 = vmatpush1.bf16.msra.mxu0 0
        %3098 = vmatprep.subr.bf16.mxu0 0
        %3099 = vmatpush1.bf16.msra.mxu0 0
        %3100 = vmatprep.subr.bf16.mxu0 0
        %3101 = vmatpush1.bf16.msra.mxu0 0
        %3102 = vmatprep.subr.bf16.mxu0 0
        %3103 = vmatpush1.bf16.msra.mxu0 0
        %3104 = vmatprep.subr.bf16.mxu0 0
        %3105 = vmatpush1.bf16.msra.mxu0 0
        %3106 = vmatprep.subr.bf16.mxu0 0
        %3107 = vmatpush1.bf16.msra.mxu0 0
        %3108 = vmatprep.subr.bf16.mxu0 0
        %3109 = vmatpush1.bf16.msra.mxu0 0
        %3110 = vmatprep.subr.bf16.mxu0 0
        %3111 = vmatpush1.bf16.msra.mxu0 0
        %3112 = vmatprep.subr.bf16.mxu0 0
        %3113 = vmatpush1.bf16.msra.mxu0 0
        %3114 = vmatprep.subr.bf16.mxu0 0
        %3115 = vmatpush1.bf16.msra.mxu0 0
        %3116 = vmatprep.subr.bf16.mxu0 0
        %3117 = vmatpush1.bf16.msra.mxu0 0
        %3118 = vmatprep.subr.bf16.mxu0 0
        %3119 = vmatpush1.bf16.msra.mxu0 0
        %3120 = vmatprep.subr.bf16.mxu0 0
        %3121 = vmatpush1.bf16.msra.mxu0 0
        %3122 = vmatprep.subr.bf16.mxu0 0
        %3123 = vmatpush1.bf16.msra.mxu0 0
        %3124 = vmatprep.mubr.bf16.mxu0 0
        %3125 = vmatmul.mubr.bf16.gmra.mrb[0].mxu0 %v3087
        %v3126 = vpop.f32.mrb[0].mxu0
        %v3127 = vadd.f32 0.0, %v3126
        %v3128 = vpop.f32.mrb[0].mxu0
        %v3129 = vpop.f32.mrb[0].mxu0
        %v3130 = vpop.f32.mrb[0].mxu0
        %3131 = vdwg.mxu0
        %v3132 = vrcp.pop %v3082
        %v3133 = vmul.f32 %v3127, %v3132
        %3134 = vrot.lane.b32.xlu0 %v3022, 120
        %v3135 = vpop.permute.xlu0 %3134
        %3136 = vrot.lane.b32.xlu0 %v3022, 88
        %v3137 = vpop.permute.xlu0 %3136
        %v3139 = vsel %vm2090, %v3135, 0
        %v3142 = vsel %vm2090, %v3137, 0
        %3144 = vmatprep.subr.bf16.mxu0 0
        %3145 = vmatpush1.bf16.xpose.msra.mxu0 %v3142
        %3146 = vmatprep.subr.bf16.mxu0 0
        %3147 = vmatpush1.bf16.xpose.msra.mxu0 0
        %3148 = vmatprep.subr.bf16.mxu0 0
        %3149 = vmatpush1.bf16.xpose.msra.mxu0 0
        %3150 = vmatprep.subr.bf16.mxu0 0
        %3151 = vmatpush1.bf16.xpose.msra.mxu0 0
        %3152 = vmatprep.subr.bf16.mxu0 0
        %3153 = vmatpush1.bf16.xpose.msra.mxu0 0
        %3154 = vmatprep.subr.bf16.mxu0 0
        %3155 = vmatpush1.bf16.xpose.msra.mxu0 0
        %3156 = vmatprep.subr.bf16.mxu0 0
        %3157 = vmatpush1.bf16.xpose.msra.mxu0 0
        %3158 = vmatprep.subr.bf16.mxu0 0
        %3159 = vmatpush1.bf16.xpose.msra.mxu0 0
        %3160 = vmatprep.subr.bf16.mxu0 0
        %3161 = vmatpush1.bf16.xpose.msra.mxu0 0
        %3162 = vmatprep.subr.bf16.mxu0 0
        %3163 = vmatpush1.bf16.xpose.msra.mxu0 0
        %3164 = vmatprep.subr.bf16.mxu0 0
        %3165 = vmatpush1.bf16.xpose.msra.mxu0 0
        %3166 = vmatprep.subr.bf16.mxu0 0
        %3167 = vmatpush1.bf16.xpose.msra.mxu0 0
        %3168 = vmatprep.subr.bf16.mxu0 0
        %3169 = vmatpush1.bf16.xpose.msra.mxu0 0
        %3170 = vmatprep.subr.bf16.mxu0 0
        %3171 = vmatpush1.bf16.xpose.msra.mxu0 0
        %3172 = vmatprep.subr.bf16.mxu0 0
        %3173 = vmatpush1.bf16.xpose.msra.mxu0 0
        %3174 = vmatprep.subr.bf16.mxu0 0
        %3175 = vmatpush1.bf16.xpose.msra.mxu0 0
        %3176 = vmatprep.mubr.bf16.mxu0 0
        %3177 = vmatmul.mubr.bf16.gmra.mrb[0].mxu0 %v3139
        %v3178 = vpop.f32.mrb[0].mxu0
        %v3179 = vadd.f32 0.0, %v3178
        %v3180 = vpop.f32.mrb[0].mxu0
        %v3181 = vpop.f32.mrb[0].mxu0
        %v3182 = vpop.f32.mrb[0].mxu0
        %3183 = vdwg.mxu0
        %v3184 = vmul.f32 %v3179, 0.35355338
        %v3185 = vadd.f32 %v3184, %v1875
        %v3186 = vsel %vm2090, %v3185, -inf
        %3187 = vmax.xlane.f32.xlu0 %v3186
        %v3188 = vpop.xlane.xlu0 %3187
        %v3189 = vsub.f32 %v3185, %v3188
        %v3190 = vmul.f32 %v3189, 1.442695
        %v3191 = vpow.pop %v3190
        %v3192 = vsel %vm2090, %v3191, 0.0
        %3193 = vadd.xlane.f32.xlu0 %v3192
        %v3194 = vpop.xlane.xlu0 %3193
        %v3195 = vpack.c.bf16 %v3191, %v3191
        %3196 = vrot.lane.b32.xlu0 %v3022, 56
        %v3197 = vpop.permute.xlu0 %3196
        %v3199 = vsel %vm2090, %v3195, 0
        %v3202 = vsel %vm2154, %v3197, 0
        %3204 = vmatprep.subr.bf16.mxu0 0
        %3205 = vmatpush1.bf16.msra.mxu0 %v3202
        %3206 = vmatprep.subr.bf16.mxu0 0
        %3207 = vmatpush1.bf16.msra.mxu0 0
        %3208 = vmatprep.subr.bf16.mxu0 0
        %3209 = vmatpush1.bf16.msra.mxu0 0
        %3210 = vmatprep.subr.bf16.mxu0 0
        %3211 = vmatpush1.bf16.msra.mxu0 0
        %3212 = vmatprep.subr.bf16.mxu0 0
        %3213 = vmatpush1.bf16.msra.mxu0 0
        %3214 = vmatprep.subr.bf16.mxu0 0
        %3215 = vmatpush1.bf16.msra.mxu0 0
        %3216 = vmatprep.subr.bf16.mxu0 0
        %3217 = vmatpush1.bf16.msra.mxu0 0
        %3218 = vmatprep.subr.bf16.mxu0 0
        %3219 = vmatpush1.bf16.msra.mxu0 0
        %3220 = vmatprep.subr.bf16.mxu0 0
        %3221 = vmatpush1.bf16.msra.mxu0 0
        %3222 = vmatprep.subr.bf16.mxu0 0
        %3223 = vmatpush1.bf16.msra.mxu0 0
        %3224 = vmatprep.subr.bf16.mxu0 0
        %3225 = vmatpush1.bf16.msra.mxu0 0
        %3226 = vmatprep.subr.bf16.mxu0 0
        %3227 = vmatpush1.bf16.msra.mxu0 0
        %3228 = vmatprep.subr.bf16.mxu0 0
        %3229 = vmatpush1.bf16.msra.mxu0 0
        %3230 = vmatprep.subr.bf16.mxu0 0
        %3231 = vmatpush1.bf16.msra.mxu0 0
        %3232 = vmatprep.subr.bf16.mxu0 0
        %3233 = vmatpush1.bf16.msra.mxu0 0
        %3234 = vmatprep.subr.bf16.mxu0 0
        %3235 = vmatpush1.bf16.msra.mxu0 0
        %3236 = vmatprep.mubr.bf16.mxu0 0
        %3237 = vmatmul.mubr.bf16.gmra.mrb[0].mxu0 %v3199
        %v3238 = vpop.f32.mrb[0].mxu0
        %v3239 = vadd.f32 0.0, %v3238
        %v3240 = vpop.f32.mrb[0].mxu0
        %v3241 = vpop.f32.mrb[0].mxu0
        %v3242 = vpop.f32.mrb[0].mxu0
        %3243 = vdwg.mxu0
        %v3244 = vrcp.pop %v3194
        %v3245 = vmul.f32 %v3239, %v3244
        %3246 = vrot.lane.b32.xlu0 %v3022, 112
        %v3247 = vpop.permute.xlu0 %3246
        %3248 = vrot.lane.b32.xlu0 %v3022, 80
        %v3249 = vpop.permute.xlu0 %3248
        %v3251 = vsel %vm2090, %v3247, 0
        %v3254 = vsel %vm2090, %v3249, 0
        %3256 = vmatprep.subr.bf16.mxu0 0
        %3257 = vmatpush1.bf16.xpose.msra.mxu0 %v3254
        %3258 = vmatprep.subr.bf16.mxu0 0
        %3259 = vmatpush1.bf16.xpose.msra.mxu0 0
        %3260 = vmatprep.subr.bf16.mxu0 0
        %3261 = vmatpush1.bf16.xpose.msra.mxu0 0
        %3262 = vmatprep.subr.bf16.mxu0 0
        %3263 = vmatpush1.bf16.xpose.msra.mxu0 0
        %3264 = vmatprep.subr.bf16.mxu0 0
        %3265 = vmatpush1.bf16.xpose.msra.mxu0 0
        %3266 = vmatprep.subr.bf16.mxu0 0
        %3267 = vmatpush1.bf16.xpose.msra.mxu0 0
        %3268 = vmatprep.subr.bf16.mxu0 0
        %3269 = vmatpush1.bf16.xpose.msra.mxu0 0
        %3270 = vmatprep.subr.bf16.mxu0 0
        %3271 = vmatpush1.bf16.xpose.msra.mxu0 0
        %3272 = vmatprep.subr.bf16.mxu0 0
        %3273 = vmatpush1.bf16.xpose.msra.mxu0 0
        %3274 = vmatprep.subr.bf16.mxu0 0
        %3275 = vmatpush1.bf16.xpose.msra.mxu0 0
        %3276 = vmatprep.subr.bf16.mxu0 0
        %3277 = vmatpush1.bf16.xpose.msra.mxu0 0
        %3278 = vmatprep.subr.bf16.mxu0 0
        %3279 = vmatpush1.bf16.xpose.msra.mxu0 0
        %3280 = vmatprep.subr.bf16.mxu0 0
        %3281 = vmatpush1.bf16.xpose.msra.mxu0 0
        %3282 = vmatprep.subr.bf16.mxu0 0
        %3283 = vmatpush1.bf16.xpose.msra.mxu0 0
        %3284 = vmatprep.subr.bf16.mxu0 0
        %3285 = vmatpush1.bf16.xpose.msra.mxu0 0
        %3286 = vmatprep.subr.bf16.mxu0 0
        %3287 = vmatpush1.bf16.xpose.msra.mxu0 0
        %3288 = vmatprep.mubr.bf16.mxu0 0
        %3289 = vmatmul.mubr.bf16.gmra.mrb[0].mxu0 %v3251
        %v3290 = vpop.f32.mrb[0].mxu0
        %v3291 = vadd.f32 0.0, %v3290
        %v3292 = vpop.f32.mrb[0].mxu0
        %v3293 = vpop.f32.mrb[0].mxu0
        %v3294 = vpop.f32.mrb[0].mxu0
        %3295 = vdwg.mxu0
        %v3296 = vmul.f32 %v3291, 0.35355338
        %v3297 = vadd.f32 %v3296, %v1875
        %v3298 = vsel %vm2090, %v3297, -inf
        %3299 = vmax.xlane.f32.xlu0 %v3298
        %v3300 = vpop.xlane.xlu0 %3299
        %v3301 = vsub.f32 %v3297, %v3300
        %v3302 = vmul.f32 %v3301, 1.442695
        %v3303 = vpow.pop %v3302
        %v3304 = vsel %vm2090, %v3303, 0.0
        %3305 = vadd.xlane.f32.xlu0 %v3304
        %v3306 = vpop.xlane.xlu0 %3305
        %v3307 = vpack.c.bf16 %v3303, %v3303
        %3308 = vrot.lane.b32.xlu0 %v3022, 48
        %v3309 = vpop.permute.xlu0 %3308
        %v3311 = vsel %vm2090, %v3307, 0
        %v3314 = vsel %vm2154, %v3309, 0
        %3316 = vmatprep.subr.bf16.mxu0 0
        %3317 = vmatpush1.bf16.msra.mxu0 %v3314
        %3318 = vmatprep.subr.bf16.mxu0 0
        %3319 = vmatpush1.bf16.msra.mxu0 0
        %3320 = vmatprep.subr.bf16.mxu0 0
        %3321 = vmatpush1.bf16.msra.mxu0 0
        %3322 = vmatprep.subr.bf16.mxu0 0
        %3323 = vmatpush1.bf16.msra.mxu0 0
        %3324 = vmatprep.subr.bf16.mxu0 0
        %3325 = vmatpush1.bf16.msra.mxu0 0
        %3326 = vmatprep.subr.bf16.mxu0 0
        %3327 = vmatpush1.bf16.msra.mxu0 0
        %3328 = vmatprep.subr.bf16.mxu0 0
        %3329 = vmatpush1.bf16.msra.mxu0 0
        %3330 = vmatprep.subr.bf16.mxu0 0
        %3331 = vmatpush1.bf16.msra.mxu0 0
        %3332 = vmatprep.subr.bf16.mxu0 0
        %3333 = vmatpush1.bf16.msra.mxu0 0
        %3334 = vmatprep.subr.bf16.mxu0 0
        %3335 = vmatpush1.bf16.msra.mxu0 0
        %3336 = vmatprep.subr.bf16.mxu0 0
        %3337 = vmatpush1.bf16.msra.mxu0 0
        %3338 = vmatprep.subr.bf16.mxu0 0
        %3339 = vmatpush1.bf16.msra.mxu0 0
        %3340 = vmatprep.subr.bf16.mxu0 0
        %3341 = vmatpush1.bf16.msra.mxu0 0
        %3342 = vmatprep.subr.bf16.mxu0 0
        %3343 = vmatpush1.bf16.msra.mxu0 0
        %3344 = vmatprep.subr.bf16.mxu0 0
        %3345 = vmatpush1.bf16.msra.mxu0 0
        %3346 = vmatprep.subr.bf16.mxu0 0
        %3347 = vmatpush1.bf16.msra.mxu0 0
        %3348 = vmatprep.mubr.bf16.mxu0 0
        %3349 = vmatmul.mubr.bf16.gmra.mrb[0].mxu0 %v3311
        %v3350 = vpop.f32.mrb[0].mxu0
        %v3351 = vadd.f32 0.0, %v3350
        %v3352 = vpop.f32.mrb[0].mxu0
        %v3353 = vpop.f32.mrb[0].mxu0
        %v3354 = vpop.f32.mrb[0].mxu0
        %3355 = vdwg.mxu0
        %v3356 = vrcp.pop %v3306
        %v3357 = vmul.f32 %v3351, %v3356
        %3358 = vrot.lane.b32.xlu0 %v3022, 104
        %v3359 = vpop.permute.xlu0 %3358
        %3360 = vrot.lane.b32.xlu0 %v3022, 72
        %v3361 = vpop.permute.xlu0 %3360
        %v3363 = vsel %vm2090, %v3359, 0
        %v3366 = vsel %vm2090, %v3361, 0
        %3368 = vmatprep.subr.bf16.mxu0 0
        %3369 = vmatpush1.bf16.xpose.msra.mxu0 %v3366
        %3370 = vmatprep.subr.bf16.mxu0 0
        %3371 = vmatpush1.bf16.xpose.msra.mxu0 0
        %3372 = vmatprep.subr.bf16.mxu0 0
        %3373 = vmatpush1.bf16.xpose.msra.mxu0 0
        %3374 = vmatprep.subr.bf16.mxu0 0
        %3375 = vmatpush1.bf16.xpose.msra.mxu0 0
        %3376 = vmatprep.subr.bf16.mxu0 0
        %3377 = vmatpush1.bf16.xpose.msra.mxu0 0
        %3378 = vmatprep.subr.bf16.mxu0 0
        %3379 = vmatpush1.bf16.xpose.msra.mxu0 0
        %3380 = vmatprep.subr.bf16.mxu0 0
        %3381 = vmatpush1.bf16.xpose.msra.mxu0 0
        %3382 = vmatprep.subr.bf16.mxu0 0
        %3383 = vmatpush1.bf16.xpose.msra.mxu0 0
        %3384 = vmatprep.subr.bf16.mxu0 0
        %3385 = vmatpush1.bf16.xpose.msra.mxu0 0
        %3386 = vmatprep.subr.bf16.mxu0 0
        %3387 = vmatpush1.bf16.xpose.msra.mxu0 0
        %3388 = vmatprep.subr.bf16.mxu0 0
        %3389 = vmatpush1.bf16.xpose.msra.mxu0 0
        %3390 = vmatprep.subr.bf16.mxu0 0
        %3391 = vmatpush1.bf16.xpose.msra.mxu0 0
        %3392 = vmatprep.subr.bf16.mxu0 0
        %3393 = vmatpush1.bf16.xpose.msra.mxu0 0
        %3394 = vmatprep.subr.bf16.mxu0 0
        %3395 = vmatpush1.bf16.xpose.msra.mxu0 0
        %3396 = vmatprep.subr.bf16.mxu0 0
        %3397 = vmatpush1.bf16.xpose.msra.mxu0 0
        %3398 = vmatprep.subr.bf16.mxu0 0
        %3399 = vmatpush1.bf16.xpose.msra.mxu0 0
        %3400 = vmatprep.mubr.bf16.mxu0 0
        %3401 = vmatmul.mubr.bf16.gmra.mrb[0].mxu0 %v3363
        %v3402 = vpop.f32.mrb[0].mxu0
        %v3403 = vadd.f32 0.0, %v3402
        %v3404 = vpop.f32.mrb[0].mxu0
        %v3405 = vpop.f32.mrb[0].mxu0
        %v3406 = vpop.f32.mrb[0].mxu0
        %3407 = vdwg.mxu0
        %v3408 = vmul.f32 %v3403, 0.35355338
        %v3409 = vadd.f32 %v3408, %v1875
        %v3410 = vsel %vm2090, %v3409, -inf
        %3411 = vmax.xlane.f32.xlu0 %v3410
        %v3412 = vpop.xlane.xlu0 %3411
        %v3413 = vsub.f32 %v3409, %v3412
        %v3414 = vmul.f32 %v3413, 1.442695
        %v3415 = vpow.pop %v3414
        %v3416 = vsel %vm2090, %v3415, 0.0
        %3417 = vadd.xlane.f32.xlu0 %v3416
        %v3418 = vpop.xlane.xlu0 %3417
        %v3419 = vpack.c.bf16 %v3415, %v3415
        %3420 = vrot.lane.b32.xlu0 %v3022, 40
        %v3421 = vpop.permute.xlu0 %3420
        %v3423 = vsel %vm2090, %v3419, 0
        %v3426 = vsel %vm2154, %v3421, 0
        %3428 = vmatprep.subr.bf16.mxu0 0
        %3429 = vmatpush1.bf16.msra.mxu0 %v3426
        %3430 = vmatprep.subr.bf16.mxu0 0
        %3431 = vmatpush1.bf16.msra.mxu0 0
        %3432 = vmatprep.subr.bf16.mxu0 0
        %3433 = vmatpush1.bf16.msra.mxu0 0
        %3434 = vmatprep.subr.bf16.mxu0 0
        %3435 = vmatpush1.bf16.msra.mxu0 0
        %3436 = vmatprep.subr.bf16.mxu0 0
        %3437 = vmatpush1.bf16.msra.mxu0 0
        %3438 = vmatprep.subr.bf16.mxu0 0
        %3439 = vmatpush1.bf16.msra.mxu0 0
        %3440 = vmatprep.subr.bf16.mxu0 0
        %3441 = vmatpush1.bf16.msra.mxu0 0
        %3442 = vmatprep.subr.bf16.mxu0 0
        %3443 = vmatpush1.bf16.msra.mxu0 0
        %3444 = vmatprep.subr.bf16.mxu0 0
        %3445 = vmatpush1.bf16.msra.mxu0 0
        %3446 = vmatprep.subr.bf16.mxu0 0
        %3447 = vmatpush1.bf16.msra.mxu0 0
        %3448 = vmatprep.subr.bf16.mxu0 0
        %3449 = vmatpush1.bf16.msra.mxu0 0
        %3450 = vmatprep.subr.bf16.mxu0 0
        %3451 = vmatpush1.bf16.msra.mxu0 0
        %3452 = vmatprep.subr.bf16.mxu0 0
        %3453 = vmatpush1.bf16.msra.mxu0 0
        %3454 = vmatprep.subr.bf16.mxu0 0
        %3455 = vmatpush1.bf16.msra.mxu0 0
        %3456 = vmatprep.subr.bf16.mxu0 0
        %3457 = vmatpush1.bf16.msra.mxu0 0
        %3458 = vmatprep.subr.bf16.mxu0 0
        %3459 = vmatpush1.bf16.msra.mxu0 0
        %3460 = vmatprep.mubr.bf16.mxu0 0
        %3461 = vmatmul.mubr.bf16.gmra.mrb[0].mxu0 %v3423
        %v3462 = vpop.f32.mrb[0].mxu0
        %v3463 = vadd.f32 0.0, %v3462
        %v3464 = vpop.f32.mrb[0].mxu0
        %v3465 = vpop.f32.mrb[0].mxu0
        %v3466 = vpop.f32.mrb[0].mxu0
        %3467 = vdwg.mxu0
        %v3468 = vrcp.pop %v3418
        %v3469 = vmul.f32 %v3463, %v3468
        %3471 = vrot.lane.b32.xlu0 %v3245, 8
        %v3472 = vpop.permute.xlu0 %3471
        %3475 = vrot.lane.b32.xlu0 %v3357, 16
        %v3476 = vpop.permute.xlu0 %3475
        %3479 = vrot.lane.b32.xlu0 %v3469, 24
        %v3480 = vpop.permute.xlu0 %3479
        %v3482 = vsel %vm2090, %v3133, %v3472
        %v3483 = vsel %vm2549, %v3482, %v3476
        %v3484 = vsel %vm2551, %v3483, %v3480
        %v3485 = vpack.c.bf16 %v3484, %v3484
        %s3486 = scalar_lea.vmem [#allocation10], 16
        %v3487 = vld [vmem:[%s3486] sm:$0xf]
        %v3488 = vld [vmem:[%s3486 + $0x4] sm:$0xf]
        %v3489 = vld [vmem:[%s3486 + $0x8] sm:$0xf]
        %v3490 = vld [vmem:[%s3486 + $0xc] sm:$0xf]
        %s3491 = scalar_lea.vmem [#allocation11], 1
        %v3492 = vld [vmem:[%s3491] sm:$0x1]
        %v3494 = vlaneseq
        %v3495 = vshrl.u32 %v3494, 7
        %v3496 = vsub.s32 0, %v3495
        %v3497 = vrot.slane %v3492, %v3496
        %v3503 = vunpack.c.l.b16 %v3487
        %v3504 = vunpack.c.l.b16 %v3488
        %v3505 = vunpack.c.l.b16 %v3489
        %v3506 = vunpack.c.l.b16 %v3490
        %v3507 = vpack.c.b16 %v3504, %v3503
        %v3508 = vpack.c.b16 %v3506, %v3505
        %v3512 = vsel %vm2577, %v3485, 0
        %3514 = vmatprep.subr.bf16.mxu0 0
        %3515 = vmatpush1.bf16.msra.mxu0 %v3507
        %3516 = vmatprep.subr.bf16.mxu0 0
        %3517 = vmatpush1.bf16.msra.mxu0 %v3508
        %3518 = vmatprep.subr.bf16.mxu0 0
        %3519 = vmatpush1.bf16.msra.mxu0 0
        %3520 = vmatprep.subr.bf16.mxu0 0
        %3521 = vmatpush1.bf16.msra.mxu0 0
        %3522 = vmatprep.subr.bf16.mxu0 0
        %3523 = vmatpush1.bf16.msra.mxu0 0
        %3524 = vmatprep.subr.bf16.mxu0 0
        %3525 = vmatpush1.bf16.msra.mxu0 0
        %3526 = vmatprep.subr.bf16.mxu0 0
        %3527 = vmatpush1.bf16.msra.mxu0 0
        %3528 = vmatprep.subr.bf16.mxu0 0
        %3529 = vmatpush1.bf16.msra.mxu0 0
        %3530 = vmatprep.subr.bf16.mxu0 0
        %3531 = vmatpush1.bf16.msra.mxu0 0
        %3532 = vmatprep.subr.bf16.mxu0 0
        %3533 = vmatpush1.bf16.msra.mxu0 0
        %3534 = vmatprep.subr.bf16.mxu0 0
        %3535 = vmatpush1.bf16.msra.mxu0 0
        %3536 = vmatprep.subr.bf16.mxu0 0
        %3537 = vmatpush1.bf16.msra.mxu0 0
        %3538 = vmatprep.subr.bf16.mxu0 0
        %3539 = vmatpush1.bf16.msra.mxu0 0
        %3540 = vmatprep.subr.bf16.mxu0 0
        %3541 = vmatpush1.bf16.msra.mxu0 0
        %3542 = vmatprep.subr.bf16.mxu0 0
        %3543 = vmatpush1.bf16.msra.mxu0 0
        %3544 = vmatprep.subr.bf16.mxu0 0
        %3545 = vmatpush1.bf16.msra.mxu0 0
        %3546 = vmatprep.mubr.bf16.mxu0 0
        %3547 = vmatmul.mubr.bf16.gmra.mrb[0].mxu0 %v3512
        %v3548 = vpop.f32.mrb[0].mxu0
        %v3549 = vadd.f32 %v3497, %v3548
        %v3550 = vpop.f32.mrb[0].mxu0
        %v3551 = vpop.f32.mrb[0].mxu0
        %v3552 = vpop.f32.mrb[0].mxu0
        %3553 = vdwg.mxu0
        %v3554 = vadd.f32 %v2907, %v3549
        %s3555 = scalar_lea.vmem [#allocation13], 1
        %v3556 = vld [vmem:[%s3555] sm:$0x1]
        %s3557 = scalar_lea.vmem [#allocation14], 1
        %v3558 = vld [vmem:[%s3557] sm:$0x1]
        %v3559 = vsel %vm2625, %v3554, 0.0
        %3560 = vadd.xlane.f32.xlu0 %v3559
        %v3561 = vpop.xlane.xlu0 %3560
        %v3562 = vmul.f32 %v3561, 0.03125
        %v3563 = vsub.f32 %v3554, %v3562
        %v3564 = vsel %vm2625, %v3563, 0.0
        %v3565 = vmul.f32 %v3564, %v3564
        %3566 = vadd.xlane.f32.xlu0 %v3565
        %v3567 = vpop.xlane.xlu0 %3566
        %v3568 = vmul.f32 %v3567, 0.03125
        %v3569 = vadd.f32 %v3568, 1e-05
        %v3570 = vrsqrt.pop %v3569
        %v3571 = vmul.f32 %v3563, %v3570
        %v3573 = vlaneseq
        %v3574 = vshrl.u32 %v3573, 7
        %v3575 = vsub.s32 0, %v3574
        %v3576 = vrot.slane %v3556, %v3575
        %v3578 = vmul.f32 %v3571, %v3576
        %v3580 = vlaneseq
        %v3581 = vshrl.u32 %v3580, 7
        %v3582 = vsub.s32 0, %v3581
        %v3583 = vrot.slane %v3558, %v3582
        %v3585 = vadd.f32 %v3578, %v3583
        %v3586 = vpack.c.bf16 %v3585, %v3585
        %s3587 = scalar_lea.vmem [#allocation16], 64
        %v3588 = vld [vmem:[%s3587] sm:$0xf]
        %v3589 = vld [vmem:[%s3587 + $0x4] sm:$0xf]
        %v3590 = vld [vmem:[%s3587 + $0x8] sm:$0xf]
        %v3591 = vld [vmem:[%s3587 + $0xc] sm:$0xf]
        %v3592 = vld [vmem:[%s3587 + $0x10] sm:$0xf]
        %v3593 = vld [vmem:[%s3587 + $0x14] sm:$0xf]
        %v3594 = vld [vmem:[%s3587 + $0x18] sm:$0xf]
        %v3595 = vld [vmem:[%s3587 + $0x1c] sm:$0xf]
        %v3596 = vld [vmem:[%s3587 + $0x20] sm:$0xf]
        %v3597 = vld [vmem:[%s3587 + $0x24] sm:$0xf]
        %v3598 = vld [vmem:[%s3587 + $0x28] sm:$0xf]
        %v3599 = vld [vmem:[%s3587 + $0x2c] sm:$0xf]
        %v3600 = vld [vmem:[%s3587 + $0x30] sm:$0xf]
        %v3601 = vld [vmem:[%s3587 + $0x34] sm:$0xf]
        %v3602 = vld [vmem:[%s3587 + $0x38] sm:$0xf]
        %v3603 = vld [vmem:[%s3587 + $0x3c] sm:$0xf]
        %s3604 = scalar_lea.vmem [#allocation17], 1
        %v3605 = vld [vmem:[%s3604] sm:$0x1]
        %v3607 = vlaneseq
        %v3608 = vshrl.u32 %v3607, 7
        %v3609 = vsub.s32 0, %v3608
        %v3610 = vrot.slane %v3605, %v3609
        %v3628 = vunpack.c.l.b16 %v3588
        %v3629 = vunpack.c.l.b16 %v3589
        %v3630 = vunpack.c.l.b16 %v3590
        %v3631 = vunpack.c.l.b16 %v3591
        %v3632 = vunpack.c.l.b16 %v3592
        %v3633 = vunpack.c.l.b16 %v3593
        %v3634 = vunpack.c.l.b16 %v3594
        %v3635 = vunpack.c.l.b16 %v3595
        %v3636 = vunpack.c.l.b16 %v3596
        %v3637 = vunpack.c.l.b16 %v3597
        %v3638 = vunpack.c.l.b16 %v3598
        %v3639 = vunpack.c.l.b16 %v3599
        %v3640 = vunpack.c.l.b16 %v3600
        %v3641 = vunpack.c.l.b16 %v3601
        %v3642 = vunpack.c.l.b16 %v3602
        %v3643 = vunpack.c.l.b16 %v3603
        %v3644 = vpack.c.b16 %v3629, %v3628
        %v3645 = vpack.c.b16 %v3631, %v3630
        %v3646 = vpack.c.b16 %v3633, %v3632
        %v3647 = vpack.c.b16 %v3635, %v3634
        %v3648 = vpack.c.b16 %v3637, %v3636
        %v3649 = vpack.c.b16 %v3639, %v3638
        %v3650 = vpack.c.b16 %v3641, %v3640
        %v3651 = vpack.c.b16 %v3643, %v3642
        %3660 = vmatprep.subr.bf16.mxu0 0
        %3661 = vmatpush1.bf16.msra.mxu0 %v3644
        %3662 = vmatprep.subr.bf16.mxu0 0
        %3663 = vmatpush1.bf16.msra.mxu0 %v3645
        %3664 = vmatprep.subr.bf16.mxu0 0
        %3665 = vmatpush1.bf16.msra.mxu0 %v3646
        %3666 = vmatprep.subr.bf16.mxu0 0
        %3667 = vmatpush1.bf16.msra.mxu0 %v3647
        %3668 = vmatprep.subr.bf16.mxu0 0
        %3669 = vmatpush1.bf16.msra.mxu0 %v3648
        %3670 = vmatprep.subr.bf16.mxu0 0
        %3671 = vmatpush1.bf16.msra.mxu0 %v3649
        %3672 = vmatprep.subr.bf16.mxu0 0
        %3673 = vmatpush1.bf16.msra.mxu0 %v3650
        %3674 = vmatprep.subr.bf16.mxu0 0
        %3675 = vmatpush1.bf16.msra.mxu0 %v3651
        %3676 = vmatprep.subr.bf16.mxu0 0
        %3677 = vmatpush1.bf16.msra.mxu0 0
        %3678 = vmatprep.subr.bf16.mxu0 0
        %3679 = vmatpush1.bf16.msra.mxu0 0
        %3680 = vmatprep.subr.bf16.mxu0 0
        %3681 = vmatpush1.bf16.msra.mxu0 0
        %3682 = vmatprep.subr.bf16.mxu0 0
        %3683 = vmatpush1.bf16.msra.mxu0 0
        %3684 = vmatprep.subr.bf16.mxu0 0
        %3685 = vmatpush1.bf16.msra.mxu0 0
        %3686 = vmatprep.subr.bf16.mxu0 0
        %3687 = vmatpush1.bf16.msra.mxu0 0
        %3688 = vmatprep.subr.bf16.mxu0 0
        %3689 = vmatpush1.bf16.msra.mxu0 0
        %3690 = vmatprep.subr.bf16.mxu0 0
        %3691 = vmatpush1.bf16.msra.mxu0 0
        %3692 = vmatprep.mubr.bf16.mxu0 0
        %3693 = vmatmul.mubr.bf16.gmra.mrb[0].mxu0 %v3586
        %v3694 = vpop.f32.mrb[0].mxu0
        %v3695 = vadd.f32 %v3610, %v3694
        %v3696 = vpop.f32.mrb[0].mxu0
        %v3697 = vpop.f32.mrb[0].mxu0
        %v3698 = vpop.f32.mrb[0].mxu0
        %3699 = vdwg.mxu0
        %v3700 = vmax.f32 %v3695, 0.0
        %v3701 = vpack.c.bf16 %v3700, %v3700
        %s3702 = scalar_lea.vmem [#allocation19], 64
        %v3703 = vld [vmem:[%s3702] sm:$0xf]
        %v3704 = vld [vmem:[%s3702 + $0x4] sm:$0xf]
        %v3705 = vld [vmem:[%s3702 + $0x8] sm:$0xf]
        %v3706 = vld [vmem:[%s3702 + $0xc] sm:$0xf]
        %v3707 = vld [vmem:[%s3702 + $0x10] sm:$0xf]
        %v3708 = vld [vmem:[%s3702 + $0x14] sm:$0xf]
        %v3709 = vld [vmem:[%s3702 + $0x18] sm:$0xf]
        %v3710 = vld [vmem:[%s3702 + $0x1c] sm:$0xf]
        %v3711 = vld [vmem:[%s3702 + $0x20] sm:$0xf]
        %v3712 = vld [vmem:[%s3702 + $0x24] sm:$0xf]
        %v3713 = vld [vmem:[%s3702 + $0x28] sm:$0xf]
        %v3714 = vld [vmem:[%s3702 + $0x2c] sm:$0xf]
        %v3715 = vld [vmem:[%s3702 + $0x30] sm:$0xf]
        %v3716 = vld [vmem:[%s3702 + $0x34] sm:$0xf]
        %v3717 = vld [vmem:[%s3702 + $0x38] sm:$0xf]
        %v3718 = vld [vmem:[%s3702 + $0x3c] sm:$0xf]
        %s3719 = scalar_lea.vmem [#allocation20], 1
        %v3720 = vld [vmem:[%s3719] sm:$0x1]
        %v3722 = vlaneseq
        %v3723 = vshrl.u32 %v3722, 7
        %v3724 = vsub.s32 0, %v3723
        %v3725 = vrot.slane %v3720, %v3724
        %v3743 = vunpack.c.l.b16 %v3703
        %v3744 = vunpack.c.l.b16 %v3704
        %v3745 = vunpack.c.l.b16 %v3705
        %v3746 = vunpack.c.l.b16 %v3706
        %v3747 = vunpack.c.l.b16 %v3707
        %v3748 = vunpack.c.l.b16 %v3708
        %v3749 = vunpack.c.l.b16 %v3709
        %v3750 = vunpack.c.l.b16 %v3710
        %v3751 = vunpack.c.l.b16 %v3711
        %v3752 = vunpack.c.l.b16 %v3712
        %v3753 = vunpack.c.l.b16 %v3713
        %v3754 = vunpack.c.l.b16 %v3714
        %v3755 = vunpack.c.l.b16 %v3715
        %v3756 = vunpack.c.l.b16 %v3716
        %v3757 = vunpack.c.l.b16 %v3717
        %v3758 = vunpack.c.l.b16 %v3718
        %v3759 = vpack.c.b16 %v3744, %v3743
        %v3760 = vpack.c.b16 %v3746, %v3745
        %v3761 = vpack.c.b16 %v3748, %v3747
        %v3762 = vpack.c.b16 %v3750, %v3749
        %v3763 = vpack.c.b16 %v3752, %v3751
        %v3764 = vpack.c.b16 %v3754, %v3753
        %v3765 = vpack.c.b16 %v3756, %v3755
        %v3766 = vpack.c.b16 %v3758, %v3757
        %3775 = vmatprep.subr.bf16.mxu0 0
        %3776 = vmatpush1.bf16.msra.mxu0 %v3759
        %3777 = vmatprep.subr.bf16.mxu0 0
        %3778 = vmatpush1.bf16.msra.mxu0 %v3760
        %3779 = vmatprep.subr.bf16.mxu0 0
        %3780 = vmatpush1.bf16.msra.mxu0 %v3761
        %3781 = vmatprep.subr.bf16.mxu0 0
        %3782 = vmatpush1.bf16.msra.mxu0 %v3762
        %3783 = vmatprep.subr.bf16.mxu0 0
        %3784 = vmatpush1.bf16.msra.mxu0 %v3763
        %3785 = vmatprep.subr.bf16.mxu0 0
        %3786 = vmatpush1.bf16.msra.mxu0 %v3764
        %3787 = vmatprep.subr.bf16.mxu0 0
        %3788 = vmatpush1.bf16.msra.mxu0 %v3765
        %3789 = vmatprep.subr.bf16.mxu0 0
        %3790 = vmatpush1.bf16.msra.mxu0 %v3766
        %3791 = vmatprep.subr.bf16.mxu0 0
        %3792 = vmatpush1.bf16.msra.mxu0 0
        %3793 = vmatprep.subr.bf16.mxu0 0
        %3794 = vmatpush1.bf16.msra.mxu0 0
        %3795 = vmatprep.subr.bf16.mxu0 0
        %3796 = vmatpush1.bf16.msra.mxu0 0
        %3797 = vmatprep.subr.bf16.mxu0 0
        %3798 = vmatpush1.bf16.msra.mxu0 0
        %3799 = vmatprep.subr.bf16.mxu0 0
        %3800 = vmatpush1.bf16.msra.mxu0 0
        %3801 = vmatprep.subr.bf16.mxu0 0
        %3802 = vmatpush1.bf16.msra.mxu0 0
        %3803 = vmatprep.subr.bf16.mxu0 0
        %3804 = vmatpush1.bf16.msra.mxu0 0
        %3805 = vmatprep.subr.bf16.mxu0 0
        %3806 = vmatpush1.bf16.msra.mxu0 0
        %3807 = vmatprep.mubr.bf16.mxu0 0
        %3808 = vmatmul.mubr.bf16.gmra.mrb[0].mxu0 %v3701
        %v3809 = vpop.f32.mrb[0].mxu0
        %v3810 = vadd.f32 %v3725, %v3809
        %v3811 = vpop.f32.mrb[0].mxu0
        %v3812 = vpop.f32.mrb[0].mxu0
        %v3813 = vpop.f32.mrb[0].mxu0
        %3814 = vdwg.mxu0
        %v3815 = vadd.f32 %v3585, %v3810
        %s3816 = scalar_lea.vmem [#allocation22], 1
        %v3817 = vld [vmem:[%s3816] sm:$0x1]
        %s3818 = scalar_lea.vmem [#allocation23], 1
        %v3819 = vld [vmem:[%s3818] sm:$0x1]
        %v3820 = vsel %vm2625, %v3815, 0.0
        %3821 = vadd.xlane.f32.xlu0 %v3820
        %v3822 = vpop.xlane.xlu0 %3821
        %v3823 = vmul.f32 %v3822, 0.03125
        %v3824 = vsub.f32 %v3815, %v3823
        %v3825 = vsel %vm2625, %v3824, 0.0
        %v3826 = vmul.f32 %v3825, %v3825
        %3827 = vadd.xlane.f32.xlu0 %v3826
        %v3828 = vpop.xlane.xlu0 %3827
        %v3829 = vmul.f32 %v3828, 0.03125
        %v3830 = vadd.f32 %v3829, 1e-05
        %v3831 = vrsqrt.pop %v3830
        %v3832 = vmul.f32 %v3824, %v3831
        %v3834 = vlaneseq
        %v3835 = vshrl.u32 %v3834, 7
        %v3836 = vsub.s32 0, %v3835
        %v3837 = vrot.slane %v3817, %v3836
        %v3839 = vmul.f32 %v3832, %v3837
        %v3841 = vlaneseq
        %v3842 = vshrl.u32 %v3841, 7
        %v3843 = vsub.s32 0, %v3842
        %v3844 = vrot.slane %v3819, %v3843
        %v3846 = vadd.f32 %v3839, %v3844
        %v3847 = vld [vmem:[#allocation25] sm:$0x1]
        %v3848 = vld [vmem:[#allocation26] sm:$0x1]
        %v3849 = vsel %vm2625, %v3846, 0.0
        %3850 = vadd.xlane.f32.xlu0 %v3849
        %v3851 = vpop.xlane.xlu0 %3850
        %v3852 = vmul.f32 %v3851, 0.03125
        %v3853 = vsub.f32 %v3846, %v3852
        %v3854 = vsel %vm2625, %v3853, 0.0
        %v3855 = vmul.f32 %v3854, %v3854
        %3856 = vadd.xlane.f32.xlu0 %v3855
        %v3857 = vpop.xlane.xlu0 %3856
        %v3858 = vmul.f32 %v3857, 0.03125
        %v3859 = vadd.f32 %v3858, 1e-05
        %v3860 = vrsqrt.pop %v3859
        %v3861 = vmul.f32 %v3853, %v3860
        %v3863 = vlaneseq
        %v3864 = vshrl.u32 %v3863, 7
        %v3865 = vsub.s32 0, %v3864
        %v3866 = vrot.slane %v3847, %v3865
        %v3868 = vmul.f32 %v3861, %v3866
        %v3870 = vlaneseq
        %v3871 = vshrl.u32 %v3870, 7
        %v3872 = vsub.s32 0, %v3871
        %v3873 = vrot.slane %v3848, %v3872
        %v3875 = vadd.f32 %v3868, %v3873
        %v3876 = vpack.c.bf16 %v3875, %v3875
        %v3877 = vld [vmem:[%s1868] sm:$0xff]
        %3878 = vset.pattern.permute.xlu0 0
        %3879 = vperm.xlu0 %3878, %v3877
        %v3880 = vpop.permute.xlu0 %3879
        %vm3881 = vcmp.eq.s32.totalorder %v3880, %v1873
        %v3882 = vsel %vm3881, 1, 0
        %v3883 = vcvt.s32.f32 %v3882
        %v3885 = vsel %vm1892, %v3883, 0
        %3887 = vmatprep.subr.mxu0 0.0
        %3888 = vmatpush1.msra.mxu0 %v1877
        %3889 = vmatprep.subr.mxu0 0.0
        %3890 = vmatpush1.msra.mxu0 %v1878
        %3891 = vmatprep.subr.mxu0 0.0
        %3892 = vmatpush1.msra.mxu0 %v1879
        %3893 = vmatprep.subr.mxu0 0.0
        %3894 = vmatpush1.msra.mxu0 %v1880
        %3895 = vmatprep.subr.mxu0 0.0
        %3896 = vmatpush1.msra.mxu0 %v1881
        %3897 = vmatprep.subr.mxu0 0.0
        %3898 = vmatpush1.msra.mxu0 %v1882
        %3899 = vmatprep.subr.mxu0 0.0
        %3900 = vmatpush1.msra.mxu0 %v1883
        %3901 = vmatprep.subr.mxu0 0.0
        %3902 = vmatpush1.msra.mxu0 0.0
        %3903 = vmatprep.subr.mxu0 0.0
        %3904 = vmatpush1.msra.mxu0 0.0
        %3905 = vmatprep.subr.mxu0 0.0
        %3906 = vmatpush1.msra.mxu0 0.0
        %3907 = vmatprep.subr.mxu0 0.0
        %3908 = vmatpush1.msra.mxu0 0.0
        %3909 = vmatprep.subr.mxu0 0.0
        %3910 = vmatpush1.msra.mxu0 0.0
        %3911 = vmatprep.subr.mxu0 0.0
        %3912 = vmatpush1.msra.mxu0 0.0
        %3913 = vmatprep.subr.mxu0 0.0
        %3914 = vmatpush1.msra.mxu0 0.0
        %3915 = vmatprep.subr.mxu0 0.0
        %3916 = vmatpush1.msra.mxu0 0.0
        %3917 = vmatprep.subr.mxu0 0.0
        %3918 = vmatpush1.msra.mxu0 0.0
        %3919 = vmatprep.subr.mxu0 0.0
        %3920 = vmatpush1.msra.mxu0 0.0
        %3921 = vmatprep.subr.mxu0 0.0
        %3922 = vmatpush1.msra.mxu0 0.0
        %3923 = vmatprep.subr.mxu0 0.0
        %3924 = vmatpush1.msra.mxu0 0.0
        %3925 = vmatprep.subr.mxu0 0.0
        %3926 = vmatpush1.msra.mxu0 0.0
        %3927 = vmatprep.subr.mxu0 0.0
        %3928 = vmatpush1.msra.mxu0 0.0
        %3929 = vmatprep.subr.mxu0 0.0
        %3930 = vmatpush1.msra.mxu0 0.0
        %3931 = vmatprep.subr.mxu0 0.0
        %3932 = vmatpush1.msra.mxu0 0.0
        %3933 = vmatprep.subr.mxu0 0.0
        %3934 = vmatpush1.msra.mxu0 0.0
        %3935 = vmatprep.subr.mxu0 0.0
        %3936 = vmatpush1.msra.mxu0 0.0
        %3937 = vmatprep.subr.mxu0 0.0
        %3938 = vmatpush1.msra.mxu0 0.0
        %3939 = vmatprep.subr.mxu0 0.0
        %3940 = vmatpush1.msra.mxu0 0.0
        %3941 = vmatprep.subr.mxu0 0.0
        %3942 = vmatpush1.msra.mxu0 0.0
        %3943 = vmatprep.subr.mxu0 0.0
        %3944 = vmatpush1.msra.mxu0 0.0
        %3945 = vmatprep.subr.mxu0 0.0
        %3946 = vmatpush1.msra.mxu0 0.0
        %3947 = vmatprep.subr.mxu0 0.0
        %3948 = vmatpush1.msra.mxu0 0.0
        %3949 = vmatprep.subr.mxu0 0.0
        %3950 = vmatpush1.msra.mxu0 0.0
        %3951 = vmatprep.mubr.f32.mxu0 0.0
        %3952 = vmatmul.mubr.f32.gmra.mrb[0].mxu0 %v3885
        %v3953 = vpop.f32.mrb[0].mxu0
        %v3954 = vadd.f32 0.0, %v3953
        %v3955 = vpop.f32.mrb[0].mxu0
        %3956 = vdwg.mxu0
        %v3957 = vmul.f32 %v3954, 5.656854
        %v3958 = vadd.f32 %v3957, %v1971
        %v3959 = vpack.c.bf16 %v3958, %v3958
        %v3960 = vld [vmem:[#allocation28] sm:$0xf]
        %v3961 = vld [vmem:[#allocation28 + $0x4] sm:$0xf]
        %v3962 = vld [vmem:[#allocation28 + $0x8] sm:$0xf]
        %v3963 = vld [vmem:[#allocation28 + $0xc] sm:$0xf]
        %v3964 = vld [vmem:[#allocation28 + $0x10] sm:$0xf]
        %v3965 = vld [vmem:[#allocation28 + $0x14] sm:$0xf]
        %v3966 = vld [vmem:[#allocation28 + $0x18] sm:$0xf]
        %v3967 = vld [vmem:[#allocation28 + $0x1c] sm:$0xf]
        %v3968 = vld [vmem:[#allocation28 + $0x20] sm:$0xf]
        %v3969 = vld [vmem:[#allocation28 + $0x24] sm:$0xf]
        %v3970 = vld [vmem:[#allocation28 + $0x28] sm:$0xf]
        %v3971 = vld [vmem:[#allocation28 + $0x2c] sm:$0xf]
        %v3972 = vld [vmem:[#allocation28 + $0x30] sm:$0xf]
        %v3973 = vld [vmem:[#allocation28 + $0x34] sm:$0xf]
        %v3974 = vld [vmem:[#allocation28 + $0x38] sm:$0xf]
        %v3975 = vld [vmem:[#allocation28 + $0x3c] sm:$0xf]
        %v3976 = vld [vmem:[#allocation29] sm:$0x1]
        %v3978 = vlaneseq
        %v3979 = vshrl.u32 %v3978, 7
        %v3980 = vsub.s32 0, %v3979
        %v3981 = vrot.slane %v3976, %v3980
        %v3999 = vunpack.c.l.b16 %v3960
        %v4000 = vunpack.c.l.b16 %v3961
        %v4001 = vunpack.c.l.b16 %v3962
        %v4002 = vunpack.c.l.b16 %v3963
        %v4003 = vunpack.c.l.b16 %v3964
        %v4004 = vunpack.c.l.b16 %v3965
        %v4005 = vunpack.c.l.b16 %v3966
        %v4006 = vunpack.c.l.b16 %v3967
        %v4007 = vunpack.c.l.b16 %v3968
        %v4008 = vunpack.c.l.b16 %v3969
        %v4009 = vunpack.c.l.b16 %v3970
        %v4010 = vunpack.c.l.b16 %v3971
        %v4011 = vunpack.c.l.b16 %v3972
        %v4012 = vunpack.c.l.b16 %v3973
        %v4013 = vunpack.c.l.b16 %v3974
        %v4014 = vunpack.c.l.b16 %v3975
        %v4015 = vpack.c.b16 %v4000, %v3999
        %v4016 = vpack.c.b16 %v4002, %v4001
        %v4017 = vpack.c.b16 %v4004, %v4003
        %v4018 = vpack.c.b16 %v4006, %v4005
        %v4019 = vpack.c.b16 %v4008, %v4007
        %v4020 = vpack.c.b16 %v4010, %v4009
        %v4021 = vpack.c.b16 %v4012, %v4011
        %v4022 = vpack.c.b16 %v4014, %v4013
        %4031 = vmatprep.subr.bf16.mxu0 0
        %4032 = vmatpush1.bf16.msra.mxu0 %v4015
        %4033 = vmatprep.subr.bf16.mxu0 0
        %4034 = vmatpush1.bf16.msra.mxu0 %v4016
        %4035 = vmatprep.subr.bf16.mxu0 0
        %4036 = vmatpush1.bf16.msra.mxu0 %v4017
        %4037 = vmatprep.subr.bf16.mxu0 0
        %4038 = vmatpush1.bf16.msra.mxu0 %v4018
        %4039 = vmatprep.subr.bf16.mxu0 0
        %4040 = vmatpush1.bf16.msra.mxu0 %v4019
        %4041 = vmatprep.subr.bf16.mxu0 0
        %4042 = vmatpush1.bf16.msra.mxu0 %v4020
        %4043 = vmatprep.subr.bf16.mxu0 0
        %4044 = vmatpush1.bf16.msra.mxu0 %v4021
        %4045 = vmatprep.subr.bf16.mxu0 0
        %4046 = vmatpush1.bf16.msra.mxu0 %v4022
        %4047 = vmatprep.subr.bf16.mxu0 0
        %4048 = vmatpush1.bf16.msra.mxu0 0
        %4049 = vmatprep.subr.bf16.mxu0 0
        %4050 = vmatpush1.bf16.msra.mxu0 0
        %4051 = vmatprep.subr.bf16.mxu0 0
        %4052 = vmatpush1.bf16.msra.mxu0 0
        %4053 = vmatprep.subr.bf16.mxu0 0
        %4054 = vmatpush1.bf16.msra.mxu0 0
        %4055 = vmatprep.subr.bf16.mxu0 0
        %4056 = vmatpush1.bf16.msra.mxu0 0
        %4057 = vmatprep.subr.bf16.mxu0 0
        %4058 = vmatpush1.bf16.msra.mxu0 0
        %4059 = vmatprep.subr.bf16.mxu0 0
        %4060 = vmatpush1.bf16.msra.mxu0 0
        %4061 = vmatprep.subr.bf16.mxu0 0
        %4062 = vmatpush1.bf16.msra.mxu0 0
        %4063 = vmatprep.mubr.bf16.mxu0 0
        %4064 = vmatmul.mubr.bf16.gmra.mrb[0].mxu0 %v3959
        %v4065 = vpop.f32.mrb[0].mxu0
        %v4066 = vadd.f32 %v3981, %v4065
        %v4067 = vpop.f32.mrb[0].mxu0
        %v4068 = vpop.f32.mrb[0].mxu0
        %v4069 = vpop.f32.mrb[0].mxu0
        %4070 = vdwg.mxu0
        %v4071 = vpack.c.bf16 %v4066, %v4066
        %4073 = vrot.lane.b32.xlu0 %v4071, 96
        %v4074 = vpop.permute.xlu0 %4073
        %v4076 = vsel %vm2090, %v4071, 0
        %v4079 = vsel %vm2090, %v4074, 0
        %4081 = vmatprep.subr.bf16.mxu0 0
        %4082 = vmatpush1.bf16.xpose.msra.mxu0 %v4079
        %4083 = vmatprep.subr.bf16.mxu0 0
        %4084 = vmatpush1.bf16.xpose.msra.mxu0 0
        %4085 = vmatprep.subr.bf16.mxu0 0
        %4086 = vmatpush1.bf16.xpose.msra.mxu0 0
        %4087 = vmatprep.subr.bf16.mxu0 0
        %4088 = vmatpush1.bf16.xpose.msra.mxu0 0
        %4089 = vmatprep.subr.bf16.mxu0 0
        %4090 = vmatpush1.bf16.xpose.msra.mxu0 0
        %4091 = vmatprep.subr.bf16.mxu0 0
        %4092 = vmatpush1.bf16.xpose.msra.mxu0 0
        %4093 = vmatprep.subr.bf16.mxu0 0
        %4094 = vmatpush1.bf16.xpose.msra.mxu0 0
        %4095 = vmatprep.subr.bf16.mxu0 0
        %4096 = vmatpush1.bf16.xpose.msra.mxu0 0
        %4097 = vmatprep.subr.bf16.mxu0 0
        %4098 = vmatpush1.bf16.xpose.msra.mxu0 0
        %4099 = vmatprep.subr.bf16.mxu0 0
        %4100 = vmatpush1.bf16.xpose.msra.mxu0 0
        %4101 = vmatprep.subr.bf16.mxu0 0
        %4102 = vmatpush1.bf16.xpose.msra.mxu0 0
        %4103 = vmatprep.subr.bf16.mxu0 0
        %4104 = vmatpush1.bf16.xpose.msra.mxu0 0
        %4105 = vmatprep.subr.bf16.mxu0 0
        %4106 = vmatpush1.bf16.xpose.msra.mxu0 0
        %4107 = vmatprep.subr.bf16.mxu0 0
        %4108 = vmatpush1.bf16.xpose.msra.mxu0 0
        %4109 = vmatprep.subr.bf16.mxu0 0
        %4110 = vmatpush1.bf16.xpose.msra.mxu0 0
        %4111 = vmatprep.subr.bf16.mxu0 0
        %4112 = vmatpush1.bf16.xpose.msra.mxu0 0
        %4113 = vmatprep.mubr.bf16.mxu0 0
        %4114 = vmatmul.mubr.bf16.gmra.mrb[0].mxu0 %v4076
        %v4115 = vpop.f32.mrb[0].mxu0
        %v4116 = vadd.f32 0.0, %v4115
        %v4117 = vpop.f32.mrb[0].mxu0
        %v4118 = vpop.f32.mrb[0].mxu0
        %v4119 = vpop.f32.mrb[0].mxu0
        %4120 = vdwg.mxu0
        %v4121 = vmul.f32 %v4116, 0.35355338
        %v4122 = vadd.f32 %v4121, %v1875
        %v4123 = vsel %vm2090, %v4122, -inf
        %4124 = vmax.xlane.f32.xlu0 %v4123
        %v4125 = vpop.xlane.xlu0 %4124
        %v4126 = vsub.f32 %v4122, %v4125
        %v4127 = vmul.f32 %v4126, 1.442695
        %v4128 = vpow.pop %v4127
        %v4129 = vsel %vm2090, %v4128, 0.0
        %4130 = vadd.xlane.f32.xlu0 %v4129
        %v4131 = vpop.xlane.xlu0 %4130
        %v4132 = vpack.c.bf16 %v4128, %v4128
        %4133 = vrot.lane.b32.xlu0 %v4071, 64
        %v4134 = vpop.permute.xlu0 %4133
        %v4136 = vsel %vm2090, %v4132, 0
        %v4139 = vsel %vm2154, %v4134, 0
        %4141 = vmatprep.subr.bf16.mxu0 0
        %4142 = vmatpush1.bf16.msra.mxu0 %v4139
        %4143 = vmatprep.subr.bf16.mxu0 0
        %4144 = vmatpush1.bf16.msra.mxu0 0
        %4145 = vmatprep.subr.bf16.mxu0 0
        %4146 = vmatpush1.bf16.msra.mxu0 0
        %4147 = vmatprep.subr.bf16.mxu0 0
        %4148 = vmatpush1.bf16.msra.mxu0 0
        %4149 = vmatprep.subr.bf16.mxu0 0
        %4150 = vmatpush1.bf16.msra.mxu0 0
        %4151 = vmatprep.subr.bf16.mxu0 0
        %4152 = vmatpush1.bf16.msra.mxu0 0
        %4153 = vmatprep.subr.bf16.mxu0 0
        %4154 = vmatpush1.bf16.msra.mxu0 0
        %4155 = vmatprep.subr.bf16.mxu0 0
        %4156 = vmatpush1.bf16.msra.mxu0 0
        %4157 = vmatprep.subr.bf16.mxu0 0
        %4158 = vmatpush1.bf16.msra.mxu0 0
        %4159 = vmatprep.subr.bf16.mxu0 0
        %4160 = vmatpush1.bf16.msra.mxu0 0
        %4161 = vmatprep.subr.bf16.mxu0 0
        %4162 = vmatpush1.bf16.msra.mxu0 0
        %4163 = vmatprep.subr.bf16.mxu0 0
        %4164 = vmatpush1.bf16.msra.mxu0 0
        %4165 = vmatprep.subr.bf16.mxu0 0
        %4166 = vmatpush1.bf16.msra.mxu0 0
        %4167 = vmatprep.subr.bf16.mxu0 0
        %4168 = vmatpush1.bf16.msra.mxu0 0
        %4169 = vmatprep.subr.bf16.mxu0 0
        %4170 = vmatpush1.bf16.msra.mxu0 0
        %4171 = vmatprep.subr.bf16.mxu0 0
        %4172 = vmatpush1.bf16.msra.mxu0 0
        %4173 = vmatprep.mubr.bf16.mxu0 0
        %4174 = vmatmul.mubr.bf16.gmra.mrb[0].mxu0 %v4136
        %v4175 = vpop.f32.mrb[0].mxu0
        %v4176 = vadd.f32 0.0, %v4175
        %v4177 = vpop.f32.mrb[0].mxu0
        %v4178 = vpop.f32.mrb[0].mxu0
        %v4179 = vpop.f32.mrb[0].mxu0
        %4180 = vdwg.mxu0
        %v4181 = vrcp.pop %v4131
        %v4182 = vmul.f32 %v4176, %v4181
        %4183 = vrot.lane.b32.xlu0 %v4071, 120
        %v4184 = vpop.permute.xlu0 %4183
        %4185 = vrot.lane.b32.xlu0 %v4071, 88
        %v4186 = vpop.permute.xlu0 %4185
        %v4188 = vsel %vm2090, %v4184, 0
        %v4191 = vsel %vm2090, %v4186, 0
        %4193 = vmatprep.subr.bf16.mxu0 0
        %4194 = vmatpush1.bf16.xpose.msra.mxu0 %v4191
        %4195 = vmatprep.subr.bf16.mxu0 0
        %4196 = vmatpush1.bf16.xpose.msra.mxu0 0
        %4197 = vmatprep.subr.bf16.mxu0 0
        %4198 = vmatpush1.bf16.xpose.msra.mxu0 0
        %4199 = vmatprep.subr.bf16.mxu0 0
        %4200 = vmatpush1.bf16.xpose.msra.mxu0 0
        %4201 = vmatprep.subr.bf16.mxu0 0
        %4202 = vmatpush1.bf16.xpose.msra.mxu0 0
        %4203 = vmatprep.subr.bf16.mxu0 0
        %4204 = vmatpush1.bf16.xpose.msra.mxu0 0
        %4205 = vmatprep.subr.bf16.mxu0 0
        %4206 = vmatpush1.bf16.xpose.msra.mxu0 0
        %4207 = vmatprep.subr.bf16.mxu0 0
        %4208 = vmatpush1.bf16.xpose.msra.mxu0 0
        %4209 = vmatprep.subr.bf16.mxu0 0
        %4210 = vmatpush1.bf16.xpose.msra.mxu0 0
        %4211 = vmatprep.subr.bf16.mxu0 0
        %4212 = vmatpush1.bf16.xpose.msra.mxu0 0
        %4213 = vmatprep.subr.bf16.mxu0 0
        %4214 = vmatpush1.bf16.xpose.msra.mxu0 0
        %4215 = vmatprep.subr.bf16.mxu0 0
        %4216 = vmatpush1.bf16.xpose.msra.mxu0 0
        %4217 = vmatprep.subr.bf16.mxu0 0
        %4218 = vmatpush1.bf16.xpose.msra.mxu0 0
        %4219 = vmatprep.subr.bf16.mxu0 0
        %4220 = vmatpush1.bf16.xpose.msra.mxu0 0
        %4221 = vmatprep.subr.bf16.mxu0 0
        %4222 = vmatpush1.bf16.xpose.msra.mxu0 0
        %4223 = vmatprep.subr.bf16.mxu0 0
        %4224 = vmatpush1.bf16.xpose.msra.mxu0 0
        %4225 = vmatprep.mubr.bf16.mxu0 0
        %4226 = vmatmul.mubr.bf16.gmra.mrb[0].mxu0 %v4188
        %v4227 = vpop.f32.mrb[0].mxu0
        %v4228 = vadd.f32 0.0, %v4227
        %v4229 = vpop.f32.mrb[0].mxu0
        %v4230 = vpop.f32.mrb[0].mxu0
        %v4231 = vpop.f32.mrb[0].mxu0
        %4232 = vdwg.mxu0
        %v4233 = vmul.f32 %v4228, 0.35355338
        %v4234 = vadd.f32 %v4233, %v1875
        %v4235 = vsel %vm2090, %v4234, -inf
        %4236 = vmax.xlane.f32.xlu0 %v4235
        %v4237 = vpop.xlane.xlu0 %4236
        %v4238 = vsub.f32 %v4234, %v4237
        %v4239 = vmul.f32 %v4238, 1.442695
        %v4240 = vpow.pop %v4239
        %v4241 = vsel %vm2090, %v4240, 0.0
        %4242 = vadd.xlane.f32.xlu0 %v4241
        %v4243 = vpop.xlane.xlu0 %4242
        %v4244 = vpack.c.bf16 %v4240, %v4240
        %4245 = vrot.lane.b32.xlu0 %v4071, 56
        %v4246 = vpop.permute.xlu0 %4245
        %v4248 = vsel %vm2090, %v4244, 0
        %v4251 = vsel %vm2154, %v4246, 0
        %4253 = vmatprep.subr.bf16.mxu0 0
        %4254 = vmatpush1.bf16.msra.mxu0 %v4251
        %4255 = vmatprep.subr.bf16.mxu0 0
        %4256 = vmatpush1.bf16.msra.mxu0 0
        %4257 = vmatprep.subr.bf16.mxu0 0
        %4258 = vmatpush1.bf16.msra.mxu0 0
        %4259 = vmatprep.subr.bf16.mxu0 0
        %4260 = vmatpush1.bf16.msra.mxu0 0
        %4261 = vmatprep.subr.bf16.mxu0 0
        %4262 = vmatpush1.bf16.msra.mxu0 0
        %4263 = vmatprep.subr.bf16.mxu0 0
        %4264 = vmatpush1.bf16.msra.mxu0 0
        %4265 = vmatprep.subr.bf16.mxu0 0
        %4266 = vmatpush1.bf16.msra.mxu0 0
        %4267 = vmatprep.subr.bf16.mxu0 0
        %4268 = vmatpush1.bf16.msra.mxu0 0
        %4269 = vmatprep.subr.bf16.mxu0 0
        %4270 = vmatpush1.bf16.msra.mxu0 0
        %4271 = vmatprep.subr.bf16.mxu0 0
        %4272 = vmatpush1.bf16.msra.mxu0 0
        %4273 = vmatprep.subr.bf16.mxu0 0
        %4274 = vmatpush1.bf16.msra.mxu0 0
        %4275 = vmatprep.subr.bf16.mxu0 0
        %4276 = vmatpush1.bf16.msra.mxu0 0
        %4277 = vmatprep.subr.bf16.mxu0 0
        %4278 = vmatpush1.bf16.msra.mxu0 0
        %4279 = vmatprep.subr.bf16.mxu0 0
        %4280 = vmatpush1.bf16.msra.mxu0 0
        %4281 = vmatprep.subr.bf16.mxu0 0
        %4282 = vmatpush1.bf16.msra.mxu0 0
        %4283 = vmatprep.subr.bf16.mxu0 0
        %4284 = vmatpush1.bf16.msra.mxu0 0
        %4285 = vmatprep.mubr.bf16.mxu0 0
        %4286 = vmatmul.mubr.bf16.gmra.mrb[0].mxu0 %v4248
        %v4287 = vpop.f32.mrb[0].mxu0
        %v4288 = vadd.f32 0.0, %v4287
        %v4289 = vpop.f32.mrb[0].mxu0
        %v4290 = vpop.f32.mrb[0].mxu0
        %v4291 = vpop.f32.mrb[0].mxu0
        %4292 = vdwg.mxu0
        %v4293 = vrcp.pop %v4243
        %v4294 = vmul.f32 %v4288, %v4293
        %4295 = vrot.lane.b32.xlu0 %v4071, 112
        %v4296 = vpop.permute.xlu0 %4295
        %4297 = vrot.lane.b32.xlu0 %v4071, 80
        %v4298 = vpop.permute.xlu0 %4297
        %v4300 = vsel %vm2090, %v4296, 0
        %v4303 = vsel %vm2090, %v4298, 0
        %4305 = vmatprep.subr.bf16.mxu0 0
        %4306 = vmatpush1.bf16.xpose.msra.mxu0 %v4303
        %4307 = vmatprep.subr.bf16.mxu0 0
        %4308 = vmatpush1.bf16.xpose.msra.mxu0 0
        %4309 = vmatprep.subr.bf16.mxu0 0
        %4310 = vmatpush1.bf16.xpose.msra.mxu0 0
        %4311 = vmatprep.subr.bf16.mxu0 0
        %4312 = vmatpush1.bf16.xpose.msra.mxu0 0
        %4313 = vmatprep.subr.bf16.mxu0 0
        %4314 = vmatpush1.bf16.xpose.msra.mxu0 0
        %4315 = vmatprep.subr.bf16.mxu0 0
        %4316 = vmatpush1.bf16.xpose.msra.mxu0 0
        %4317 = vmatprep.subr.bf16.mxu0 0
        %4318 = vmatpush1.bf16.xpose.msra.mxu0 0
        %4319 = vmatprep.subr.bf16.mxu0 0
        %4320 = vmatpush1.bf16.xpose.msra.mxu0 0
        %4321 = vmatprep.subr.bf16.mxu0 0
        %4322 = vmatpush1.bf16.xpose.msra.mxu0 0
        %4323 = vmatprep.subr.bf16.mxu0 0
        %4324 = vmatpush1.bf16.xpose.msra.mxu0 0
        %4325 = vmatprep.subr.bf16.mxu0 0
        %4326 = vmatpush1.bf16.xpose.msra.mxu0 0
        %4327 = vmatprep.subr.bf16.mxu0 0
        %4328 = vmatpush1.bf16.xpose.msra.mxu0 0
        %4329 = vmatprep.subr.bf16.mxu0 0
        %4330 = vmatpush1.bf16.xpose.msra.mxu0 0
        %4331 = vmatprep.subr.bf16.mxu0 0
        %4332 = vmatpush1.bf16.xpose.msra.mxu0 0
        %4333 = vmatprep.subr.bf16.mxu0 0
        %4334 = vmatpush1.bf16.xpose.msra.mxu0 0
        %4335 = vmatprep.subr.bf16.mxu0 0
        %4336 = vmatpush1.bf16.xpose.msra.mxu0 0
        %4337 = vmatprep.mubr.bf16.mxu0 0
        %4338 = vmatmul.mubr.bf16.gmra.mrb[0].mxu0 %v4300
        %v4339 = vpop.f32.mrb[0].mxu0
        %v4340 = vadd.f32 0.0, %v4339
        %v4341 = vpop.f32.mrb[0].mxu0
        %v4342 = vpop.f32.mrb[0].mxu0
        %v4343 = vpop.f32.mrb[0].mxu0
        %4344 = vdwg.mxu0
        %v4345 = vmul.f32 %v4340, 0.35355338
        %v4346 = vadd.f32 %v4345, %v1875
        %v4347 = vsel %vm2090, %v4346, -inf
        %4348 = vmax.xlane.f32.xlu0 %v4347
        %v4349 = vpop.xlane.xlu0 %4348
        %v4350 = vsub.f32 %v4346, %v4349
        %v4351 = vmul.f32 %v4350, 1.442695
        %v4352 = vpow.pop %v4351
        %v4353 = vsel %vm2090, %v4352, 0.0
        %4354 = vadd.xlane.f32.xlu0 %v4353
        %v4355 = vpop.xlane.xlu0 %4354
        %v4356 = vpack.c.bf16 %v4352, %v4352
        %4357 = vrot.lane.b32.xlu0 %v4071, 48
        %v4358 = vpop.permute.xlu0 %4357
        %v4360 = vsel %vm2090, %v4356, 0
        %v4363 = vsel %vm2154, %v4358, 0
        %4365 = vmatprep.subr.bf16.mxu0 0
        %4366 = vmatpush1.bf16.msra.mxu0 %v4363
        %4367 = vmatprep.subr.bf16.mxu0 0
        %4368 = vmatpush1.bf16.msra.mxu0 0
        %4369 = vmatprep.subr.bf16.mxu0 0
        %4370 = vmatpush1.bf16.msra.mxu0 0
        %4371 = vmatprep.subr.bf16.mxu0 0
        %4372 = vmatpush1.bf16.msra.mxu0 0
        %4373 = vmatprep.subr.bf16.mxu0 0
        %4374 = vmatpush1.bf16.msra.mxu0 0
        %4375 = vmatprep.subr.bf16.mxu0 0
        %4376 = vmatpush1.bf16.msra.mxu0 0
        %4377 = vmatprep.subr.bf16.mxu0 0
        %4378 = vmatpush1.bf16.msra.mxu0 0
        %4379 = vmatprep.subr.bf16.mxu0 0
        %4380 = vmatpush1.bf16.msra.mxu0 0
        %4381 = vmatprep.subr.bf16.mxu0 0
        %4382 = vmatpush1.bf16.msra.mxu0 0
        %4383 = vmatprep.subr.bf16.mxu0 0
        %4384 = vmatpush1.bf16.msra.mxu0 0
        %4385 = vmatprep.subr.bf16.mxu0 0
        %4386 = vmatpush1.bf16.msra.mxu0 0
        %4387 = vmatprep.subr.bf16.mxu0 0
        %4388 = vmatpush1.bf16.msra.mxu0 0
        %4389 = vmatprep.subr.bf16.mxu0 0
        %4390 = vmatpush1.bf16.msra.mxu0 0
        %4391 = vmatprep.subr.bf16.mxu0 0
        %4392 = vmatpush1.bf16.msra.mxu0 0
        %4393 = vmatprep.subr.bf16.mxu0 0
        %4394 = vmatpush1.bf16.msra.mxu0 0
        %4395 = vmatprep.subr.bf16.mxu0 0
        %4396 = vmatpush1.bf16.msra.mxu0 0
        %4397 = vmatprep.mubr.bf16.mxu0 0
        %4398 = vmatmul.mubr.bf16.gmra.mrb[0].mxu0 %v4360
        %v4399 = vpop.f32.mrb[0].mxu0
        %v4400 = vadd.f32 0.0, %v4399
        %v4401 = vpop.f32.mrb[0].mxu0
        %v4402 = vpop.f32.mrb[0].mxu0
        %v4403 = vpop.f32.mrb[0].mxu0
        %4404 = vdwg.mxu0
        %v4405 = vrcp.pop %v4355
        %v4406 = vmul.f32 %v4400, %v4405
        %4407 = vrot.lane.b32.xlu0 %v4071, 104
        %v4408 = vpop.permute.xlu0 %4407
        %4409 = vrot.lane.b32.xlu0 %v4071, 72
        %v4410 = vpop.permute.xlu0 %4409
        %v4412 = vsel %vm2090, %v4408, 0
        %v4415 = vsel %vm2090, %v4410, 0
        %4417 = vmatprep.subr.bf16.mxu0 0
        %4418 = vmatpush1.bf16.xpose.msra.mxu0 %v4415
        %4419 = vmatprep.subr.bf16.mxu0 0
        %4420 = vmatpush1.bf16.xpose.msra.mxu0 0
        %4421 = vmatprep.subr.bf16.mxu0 0
        %4422 = vmatpush1.bf16.xpose.msra.mxu0 0
        %4423 = vmatprep.subr.bf16.mxu0 0
        %4424 = vmatpush1.bf16.xpose.msra.mxu0 0
        %4425 = vmatprep.subr.bf16.mxu0 0
        %4426 = vmatpush1.bf16.xpose.msra.mxu0 0
        %4427 = vmatprep.subr.bf16.mxu0 0
        %4428 = vmatpush1.bf16.xpose.msra.mxu0 0
        %4429 = vmatprep.subr.bf16.mxu0 0
        %4430 = vmatpush1.bf16.xpose.msra.mxu0 0
        %4431 = vmatprep.subr.bf16.mxu0 0
        %4432 = vmatpush1.bf16.xpose.msra.mxu0 0
        %4433 = vmatprep.subr.bf16.mxu0 0
        %4434 = vmatpush1.bf16.xpose.msra.mxu0 0
        %4435 = vmatprep.subr.bf16.mxu0 0
        %4436 = vmatpush1.bf16.xpose.msra.mxu0 0
        %4437 = vmatprep.subr.bf16.mxu0 0
        %4438 = vmatpush1.bf16.xpose.msra.mxu0 0
        %4439 = vmatprep.subr.bf16.mxu0 0
        %4440 = vmatpush1.bf16.xpose.msra.mxu0 0
        %4441 = vmatprep.subr.bf16.mxu0 0
        %4442 = vmatpush1.bf16.xpose.msra.mxu0 0
        %4443 = vmatprep.subr.bf16.mxu0 0
        %4444 = vmatpush1.bf16.xpose.msra.mxu0 0
        %4445 = vmatprep.subr.bf16.mxu0 0
        %4446 = vmatpush1.bf16.xpose.msra.mxu0 0
        %4447 = vmatprep.subr.bf16.mxu0 0
        %4448 = vmatpush1.bf16.xpose.msra.mxu0 0
        %4449 = vmatprep.mubr.bf16.mxu0 0
        %4450 = vmatmul.mubr.bf16.gmra.mrb[0].mxu0 %v4412
        %v4451 = vpop.f32.mrb[0].mxu0
        %v4452 = vadd.f32 0.0, %v4451
        %v4453 = vpop.f32.mrb[0].mxu0
        %v4454 = vpop.f32.mrb[0].mxu0
        %v4455 = vpop.f32.mrb[0].mxu0
        %4456 = vdwg.mxu0
        %v4457 = vmul.f32 %v4452, 0.35355338
        %v4458 = vadd.f32 %v4457, %v1875
        %v4459 = vsel %vm2090, %v4458, -inf
        %4460 = vmax.xlane.f32.xlu0 %v4459
        %v4461 = vpop.xlane.xlu0 %4460
        %v4462 = vsub.f32 %v4458, %v4461
        %v4463 = vmul.f32 %v4462, 1.442695
        %v4464 = vpow.pop %v4463
        %v4465 = vsel %vm2090, %v4464, 0.0
        %4466 = vadd.xlane.f32.xlu0 %v4465
        %v4467 = vpop.xlane.xlu0 %4466
        %v4468 = vpack.c.bf16 %v4464, %v4464
        %4469 = vrot.lane.b32.xlu0 %v4071, 40
        %v4470 = vpop.permute.xlu0 %4469
        %v4472 = vsel %vm2090, %v4468, 0
        %v4475 = vsel %vm2154, %v4470, 0
        %4477 = vmatprep.subr.bf16.mxu0 0
        %4478 = vmatpush1.bf16.msra.mxu0 %v4475
        %4479 = vmatprep.subr.bf16.mxu0 0
        %4480 = vmatpush1.bf16.msra.mxu0 0
        %4481 = vmatprep.subr.bf16.mxu0 0
        %4482 = vmatpush1.bf16.msra.mxu0 0
        %4483 = vmatprep.subr.bf16.mxu0 0
        %4484 = vmatpush1.bf16.msra.mxu0 0
        %4485 = vmatprep.subr.bf16.mxu0 0
        %4486 = vmatpush1.bf16.msra.mxu0 0
        %4487 = vmatprep.subr.bf16.mxu0 0
        %4488 = vmatpush1.bf16.msra.mxu0 0
        %4489 = vmatprep.subr.bf16.mxu0 0
        %4490 = vmatpush1.bf16.msra.mxu0 0
        %4491 = vmatprep.subr.bf16.mxu0 0
        %4492 = vmatpush1.bf16.msra.mxu0 0
        %4493 = vmatprep.subr.bf16.mxu0 0
        %4494 = vmatpush1.bf16.msra.mxu0 0
        %4495 = vmatprep.subr.bf16.mxu0 0
        %4496 = vmatpush1.bf16.msra.mxu0 0
        %4497 = vmatprep.subr.bf16.mxu0 0
        %4498 = vmatpush1.bf16.msra.mxu0 0
        %4499 = vmatprep.subr.bf16.mxu0 0
        %4500 = vmatpush1.bf16.msra.mxu0 0
        %4501 = vmatprep.subr.bf16.mxu0 0
        %4502 = vmatpush1.bf16.msra.mxu0 0
        %4503 = vmatprep.subr.bf16.mxu0 0
        %4504 = vmatpush1.bf16.msra.mxu0 0
        %4505 = vmatprep.subr.bf16.mxu0 0
        %4506 = vmatpush1.bf16.msra.mxu0 0
        %4507 = vmatprep.subr.bf16.mxu0 0
        %4508 = vmatpush1.bf16.msra.mxu0 0
        %4509 = vmatprep.mubr.bf16.mxu0 0
        %4510 = vmatmul.mubr.bf16.gmra.mrb[0].mxu0 %v4472
        %v4511 = vpop.f32.mrb[0].mxu0
        %v4512 = vadd.f32 0.0, %v4511
        %v4513 = vpop.f32.mrb[0].mxu0
        %v4514 = vpop.f32.mrb[0].mxu0
        %v4515 = vpop.f32.mrb[0].mxu0
        %4516 = vdwg.mxu0
        %v4517 = vrcp.pop %v4467
        %v4518 = vmul.f32 %v4512, %v4517
        %4520 = vrot.lane.b32.xlu0 %v4294, 8
        %v4521 = vpop.permute.xlu0 %4520
        %4524 = vrot.lane.b32.xlu0 %v4406, 16
        %v4525 = vpop.permute.xlu0 %4524
        %4528 = vrot.lane.b32.xlu0 %v4518, 24
        %v4529 = vpop.permute.xlu0 %4528
        %v4531 = vsel %vm2090, %v4182, %v4521
        %v4532 = vsel %vm2549, %v4531, %v4525
        %v4533 = vsel %vm2551, %v4532, %v4529
        %v4534 = vpack.c.bf16 %v4533, %v4533
        %v4535 = vld [vmem:[#allocation31] sm:$0xf]
        %v4536 = vld [vmem:[#allocation31 + $0x4] sm:$0xf]
        %v4537 = vld [vmem:[#allocation31 + $0x8] sm:$0xf]
        %v4538 = vld [vmem:[#allocation31 + $0xc] sm:$0xf]
        %v4539 = vld [vmem:[#allocation32] sm:$0x1]
        %v4541 = vlaneseq
        %v4542 = vshrl.u32 %v4541, 7
        %v4543 = vsub.s32 0, %v4542
        %v4544 = vrot.slane %v4539, %v4543
        %v4550 = vunpack.c.l.b16 %v4535
        %v4551 = vunpack.c.l.b16 %v4536
        %v4552 = vunpack.c.l.b16 %v4537
        %v4553 = vunpack.c.l.b16 %v4538
        %v4554 = vpack.c.b16 %v4551, %v4550
        %v4555 = vpack.c.b16 %v4553, %v4552
        %v4559 = vsel %vm2577, %v4534, 0
        %4561 = vmatprep.subr.bf16.mxu0 0
        %4562 = vmatpush1.bf16.msra.mxu0 %v4554
        %4563 = vmatprep.subr.bf16.mxu0 0
        %4564 = vmatpush1.bf16.msra.mxu0 %v4555
        %4565 = vmatprep.subr.bf16.mxu0 0
        %4566 = vmatpush1.bf16.msra.mxu0 0
        %4567 = vmatprep.subr.bf16.mxu0 0
        %4568 = vmatpush1.bf16.msra.mxu0 0
        %4569 = vmatprep.subr.bf16.mxu0 0
        %4570 = vmatpush1.bf16.msra.mxu0 0
        %4571 = vmatprep.subr.bf16.mxu0 0
        %4572 = vmatpush1.bf16.msra.mxu0 0
        %4573 = vmatprep.subr.bf16.mxu0 0
        %4574 = vmatpush1.bf16.msra.mxu0 0
        %4575 = vmatprep.subr.bf16.mxu0 0
        %4576 = vmatpush1.bf16.msra.mxu0 0
        %4577 = vmatprep.subr.bf16.mxu0 0
        %4578 = vmatpush1.bf16.msra.mxu0 0
        %4579 = vmatprep.subr.bf16.mxu0 0
        %4580 = vmatpush1.bf16.msra.mxu0 0
        %4581 = vmatprep.subr.bf16.mxu0 0
        %4582 = vmatpush1.bf16.msra.mxu0 0
        %4583 = vmatprep.subr.bf16.mxu0 0
        %4584 = vmatpush1.bf16.msra.mxu0 0
        %4585 = vmatprep.subr.bf16.mxu0 0
        %4586 = vmatpush1.bf16.msra.mxu0 0
        %4587 = vmatprep.subr.bf16.mxu0 0
        %4588 = vmatpush1.bf16.msra.mxu0 0
        %4589 = vmatprep.subr.bf16.mxu0 0
        %4590 = vmatpush1.bf16.msra.mxu0 0
        %4591 = vmatprep.subr.bf16.mxu0 0
        %4592 = vmatpush1.bf16.msra.mxu0 0
        %4593 = vmatprep.mubr.bf16.mxu0 0
        %4594 = vmatmul.mubr.bf16.gmra.mrb[0].mxu0 %v4559
        %v4595 = vpop.f32.mrb[0].mxu0
        %v4596 = vadd.f32 %v4544, %v4595
        %v4597 = vpop.f32.mrb[0].mxu0
        %v4598 = vpop.f32.mrb[0].mxu0
        %v4599 = vpop.f32.mrb[0].mxu0
        %4600 = vdwg.mxu0
        %v4601 = vadd.f32 %v3958, %v4596
        %v4602 = vld [vmem:[#allocation43] sm:$0x1]
        %v4603 = vld [vmem:[#allocation44] sm:$0x1]
        %v4604 = vsel %vm2625, %v4601, 0.0
        %4605 = vadd.xlane.f32.xlu0 %v4604
        %v4606 = vpop.xlane.xlu0 %4605
        %v4607 = vmul.f32 %v4606, 0.03125
        %v4608 = vsub.f32 %v4601, %v4607
        %v4609 = vsel %vm2625, %v4608, 0.0
        %v4610 = vmul.f32 %v4609, %v4609
        %4611 = vadd.xlane.f32.xlu0 %v4610
        %v4612 = vpop.xlane.xlu0 %4611
        %v4613 = vmul.f32 %v4612, 0.03125
        %v4614 = vadd.f32 %v4613, 1e-05
        %v4615 = vrsqrt.pop %v4614
        %v4616 = vmul.f32 %v4608, %v4615
        %v4618 = vlaneseq
        %v4619 = vshrl.u32 %v4618, 7
        %v4620 = vsub.s32 0, %v4619
        %v4621 = vrot.slane %v4602, %v4620
        %v4623 = vmul.f32 %v4616, %v4621
        %v4625 = vlaneseq
        %v4626 = vshrl.u32 %v4625, 7
        %v4627 = vsub.s32 0, %v4626
        %v4628 = vrot.slane %v4603, %v4627
        %v4630 = vadd.f32 %v4623, %v4628
        %v4631 = vpack.c.bf16 %v4630, %v4630
        %v4632 = vld [vmem:[#allocation34] sm:$0xf]
        %v4633 = vld [vmem:[#allocation34 + $0x4] sm:$0xf]
        %v4634 = vld [vmem:[#allocation34 + $0x8] sm:$0xf]
        %v4635 = vld [vmem:[#allocation34 + $0xc] sm:$0xf]
        %v4636 = vld [vmem:[#allocation34 + $0x10] sm:$0xf]
        %v4637 = vld [vmem:[#allocation34 + $0x14] sm:$0xf]
        %v4638 = vld [vmem:[#allocation34 + $0x18] sm:$0xf]
        %v4639 = vld [vmem:[#allocation34 + $0x1c] sm:$0xf]
        %v4640 = vld [vmem:[#allocation34 + $0x20] sm:$0xf]
        %v4641 = vld [vmem:[#allocation34 + $0x24] sm:$0xf]
        %v4642 = vld [vmem:[#allocation34 + $0x28] sm:$0xf]
        %v4643 = vld [vmem:[#allocation34 + $0x2c] sm:$0xf]
        %v4644 = vld [vmem:[#allocation34 + $0x30] sm:$0xf]
        %v4645 = vld [vmem:[#allocation34 + $0x34] sm:$0xf]
        %v4646 = vld [vmem:[#allocation34 + $0x38] sm:$0xf]
        %v4647 = vld [vmem:[#allocation34 + $0x3c] sm:$0xf]
        %v4648 = vld [vmem:[#allocation35] sm:$0x1]
        %v4650 = vlaneseq
        %v4651 = vshrl.u32 %v4650, 7
        %v4652 = vsub.s32 0, %v4651
        %v4653 = vrot.slane %v4648, %v4652
        %v4671 = vunpack.c.l.b16 %v4632
        %v4672 = vunpack.c.l.b16 %v4633
        %v4673 = vunpack.c.l.b16 %v4634
        %v4674 = vunpack.c.l.b16 %v4635
        %v4675 = vunpack.c.l.b16 %v4636
        %v4676 = vunpack.c.l.b16 %v4637
        %v4677 = vunpack.c.l.b16 %v4638
        %v4678 = vunpack.c.l.b16 %v4639
        %v4679 = vunpack.c.l.b16 %v4640
        %v4680 = vunpack.c.l.b16 %v4641
        %v4681 = vunpack.c.l.b16 %v4642
        %v4682 = vunpack.c.l.b16 %v4643
        %v4683 = vunpack.c.l.b16 %v4644
        %v4684 = vunpack.c.l.b16 %v4645
        %v4685 = vunpack.c.l.b16 %v4646
        %v4686 = vunpack.c.l.b16 %v4647
        %v4687 = vpack.c.b16 %v4672, %v4671
        %v4688 = vpack.c.b16 %v4674, %v4673
        %v4689 = vpack.c.b16 %v4676, %v4675
        %v4690 = vpack.c.b16 %v4678, %v4677
        %v4691 = vpack.c.b16 %v4680, %v4679
        %v4692 = vpack.c.b16 %v4682, %v4681
        %v4693 = vpack.c.b16 %v4684, %v4683
        %v4694 = vpack.c.b16 %v4686, %v4685
        %4703 = vmatprep.subr.bf16.mxu0 0
        %4704 = vmatpush1.bf16.msra.mxu0 %v4687
        %4705 = vmatprep.subr.bf16.mxu0 0
        %4706 = vmatpush1.bf16.msra.mxu0 %v4688
        %4707 = vmatprep.subr.bf16.mxu0 0
        %4708 = vmatpush1.bf16.msra.mxu0 %v4689
        %4709 = vmatprep.subr.bf16.mxu0 0
        %4710 = vmatpush1.bf16.msra.mxu0 %v4690
        %4711 = vmatprep.subr.bf16.mxu0 0
        %4712 = vmatpush1.bf16.msra.mxu0 %v4691
        %4713 = vmatprep.subr.bf16.mxu0 0
        %4714 = vmatpush1.bf16.msra.mxu0 %v4692
        %4715 = vmatprep.subr.bf16.mxu0 0
        %4716 = vmatpush1.bf16.msra.mxu0 %v4693
        %4717 = vmatprep.subr.bf16.mxu0 0
        %4718 = vmatpush1.bf16.msra.mxu0 %v4694
        %4719 = vmatprep.subr.bf16.mxu0 0
        %4720 = vmatpush1.bf16.msra.mxu0 0
        %4721 = vmatprep.subr.bf16.mxu0 0
        %4722 = vmatpush1.bf16.msra.mxu0 0
        %4723 = vmatprep.subr.bf16.mxu0 0
        %4724 = vmatpush1.bf16.msra.mxu0 0
        %4725 = vmatprep.subr.bf16.mxu0 0
        %4726 = vmatpush1.bf16.msra.mxu0 0
        %4727 = vmatprep.subr.bf16.mxu0 0
        %4728 = vmatpush1.bf16.msra.mxu0 0
        %4729 = vmatprep.subr.bf16.mxu0 0
        %4730 = vmatpush1.bf16.msra.mxu0 0
        %4731 = vmatprep.subr.bf16.mxu0 0
        %4732 = vmatpush1.bf16.msra.mxu0 0
        %4733 = vmatprep.subr.bf16.mxu0 0
        %4734 = vmatpush1.bf16.msra.mxu0 0
        %4735 = vmatprep.mubr.bf16.mxu0 0
        %4736 = vmatmul.mubr.bf16.gmra.mrb[0].mxu0 %v4631
        %v4737 = vpop.f32.mrb[0].mxu0
        %v4738 = vadd.f32 %v4653, %v4737
        %v4739 = vpop.f32.mrb[0].mxu0
        %v4740 = vpop.f32.mrb[0].mxu0
        %v4741 = vpop.f32.mrb[0].mxu0
        %4742 = vdwg.mxu0
        %v4743 = vpack.c.bf16 %v4738, %v4738
        %v4744 = vld [vmem:[#allocation37] sm:$0xf]
        %v4745 = vld [vmem:[#allocation37 + $0x4] sm:$0xf]
        %v4746 = vld [vmem:[#allocation37 + $0x8] sm:$0xf]
        %v4747 = vld [vmem:[#allocation37 + $0xc] sm:$0xf]
        %v4748 = vld [vmem:[#allocation37 + $0x10] sm:$0xf]
        %v4749 = vld [vmem:[#allocation37 + $0x14] sm:$0xf]
        %v4750 = vld [vmem:[#allocation37 + $0x18] sm:$0xf]
        %v4751 = vld [vmem:[#allocation37 + $0x1c] sm:$0xf]
        %v4752 = vld [vmem:[#allocation37 + $0x20] sm:$0xf]
        %v4753 = vld [vmem:[#allocation37 + $0x24] sm:$0xf]
        %v4754 = vld [vmem:[#allocation37 + $0x28] sm:$0xf]
        %v4755 = vld [vmem:[#allocation37 + $0x2c] sm:$0xf]
        %v4756 = vld [vmem:[#allocation37 + $0x30] sm:$0xf]
        %v4757 = vld [vmem:[#allocation37 + $0x34] sm:$0xf]
        %v4758 = vld [vmem:[#allocation37 + $0x38] sm:$0xf]
        %v4759 = vld [vmem:[#allocation37 + $0x3c] sm:$0xf]
        %v4760 = vld [vmem:[#allocation38] sm:$0x1]
        %v4762 = vlaneseq
        %v4763 = vshrl.u32 %v4762, 7
        %v4764 = vsub.s32 0, %v4763
        %v4765 = vrot.slane %v4760, %v4764
        %v4783 = vunpack.c.l.b16 %v4744
        %v4784 = vunpack.c.l.b16 %v4745
        %v4785 = vunpack.c.l.b16 %v4746
        %v4786 = vunpack.c.l.b16 %v4747
        %v4787 = vunpack.c.l.b16 %v4748
        %v4788 = vunpack.c.l.b16 %v4749
        %v4789 = vunpack.c.l.b16 %v4750
        %v4790 = vunpack.c.l.b16 %v4751
        %v4791 = vunpack.c.l.b16 %v4752
        %v4792 = vunpack.c.l.b16 %v4753
        %v4793 = vunpack.c.l.b16 %v4754
        %v4794 = vunpack.c.l.b16 %v4755
        %v4795 = vunpack.c.l.b16 %v4756
        %v4796 = vunpack.c.l.b16 %v4757
        %v4797 = vunpack.c.l.b16 %v4758
        %v4798 = vunpack.c.l.b16 %v4759
        %v4799 = vpack.c.b16 %v4784, %v4783
        %v4800 = vpack.c.b16 %v4786, %v4785
        %v4801 = vpack.c.b16 %v4788, %v4787
        %v4802 = vpack.c.b16 %v4790, %v4789
        %v4803 = vpack.c.b16 %v4792, %v4791
        %v4804 = vpack.c.b16 %v4794, %v4793
        %v4805 = vpack.c.b16 %v4796, %v4795
        %v4806 = vpack.c.b16 %v4798, %v4797
        %4815 = vmatprep.subr.bf16.mxu0 0
        %4816 = vmatpush1.bf16.msra.mxu0 %v4799
        %4817 = vmatprep.subr.bf16.mxu0 0
        %4818 = vmatpush1.bf16.msra.mxu0 %v4800
        %4819 = vmatprep.subr.bf16.mxu0 0
        %4820 = vmatpush1.bf16.msra.mxu0 %v4801
        %4821 = vmatprep.subr.bf16.mxu0 0
        %4822 = vmatpush1.bf16.msra.mxu0 %v4802
        %4823 = vmatprep.subr.bf16.mxu0 0
        %4824 = vmatpush1.bf16.msra.mxu0 %v4803
        %4825 = vmatprep.subr.bf16.mxu0 0
        %4826 = vmatpush1.bf16.msra.mxu0 %v4804
        %4827 = vmatprep.subr.bf16.mxu0 0
        %4828 = vmatpush1.bf16.msra.mxu0 %v4805
        %4829 = vmatprep.subr.bf16.mxu0 0
        %4830 = vmatpush1.bf16.msra.mxu0 %v4806
        %4831 = vmatprep.subr.bf16.mxu0 0
        %4832 = vmatpush1.bf16.msra.mxu0 0
        %4833 = vmatprep.subr.bf16.mxu0 0
        %4834 = vmatpush1.bf16.msra.mxu0 0
        %4835 = vmatprep.subr.bf16.mxu0 0
        %4836 = vmatpush1.bf16.msra.mxu0 0
        %4837 = vmatprep.subr.bf16.mxu0 0
        %4838 = vmatpush1.bf16.msra.mxu0 0
        %4839 = vmatprep.subr.bf16.mxu0 0
        %4840 = vmatpush1.bf16.msra.mxu0 0
        %4841 = vmatprep.subr.bf16.mxu0 0
        %4842 = vmatpush1.bf16.msra.mxu0 0
        %4843 = vmatprep.subr.bf16.mxu0 0
        %4844 = vmatpush1.bf16.msra.mxu0 0
        %4845 = vmatprep.subr.bf16.mxu0 0
        %4846 = vmatpush1.bf16.msra.mxu0 0
        %4847 = vmatprep.mubr.bf16.mxu0 0
        %4848 = vmatmul.mubr.bf16.gmra.mrb[0].mxu0 %v3876
        %v4849 = vpop.f32.mrb[0].mxu0
        %v4850 = vadd.f32 %v4765, %v4849
        %v4851 = vpop.f32.mrb[0].mxu0
        %v4852 = vpop.f32.mrb[0].mxu0
        %v4853 = vpop.f32.mrb[0].mxu0
        %4854 = vdwg.mxu0
        %v4855 = vpack.c.bf16 %v4850, %v4850
        %v4857 = vsel %vm2090, %v4743, 0
        %v4860 = vsel %vm2090, %v4855, 0
        %4862 = vmatprep.subr.bf16.mxu0 0
        %4863 = vmatpush1.bf16.xpose.msra.mxu0 %v4860
        %4864 = vmatprep.subr.bf16.mxu0 0
        %4865 = vmatpush1.bf16.xpose.msra.mxu0 0
        %4866 = vmatprep.subr.bf16.mxu0 0
        %4867 = vmatpush1.bf16.xpose.msra.mxu0 0
        %4868 = vmatprep.subr.bf16.mxu0 0
        %4869 = vmatpush1.bf16.xpose.msra.mxu0 0
        %4870 = vmatprep.subr.bf16.mxu0 0
        %4871 = vmatpush1.bf16.xpose.msra.mxu0 0
        %4872 = vmatprep.subr.bf16.mxu0 0
        %4873 = vmatpush1.bf16.xpose.msra.mxu0 0
        %4874 = vmatprep.subr.bf16.mxu0 0
        %4875 = vmatpush1.bf16.xpose.msra.mxu0 0
        %4876 = vmatprep.subr.bf16.mxu0 0
        %4877 = vmatpush1.bf16.xpose.msra.mxu0 0
        %4878 = vmatprep.subr.bf16.mxu0 0
        %4879 = vmatpush1.bf16.xpose.msra.mxu0 0
        %4880 = vmatprep.subr.bf16.mxu0 0
        %4881 = vmatpush1.bf16.xpose.msra.mxu0 0
        %4882 = vmatprep.subr.bf16.mxu0 0
        %4883 = vmatpush1.bf16.xpose.msra.mxu0 0
        %4884 = vmatprep.subr.bf16.mxu0 0
        %4885 = vmatpush1.bf16.xpose.msra.mxu0 0
        %4886 = vmatprep.subr.bf16.mxu0 0
        %4887 = vmatpush1.bf16.xpose.msra.mxu0 0
        %4888 = vmatprep.subr.bf16.mxu0 0
        %4889 = vmatpush1.bf16.xpose.msra.mxu0 0
        %4890 = vmatprep.subr.bf16.mxu0 0
        %4891 = vmatpush1.bf16.xpose.msra.mxu0 0
        %4892 = vmatprep.subr.bf16.mxu0 0
        %4893 = vmatpush1.bf16.xpose.msra.mxu0 0
        %4894 = vmatprep.mubr.bf16.mxu0 0
        %4895 = vmatmul.mubr.bf16.gmra.mrb[0].mxu0 %v4857
        %v4896 = vpop.f32.mrb[0].mxu0
        %v4897 = vadd.f32 0.0, %v4896
        %v4898 = vpop.f32.mrb[0].mxu0
        %v4899 = vpop.f32.mrb[0].mxu0
        %v4900 = vpop.f32.mrb[0].mxu0
        %4901 = vdwg.mxu0
        %v4902 = vmul.f32 %v4897, 0.35355338
        %v4903 = vsel %vm2090, %v4902, -inf
        %4904 = vmax.xlane.f32.xlu0 %v4903
        %v4905 = vpop.xlane.xlu0 %4904
        %v4906 = vsub.f32 %v4902, %v4905
        %v4907 = vmul.f32 %v4906, 1.442695
        %v4908 = vpow.pop %v4907
        %v4909 = vsel %vm2090, %v4908, 0.0
        %4910 = vadd.xlane.f32.xlu0 %v4909
        %v4911 = vpop.xlane.xlu0 %4910
        %v4912 = vpack.c.bf16 %v4908, %v4908
        %4914 = vrot.lane.b32.xlu0 %v4855, 96
        %v4915 = vpop.permute.xlu0 %4914
        %v4917 = vsel %vm2090, %v4912, 0
        %v4920 = vsel %vm2154, %v4915, 0
        %4922 = vmatprep.subr.bf16.mxu0 0
        %4923 = vmatpush1.bf16.msra.mxu0 %v4920
        %4924 = vmatprep.subr.bf16.mxu0 0
        %4925 = vmatpush1.bf16.msra.mxu0 0
        %4926 = vmatprep.subr.bf16.mxu0 0
        %4927 = vmatpush1.bf16.msra.mxu0 0
        %4928 = vmatprep.subr.bf16.mxu0 0
        %4929 = vmatpush1.bf16.msra.mxu0 0
        %4930 = vmatprep.subr.bf16.mxu0 0
        %4931 = vmatpush1.bf16.msra.mxu0 0
        %4932 = vmatprep.subr.bf16.mxu0 0
        %4933 = vmatpush1.bf16.msra.mxu0 0
        %4934 = vmatprep.subr.bf16.mxu0 0
        %4935 = vmatpush1.bf16.msra.mxu0 0
        %4936 = vmatprep.subr.bf16.mxu0 0
        %4937 = vmatpush1.bf16.msra.mxu0 0
        %4938 = vmatprep.subr.bf16.mxu0 0
        %4939 = vmatpush1.bf16.msra.mxu0 0
        %4940 = vmatprep.subr.bf16.mxu0 0
        %4941 = vmatpush1.bf16.msra.mxu0 0
        %4942 = vmatprep.subr.bf16.mxu0 0
        %4943 = vmatpush1.bf16.msra.mxu0 0
        %4944 = vmatprep.subr.bf16.mxu0 0
        %4945 = vmatpush1.bf16.msra.mxu0 0
        %4946 = vmatprep.subr.bf16.mxu0 0
        %4947 = vmatpush1.bf16.msra.mxu0 0
        %4948 = vmatprep.subr.bf16.mxu0 0
        %4949 = vmatpush1.bf16.msra.mxu0 0
        %4950 = vmatprep.subr.bf16.mxu0 0
        %4951 = vmatpush1.bf16.msra.mxu0 0
        %4952 = vmatprep.subr.bf16.mxu0 0
        %4953 = vmatpush1.bf16.msra.mxu0 0
        %4954 = vmatprep.mubr.bf16.mxu0 0
        %4955 = vmatmul.mubr.bf16.gmra.mrb[0].mxu0 %v4917
        %v4956 = vpop.f32.mrb[0].mxu0
        %v4957 = vadd.f32 0.0, %v4956
        %v4958 = vpop.f32.mrb[0].mxu0
        %v4959 = vpop.f32.mrb[0].mxu0
        %v4960 = vpop.f32.mrb[0].mxu0
        %4961 = vdwg.mxu0
        %v4962 = vrcp.pop %v4911
        %v4963 = vmul.f32 %v4957, %v4962
        %4965 = vrot.lane.b32.xlu0 %v4743, 120
        %v4966 = vpop.permute.xlu0 %4965
        %4967 = vrot.lane.b32.xlu0 %v4855, 120
        %v4968 = vpop.permute.xlu0 %4967
        %v4970 = vsel %vm2090, %v4966, 0
        %v4973 = vsel %vm2090, %v4968, 0
        %4975 = vmatprep.subr.bf16.mxu0 0
        %4976 = vmatpush1.bf16.xpose.msra.mxu0 %v4973
        %4977 = vmatprep.subr.bf16.mxu0 0
        %4978 = vmatpush1.bf16.xpose.msra.mxu0 0
        %4979 = vmatprep.subr.bf16.mxu0 0
        %4980 = vmatpush1.bf16.xpose.msra.mxu0 0
        %4981 = vmatprep.subr.bf16.mxu0 0
        %4982 = vmatpush1.bf16.xpose.msra.mxu0 0
        %4983 = vmatprep.subr.bf16.mxu0 0
        %4984 = vmatpush1.bf16.xpose.msra.mxu0 0
        %4985 = vmatprep.subr.bf16.mxu0 0
        %4986 = vmatpush1.bf16.xpose.msra.mxu0 0
        %4987 = vmatprep.subr.bf16.mxu0 0
        %4988 = vmatpush1.bf16.xpose.msra.mxu0 0
        %4989 = vmatprep.subr.bf16.mxu0 0
        %4990 = vmatpush1.bf16.xpose.msra.mxu0 0
        %4991 = vmatprep.subr.bf16.mxu0 0
        %4992 = vmatpush1.bf16.xpose.msra.mxu0 0
        %4993 = vmatprep.subr.bf16.mxu0 0
        %4994 = vmatpush1.bf16.xpose.msra.mxu0 0
        %4995 = vmatprep.subr.bf16.mxu0 0
        %4996 = vmatpush1.bf16.xpose.msra.mxu0 0
        %4997 = vmatprep.subr.bf16.mxu0 0
        %4998 = vmatpush1.bf16.xpose.msra.mxu0 0
        %4999 = vmatprep.subr.bf16.mxu0 0
        %5000 = vmatpush1.bf16.xpose.msra.mxu0 0
        %5001 = vmatprep.subr.bf16.mxu0 0
        %5002 = vmatpush1.bf16.xpose.msra.mxu0 0
        %5003 = vmatprep.subr.bf16.mxu0 0
        %5004 = vmatpush1.bf16.xpose.msra.mxu0 0
        %5005 = vmatprep.subr.bf16.mxu0 0
        %5006 = vmatpush1.bf16.xpose.msra.mxu0 0
        %5007 = vmatprep.mubr.bf16.mxu0 0
        %5008 = vmatmul.mubr.bf16.gmra.mrb[0].mxu0 %v4970
        %v5009 = vpop.f32.mrb[0].mxu0
        %v5010 = vadd.f32 0.0, %v5009
        %v5011 = vpop.f32.mrb[0].mxu0
        %v5012 = vpop.f32.mrb[0].mxu0
        %v5013 = vpop.f32.mrb[0].mxu0
        %5014 = vdwg.mxu0
        %v5015 = vmul.f32 %v5010, 0.35355338
        %v5016 = vsel %vm2090, %v5015, -inf
        %5017 = vmax.xlane.f32.xlu0 %v5016
        %v5018 = vpop.xlane.xlu0 %5017
        %v5019 = vsub.f32 %v5015, %v5018
        %v5020 = vmul.f32 %v5019, 1.442695
        %v5021 = vpow.pop %v5020
        %v5022 = vsel %vm2090, %v5021, 0.0
        %5023 = vadd.xlane.f32.xlu0 %v5022
        %v5024 = vpop.xlane.xlu0 %5023
        %v5025 = vpack.c.bf16 %v5021, %v5021
        %5026 = vrot.lane.b32.xlu0 %v4855, 88
        %v5027 = vpop.permute.xlu0 %5026
        %v5029 = vsel %vm2090, %v5025, 0
        %v5032 = vsel %vm2154, %v5027, 0
        %5034 = vmatprep.subr.bf16.mxu0 0
        %5035 = vmatpush1.bf16.msra.mxu0 %v5032
        %5036 = vmatprep.subr.bf16.mxu0 0
        %5037 = vmatpush1.bf16.msra.mxu0 0
        %5038 = vmatprep.subr.bf16.mxu0 0
        %5039 = vmatpush1.bf16.msra.mxu0 0
        %5040 = vmatprep.subr.bf16.mxu0 0
        %5041 = vmatpush1.bf16.msra.mxu0 0
        %5042 = vmatprep.subr.bf16.mxu0 0
        %5043 = vmatpush1.bf16.msra.mxu0 0
        %5044 = vmatprep.subr.bf16.mxu0 0
        %5045 = vmatpush1.bf16.msra.mxu0 0
        %5046 = vmatprep.subr.bf16.mxu0 0
        %5047 = vmatpush1.bf16.msra.mxu0 0
        %5048 = vmatprep.subr.bf16.mxu0 0
        %5049 = vmatpush1.bf16.msra.mxu0 0
        %5050 = vmatprep.subr.bf16.mxu0 0
        %5051 = vmatpush1.bf16.msra.mxu0 0
        %5052 = vmatprep.subr.bf16.mxu0 0
        %5053 = vmatpush1.bf16.msra.mxu0 0
        %5054 = vmatprep.subr.bf16.mxu0 0
        %5055 = vmatpush1.bf16.msra.mxu0 0
        %5056 = vmatprep.subr.bf16.mxu0 0
        %5057 = vmatpush1.bf16.msra.mxu0 0
        %5058 = vmatprep.subr.bf16.mxu0 0
        %5059 = vmatpush1.bf16.msra.mxu0 0
        %5060 = vmatprep.subr.bf16.mxu0 0
        %5061 = vmatpush1.bf16.msra.mxu0 0
        %5062 = vmatprep.subr.bf16.mxu0 0
        %5063 = vmatpush1.bf16.msra.mxu0 0
        %5064 = vmatprep.subr.bf16.mxu0 0
        %5065 = vmatpush1.bf16.msra.mxu0 0
        %5066 = vmatprep.mubr.bf16.mxu0 0
        %5067 = vmatmul.mubr.bf16.gmra.mrb[0].mxu0 %v5029
        %v5068 = vpop.f32.mrb[0].mxu0
        %v5069 = vadd.f32 0.0, %v5068
        %v5070 = vpop.f32.mrb[0].mxu0
        %v5071 = vpop.f32.mrb[0].mxu0
        %v5072 = vpop.f32.mrb[0].mxu0
        %5073 = vdwg.mxu0
        %v5074 = vrcp.pop %v5024
        %v5075 = vmul.f32 %v5069, %v5074
        %5076 = vrot.lane.b32.xlu0 %v4743, 112
        %v5077 = vpop.permute.xlu0 %5076
        %5078 = vrot.lane.b32.xlu0 %v4855, 112
        %v5079 = vpop.permute.xlu0 %5078
        %v5081 = vsel %vm2090, %v5077, 0
        %v5084 = vsel %vm2090, %v5079, 0
        %5086 = vmatprep.subr.bf16.mxu0 0
        %5087 = vmatpush1.bf16.xpose.msra.mxu0 %v5084
        %5088 = vmatprep.subr.bf16.mxu0 0
        %5089 = vmatpush1.bf16.xpose.msra.mxu0 0
        %5090 = vmatprep.subr.bf16.mxu0 0
        %5091 = vmatpush1.bf16.xpose.msra.mxu0 0
        %5092 = vmatprep.subr.bf16.mxu0 0
        %5093 = vmatpush1.bf16.xpose.msra.mxu0 0
        %5094 = vmatprep.subr.bf16.mxu0 0
        %5095 = vmatpush1.bf16.xpose.msra.mxu0 0
        %5096 = vmatprep.subr.bf16.mxu0 0
        %5097 = vmatpush1.bf16.xpose.msra.mxu0 0
        %5098 = vmatprep.subr.bf16.mxu0 0
        %5099 = vmatpush1.bf16.xpose.msra.mxu0 0
        %5100 = vmatprep.subr.bf16.mxu0 0
        %5101 = vmatpush1.bf16.xpose.msra.mxu0 0
        %5102 = vmatprep.subr.bf16.mxu0 0
        %5103 = vmatpush1.bf16.xpose.msra.mxu0 0
        %5104 = vmatprep.subr.bf16.mxu0 0
        %5105 = vmatpush1.bf16.xpose.msra.mxu0 0
        %5106 = vmatprep.subr.bf16.mxu0 0
        %5107 = vmatpush1.bf16.xpose.msra.mxu0 0
        %5108 = vmatprep.subr.bf16.mxu0 0
        %5109 = vmatpush1.bf16.xpose.msra.mxu0 0
        %5110 = vmatprep.subr.bf16.mxu0 0
        %5111 = vmatpush1.bf16.xpose.msra.mxu0 0
        %5112 = vmatprep.subr.bf16.mxu0 0
        %5113 = vmatpush1.bf16.xpose.msra.mxu0 0
        %5114 = vmatprep.subr.bf16.mxu0 0
        %5115 = vmatpush1.bf16.xpose.msra.mxu0 0
        %5116 = vmatprep.subr.bf16.mxu0 0
        %5117 = vmatpush1.bf16.xpose.msra.mxu0 0
        %5118 = vmatprep.mubr.bf16.mxu0 0
        %5119 = vmatmul.mubr.bf16.gmra.mrb[0].mxu0 %v5081
        %v5120 = vpop.f32.mrb[0].mxu0
        %v5121 = vadd.f32 0.0, %v5120
        %v5122 = vpop.f32.mrb[0].mxu0
        %v5123 = vpop.f32.mrb[0].mxu0
        %v5124 = vpop.f32.mrb[0].mxu0
        %5125 = vdwg.mxu0
        %v5126 = vmul.f32 %v5121, 0.35355338
        %v5127 = vsel %vm2090, %v5126, -inf
        %5128 = vmax.xlane.f32.xlu0 %v5127
        %v5129 = vpop.xlane.xlu0 %5128
        %v5130 = vsub.f32 %v5126, %v5129
        %v5131 = vmul.f32 %v5130, 1.442695
        %v5132 = vpow.pop %v5131
        %v5133 = vsel %vm2090, %v5132, 0.0
        %5134 = vadd.xlane.f32.xlu0 %v5133
        %v5135 = vpop.xlane.xlu0 %5134
        %v5136 = vpack.c.bf16 %v5132, %v5132
        %5137 = vrot.lane.b32.xlu0 %v4855, 80
        %v5138 = vpop.permute.xlu0 %5137
        %v5140 = vsel %vm2090, %v5136, 0
        %v5143 = vsel %vm2154, %v5138, 0
        %5145 = vmatprep.subr.bf16.mxu0 0
        %5146 = vmatpush1.bf16.msra.mxu0 %v5143
        %5147 = vmatprep.subr.bf16.mxu0 0
        %5148 = vmatpush1.bf16.msra.mxu0 0
        %5149 = vmatprep.subr.bf16.mxu0 0
        %5150 = vmatpush1.bf16.msra.mxu0 0
        %5151 = vmatprep.subr.bf16.mxu0 0
        %5152 = vmatpush1.bf16.msra.mxu0 0
        %5153 = vmatprep.subr.bf16.mxu0 0
        %5154 = vmatpush1.bf16.msra.mxu0 0
        %5155 = vmatprep.subr.bf16.mxu0 0
        %5156 = vmatpush1.bf16.msra.mxu0 0
        %5157 = vmatprep.subr.bf16.mxu0 0
        %5158 = vmatpush1.bf16.msra.mxu0 0
        %5159 = vmatprep.subr.bf16.mxu0 0
        %5160 = vmatpush1.bf16.msra.mxu0 0
        %5161 = vmatprep.subr.bf16.mxu0 0
        %5162 = vmatpush1.bf16.msra.mxu0 0
        %5163 = vmatprep.subr.bf16.mxu0 0
        %5164 = vmatpush1.bf16.msra.mxu0 0
        %5165 = vmatprep.subr.bf16.mxu0 0
        %5166 = vmatpush1.bf16.msra.mxu0 0
        %5167 = vmatprep.subr.bf16.mxu0 0
        %5168 = vmatpush1.bf16.msra.mxu0 0
        %5169 = vmatprep.subr.bf16.mxu0 0
        %5170 = vmatpush1.bf16.msra.mxu0 0
        %5171 = vmatprep.subr.bf16.mxu0 0
        %5172 = vmatpush1.bf16.msra.mxu0 0
        %5173 = vmatprep.subr.bf16.mxu0 0
        %5174 = vmatpush1.bf16.msra.mxu0 0
        %5175 = vmatprep.subr.bf16.mxu0 0
        %5176 = vmatpush1.bf16.msra.mxu0 0
        %5177 = vmatprep.mubr.bf16.mxu0 0
        %5178 = vmatmul.mubr.bf16.gmra.mrb[0].mxu0 %v5140
        %v5179 = vpop.f32.mrb[0].mxu0
        %v5180 = vadd.f32 0.0, %v5179
        %v5181 = vpop.f32.mrb[0].mxu0
        %v5182 = vpop.f32.mrb[0].mxu0
        %v5183 = vpop.f32.mrb[0].mxu0
        %5184 = vdwg.mxu0
        %v5185 = vrcp.pop %v5135
        %v5186 = vmul.f32 %v5180, %v5185
        %5187 = vrot.lane.b32.xlu0 %v4743, 104
        %v5188 = vpop.permute.xlu0 %5187
        %5189 = vrot.lane.b32.xlu0 %v4855, 104
        %v5190 = vpop.permute.xlu0 %5189
        %v5192 = vsel %vm2090, %v5188, 0
        %v5195 = vsel %vm2090, %v5190, 0
        %5197 = vmatprep.subr.bf16.mxu0 0
        %5198 = vmatpush1.bf16.xpose.msra.mxu0 %v5195
        %5199 = vmatprep.subr.bf16.mxu0 0
        %5200 = vmatpush1.bf16.xpose.msra.mxu0 0
        %5201 = vmatprep.subr.bf16.mxu0 0
        %5202 = vmatpush1.bf16.xpose.msra.mxu0 0
        %5203 = vmatprep.subr.bf16.mxu0 0
        %5204 = vmatpush1.bf16.xpose.msra.mxu0 0
        %5205 = vmatprep.subr.bf16.mxu0 0
        %5206 = vmatpush1.bf16.xpose.msra.mxu0 0
        %5207 = vmatprep.subr.bf16.mxu0 0
        %5208 = vmatpush1.bf16.xpose.msra.mxu0 0
        %5209 = vmatprep.subr.bf16.mxu0 0
        %5210 = vmatpush1.bf16.xpose.msra.mxu0 0
        %5211 = vmatprep.subr.bf16.mxu0 0
        %5212 = vmatpush1.bf16.xpose.msra.mxu0 0
        %5213 = vmatprep.subr.bf16.mxu0 0
        %5214 = vmatpush1.bf16.xpose.msra.mxu0 0
        %5215 = vmatprep.subr.bf16.mxu0 0
        %5216 = vmatpush1.bf16.xpose.msra.mxu0 0
        %5217 = vmatprep.subr.bf16.mxu0 0
        %5218 = vmatpush1.bf16.xpose.msra.mxu0 0
        %5219 = vmatprep.subr.bf16.mxu0 0
        %5220 = vmatpush1.bf16.xpose.msra.mxu0 0
        %5221 = vmatprep.subr.bf16.mxu0 0
        %5222 = vmatpush1.bf16.xpose.msra.mxu0 0
        %5223 = vmatprep.subr.bf16.mxu0 0
        %5224 = vmatpush1.bf16.xpose.msra.mxu0 0
        %5225 = vmatprep.subr.bf16.mxu0 0
        %5226 = vmatpush1.bf16.xpose.msra.mxu0 0
        %5227 = vmatprep.subr.bf16.mxu0 0
        %5228 = vmatpush1.bf16.xpose.msra.mxu0 0
        %5229 = vmatprep.mubr.bf16.mxu0 0
        %5230 = vmatmul.mubr.bf16.gmra.mrb[0].mxu0 %v5192
        %v5231 = vpop.f32.mrb[0].mxu0
        %v5232 = vadd.f32 0.0, %v5231
        %v5233 = vpop.f32.mrb[0].mxu0
        %v5234 = vpop.f32.mrb[0].mxu0
        %v5235 = vpop.f32.mrb[0].mxu0
        %5236 = vdwg.mxu0
        %v5237 = vmul.f32 %v5232, 0.35355338
        %v5238 = vsel %vm2090, %v5237, -inf
        %5239 = vmax.xlane.f32.xlu0 %v5238
        %v5240 = vpop.xlane.xlu0 %5239
        %v5241 = vsub.f32 %v5237, %v5240
        %v5242 = vmul.f32 %v5241, 1.442695
        %v5243 = vpow.pop %v5242
        %v5244 = vsel %vm2090, %v5243, 0.0
        %5245 = vadd.xlane.f32.xlu0 %v5244
        %v5246 = vpop.xlane.xlu0 %5245
        %v5247 = vpack.c.bf16 %v5243, %v5243
        %5248 = vrot.lane.b32.xlu0 %v4855, 72
        %v5249 = vpop.permute.xlu0 %5248
        %v5251 = vsel %vm2090, %v5247, 0
        %v5254 = vsel %vm2154, %v5249, 0
        %5256 = vmatprep.subr.bf16.mxu0 0
        %5257 = vmatpush1.bf16.msra.mxu0 %v5254
        %5258 = vmatprep.subr.bf16.mxu0 0
        %5259 = vmatpush1.bf16.msra.mxu0 0
        %5260 = vmatprep.subr.bf16.mxu0 0
        %5261 = vmatpush1.bf16.msra.mxu0 0
        %5262 = vmatprep.subr.bf16.mxu0 0
        %5263 = vmatpush1.bf16.msra.mxu0 0
        %5264 = vmatprep.subr.bf16.mxu0 0
        %5265 = vmatpush1.bf16.msra.mxu0 0
        %5266 = vmatprep.subr.bf16.mxu0 0
        %5267 = vmatpush1.bf16.msra.mxu0 0
        %5268 = vmatprep.subr.bf16.mxu0 0
        %5269 = vmatpush1.bf16.msra.mxu0 0
        %5270 = vmatprep.subr.bf16.mxu0 0
        %5271 = vmatpush1.bf16.msra.mxu0 0
        %5272 = vmatprep.subr.bf16.mxu0 0
        %5273 = vmatpush1.bf16.msra.mxu0 0
        %5274 = vmatprep.subr.bf16.mxu0 0
        %5275 = vmatpush1.bf16.msra.mxu0 0
        %5276 = vmatprep.subr.bf16.mxu0 0
        %5277 = vmatpush1.bf16.msra.mxu0 0
        %5278 = vmatprep.subr.bf16.mxu0 0
        %5279 = vmatpush1.bf16.msra.mxu0 0
        %5280 = vmatprep.subr.bf16.mxu0 0
        %5281 = vmatpush1.bf16.msra.mxu0 0
        %5282 = vmatprep.subr.bf16.mxu0 0
        %5283 = vmatpush1.bf16.msra.mxu0 0
        %5284 = vmatprep.subr.bf16.mxu0 0
        %5285 = vmatpush1.bf16.msra.mxu0 0
        %5286 = vmatprep.subr.bf16.mxu0 0
        %5287 = vmatpush1.bf16.msra.mxu0 0
        %5288 = vmatprep.mubr.bf16.mxu0 0
        %5289 = vmatmul.mubr.bf16.gmra.mrb[0].mxu0 %v5251
        %v5290 = vpop.f32.mrb[0].mxu0
        %v5291 = vadd.f32 0.0, %v5290
        %v5292 = vpop.f32.mrb[0].mxu0
        %v5293 = vpop.f32.mrb[0].mxu0
        %v5294 = vpop.f32.mrb[0].mxu0
        %5295 = vdwg.mxu0
        %v5296 = vrcp.pop %v5246
        %v5297 = vmul.f32 %v5291, %v5296
        %5299 = vrot.lane.b32.xlu0 %v5075, 8
        %v5300 = vpop.permute.xlu0 %5299
        %5303 = vrot.lane.b32.xlu0 %v5186, 16
        %v5304 = vpop.permute.xlu0 %5303
        %5307 = vrot.lane.b32.xlu0 %v5297, 24
        %v5308 = vpop.permute.xlu0 %5307
        %v5310 = vsel %vm2090, %v4963, %v5300
        %v5311 = vsel %vm2549, %v5310, %v5304
        %v5312 = vsel %vm2551, %v5311, %v5308
        %v5313 = vpack.c.bf16 %v5312, %v5312
        %v5314 = vld [vmem:[#allocation40] sm:$0xf]
        %v5315 = vld [vmem:[#allocation40 + $0x4] sm:$0xf]
        %v5316 = vld [vmem:[#allocation40 + $0x8] sm:$0xf]
        %v5317 = vld [vmem:[#allocation40 + $0xc] sm:$0xf]
        %v5318 = vld [vmem:[#allocation41] sm:$0x1]
        %v5320 = vlaneseq
        %v5321 = vshrl.u32 %v5320, 7
        %v5322 = vsub.s32 0, %v5321
        %v5323 = vrot.slane %v5318, %v5322
        %v5329 = vunpack.c.l.b16 %v5314
        %v5330 = vunpack.c.l.b16 %v5315
        %v5331 = vunpack.c.l.b16 %v5316
        %v5332 = vunpack.c.l.b16 %v5317
        %v5333 = vpack.c.b16 %v5330, %v5329
        %v5334 = vpack.c.b16 %v5332, %v5331
        %v5338 = vsel %vm2577, %v5313, 0
        %5340 = vmatprep.subr.bf16.mxu0 0
        %5341 = vmatpush1.bf16.msra.mxu0 %v5333
        %5342 = vmatprep.subr.bf16.mxu0 0
        %5343 = vmatpush1.bf16.msra.mxu0 %v5334
        %5344 = vmatprep.subr.bf16.mxu0 0
        %5345 = vmatpush1.bf16.msra.mxu0 0
        %5346 = vmatprep.subr.bf16.mxu0 0
        %5347 = vmatpush1.bf16.msra.mxu0 0
        %5348 = vmatprep.subr.bf16.mxu0 0
        %5349 = vmatpush1.bf16.msra.mxu0 0
        %5350 = vmatprep.subr.bf16.mxu0 0
        %5351 = vmatpush1.bf16.msra.mxu0 0
        %5352 = vmatprep.subr.bf16.mxu0 0
        %5353 = vmatpush1.bf16.msra.mxu0 0
        %5354 = vmatprep.subr.bf16.mxu0 0
        %5355 = vmatpush1.bf16.msra.mxu0 0
        %5356 = vmatprep.subr.bf16.mxu0 0
        %5357 = vmatpush1.bf16.msra.mxu0 0
        %5358 = vmatprep.subr.bf16.mxu0 0
        %5359 = vmatpush1.bf16.msra.mxu0 0
        %5360 = vmatprep.subr.bf16.mxu0 0
        %5361 = vmatpush1.bf16.msra.mxu0 0
        %5362 = vmatprep.subr.bf16.mxu0 0
        %5363 = vmatpush1.bf16.msra.mxu0 0
        %5364 = vmatprep.subr.bf16.mxu0 0
        %5365 = vmatpush1.bf16.msra.mxu0 0
        %5366 = vmatprep.subr.bf16.mxu0 0
        %5367 = vmatpush1.bf16.msra.mxu0 0
        %5368 = vmatprep.subr.bf16.mxu0 0
        %5369 = vmatpush1.bf16.msra.mxu0 0
        %5370 = vmatprep.subr.bf16.mxu0 0
        %5371 = vmatpush1.bf16.msra.mxu0 0
        %5372 = vmatprep.mubr.bf16.mxu0 0
        %5373 = vmatmul.mubr.bf16.gmra.mrb[0].mxu0 %v5338
        %v5374 = vpop.f32.mrb[0].mxu0
        %v5375 = vadd.f32 %v5323, %v5374
        %v5376 = vpop.f32.mrb[0].mxu0
        %v5377 = vpop.f32.mrb[0].mxu0
        %v5378 = vpop.f32.mrb[0].mxu0
        %5379 = vdwg.mxu0
        %v5380 = vadd.f32 %v4630, %v5375
        %v5381 = vld [vmem:[#allocation46] sm:$0x1]
        %v5382 = vld [vmem:[#allocation47] sm:$0x1]
        %v5383 = vsel %vm2625, %v5380, 0.0
        %5384 = vadd.xlane.f32.xlu0 %v5383
        %v5385 = vpop.xlane.xlu0 %5384
        %v5386 = vmul.f32 %v5385, 0.03125
        %v5387 = vsub.f32 %v5380, %v5386
        %v5388 = vsel %vm2625, %v5387, 0.0
        %v5389 = vmul.f32 %v5388, %v5388
        %5390 = vadd.xlane.f32.xlu0 %v5389
        %v5391 = vpop.xlane.xlu0 %5390
        %v5392 = vmul.f32 %v5391, 0.03125
        %v5393 = vadd.f32 %v5392, 1e-05
        %v5394 = vrsqrt.pop %v5393
        %v5395 = vmul.f32 %v5387, %v5394
        %v5397 = vlaneseq
        %v5398 = vshrl.u32 %v5397, 7
        %v5399 = vsub.s32 0, %v5398
        %v5400 = vrot.slane %v5381, %v5399
        %v5402 = vmul.f32 %v5395, %v5400
        %v5404 = vlaneseq
        %v5405 = vshrl.u32 %v5404, 7
        %v5406 = vsub.s32 0, %v5405
        %v5407 = vrot.slane %v5382, %v5406
        %v5409 = vadd.f32 %v5402, %v5407
        %v5410 = vpack.c.bf16 %v5409, %v5409
        %v5411 = vld [vmem:[#allocation52] sm:$0xf]
        %v5412 = vld [vmem:[#allocation52 + $0x4] sm:$0xf]
        %v5413 = vld [vmem:[#allocation52 + $0x8] sm:$0xf]
        %v5414 = vld [vmem:[#allocation52 + $0xc] sm:$0xf]
        %v5415 = vld [vmem:[#allocation52 + $0x10] sm:$0xf]
        %v5416 = vld [vmem:[#allocation52 + $0x14] sm:$0xf]
        %v5417 = vld [vmem:[#allocation52 + $0x18] sm:$0xf]
        %v5418 = vld [vmem:[#allocation52 + $0x1c] sm:$0xf]
        %v5419 = vld [vmem:[#allocation52 + $0x20] sm:$0xf]
        %v5420 = vld [vmem:[#allocation52 + $0x24] sm:$0xf]
        %v5421 = vld [vmem:[#allocation52 + $0x28] sm:$0xf]
        %v5422 = vld [vmem:[#allocation52 + $0x2c] sm:$0xf]
        %v5423 = vld [vmem:[#allocation52 + $0x30] sm:$0xf]
        %v5424 = vld [vmem:[#allocation52 + $0x34] sm:$0xf]
        %v5425 = vld [vmem:[#allocation52 + $0x38] sm:$0xf]
        %v5426 = vld [vmem:[#allocation52 + $0x3c] sm:$0xf]
        %v5427 = vld [vmem:[#allocation53] sm:$0x1]
        %v5429 = vlaneseq
        %v5430 = vshrl.u32 %v5429, 7
        %v5431 = vsub.s32 0, %v5430
        %v5432 = vrot.slane %v5427, %v5431
        %v5450 = vunpack.c.l.b16 %v5411
        %v5451 = vunpack.c.l.b16 %v5412
        %v5452 = vunpack.c.l.b16 %v5413
        %v5453 = vunpack.c.l.b16 %v5414
        %v5454 = vunpack.c.l.b16 %v5415
        %v5455 = vunpack.c.l.b16 %v5416
        %v5456 = vunpack.c.l.b16 %v5417
        %v5457 = vunpack.c.l.b16 %v5418
        %v5458 = vunpack.c.l.b16 %v5419
        %v5459 = vunpack.c.l.b16 %v5420
        %v5460 = vunpack.c.l.b16 %v5421
        %v5461 = vunpack.c.l.b16 %v5422
        %v5462 = vunpack.c.l.b16 %v5423
        %v5463 = vunpack.c.l.b16 %v5424
        %v5464 = vunpack.c.l.b16 %v5425
        %v5465 = vunpack.c.l.b16 %v5426
        %v5466 = vpack.c.b16 %v5451, %v5450
        %v5467 = vpack.c.b16 %v5453, %v5452
        %v5468 = vpack.c.b16 %v5455, %v5454
        %v5469 = vpack.c.b16 %v5457, %v5456
        %v5470 = vpack.c.b16 %v5459, %v5458
        %v5471 = vpack.c.b16 %v5461, %v5460
        %v5472 = vpack.c.b16 %v5463, %v5462
        %v5473 = vpack.c.b16 %v5465, %v5464
        %5482 = vmatprep.subr.bf16.mxu0 0
        %5483 = vmatpush1.bf16.msra.mxu0 %v5466
        %5484 = vmatprep.subr.bf16.mxu0 0
        %5485 = vmatpush1.bf16.msra.mxu0 %v5467
        %5486 = vmatprep.subr.bf16.mxu0 0
        %5487 = vmatpush1.bf16.msra.mxu0 %v5468
        %5488 = vmatprep.subr.bf16.mxu0 0
        %5489 = vmatpush1.bf16.msra.mxu0 %v5469
        %5490 = vmatprep.subr.bf16.mxu0 0
        %5491 = vmatpush1.bf16.msra.mxu0 %v5470
        %5492 = vmatprep.subr.bf16.mxu0 0
        %5493 = vmatpush1.bf16.msra.mxu0 %v5471
        %5494 = vmatprep.subr.bf16.mxu0 0
        %5495 = vmatpush1.bf16.msra.mxu0 %v5472
        %5496 = vmatprep.subr.bf16.mxu0 0
        %5497 = vmatpush1.bf16.msra.mxu0 %v5473
        %5498 = vmatprep.subr.bf16.mxu0 0
        %5499 = vmatpush1.bf16.msra.mxu0 0
        %5500 = vmatprep.subr.bf16.mxu0 0
        %5501 = vmatpush1.bf16.msra.mxu0 0
        %5502 = vmatprep.subr.bf16.mxu0 0
        %5503 = vmatpush1.bf16.msra.mxu0 0
        %5504 = vmatprep.subr.bf16.mxu0 0
        %5505 = vmatpush1.bf16.msra.mxu0 0
        %5506 = vmatprep.subr.bf16.mxu0 0
        %5507 = vmatpush1.bf16.msra.mxu0 0
        %5508 = vmatprep.subr.bf16.mxu0 0
        %5509 = vmatpush1.bf16.msra.mxu0 0
        %5510 = vmatprep.subr.bf16.mxu0 0
        %5511 = vmatpush1.bf16.msra.mxu0 0
        %5512 = vmatprep.subr.bf16.mxu0 0
        %5513 = vmatpush1.bf16.msra.mxu0 0
        %5514 = vmatprep.mubr.bf16.mxu0 0
        %5515 = vmatmul.mubr.bf16.gmra.mrb[0].mxu0 %v5410
        %v5516 = vpop.f32.mrb[0].mxu0
        %v5517 = vadd.f32 %v5432, %v5516
        %v5518 = vpop.f32.mrb[0].mxu0
        %v5519 = vpop.f32.mrb[0].mxu0
        %v5520 = vpop.f32.mrb[0].mxu0
        %5521 = vdwg.mxu0
        %v5522 = vmax.f32 %v5517, 0.0
        %v5523 = vpack.c.bf16 %v5522, %v5522
        %v5524 = vld [vmem:[#allocation55] sm:$0xf]
        %v5525 = vld [vmem:[#allocation55 + $0x4] sm:$0xf]
        %v5526 = vld [vmem:[#allocation55 + $0x8] sm:$0xf]
        %v5527 = vld [vmem:[#allocation55 + $0xc] sm:$0xf]
        %v5528 = vld [vmem:[#allocation55 + $0x10] sm:$0xf]
        %v5529 = vld [vmem:[#allocation55 + $0x14] sm:$0xf]
        %v5530 = vld [vmem:[#allocation55 + $0x18] sm:$0xf]
        %v5531 = vld [vmem:[#allocation55 + $0x1c] sm:$0xf]
        %v5532 = vld [vmem:[#allocation55 + $0x20] sm:$0xf]
        %v5533 = vld [vmem:[#allocation55 + $0x24] sm:$0xf]
        %v5534 = vld [vmem:[#allocation55 + $0x28] sm:$0xf]
        %v5535 = vld [vmem:[#allocation55 + $0x2c] sm:$0xf]
        %v5536 = vld [vmem:[#allocation55 + $0x30] sm:$0xf]
        %v5537 = vld [vmem:[#allocation55 + $0x34] sm:$0xf]
        %v5538 = vld [vmem:[#allocation55 + $0x38] sm:$0xf]
        %v5539 = vld [vmem:[#allocation55 + $0x3c] sm:$0xf]
        %v5540 = vld [vmem:[#allocation56] sm:$0x1]
        %v5542 = vlaneseq
        %v5543 = vshrl.u32 %v5542, 7
        %v5544 = vsub.s32 0, %v5543
        %v5545 = vrot.slane %v5540, %v5544
        %v5563 = vunpack.c.l.b16 %v5524
        %v5564 = vunpack.c.l.b16 %v5525
        %v5565 = vunpack.c.l.b16 %v5526
        %v5566 = vunpack.c.l.b16 %v5527
        %v5567 = vunpack.c.l.b16 %v5528
        %v5568 = vunpack.c.l.b16 %v5529
        %v5569 = vunpack.c.l.b16 %v5530
        %v5570 = vunpack.c.l.b16 %v5531
        %v5571 = vunpack.c.l.b16 %v5532
        %v5572 = vunpack.c.l.b16 %v5533
        %v5573 = vunpack.c.l.b16 %v5534
        %v5574 = vunpack.c.l.b16 %v5535
        %v5575 = vunpack.c.l.b16 %v5536
        %v5576 = vunpack.c.l.b16 %v5537
        %v5577 = vunpack.c.l.b16 %v5538
        %v5578 = vunpack.c.l.b16 %v5539
        %v5579 = vpack.c.b16 %v5564, %v5563
        %v5580 = vpack.c.b16 %v5566, %v5565
        %v5581 = vpack.c.b16 %v5568, %v5567
        %v5582 = vpack.c.b16 %v5570, %v5569
        %v5583 = vpack.c.b16 %v5572, %v5571
        %v5584 = vpack.c.b16 %v5574, %v5573
        %v5585 = vpack.c.b16 %v5576, %v5575
        %v5586 = vpack.c.b16 %v5578, %v5577
        %5595 = vmatprep.subr.bf16.mxu0 0
        %5596 = vmatpush1.bf16.msra.mxu0 %v5579
        %5597 = vmatprep.subr.bf16.mxu0 0
        %5598 = vmatpush1.bf16.msra.mxu0 %v5580
        %5599 = vmatprep.subr.bf16.mxu0 0
        %5600 = vmatpush1.bf16.msra.mxu0 %v5581
        %5601 = vmatprep.subr.bf16.mxu0 0
        %5602 = vmatpush1.bf16.msra.mxu0 %v5582
        %5603 = vmatprep.subr.bf16.mxu0 0
        %5604 = vmatpush1.bf16.msra.mxu0 %v5583
        %5605 = vmatprep.subr.bf16.mxu0 0
        %5606 = vmatpush1.bf16.msra.mxu0 %v5584
        %5607 = vmatprep.subr.bf16.mxu0 0
        %5608 = vmatpush1.bf16.msra.mxu0 %v5585
        %5609 = vmatprep.subr.bf16.mxu0 0
        %5610 = vmatpush1.bf16.msra.mxu0 %v5586
        %5611 = vmatprep.subr.bf16.mxu0 0
        %5612 = vmatpush1.bf16.msra.mxu0 0
        %5613 = vmatprep.subr.bf16.mxu0 0
        %5614 = vmatpush1.bf16.msra.mxu0 0
        %5615 = vmatprep.subr.bf16.mxu0 0
        %5616 = vmatpush1.bf16.msra.mxu0 0
        %5617 = vmatprep.subr.bf16.mxu0 0
        %5618 = vmatpush1.bf16.msra.mxu0 0
        %5619 = vmatprep.subr.bf16.mxu0 0
        %5620 = vmatpush1.bf16.msra.mxu0 0
        %5621 = vmatprep.subr.bf16.mxu0 0
        %5622 = vmatpush1.bf16.msra.mxu0 0
        %5623 = vmatprep.subr.bf16.mxu0 0
        %5624 = vmatpush1.bf16.msra.mxu0 0
        %5625 = vmatprep.subr.bf16.mxu0 0
        %5626 = vmatpush1.bf16.msra.mxu0 0
        %5627 = vmatprep.mubr.bf16.mxu0 0
        %5628 = vmatmul.mubr.bf16.gmra.mrb[0].mxu0 %v5523
        %v5629 = vpop.f32.mrb[0].mxu0
        %v5630 = vadd.f32 %v5545, %v5629
        %v5631 = vpop.f32.mrb[0].mxu0
        %v5632 = vpop.f32.mrb[0].mxu0
        %v5633 = vpop.f32.mrb[0].mxu0
        %5634 = vdwg.mxu0
        %v5635 = vadd.f32 %v5409, %v5630
        %v5636 = vld [vmem:[#allocation49] sm:$0x1]
        %v5637 = vld [vmem:[#allocation50] sm:$0x1]
        %v5638 = vsel %vm2625, %v5635, 0.0
        %5639 = vadd.xlane.f32.xlu0 %v5638
        %v5640 = vpop.xlane.xlu0 %5639
        %v5641 = vmul.f32 %v5640, 0.03125
        %v5642 = vsub.f32 %v5635, %v5641
        %v5643 = vsel %vm2625, %v5642, 0.0
        %v5644 = vmul.f32 %v5643, %v5643
        %5645 = vadd.xlane.f32.xlu0 %v5644
        %v5646 = vpop.xlane.xlu0 %5645
        %v5647 = vmul.f32 %v5646, 0.03125
        %v5648 = vadd.f32 %v5647, 1e-05
        %v5649 = vrsqrt.pop %v5648
        %v5650 = vmul.f32 %v5642, %v5649
        %v5652 = vlaneseq
        %v5653 = vshrl.u32 %v5652, 7
        %v5654 = vsub.s32 0, %v5653
        %v5655 = vrot.slane %v5636, %v5654
        %v5657 = vmul.f32 %v5650, %v5655
        %v5659 = vlaneseq
        %v5660 = vshrl.u32 %v5659, 7
        %v5661 = vsub.s32 0, %v5660
        %v5662 = vrot.slane %v5637, %v5661
        %v5664 = vadd.f32 %v5657, %v5662
        %v5665 = vpack.c.bf16 %v5664, %v5664
        %s5666 = scalar_lea.vmem [#allocation28], 64
        %v5667 = vld [vmem:[%s5666] sm:$0xf]
        %v5668 = vld [vmem:[%s5666 + $0x4] sm:$0xf]
        %v5669 = vld [vmem:[%s5666 + $0x8] sm:$0xf]
        %v5670 = vld [vmem:[%s5666 + $0xc] sm:$0xf]
        %v5671 = vld [vmem:[%s5666 + $0x10] sm:$0xf]
        %v5672 = vld [vmem:[%s5666 + $0x14] sm:$0xf]
        %v5673 = vld [vmem:[%s5666 + $0x18] sm:$0xf]
        %v5674 = vld [vmem:[%s5666 + $0x1c] sm:$0xf]
        %v5675 = vld [vmem:[%s5666 + $0x20] sm:$0xf]
        %v5676 = vld [vmem:[%s5666 + $0x24] sm:$0xf]
        %v5677 = vld [vmem:[%s5666 + $0x28] sm:$0xf]
        %v5678 = vld [vmem:[%s5666 + $0x2c] sm:$0xf]
        %v5679 = vld [vmem:[%s5666 + $0x30] sm:$0xf]
        %v5680 = vld [vmem:[%s5666 + $0x34] sm:$0xf]
        %v5681 = vld [vmem:[%s5666 + $0x38] sm:$0xf]
        %v5682 = vld [vmem:[%s5666 + $0x3c] sm:$0xf]
        %s5683 = scalar_lea.vmem [#allocation29], 1
        %v5684 = vld [vmem:[%s5683] sm:$0x1]
        %v5686 = vlaneseq
        %v5687 = vshrl.u32 %v5686, 7
        %v5688 = vsub.s32 0, %v5687
        %v5689 = vrot.slane %v5684, %v5688
        %v5707 = vunpack.c.l.b16 %v5667
        %v5708 = vunpack.c.l.b16 %v5668
        %v5709 = vunpack.c.l.b16 %v5669
        %v5710 = vunpack.c.l.b16 %v5670
        %v5711 = vunpack.c.l.b16 %v5671
        %v5712 = vunpack.c.l.b16 %v5672
        %v5713 = vunpack.c.l.b16 %v5673
        %v5714 = vunpack.c.l.b16 %v5674
        %v5715 = vunpack.c.l.b16 %v5675
        %v5716 = vunpack.c.l.b16 %v5676
        %v5717 = vunpack.c.l.b16 %v5677
        %v5718 = vunpack.c.l.b16 %v5678
        %v5719 = vunpack.c.l.b16 %v5679
        %v5720 = vunpack.c.l.b16 %v5680
        %v5721 = vunpack.c.l.b16 %v5681
        %v5722 = vunpack.c.l.b16 %v5682
        %v5723 = vpack.c.b16 %v5708, %v5707
        %v5724 = vpack.c.b16 %v5710, %v5709
        %v5725 = vpack.c.b16 %v5712, %v5711
        %v5726 = vpack.c.b16 %v5714, %v5713
        %v5727 = vpack.c.b16 %v5716, %v5715
        %v5728 = vpack.c.b16 %v5718, %v5717
        %v5729 = vpack.c.b16 %v5720, %v5719
        %v5730 = vpack.c.b16 %v5722, %v5721
        %5739 = vmatprep.subr.bf16.mxu0 0
        %5740 = vmatpush1.bf16.msra.mxu0 %v5723
        %5741 = vmatprep.subr.bf16.mxu0 0
        %5742 = vmatpush1.bf16.msra.mxu0 %v5724
        %5743 = vmatprep.subr.bf16.mxu0 0
        %5744 = vmatpush1.bf16.msra.mxu0 %v5725
        %5745 = vmatprep.subr.bf16.mxu0 0
        %5746 = vmatpush1.bf16.msra.mxu0 %v5726
        %5747 = vmatprep.subr.bf16.mxu0 0
        %5748 = vmatpush1.bf16.msra.mxu0 %v5727
        %5749 = vmatprep.subr.bf16.mxu0 0
        %5750 = vmatpush1.bf16.msra.mxu0 %v5728
        %5751 = vmatprep.subr.bf16.mxu0 0
        %5752 = vmatpush1.bf16.msra.mxu0 %v5729
        %5753 = vmatprep.subr.bf16.mxu0 0
        %5754 = vmatpush1.bf16.msra.mxu0 %v5730
        %5755 = vmatprep.subr.bf16.mxu0 0
        %5756 = vmatpush1.bf16.msra.mxu0 0
        %5757 = vmatprep.subr.bf16.mxu0 0
        %5758 = vmatpush1.bf16.msra.mxu0 0
        %5759 = vmatprep.subr.bf16.mxu0 0
        %5760 = vmatpush1.bf16.msra.mxu0 0
        %5761 = vmatprep.subr.bf16.mxu0 0
        %5762 = vmatpush1.bf16.msra.mxu0 0
        %5763 = vmatprep.subr.bf16.mxu0 0
        %5764 = vmatpush1.bf16.msra.mxu0 0
        %5765 = vmatprep.subr.bf16.mxu0 0
        %5766 = vmatpush1.bf16.msra.mxu0 0
        %5767 = vmatprep.subr.bf16.mxu0 0
        %5768 = vmatpush1.bf16.msra.mxu0 0
        %5769 = vmatprep.subr.bf16.mxu0 0
        %5770 = vmatpush1.bf16.msra.mxu0 0
        %5771 = vmatprep.mubr.bf16.mxu0 0
        %5772 = vmatmul.mubr.bf16.gmra.mrb[0].mxu0 %v5665
        %v5773 = vpop.f32.mrb[0].mxu0
        %v5774 = vadd.f32 %v5689, %v5773
        %v5775 = vpop.f32.mrb[0].mxu0
        %v5776 = vpop.f32.mrb[0].mxu0
        %v5777 = vpop.f32.mrb[0].mxu0
        %5778 = vdwg.mxu0
        %v5779 = vpack.c.bf16 %v5774, %v5774
        %5781 = vrot.lane.b32.xlu0 %v5779, 96
        %v5782 = vpop.permute.xlu0 %5781
        %v5784 = vsel %vm2090, %v5779, 0
        %v5787 = vsel %vm2090, %v5782, 0
        %5789 = vmatprep.subr.bf16.mxu0 0
        %5790 = vmatpush1.bf16.xpose.msra.mxu0 %v5787
        %5791 = vmatprep.subr.bf16.mxu0 0
        %5792 = vmatpush1.bf16.xpose.msra.mxu0 0
        %5793 = vmatprep.subr.bf16.mxu0 0
        %5794 = vmatpush1.bf16.xpose.msra.mxu0 0
        %5795 = vmatprep.subr.bf16.mxu0 0
        %5796 = vmatpush1.bf16.xpose.msra.mxu0 0
        %5797 = vmatprep.subr.bf16.mxu0 0
        %5798 = vmatpush1.bf16.xpose.msra.mxu0 0
        %5799 = vmatprep.subr.bf16.mxu0 0
        %5800 = vmatpush1.bf16.xpose.msra.mxu0 0
        %5801 = vmatprep.subr.bf16.mxu0 0
        %5802 = vmatpush1.bf16.xpose.msra.mxu0 0
        %5803 = vmatprep.subr.bf16.mxu0 0
        %5804 = vmatpush1.bf16.xpose.msra.mxu0 0
        %5805 = vmatprep.subr.bf16.mxu0 0
        %5806 = vmatpush1.bf16.xpose.msra.mxu0 0
        %5807 = vmatprep.subr.bf16.mxu0 0
        %5808 = vmatpush1.bf16.xpose.msra.mxu0 0
        %5809 = vmatprep.subr.bf16.mxu0 0
        %5810 = vmatpush1.bf16.xpose.msra.mxu0 0
        %5811 = vmatprep.subr.bf16.mxu0 0
        %5812 = vmatpush1.bf16.xpose.msra.mxu0 0
        %5813 = vmatprep.subr.bf16.mxu0 0
        %5814 = vmatpush1.bf16.xpose.msra.mxu0 0
        %5815 = vmatprep.subr.bf16.mxu0 0
        %5816 = vmatpush1.bf16.xpose.msra.mxu0 0
        %5817 = vmatprep.subr.bf16.mxu0 0
        %5818 = vmatpush1.bf16.xpose.msra.mxu0 0
        %5819 = vmatprep.subr.bf16.mxu0 0
        %5820 = vmatpush1.bf16.xpose.msra.mxu0 0
        %5821 = vmatprep.mubr.bf16.mxu0 0
        %5822 = vmatmul.mubr.bf16.gmra.mrb[0].mxu0 %v5784
        %v5823 = vpop.f32.mrb[0].mxu0
        %v5824 = vadd.f32 0.0, %v5823
        %v5825 = vpop.f32.mrb[0].mxu0
        %v5826 = vpop.f32.mrb[0].mxu0
        %v5827 = vpop.f32.mrb[0].mxu0
        %5828 = vdwg.mxu0
        %v5829 = vmul.f32 %v5824, 0.35355338
        %v5830 = vadd.f32 %v5829, %v1875
        %v5831 = vsel %vm2090, %v5830, -inf
        %5832 = vmax.xlane.f32.xlu0 %v5831
        %v5833 = vpop.xlane.xlu0 %5832
        %v5834 = vsub.f32 %v5830, %v5833
        %v5835 = vmul.f32 %v5834, 1.442695
        %v5836 = vpow.pop %v5835
        %v5837 = vsel %vm2090, %v5836, 0.0
        %5838 = vadd.xlane.f32.xlu0 %v5837
        %v5839 = vpop.xlane.xlu0 %5838
        %v5840 = vpack.c.bf16 %v5836, %v5836
        %5841 = vrot.lane.b32.xlu0 %v5779, 64
        %v5842 = vpop.permute.xlu0 %5841
        %v5844 = vsel %vm2090, %v5840, 0
        %v5847 = vsel %vm2154, %v5842, 0
        %5849 = vmatprep.subr.bf16.mxu0 0
        %5850 = vmatpush1.bf16.msra.mxu0 %v5847
        %5851 = vmatprep.subr.bf16.mxu0 0
        %5852 = vmatpush1.bf16.msra.mxu0 0
        %5853 = vmatprep.subr.bf16.mxu0 0
        %5854 = vmatpush1.bf16.msra.mxu0 0
        %5855 = vmatprep.subr.bf16.mxu0 0
        %5856 = vmatpush1.bf16.msra.mxu0 0
        %5857 = vmatprep.subr.bf16.mxu0 0
        %5858 = vmatpush1.bf16.msra.mxu0 0
        %5859 = vmatprep.subr.bf16.mxu0 0
        %5860 = vmatpush1.bf16.msra.mxu0 0
        %5861 = vmatprep.subr.bf16.mxu0 0
        %5862 = vmatpush1.bf16.msra.mxu0 0
        %5863 = vmatprep.subr.bf16.mxu0 0
        %5864 = vmatpush1.bf16.msra.mxu0 0
        %5865 = vmatprep.subr.bf16.mxu0 0
        %5866 = vmatpush1.bf16.msra.mxu0 0
        %5867 = vmatprep.subr.bf16.mxu0 0
        %5868 = vmatpush1.bf16.msra.mxu0 0
        %5869 = vmatprep.subr.bf16.mxu0 0
        %5870 = vmatpush1.bf16.msra.mxu0 0
        %5871 = vmatprep.subr.bf16.mxu0 0
        %5872 = vmatpush1.bf16.msra.mxu0 0
        %5873 = vmatprep.subr.bf16.mxu0 0
        %5874 = vmatpush1.bf16.msra.mxu0 0
        %5875 = vmatprep.subr.bf16.mxu0 0
        %5876 = vmatpush1.bf16.msra.mxu0 0
        %5877 = vmatprep.subr.bf16.mxu0 0
        %5878 = vmatpush1.bf16.msra.mxu0 0
        %5879 = vmatprep.subr.bf16.mxu0 0
        %5880 = vmatpush1.bf16.msra.mxu0 0
        %5881 = vmatprep.mubr.bf16.mxu0 0
        %5882 = vmatmul.mubr.bf16.gmra.mrb[0].mxu0 %v5844
        %v5883 = vpop.f32.mrb[0].mxu0
        %v5884 = vadd.f32 0.0, %v5883
        %v5885 = vpop.f32.mrb[0].mxu0
        %v5886 = vpop.f32.mrb[0].mxu0
        %v5887 = vpop.f32.mrb[0].mxu0
        %5888 = vdwg.mxu0
        %v5889 = vrcp.pop %v5839
        %v5890 = vmul.f32 %v5884, %v5889
        %5891 = vrot.lane.b32.xlu0 %v5779, 120
        %v5892 = vpop.permute.xlu0 %5891
        %5893 = vrot.lane.b32.xlu0 %v5779, 88
        %v5894 = vpop.permute.xlu0 %5893
        %v5896 = vsel %vm2090, %v5892, 0
        %v5899 = vsel %vm2090, %v5894, 0
        %5901 = vmatprep.subr.bf16.mxu0 0
        %5902 = vmatpush1.bf16.xpose.msra.mxu0 %v5899
        %5903 = vmatprep.subr.bf16.mxu0 0
        %5904 = vmatpush1.bf16.xpose.msra.mxu0 0
        %5905 = vmatprep.subr.bf16.mxu0 0
        %5906 = vmatpush1.bf16.xpose.msra.mxu0 0
        %5907 = vmatprep.subr.bf16.mxu0 0
        %5908 = vmatpush1.bf16.xpose.msra.mxu0 0
        %5909 = vmatprep.subr.bf16.mxu0 0
        %5910 = vmatpush1.bf16.xpose.msra.mxu0 0
        %5911 = vmatprep.subr.bf16.mxu0 0
        %5912 = vmatpush1.bf16.xpose.msra.mxu0 0
        %5913 = vmatprep.subr.bf16.mxu0 0
        %5914 = vmatpush1.bf16.xpose.msra.mxu0 0
        %5915 = vmatprep.subr.bf16.mxu0 0
        %5916 = vmatpush1.bf16.xpose.msra.mxu0 0
        %5917 = vmatprep.subr.bf16.mxu0 0
        %5918 = vmatpush1.bf16.xpose.msra.mxu0 0
        %5919 = vmatprep.subr.bf16.mxu0 0
        %5920 = vmatpush1.bf16.xpose.msra.mxu0 0
        %5921 = vmatprep.subr.bf16.mxu0 0
        %5922 = vmatpush1.bf16.xpose.msra.mxu0 0
        %5923 = vmatprep.subr.bf16.mxu0 0
        %5924 = vmatpush1.bf16.xpose.msra.mxu0 0
        %5925 = vmatprep.subr.bf16.mxu0 0
        %5926 = vmatpush1.bf16.xpose.msra.mxu0 0
        %5927 = vmatprep.subr.bf16.mxu0 0
        %5928 = vmatpush1.bf16.xpose.msra.mxu0 0
        %5929 = vmatprep.subr.bf16.mxu0 0
        %5930 = vmatpush1.bf16.xpose.msra.mxu0 0
        %5931 = vmatprep.subr.bf16.mxu0 0
        %5932 = vmatpush1.bf16.xpose.msra.mxu0 0
        %5933 = vmatprep.mubr.bf16.mxu0 0
        %5934 = vmatmul.mubr.bf16.gmra.mrb[0].mxu0 %v5896
        %v5935 = vpop.f32.mrb[0].mxu0
        %v5936 = vadd.f32 0.0, %v5935
        %v5937 = vpop.f32.mrb[0].mxu0
        %v5938 = vpop.f32.mrb[0].mxu0
        %v5939 = vpop.f32.mrb[0].mxu0
        %5940 = vdwg.mxu0
        %v5941 = vmul.f32 %v5936, 0.35355338
        %v5942 = vadd.f32 %v5941, %v1875
        %v5943 = vsel %vm2090, %v5942, -inf
        %5944 = vmax.xlane.f32.xlu0 %v5943
        %v5945 = vpop.xlane.xlu0 %5944
        %v5946 = vsub.f32 %v5942, %v5945
        %v5947 = vmul.f32 %v5946, 1.442695
        %v5948 = vpow.pop %v5947
        %v5949 = vsel %vm2090, %v5948, 0.0
        %5950 = vadd.xlane.f32.xlu0 %v5949
        %v5951 = vpop.xlane.xlu0 %5950
        %v5952 = vpack.c.bf16 %v5948, %v5948
        %5953 = vrot.lane.b32.xlu0 %v5779, 56
        %v5954 = vpop.permute.xlu0 %5953
        %v5956 = vsel %vm2090, %v5952, 0
        %v5959 = vsel %vm2154, %v5954, 0
        %5961 = vmatprep.subr.bf16.mxu0 0
        %5962 = vmatpush1.bf16.msra.mxu0 %v5959
        %5963 = vmatprep.subr.bf16.mxu0 0
        %5964 = vmatpush1.bf16.msra.mxu0 0
        %5965 = vmatprep.subr.bf16.mxu0 0
        %5966 = vmatpush1.bf16.msra.mxu0 0
        %5967 = vmatprep.subr.bf16.mxu0 0
        %5968 = vmatpush1.bf16.msra.mxu0 0
        %5969 = vmatprep.subr.bf16.mxu0 0
        %5970 = vmatpush1.bf16.msra.mxu0 0
        %5971 = vmatprep.subr.bf16.mxu0 0
        %5972 = vmatpush1.bf16.msra.mxu0 0
        %5973 = vmatprep.subr.bf16.mxu0 0
        %5974 = vmatpush1.bf16.msra.mxu0 0
        %5975 = vmatprep.subr.bf16.mxu0 0
        %5976 = vmatpush1.bf16.msra.mxu0 0
        %5977 = vmatprep.subr.bf16.mxu0 0
        %5978 = vmatpush1.bf16.msra.mxu0 0
        %5979 = vmatprep.subr.bf16.mxu0 0
        %5980 = vmatpush1.bf16.msra.mxu0 0
        %5981 = vmatprep.subr.bf16.mxu0 0
        %5982 = vmatpush1.bf16.msra.mxu0 0
        %5983 = vmatprep.subr.bf16.mxu0 0
        %5984 = vmatpush1.bf16.msra.mxu0 0
        %5985 = vmatprep.subr.bf16.mxu0 0
        %5986 = vmatpush1.bf16.msra.mxu0 0
        %5987 = vmatprep.subr.bf16.mxu0 0
        %5988 = vmatpush1.bf16.msra.mxu0 0
        %5989 = vmatprep.subr.bf16.mxu0 0
        %5990 = vmatpush1.bf16.msra.mxu0 0
        %5991 = vmatprep.subr.bf16.mxu0 0
        %5992 = vmatpush1.bf16.msra.mxu0 0
        %5993 = vmatprep.mubr.bf16.mxu0 0
        %5994 = vmatmul.mubr.bf16.gmra.mrb[0].mxu0 %v5956
        %v5995 = vpop.f32.mrb[0].mxu0
        %v5996 = vadd.f32 0.0, %v5995
        %v5997 = vpop.f32.mrb[0].mxu0
        %v5998 = vpop.f32.mrb[0].mxu0
        %v5999 = vpop.f32.mrb[0].mxu0
        %6000 = vdwg.mxu0
        %v6001 = vrcp.pop %v5951
        %v6002 = vmul.f32 %v5996, %v6001
        %6003 = vrot.lane.b32.xlu0 %v5779, 112
        %v6004 = vpop.permute.xlu0 %6003
        %6005 = vrot.lane.b32.xlu0 %v5779, 80
        %v6006 = vpop.permute.xlu0 %6005
        %v6008 = vsel %vm2090, %v6004, 0
        %v6011 = vsel %vm2090, %v6006, 0
        %6013 = vmatprep.subr.bf16.mxu0 0
        %6014 = vmatpush1.bf16.xpose.msra.mxu0 %v6011
        %6015 = vmatprep.subr.bf16.mxu0 0
        %6016 = vmatpush1.bf16.xpose.msra.mxu0 0
        %6017 = vmatprep.subr.bf16.mxu0 0
        %6018 = vmatpush1.bf16.xpose.msra.mxu0 0
        %6019 = vmatprep.subr.bf16.mxu0 0
        %6020 = vmatpush1.bf16.xpose.msra.mxu0 0
        %6021 = vmatprep.subr.bf16.mxu0 0
        %6022 = vmatpush1.bf16.xpose.msra.mxu0 0
        %6023 = vmatprep.subr.bf16.mxu0 0
        %6024 = vmatpush1.bf16.xpose.msra.mxu0 0
        %6025 = vmatprep.subr.bf16.mxu0 0
        %6026 = vmatpush1.bf16.xpose.msra.mxu0 0
        %6027 = vmatprep.subr.bf16.mxu0 0
        %6028 = vmatpush1.bf16.xpose.msra.mxu0 0
        %6029 = vmatprep.subr.bf16.mxu0 0
        %6030 = vmatpush1.bf16.xpose.msra.mxu0 0
        %6031 = vmatprep.subr.bf16.mxu0 0
        %6032 = vmatpush1.bf16.xpose.msra.mxu0 0
        %6033 = vmatprep.subr.bf16.mxu0 0
        %6034 = vmatpush1.bf16.xpose.msra.mxu0 0
        %6035 = vmatprep.subr.bf16.mxu0 0
        %6036 = vmatpush1.bf16.xpose.msra.mxu0 0
        %6037 = vmatprep.subr.bf16.mxu0 0
        %6038 = vmatpush1.bf16.xpose.msra.mxu0 0
        %6039 = vmatprep.subr.bf16.mxu0 0
        %6040 = vmatpush1.bf16.xpose.msra.mxu0 0
        %6041 = vmatprep.subr.bf16.mxu0 0
        %6042 = vmatpush1.bf16.xpose.msra.mxu0 0
        %6043 = vmatprep.subr.bf16.mxu0 0
        %6044 = vmatpush1.bf16.xpose.msra.mxu0 0
        %6045 = vmatprep.mubr.bf16.mxu0 0
        %6046 = vmatmul.mubr.bf16.gmra.mrb[0].mxu0 %v6008
        %v6047 = vpop.f32.mrb[0].mxu0
        %v6048 = vadd.f32 0.0, %v6047
        %v6049 = vpop.f32.mrb[0].mxu0
        %v6050 = vpop.f32.mrb[0].mxu0
        %v6051 = vpop.f32.mrb[0].mxu0
        %6052 = vdwg.mxu0
        %v6053 = vmul.f32 %v6048, 0.35355338
        %v6054 = vadd.f32 %v6053, %v1875
        %v6055 = vsel %vm2090, %v6054, -inf
        %6056 = vmax.xlane.f32.xlu0 %v6055
        %v6057 = vpop.xlane.xlu0 %6056
        %v6058 = vsub.f32 %v6054, %v6057
        %v6059 = vmul.f32 %v6058, 1.442695
        %v6060 = vpow.pop %v6059
        %v6061 = vsel %vm2090, %v6060, 0.0
        %6062 = vadd.xlane.f32.xlu0 %v6061
        %v6063 = vpop.xlane.xlu0 %6062
        %v6064 = vpack.c.bf16 %v6060, %v6060
        %6065 = vrot.lane.b32.xlu0 %v5779, 48
        %v6066 = vpop.permute.xlu0 %6065
        %v6068 = vsel %vm2090, %v6064, 0
        %v6071 = vsel %vm2154, %v6066, 0
        %6073 = vmatprep.subr.bf16.mxu0 0
        %6074 = vmatpush1.bf16.msra.mxu0 %v6071
        %6075 = vmatprep.subr.bf16.mxu0 0
        %6076 = vmatpush1.bf16.msra.mxu0 0
        %6077 = vmatprep.subr.bf16.mxu0 0
        %6078 = vmatpush1.bf16.msra.mxu0 0
        %6079 = vmatprep.subr.bf16.mxu0 0
        %6080 = vmatpush1.bf16.msra.mxu0 0
        %6081 = vmatprep.subr.bf16.mxu0 0
        %6082 = vmatpush1.bf16.msra.mxu0 0
        %6083 = vmatprep.subr.bf16.mxu0 0
        %6084 = vmatpush1.bf16.msra.mxu0 0
        %6085 = vmatprep.subr.bf16.mxu0 0
        %6086 = vmatpush1.bf16.msra.mxu0 0
        %6087 = vmatprep.subr.bf16.mxu0 0
        %6088 = vmatpush1.bf16.msra.mxu0 0
        %6089 = vmatprep.subr.bf16.mxu0 0
        %6090 = vmatpush1.bf16.msra.mxu0 0
        %6091 = vmatprep.subr.bf16.mxu0 0
        %6092 = vmatpush1.bf16.msra.mxu0 0
        %6093 = vmatprep.subr.bf16.mxu0 0
        %6094 = vmatpush1.bf16.msra.mxu0 0
        %6095 = vmatprep.subr.bf16.mxu0 0
        %6096 = vmatpush1.bf16.msra.mxu0 0
        %6097 = vmatprep.subr.bf16.mxu0 0
        %6098 = vmatpush1.bf16.msra.mxu0 0
        %6099 = vmatprep.subr.bf16.mxu0 0
        %6100 = vmatpush1.bf16.msra.mxu0 0
        %6101 = vmatprep.subr.bf16.mxu0 0
        %6102 = vmatpush1.bf16.msra.mxu0 0
        %6103 = vmatprep.subr.bf16.mxu0 0
        %6104 = vmatpush1.bf16.msra.mxu0 0
        %6105 = vmatprep.mubr.bf16.mxu0 0
        %6106 = vmatmul.mubr.bf16.gmra.mrb[0].mxu0 %v6068
        %v6107 = vpop.f32.mrb[0].mxu0
        %v6108 = vadd.f32 0.0, %v6107
        %v6109 = vpop.f32.mrb[0].mxu0
        %v6110 = vpop.f32.mrb[0].mxu0
        %v6111 = vpop.f32.mrb[0].mxu0
        %6112 = vdwg.mxu0
        %v6113 = vrcp.pop %v6063
        %v6114 = vmul.f32 %v6108, %v6113
        %6115 = vrot.lane.b32.xlu0 %v5779, 104
        %v6116 = vpop.permute.xlu0 %6115
        %6117 = vrot.lane.b32.xlu0 %v5779, 72
        %v6118 = vpop.permute.xlu0 %6117
        %v6120 = vsel %vm2090, %v6116, 0
        %v6123 = vsel %vm2090, %v6118, 0
        %6125 = vmatprep.subr.bf16.mxu0 0
        %6126 = vmatpush1.bf16.xpose.msra.mxu0 %v6123
        %6127 = vmatprep.subr.bf16.mxu0 0
        %6128 = vmatpush1.bf16.xpose.msra.mxu0 0
        %6129 = vmatprep.subr.bf16.mxu0 0
        %6130 = vmatpush1.bf16.xpose.msra.mxu0 0
        %6131 = vmatprep.subr.bf16.mxu0 0
        %6132 = vmatpush1.bf16.xpose.msra.mxu0 0
        %6133 = vmatprep.subr.bf16.mxu0 0
        %6134 = vmatpush1.bf16.xpose.msra.mxu0 0
        %6135 = vmatprep.subr.bf16.mxu0 0
        %6136 = vmatpush1.bf16.xpose.msra.mxu0 0
        %6137 = vmatprep.subr.bf16.mxu0 0
        %6138 = vmatpush1.bf16.xpose.msra.mxu0 0
        %6139 = vmatprep.subr.bf16.mxu0 0
        %6140 = vmatpush1.bf16.xpose.msra.mxu0 0
        %6141 = vmatprep.subr.bf16.mxu0 0
        %6142 = vmatpush1.bf16.xpose.msra.mxu0 0
        %6143 = vmatprep.subr.bf16.mxu0 0
        %6144 = vmatpush1.bf16.xpose.msra.mxu0 0
        %6145 = vmatprep.subr.bf16.mxu0 0
        %6146 = vmatpush1.bf16.xpose.msra.mxu0 0
        %6147 = vmatprep.subr.bf16.mxu0 0
        %6148 = vmatpush1.bf16.xpose.msra.mxu0 0
        %6149 = vmatprep.subr.bf16.mxu0 0
        %6150 = vmatpush1.bf16.xpose.msra.mxu0 0
        %6151 = vmatprep.subr.bf16.mxu0 0
        %6152 = vmatpush1.bf16.xpose.msra.mxu0 0
        %6153 = vmatprep.subr.bf16.mxu0 0
        %6154 = vmatpush1.bf16.xpose.msra.mxu0 0
        %6155 = vmatprep.subr.bf16.mxu0 0
        %6156 = vmatpush1.bf16.xpose.msra.mxu0 0
        %6157 = vmatprep.mubr.bf16.mxu0 0
        %6158 = vmatmul.mubr.bf16.gmra.mrb[0].mxu0 %v6120
        %v6159 = vpop.f32.mrb[0].mxu0
        %v6160 = vadd.f32 0.0, %v6159
        %v6161 = vpop.f32.mrb[0].mxu0
        %v6162 = vpop.f32.mrb[0].mxu0
        %v6163 = vpop.f32.mrb[0].mxu0
        %6164 = vdwg.mxu0
        %v6165 = vmul.f32 %v6160, 0.35355338
        %v6166 = vadd.f32 %v6165, %v1875
        %v6167 = vsel %vm2090, %v6166, -inf
        %6168 = vmax.xlane.f32.xlu0 %v6167
        %v6169 = vpop.xlane.xlu0 %6168
        %v6170 = vsub.f32 %v6166, %v6169
        %v6171 = vmul.f32 %v6170, 1.442695
        %v6172 = vpow.pop %v6171
        %v6173 = vsel %vm2090, %v6172, 0.0
        %6174 = vadd.xlane.f32.xlu0 %v6173
        %v6175 = vpop.xlane.xlu0 %6174
        %v6176 = vpack.c.bf16 %v6172, %v6172
        %6177 = vrot.lane.b32.xlu0 %v5779, 40
        %v6178 = vpop.permute.xlu0 %6177
        %v6180 = vsel %vm2090, %v6176, 0
        %v6183 = vsel %vm2154, %v6178, 0
        %6185 = vmatprep.subr.bf16.mxu0 0
        %6186 = vmatpush1.bf16.msra.mxu0 %v6183
        %6187 = vmatprep.subr.bf16.mxu0 0
        %6188 = vmatpush1.bf16.msra.mxu0 0
        %6189 = vmatprep.subr.bf16.mxu0 0
        %6190 = vmatpush1.bf16.msra.mxu0 0
        %6191 = vmatprep.subr.bf16.mxu0 0
        %6192 = vmatpush1.bf16.msra.mxu0 0
        %6193 = vmatprep.subr.bf16.mxu0 0
        %6194 = vmatpush1.bf16.msra.mxu0 0
        %6195 = vmatprep.subr.bf16.mxu0 0
        %6196 = vmatpush1.bf16.msra.mxu0 0
        %6197 = vmatprep.subr.bf16.mxu0 0
        %6198 = vmatpush1.bf16.msra.mxu0 0
        %6199 = vmatprep.subr.bf16.mxu0 0
        %6200 = vmatpush1.bf16.msra.mxu0 0
        %6201 = vmatprep.subr.bf16.mxu0 0
        %6202 = vmatpush1.bf16.msra.mxu0 0
        %6203 = vmatprep.subr.bf16.mxu0 0
        %6204 = vmatpush1.bf16.msra.mxu0 0
        %6205 = vmatprep.subr.bf16.mxu0 0
        %6206 = vmatpush1.bf16.msra.mxu0 0
        %6207 = vmatprep.subr.bf16.mxu0 0
        %6208 = vmatpush1.bf16.msra.mxu0 0
        %6209 = vmatprep.subr.bf16.mxu0 0
        %6210 = vmatpush1.bf16.msra.mxu0 0
        %6211 = vmatprep.subr.bf16.mxu0 0
        %6212 = vmatpush1.bf16.msra.mxu0 0
        %6213 = vmatprep.subr.bf16.mxu0 0
        %6214 = vmatpush1.bf16.msra.mxu0 0
        %6215 = vmatprep.subr.bf16.mxu0 0
        %6216 = vmatpush1.bf16.msra.mxu0 0
        %6217 = vmatprep.mubr.bf16.mxu0 0
        %6218 = vmatmul.mubr.bf16.gmra.mrb[0].mxu0 %v6180
        %v6219 = vpop.f32.mrb[0].mxu0
        %v6220 = vadd.f32 0.0, %v6219
        %v6221 = vpop.f32.mrb[0].mxu0
        %v6222 = vpop.f32.mrb[0].mxu0
        %v6223 = vpop.f32.mrb[0].mxu0
        %6224 = vdwg.mxu0
        %v6225 = vrcp.pop %v6175
        %v6226 = vmul.f32 %v6220, %v6225
        %6228 = vrot.lane.b32.xlu0 %v6002, 8
        %v6229 = vpop.permute.xlu0 %6228
        %6232 = vrot.lane.b32.xlu0 %v6114, 16
        %v6233 = vpop.permute.xlu0 %6232
        %6236 = vrot.lane.b32.xlu0 %v6226, 24
        %v6237 = vpop.permute.xlu0 %6236
        %v6239 = vsel %vm2090, %v5890, %v6229
        %v6240 = vsel %vm2549, %v6239, %v6233
        %v6241 = vsel %vm2551, %v6240, %v6237
        %v6242 = vpack.c.bf16 %v6241, %v6241
        %s6243 = scalar_lea.vmem [#allocation31], 16
        %v6244 = vld [vmem:[%s6243] sm:$0xf]
        %v6245 = vld [vmem:[%s6243 + $0x4] sm:$0xf]
        %v6246 = vld [vmem:[%s6243 + $0x8] sm:$0xf]
        %v6247 = vld [vmem:[%s6243 + $0xc] sm:$0xf]
        %s6248 = scalar_lea.vmem [#allocation32], 1
        %v6249 = vld [vmem:[%s6248] sm:$0x1]
        %v6251 = vlaneseq
        %v6252 = vshrl.u32 %v6251, 7
        %v6253 = vsub.s32 0, %v6252
        %v6254 = vrot.slane %v6249, %v6253
        %v6260 = vunpack.c.l.b16 %v6244
        %v6261 = vunpack.c.l.b16 %v6245
        %v6262 = vunpack.c.l.b16 %v6246
        %v6263 = vunpack.c.l.b16 %v6247
        %v6264 = vpack.c.b16 %v6261, %v6260
        %v6265 = vpack.c.b16 %v6263, %v6262
        %v6269 = vsel %vm2577, %v6242, 0
        %6271 = vmatprep.subr.bf16.mxu0 0
        %6272 = vmatpush1.bf16.msra.mxu0 %v6264
        %6273 = vmatprep.subr.bf16.mxu0 0
        %6274 = vmatpush1.bf16.msra.mxu0 %v6265
        %6275 = vmatprep.subr.bf16.mxu0 0
        %6276 = vmatpush1.bf16.msra.mxu0 0
        %6277 = vmatprep.subr.bf16.mxu0 0
        %6278 = vmatpush1.bf16.msra.mxu0 0
        %6279 = vmatprep.subr.bf16.mxu0 0
        %6280 = vmatpush1.bf16.msra.mxu0 0
        %6281 = vmatprep.subr.bf16.mxu0 0
        %6282 = vmatpush1.bf16.msra.mxu0 0
        %6283 = vmatprep.subr.bf16.mxu0 0
        %6284 = vmatpush1.bf16.msra.mxu0 0
        %6285 = vmatprep.subr.bf16.mxu0 0
        %6286 = vmatpush1.bf16.msra.mxu0 0
        %6287 = vmatprep.subr.bf16.mxu0 0
        %6288 = vmatpush1.bf16.msra.mxu0 0
        %6289 = vmatprep.subr.bf16.mxu0 0
        %6290 = vmatpush1.bf16.msra.mxu0 0
        %6291 = vmatprep.subr.bf16.mxu0 0
        %6292 = vmatpush1.bf16.msra.mxu0 0
        %6293 = vmatprep.subr.bf16.mxu0 0
        %6294 = vmatpush1.bf16.msra.mxu0 0
        %6295 = vmatprep.subr.bf16.mxu0 0
        %6296 = vmatpush1.bf16.msra.mxu0 0
        %6297 = vmatprep.subr.bf16.mxu0 0
        %6298 = vmatpush1.bf16.msra.mxu0 0
        %6299 = vmatprep.subr.bf16.mxu0 0
        %6300 = vmatpush1.bf16.msra.mxu0 0
        %6301 = vmatprep.subr.bf16.mxu0 0
        %6302 = vmatpush1.bf16.msra.mxu0 0
        %6303 = vmatprep.mubr.bf16.mxu0 0
        %6304 = vmatmul.mubr.bf16.gmra.mrb[0].mxu0 %v6269
        %v6305 = vpop.f32.mrb[0].mxu0
        %v6306 = vadd.f32 %v6254, %v6305
        %v6307 = vpop.f32.mrb[0].mxu0
        %v6308 = vpop.f32.mrb[0].mxu0
        %v6309 = vpop.f32.mrb[0].mxu0
        %6310 = vdwg.mxu0
        %v6311 = vadd.f32 %v5664, %v6306
        %s6312 = scalar_lea.vmem [#allocation43], 1
        %v6313 = vld [vmem:[%s6312] sm:$0x1]
        %s6314 = scalar_lea.vmem [#allocation44], 1
        %v6315 = vld [vmem:[%s6314] sm:$0x1]
        %v6316 = vsel %vm2625, %v6311, 0.0
        %6317 = vadd.xlane.f32.xlu0 %v6316
        %v6318 = vpop.xlane.xlu0 %6317
        %v6319 = vmul.f32 %v6318, 0.03125
        %v6320 = vsub.f32 %v6311, %v6319
        %v6321 = vsel %vm2625, %v6320, 0.0
        %v6322 = vmul.f32 %v6321, %v6321
        %6323 = vadd.xlane.f32.xlu0 %v6322
        %v6324 = vpop.xlane.xlu0 %6323
        %v6325 = vmul.f32 %v6324, 0.03125
        %v6326 = vadd.f32 %v6325, 1e-05
        %v6327 = vrsqrt.pop %v6326
        %v6328 = vmul.f32 %v6320, %v6327
        %v6330 = vlaneseq
        %v6331 = vshrl.u32 %v6330, 7
        %v6332 = vsub.s32 0, %v6331
        %v6333 = vrot.slane %v6313, %v6332
        %v6335 = vmul.f32 %v6328, %v6333
        %v6337 = vlaneseq
        %v6338 = vshrl.u32 %v6337, 7
        %v6339 = vsub.s32 0, %v6338
        %v6340 = vrot.slane %v6315, %v6339
        %v6342 = vadd.f32 %v6335, %v6340
        %v6343 = vpack.c.bf16 %v6342, %v6342
        %s6344 = scalar_lea.vmem [#allocation34], 64
        %v6345 = vld [vmem:[%s6344] sm:$0xf]
        %v6346 = vld [vmem:[%s6344 + $0x4] sm:$0xf]
        %v6347 = vld [vmem:[%s6344 + $0x8] sm:$0xf]
        %v6348 = vld [vmem:[%s6344 + $0xc] sm:$0xf]
        %v6349 = vld [vmem:[%s6344 + $0x10] sm:$0xf]
        %v6350 = vld [vmem:[%s6344 + $0x14] sm:$0xf]
        %v6351 = vld [vmem:[%s6344 + $0x18] sm:$0xf]
        %v6352 = vld [vmem:[%s6344 + $0x1c] sm:$0xf]
        %v6353 = vld [vmem:[%s6344 + $0x20] sm:$0xf]
        %v6354 = vld [vmem:[%s6344 + $0x24] sm:$0xf]
        %v6355 = vld [vmem:[%s6344 + $0x28] sm:$0xf]
        %v6356 = vld [vmem:[%s6344 + $0x2c] sm:$0xf]
        %v6357 = vld [vmem:[%s6344 + $0x30] sm:$0xf]
        %v6358 = vld [vmem:[%s6344 + $0x34] sm:$0xf]
        %v6359 = vld [vmem:[%s6344 + $0x38] sm:$0xf]
        %v6360 = vld [vmem:[%s6344 + $0x3c] sm:$0xf]
        %s6361 = scalar_lea.vmem [#allocation35], 1
        %v6362 = vld [vmem:[%s6361] sm:$0x1]
        %v6364 = vlaneseq
        %v6365 = vshrl.u32 %v6364, 7
        %v6366 = vsub.s32 0, %v6365
        %v6367 = vrot.slane %v6362, %v6366
        %v6385 = vunpack.c.l.b16 %v6345
        %v6386 = vunpack.c.l.b16 %v6346
        %v6387 = vunpack.c.l.b16 %v6347
        %v6388 = vunpack.c.l.b16 %v6348
        %v6389 = vunpack.c.l.b16 %v6349
        %v6390 = vunpack.c.l.b16 %v6350
        %v6391 = vunpack.c.l.b16 %v6351
        %v6392 = vunpack.c.l.b16 %v6352
        %v6393 = vunpack.c.l.b16 %v6353
        %v6394 = vunpack.c.l.b16 %v6354
        %v6395 = vunpack.c.l.b16 %v6355
        %v6396 = vunpack.c.l.b16 %v6356
        %v6397 = vunpack.c.l.b16 %v6357
        %v6398 = vunpack.c.l.b16 %v6358
        %v6399 = vunpack.c.l.b16 %v6359
        %v6400 = vunpack.c.l.b16 %v6360
        %v6401 = vpack.c.b16 %v6386, %v6385
        %v6402 = vpack.c.b16 %v6388, %v6387
        %v6403 = vpack.c.b16 %v6390, %v6389
        %v6404 = vpack.c.b16 %v6392, %v6391
        %v6405 = vpack.c.b16 %v6394, %v6393
        %v6406 = vpack.c.b16 %v6396, %v6395
        %v6407 = vpack.c.b16 %v6398, %v6397
        %v6408 = vpack.c.b16 %v6400, %v6399
        %6417 = vmatprep.subr.bf16.mxu0 0
        %6418 = vmatpush1.bf16.msra.mxu0 %v6401
        %6419 = vmatprep.subr.bf16.mxu0 0
        %6420 = vmatpush1.bf16.msra.mxu0 %v6402
        %6421 = vmatprep.subr.bf16.mxu0 0
        %6422 = vmatpush1.bf16.msra.mxu0 %v6403
        %6423 = vmatprep.subr.bf16.mxu0 0
        %6424 = vmatpush1.bf16.msra.mxu0 %v6404
        %6425 = vmatprep.subr.bf16.mxu0 0
        %6426 = vmatpush1.bf16.msra.mxu0 %v6405
        %6427 = vmatprep.subr.bf16.mxu0 0
        %6428 = vmatpush1.bf16.msra.mxu0 %v6406
        %6429 = vmatprep.subr.bf16.mxu0 0
        %6430 = vmatpush1.bf16.msra.mxu0 %v6407
        %6431 = vmatprep.subr.bf16.mxu0 0
        %6432 = vmatpush1.bf16.msra.mxu0 %v6408
        %6433 = vmatprep.subr.bf16.mxu0 0
        %6434 = vmatpush1.bf16.msra.mxu0 0
        %6435 = vmatprep.subr.bf16.mxu0 0
        %6436 = vmatpush1.bf16.msra.mxu0 0
        %6437 = vmatprep.subr.bf16.mxu0 0
        %6438 = vmatpush1.bf16.msra.mxu0 0
        %6439 = vmatprep.subr.bf16.mxu0 0
        %6440 = vmatpush1.bf16.msra.mxu0 0
        %6441 = vmatprep.subr.bf16.mxu0 0
        %6442 = vmatpush1.bf16.msra.mxu0 0
        %6443 = vmatprep.subr.bf16.mxu0 0
        %6444 = vmatpush1.bf16.msra.mxu0 0
        %6445 = vmatprep.subr.bf16.mxu0 0
        %6446 = vmatpush1.bf16.msra.mxu0 0
        %6447 = vmatprep.subr.bf16.mxu0 0
        %6448 = vmatpush1.bf16.msra.mxu0 0
        %6449 = vmatprep.mubr.bf16.mxu0 0
        %6450 = vmatmul.mubr.bf16.gmra.mrb[0].mxu0 %v6343
        %v6451 = vpop.f32.mrb[0].mxu0
        %v6452 = vadd.f32 %v6367, %v6451
        %v6453 = vpop.f32.mrb[0].mxu0
        %v6454 = vpop.f32.mrb[0].mxu0
        %v6455 = vpop.f32.mrb[0].mxu0
        %6456 = vdwg.mxu0
        %v6457 = vpack.c.bf16 %v6452, %v6452
        %s6458 = scalar_lea.vmem [#allocation37], 64
        %v6459 = vld [vmem:[%s6458] sm:$0xf]
        %v6460 = vld [vmem:[%s6458 + $0x4] sm:$0xf]
        %v6461 = vld [vmem:[%s6458 + $0x8] sm:$0xf]
        %v6462 = vld [vmem:[%s6458 + $0xc] sm:$0xf]
        %v6463 = vld [vmem:[%s6458 + $0x10] sm:$0xf]
        %v6464 = vld [vmem:[%s6458 + $0x14] sm:$0xf]
        %v6465 = vld [vmem:[%s6458 + $0x18] sm:$0xf]
        %v6466 = vld [vmem:[%s6458 + $0x1c] sm:$0xf]
        %v6467 = vld [vmem:[%s6458 + $0x20] sm:$0xf]
        %v6468 = vld [vmem:[%s6458 + $0x24] sm:$0xf]
        %v6469 = vld [vmem:[%s6458 + $0x28] sm:$0xf]
        %v6470 = vld [vmem:[%s6458 + $0x2c] sm:$0xf]
        %v6471 = vld [vmem:[%s6458 + $0x30] sm:$0xf]
        %v6472 = vld [vmem:[%s6458 + $0x34] sm:$0xf]
        %v6473 = vld [vmem:[%s6458 + $0x38] sm:$0xf]
        %v6474 = vld [vmem:[%s6458 + $0x3c] sm:$0xf]
        %s6475 = scalar_lea.vmem [#allocation38], 1
        %v6476 = vld [vmem:[%s6475] sm:$0x1]
        %v6478 = vlaneseq
        %v6479 = vshrl.u32 %v6478, 7
        %v6480 = vsub.s32 0, %v6479
        %v6481 = vrot.slane %v6476, %v6480
        %v6499 = vunpack.c.l.b16 %v6459
        %v6500 = vunpack.c.l.b16 %v6460
        %v6501 = vunpack.c.l.b16 %v6461
        %v6502 = vunpack.c.l.b16 %v6462
        %v6503 = vunpack.c.l.b16 %v6463
        %v6504 = vunpack.c.l.b16 %v6464
        %v6505 = vunpack.c.l.b16 %v6465
        %v6506 = vunpack.c.l.b16 %v6466
        %v6507 = vunpack.c.l.b16 %v6467
        %v6508 = vunpack.c.l.b16 %v6468
        %v6509 = vunpack.c.l.b16 %v6469
        %v6510 = vunpack.c.l.b16 %v6470
        %v6511 = vunpack.c.l.b16 %v6471
        %v6512 = vunpack.c.l.b16 %v6472
        %v6513 = vunpack.c.l.b16 %v6473
        %v6514 = vunpack.c.l.b16 %v6474
        %v6515 = vpack.c.b16 %v6500, %v6499
        %v6516 = vpack.c.b16 %v6502, %v6501
        %v6517 = vpack.c.b16 %v6504, %v6503
        %v6518 = vpack.c.b16 %v6506, %v6505
        %v6519 = vpack.c.b16 %v6508, %v6507
        %v6520 = vpack.c.b16 %v6510, %v6509
        %v6521 = vpack.c.b16 %v6512, %v6511
        %v6522 = vpack.c.b16 %v6514, %v6513
        %6531 = vmatprep.subr.bf16.mxu0 0
        %6532 = vmatpush1.bf16.msra.mxu0 %v6515
        %6533 = vmatprep.subr.bf16.mxu0 0
        %6534 = vmatpush1.bf16.msra.mxu0 %v6516
        %6535 = vmatprep.subr.bf16.mxu0 0
        %6536 = vmatpush1.bf16.msra.mxu0 %v6517
        %6537 = vmatprep.subr.bf16.mxu0 0
        %6538 = vmatpush1.bf16.msra.mxu0 %v6518
        %6539 = vmatprep.subr.bf16.mxu0 0
        %6540 = vmatpush1.bf16.msra.mxu0 %v6519
        %6541 = vmatprep.subr.bf16.mxu0 0
        %6542 = vmatpush1.bf16.msra.mxu0 %v6520
        %6543 = vmatprep.subr.bf16.mxu0 0
        %6544 = vmatpush1.bf16.msra.mxu0 %v6521
        %6545 = vmatprep.subr.bf16.mxu0 0
        %6546 = vmatpush1.bf16.msra.mxu0 %v6522
        %6547 = vmatprep.subr.bf16.mxu0 0
        %6548 = vmatpush1.bf16.msra.mxu0 0
        %6549 = vmatprep.subr.bf16.mxu0 0
        %6550 = vmatpush1.bf16.msra.mxu0 0
        %6551 = vmatprep.subr.bf16.mxu0 0
        %6552 = vmatpush1.bf16.msra.mxu0 0
        %6553 = vmatprep.subr.bf16.mxu0 0
        %6554 = vmatpush1.bf16.msra.mxu0 0
        %6555 = vmatprep.subr.bf16.mxu0 0
        %6556 = vmatpush1.bf16.msra.mxu0 0
        %6557 = vmatprep.subr.bf16.mxu0 0
        %6558 = vmatpush1.bf16.msra.mxu0 0
        %6559 = vmatprep.subr.bf16.mxu0 0
        %6560 = vmatpush1.bf16.msra.mxu0 0
        %6561 = vmatprep.subr.bf16.mxu0 0
        %6562 = vmatpush1.bf16.msra.mxu0 0
        %6563 = vmatprep.mubr.bf16.mxu0 0
        %6564 = vmatmul.mubr.bf16.gmra.mrb[0].mxu0 %v3876
        %v6565 = vpop.f32.mrb[0].mxu0
        %v6566 = vadd.f32 %v6481, %v6565
        %v6567 = vpop.f32.mrb[0].mxu0
        %v6568 = vpop.f32.mrb[0].mxu0
        %v6569 = vpop.f32.mrb[0].mxu0
        %6570 = vdwg.mxu0
        %v6571 = vpack.c.bf16 %v6566, %v6566
        %v6573 = vsel %vm2090, %v6457, 0
        %v6576 = vsel %vm2090, %v6571, 0
        %6578 = vmatprep.subr.bf16.mxu0 0
        %6579 = vmatpush1.bf16.xpose.msra.mxu0 %v6576
        %6580 = vmatprep.subr.bf16.mxu0 0
        %6581 = vmatpush1.bf16.xpose.msra.mxu0 0
        %6582 = vmatprep.subr.bf16.mxu0 0
        %6583 = vmatpush1.bf16.xpose.msra.mxu0 0
        %6584 = vmatprep.subr.bf16.mxu0 0
        %6585 = vmatpush1.bf16.xpose.msra.mxu0 0
        %6586 = vmatprep.subr.bf16.mxu0 0
        %6587 = vmatpush1.bf16.xpose.msra.mxu0 0
        %6588 = vmatprep.subr.bf16.mxu0 0
        %6589 = vmatpush1.bf16.xpose.msra.mxu0 0
        %6590 = vmatprep.subr.bf16.mxu0 0
        %6591 = vmatpush1.bf16.xpose.msra.mxu0 0
        %6592 = vmatprep.subr.bf16.mxu0 0
        %6593 = vmatpush1.bf16.xpose.msra.mxu0 0
        %6594 = vmatprep.subr.bf16.mxu0 0
        %6595 = vmatpush1.bf16.xpose.msra.mxu0 0
        %6596 = vmatprep.subr.bf16.mxu0 0
        %6597 = vmatpush1.bf16.xpose.msra.mxu0 0
        %6598 = vmatprep.subr.bf16.mxu0 0
        %6599 = vmatpush1.bf16.xpose.msra.mxu0 0
        %6600 = vmatprep.subr.bf16.mxu0 0
        %6601 = vmatpush1.bf16.xpose.msra.mxu0 0
        %6602 = vmatprep.subr.bf16.mxu0 0
        %6603 = vmatpush1.bf16.xpose.msra.mxu0 0
        %6604 = vmatprep.subr.bf16.mxu0 0
        %6605 = vmatpush1.bf16.xpose.msra.mxu0 0
        %6606 = vmatprep.subr.bf16.mxu0 0
        %6607 = vmatpush1.bf16.xpose.msra.mxu0 0
        %6608 = vmatprep.subr.bf16.mxu0 0
        %6609 = vmatpush1.bf16.xpose.msra.mxu0 0
        %6610 = vmatprep.mubr.bf16.mxu0 0
        %6611 = vmatmul.mubr.bf16.gmra.mrb[0].mxu0 %v6573
        %v6612 = vpop.f32.mrb[0].mxu0
        %v6613 = vadd.f32 0.0, %v6612
        %v6614 = vpop.f32.mrb[0].mxu0
        %v6615 = vpop.f32.mrb[0].mxu0
        %v6616 = vpop.f32.mrb[0].mxu0
        %6617 = vdwg.mxu0
        %v6618 = vmul.f32 %v6613, 0.35355338
        %v6619 = vsel %vm2090, %v6618, -inf
        %6620 = vmax.xlane.f32.xlu0 %v6619
        %v6621 = vpop.xlane.xlu0 %6620
        %v6622 = vsub.f32 %v6618, %v6621
        %v6623 = vmul.f32 %v6622, 1.442695
        %v6624 = vpow.pop %v6623
        %v6625 = vsel %vm2090, %v6624, 0.0
        %6626 = vadd.xlane.f32.xlu0 %v6625
        %v6627 = vpop.xlane.xlu0 %6626
        %v6628 = vpack.c.bf16 %v6624, %v6624
        %6630 = vrot.lane.b32.xlu0 %v6571, 96
        %v6631 = vpop.permute.xlu0 %6630
        %v6633 = vsel %vm2090, %v6628, 0
        %v6636 = vsel %vm2154, %v6631, 0
        %6638 = vmatprep.subr.bf16.mxu0 0
        %6639 = vmatpush1.bf16.msra.mxu0 %v6636
        %6640 = vmatprep.subr.bf16.mxu0 0
        %6641 = vmatpush1.bf16.msra.mxu0 0
        %6642 = vmatprep.subr.bf16.mxu0 0
        %6643 = vmatpush1.bf16.msra.mxu0 0
        %6644 = vmatprep.subr.bf16.mxu0 0
        %6645 = vmatpush1.bf16.msra.mxu0 0
        %6646 = vmatprep.subr.bf16.mxu0 0
        %6647 = vmatpush1.bf16.msra.mxu0 0
        %6648 = vmatprep.subr.bf16.mxu0 0
        %6649 = vmatpush1.bf16.msra.mxu0 0
        %6650 = vmatprep.subr.bf16.mxu0 0
        %6651 = vmatpush1.bf16.msra.mxu0 0
        %6652 = vmatprep.subr.bf16.mxu0 0
        %6653 = vmatpush1.bf16.msra.mxu0 0
        %6654 = vmatprep.subr.bf16.mxu0 0
        %6655 = vmatpush1.bf16.msra.mxu0 0
        %6656 = vmatprep.subr.bf16.mxu0 0
        %6657 = vmatpush1.bf16.msra.mxu0 0
        %6658 = vmatprep.subr.bf16.mxu0 0
        %6659 = vmatpush1.bf16.msra.mxu0 0
        %6660 = vmatprep.subr.bf16.mxu0 0
        %6661 = vmatpush1.bf16.msra.mxu0 0
        %6662 = vmatprep.subr.bf16.mxu0 0
        %6663 = vmatpush1.bf16.msra.mxu0 0
        %6664 = vmatprep.subr.bf16.mxu0 0
        %6665 = vmatpush1.bf16.msra.mxu0 0
        %6666 = vmatprep.subr.bf16.mxu0 0
        %6667 = vmatpush1.bf16.msra.mxu0 0
        %6668 = vmatprep.subr.bf16.mxu0 0
        %6669 = vmatpush1.bf16.msra.mxu0 0
        %6670 = vmatprep.mubr.bf16.mxu0 0
        %6671 = vmatmul.mubr.bf16.gmra.mrb[0].mxu0 %v6633
        %v6672 = vpop.f32.mrb[0].mxu0
        %v6673 = vadd.f32 0.0, %v6672
        %v6674 = vpop.f32.mrb[0].mxu0
        %v6675 = vpop.f32.mrb[0].mxu0
        %v6676 = vpop.f32.mrb[0].mxu0
        %6677 = vdwg.mxu0
        %v6678 = vrcp.pop %v6627
        %v6679 = vmul.f32 %v6673, %v6678
        %6681 = vrot.lane.b32.xlu0 %v6457, 120
        %v6682 = vpop.permute.xlu0 %6681
        %6683 = vrot.lane.b32.xlu0 %v6571, 120
        %v6684 = vpop.permute.xlu0 %6683
        %v6686 = vsel %vm2090, %v6682, 0
        %v6689 = vsel %vm2090, %v6684, 0
        %6691 = vmatprep.subr.bf16.mxu0 0
        %6692 = vmatpush1.bf16.xpose.msra.mxu0 %v6689
        %6693 = vmatprep.subr.bf16.mxu0 0
        %6694 = vmatpush1.bf16.xpose.msra.mxu0 0
        %6695 = vmatprep.subr.bf16.mxu0 0
        %6696 = vmatpush1.bf16.xpose.msra.mxu0 0
        %6697 = vmatprep.subr.bf16.mxu0 0
        %6698 = vmatpush1.bf16.xpose.msra.mxu0 0
        %6699 = vmatprep.subr.bf16.mxu0 0
        %6700 = vmatpush1.bf16.xpose.msra.mxu0 0
        %6701 = vmatprep.subr.bf16.mxu0 0
        %6702 = vmatpush1.bf16.xpose.msra.mxu0 0
        %6703 = vmatprep.subr.bf16.mxu0 0
        %6704 = vmatpush1.bf16.xpose.msra.mxu0 0
        %6705 = vmatprep.subr.bf16.mxu0 0
        %6706 = vmatpush1.bf16.xpose.msra.mxu0 0
        %6707 = vmatprep.subr.bf16.mxu0 0
        %6708 = vmatpush1.bf16.xpose.msra.mxu0 0
        %6709 = vmatprep.subr.bf16.mxu0 0
        %6710 = vmatpush1.bf16.xpose.msra.mxu0 0
        %6711 = vmatprep.subr.bf16.mxu0 0
        %6712 = vmatpush1.bf16.xpose.msra.mxu0 0
        %6713 = vmatprep.subr.bf16.mxu0 0
        %6714 = vmatpush1.bf16.xpose.msra.mxu0 0
        %6715 = vmatprep.subr.bf16.mxu0 0
        %6716 = vmatpush1.bf16.xpose.msra.mxu0 0
        %6717 = vmatprep.subr.bf16.mxu0 0
        %6718 = vmatpush1.bf16.xpose.msra.mxu0 0
        %6719 = vmatprep.subr.bf16.mxu0 0
        %6720 = vmatpush1.bf16.xpose.msra.mxu0 0
        %6721 = vmatprep.subr.bf16.mxu0 0
        %6722 = vmatpush1.bf16.xpose.msra.mxu0 0
        %6723 = vmatprep.mubr.bf16.mxu0 0
        %6724 = vmatmul.mubr.bf16.gmra.mrb[0].mxu0 %v6686
        %v6725 = vpop.f32.mrb[0].mxu0
        %v6726 = vadd.f32 0.0, %v6725
        %v6727 = vpop.f32.mrb[0].mxu0
        %v6728 = vpop.f32.mrb[0].mxu0
        %v6729 = vpop.f32.mrb[0].mxu0
        %6730 = vdwg.mxu0
        %v6731 = vmul.f32 %v6726, 0.35355338
        %v6732 = vsel %vm2090, %v6731, -inf
        %6733 = vmax.xlane.f32.xlu0 %v6732
        %v6734 = vpop.xlane.xlu0 %6733
        %v6735 = vsub.f32 %v6731, %v6734
        %v6736 = vmul.f32 %v6735, 1.442695
        %v6737 = vpow.pop %v6736
        %v6738 = vsel %vm2090, %v6737, 0.0
        %6739 = vadd.xlane.f32.xlu0 %v6738
        %v6740 = vpop.xlane.xlu0 %6739
        %v6741 = vpack.c.bf16 %v6737, %v6737
        %6742 = vrot.lane.b32.xlu0 %v6571, 88
        %v6743 = vpop.permute.xlu0 %6742
        %v6745 = vsel %vm2090, %v6741, 0
        %v6748 = vsel %vm2154, %v6743, 0
        %6750 = vmatprep.subr.bf16.mxu0 0
        %6751 = vmatpush1.bf16.msra.mxu0 %v6748
        %6752 = vmatprep.subr.bf16.mxu0 0
        %6753 = vmatpush1.bf16.msra.mxu0 0
        %6754 = vmatprep.subr.bf16.mxu0 0
        %6755 = vmatpush1.bf16.msra.mxu0 0
        %6756 = vmatprep.subr.bf16.mxu0 0
        %6757 = vmatpush1.bf16.msra.mxu0 0
        %6758 = vmatprep.subr.bf16.mxu0 0
        %6759 = vmatpush1.bf16.msra.mxu0 0
        %6760 = vmatprep.subr.bf16.mxu0 0
        %6761 = vmatpush1.bf16.msra.mxu0 0
        %6762 = vmatprep.subr.bf16.mxu0 0
        %6763 = vmatpush1.bf16.msra.mxu0 0
        %6764 = vmatprep.subr.bf16.mxu0 0
        %6765 = vmatpush1.bf16.msra.mxu0 0
        %6766 = vmatprep.subr.bf16.mxu0 0
        %6767 = vmatpush1.bf16.msra.mxu0 0
        %6768 = vmatprep.subr.bf16.mxu0 0
        %6769 = vmatpush1.bf16.msra.mxu0 0
        %6770 = vmatprep.subr.bf16.mxu0 0
        %6771 = vmatpush1.bf16.msra.mxu0 0
        %6772 = vmatprep.subr.bf16.mxu0 0
        %6773 = vmatpush1.bf16.msra.mxu0 0
        %6774 = vmatprep.subr.bf16.mxu0 0
        %6775 = vmatpush1.bf16.msra.mxu0 0
        %6776 = vmatprep.subr.bf16.mxu0 0
        %6777 = vmatpush1.bf16.msra.mxu0 0
        %6778 = vmatprep.subr.bf16.mxu0 0
        %6779 = vmatpush1.bf16.msra.mxu0 0
        %6780 = vmatprep.subr.bf16.mxu0 0
        %6781 = vmatpush1.bf16.msra.mxu0 0
        %6782 = vmatprep.mubr.bf16.mxu0 0
        %6783 = vmatmul.mubr.bf16.gmra.mrb[0].mxu0 %v6745
        %v6784 = vpop.f32.mrb[0].mxu0
        %v6785 = vadd.f32 0.0, %v6784
        %v6786 = vpop.f32.mrb[0].mxu0
        %v6787 = vpop.f32.mrb[0].mxu0
        %v6788 = vpop.f32.mrb[0].mxu0
        %6789 = vdwg.mxu0
        %v6790 = vrcp.pop %v6740
        %v6791 = vmul.f32 %v6785, %v6790
        %6792 = vrot.lane.b32.xlu0 %v6457, 112
        %v6793 = vpop.permute.xlu0 %6792
        %6794 = vrot.lane.b32.xlu0 %v6571, 112
        %v6795 = vpop.permute.xlu0 %6794
        %v6797 = vsel %vm2090, %v6793, 0
        %v6800 = vsel %vm2090, %v6795, 0
        %6802 = vmatprep.subr.bf16.mxu0 0
        %6803 = vmatpush1.bf16.xpose.msra.mxu0 %v6800
        %6804 = vmatprep.subr.bf16.mxu0 0
        %6805 = vmatpush1.bf16.xpose.msra.mxu0 0
        %6806 = vmatprep.subr.bf16.mxu0 0
        %6807 = vmatpush1.bf16.xpose.msra.mxu0 0
        %6808 = vmatprep.subr.bf16.mxu0 0
        %6809 = vmatpush1.bf16.xpose.msra.mxu0 0
        %6810 = vmatprep.subr.bf16.mxu0 0
        %6811 = vmatpush1.bf16.xpose.msra.mxu0 0
        %6812 = vmatprep.subr.bf16.mxu0 0
        %6813 = vmatpush1.bf16.xpose.msra.mxu0 0
        %6814 = vmatprep.subr.bf16.mxu0 0
        %6815 = vmatpush1.bf16.xpose.msra.mxu0 0
        %6816 = vmatprep.subr.bf16.mxu0 0
        %6817 = vmatpush1.bf16.xpose.msra.mxu0 0
        %6818 = vmatprep.subr.bf16.mxu0 0
        %6819 = vmatpush1.bf16.xpose.msra.mxu0 0
        %6820 = vmatprep.subr.bf16.mxu0 0
        %6821 = vmatpush1.bf16.xpose.msra.mxu0 0
        %6822 = vmatprep.subr.bf16.mxu0 0
        %6823 = vmatpush1.bf16.xpose.msra.mxu0 0
        %6824 = vmatprep.subr.bf16.mxu0 0
        %6825 = vmatpush1.bf16.xpose.msra.mxu0 0
        %6826 = vmatprep.subr.bf16.mxu0 0
        %6827 = vmatpush1.bf16.xpose.msra.mxu0 0
        %6828 = vmatprep.subr.bf16.mxu0 0
        %6829 = vmatpush1.bf16.xpose.msra.mxu0 0
        %6830 = vmatprep.subr.bf16.mxu0 0
        %6831 = vmatpush1.bf16.xpose.msra.mxu0 0
        %6832 = vmatprep.subr.bf16.mxu0 0
        %6833 = vmatpush1.bf16.xpose.msra.mxu0 0
        %6834 = vmatprep.mubr.bf16.mxu0 0
        %6835 = vmatmul.mubr.bf16.gmra.mrb[0].mxu0 %v6797
        %v6836 = vpop.f32.mrb[0].mxu0
        %v6837 = vadd.f32 0.0, %v6836
        %v6838 = vpop.f32.mrb[0].mxu0
        %v6839 = vpop.f32.mrb[0].mxu0
        %v6840 = vpop.f32.mrb[0].mxu0
        %6841 = vdwg.mxu0
        %v6842 = vmul.f32 %v6837, 0.35355338
        %v6843 = vsel %vm2090, %v6842, -inf
        %6844 = vmax.xlane.f32.xlu0 %v6843
        %v6845 = vpop.xlane.xlu0 %6844
        %v6846 = vsub.f32 %v6842, %v6845
        %v6847 = vmul.f32 %v6846, 1.442695
        %v6848 = vpow.pop %v6847
        %v6849 = vsel %vm2090, %v6848, 0.0
        %6850 = vadd.xlane.f32.xlu0 %v6849
        %v6851 = vpop.xlane.xlu0 %6850
        %v6852 = vpack.c.bf16 %v6848, %v6848
        %6853 = vrot.lane.b32.xlu0 %v6571, 80
        %v6854 = vpop.permute.xlu0 %6853
        %v6856 = vsel %vm2090, %v6852, 0
        %v6859 = vsel %vm2154, %v6854, 0
        %6861 = vmatprep.subr.bf16.mxu0 0
        %6862 = vmatpush1.bf16.msra.mxu0 %v6859
        %6863 = vmatprep.subr.bf16.mxu0 0
        %6864 = vmatpush1.bf16.msra.mxu0 0
        %6865 = vmatprep.subr.bf16.mxu0 0
        %6866 = vmatpush1.bf16.msra.mxu0 0
        %6867 = vmatprep.subr.bf16.mxu0 0
        %6868 = vmatpush1.bf16.msra.mxu0 0
        %6869 = vmatprep.subr.bf16.mxu0 0
        %6870 = vmatpush1.bf16.msra.mxu0 0
        %6871 = vmatprep.subr.bf16.mxu0 0
        %6872 = vmatpush1.bf16.msra.mxu0 0
        %6873 = vmatprep.subr.bf16.mxu0 0
        %6874 = vmatpush1.bf16.msra.mxu0 0
        %6875 = vmatprep.subr.bf16.mxu0 0
        %6876 = vmatpush1.bf16.msra.mxu0 0
        %6877 = vmatprep.subr.bf16.mxu0 0
        %6878 = vmatpush1.bf16.msra.mxu0 0
        %6879 = vmatprep.subr.bf16.mxu0 0
        %6880 = vmatpush1.bf16.msra.mxu0 0
        %6881 = vmatprep.subr.bf16.mxu0 0
        %6882 = vmatpush1.bf16.msra.mxu0 0
        %6883 = vmatprep.subr.bf16.mxu0 0
        %6884 = vmatpush1.bf16.msra.mxu0 0
        %6885 = vmatprep.subr.bf16.mxu0 0
        %6886 = vmatpush1.bf16.msra.mxu0 0
        %6887 = vmatprep.subr.bf16.mxu0 0
        %6888 = vmatpush1.bf16.msra.mxu0 0
        %6889 = vmatprep.subr.bf16.mxu0 0
        %6890 = vmatpush1.bf16.msra.mxu0 0
        %6891 = vmatprep.subr.bf16.mxu0 0
        %6892 = vmatpush1.bf16.msra.mxu0 0
        %6893 = vmatprep.mubr.bf16.mxu0 0
        %6894 = vmatmul.mubr.bf16.gmra.mrb[0].mxu0 %v6856
        %v6895 = vpop.f32.mrb[0].mxu0
        %v6896 = vadd.f32 0.0, %v6895
        %v6897 = vpop.f32.mrb[0].mxu0
        %v6898 = vpop.f32.mrb[0].mxu0
        %v6899 = vpop.f32.mrb[0].mxu0
        %6900 = vdwg.mxu0
        %v6901 = vrcp.pop %v6851
        %v6902 = vmul.f32 %v6896, %v6901
        %6903 = vrot.lane.b32.xlu0 %v6457, 104
        %v6904 = vpop.permute.xlu0 %6903
        %6905 = vrot.lane.b32.xlu0 %v6571, 104
        %v6906 = vpop.permute.xlu0 %6905
        %v6908 = vsel %vm2090, %v6904, 0
        %v6911 = vsel %vm2090, %v6906, 0
        %6913 = vmatprep.subr.bf16.mxu0 0
        %6914 = vmatpush1.bf16.xpose.msra.mxu0 %v6911
        %6915 = vmatprep.subr.bf16.mxu0 0
        %6916 = vmatpush1.bf16.xpose.msra.mxu0 0
        %6917 = vmatprep.subr.bf16.mxu0 0
        %6918 = vmatpush1.bf16.xpose.msra.mxu0 0
        %6919 = vmatprep.subr.bf16.mxu0 0
        %6920 = vmatpush1.bf16.xpose.msra.mxu0 0
        %6921 = vmatprep.subr.bf16.mxu0 0
        %6922 = vmatpush1.bf16.xpose.msra.mxu0 0
        %6923 = vmatprep.subr.bf16.mxu0 0
        %6924 = vmatpush1.bf16.xpose.msra.mxu0 0
        %6925 = vmatprep.subr.bf16.mxu0 0
        %6926 = vmatpush1.bf16.xpose.msra.mxu0 0
        %6927 = vmatprep.subr.bf16.mxu0 0
        %6928 = vmatpush1.bf16.xpose.msra.mxu0 0
        %6929 = vmatprep.subr.bf16.mxu0 0
        %6930 = vmatpush1.bf16.xpose.msra.mxu0 0
        %6931 = vmatprep.subr.bf16.mxu0 0
        %6932 = vmatpush1.bf16.xpose.msra.mxu0 0
        %6933 = vmatprep.subr.bf16.mxu0 0
        %6934 = vmatpush1.bf16.xpose.msra.mxu0 0
        %6935 = vmatprep.subr.bf16.mxu0 0
        %6936 = vmatpush1.bf16.xpose.msra.mxu0 0
        %6937 = vmatprep.subr.bf16.mxu0 0
        %6938 = vmatpush1.bf16.xpose.msra.mxu0 0
        %6939 = vmatprep.subr.bf16.mxu0 0
        %6940 = vmatpush1.bf16.xpose.msra.mxu0 0
        %6941 = vmatprep.subr.bf16.mxu0 0
        %6942 = vmatpush1.bf16.xpose.msra.mxu0 0
        %6943 = vmatprep.subr.bf16.mxu0 0
        %6944 = vmatpush1.bf16.xpose.msra.mxu0 0
        %6945 = vmatprep.mubr.bf16.mxu0 0
        %6946 = vmatmul.mubr.bf16.gmra.mrb[0].mxu0 %v6908
        %v6947 = vpop.f32.mrb[0].mxu0
        %v6948 = vadd.f32 0.0, %v6947
        %v6949 = vpop.f32.mrb[0].mxu0
        %v6950 = vpop.f32.mrb[0].mxu0
        %v6951 = vpop.f32.mrb[0].mxu0
        %6952 = vdwg.mxu0
        %v6953 = vmul.f32 %v6948, 0.35355338
        %v6954 = vsel %vm2090, %v6953, -inf
        %6955 = vmax.xlane.f32.xlu0 %v6954
        %v6956 = vpop.xlane.xlu0 %6955
        %v6957 = vsub.f32 %v6953, %v6956
        %v6958 = vmul.f32 %v6957, 1.442695
        %v6959 = vpow.pop %v6958
        %v6960 = vsel %vm2090, %v6959, 0.0
        %6961 = vadd.xlane.f32.xlu0 %v6960
        %v6962 = vpop.xlane.xlu0 %6961
        %v6963 = vpack.c.bf16 %v6959, %v6959
        %6964 = vrot.lane.b32.xlu0 %v6571, 72
        %v6965 = vpop.permute.xlu0 %6964
        %v6967 = vsel %vm2090, %v6963, 0
        %v6970 = vsel %vm2154, %v6965, 0
        %6972 = vmatprep.subr.bf16.mxu0 0
        %6973 = vmatpush1.bf16.msra.mxu0 %v6970
        %6974 = vmatprep.subr.bf16.mxu0 0
        %6975 = vmatpush1.bf16.msra.mxu0 0
        %6976 = vmatprep.subr.bf16.mxu0 0
        %6977 = vmatpush1.bf16.msra.mxu0 0
        %6978 = vmatprep.subr.bf16.mxu0 0
        %6979 = vmatpush1.bf16.msra.mxu0 0
        %6980 = vmatprep.subr.bf16.mxu0 0
        %6981 = vmatpush1.bf16.msra.mxu0 0
        %6982 = vmatprep.subr.bf16.mxu0 0
        %6983 = vmatpush1.bf16.msra.mxu0 0
        %6984 = vmatprep.subr.bf16.mxu0 0
        %6985 = vmatpush1.bf16.msra.mxu0 0
        %6986 = vmatprep.subr.bf16.mxu0 0
        %6987 = vmatpush1.bf16.msra.mxu0 0
        %6988 = vmatprep.subr.bf16.mxu0 0
        %6989 = vmatpush1.bf16.msra.mxu0 0
        %6990 = vmatprep.subr.bf16.mxu0 0
        %6991 = vmatpush1.bf16.msra.mxu0 0
        %6992 = vmatprep.subr.bf16.mxu0 0
        %6993 = vmatpush1.bf16.msra.mxu0 0
        %6994 = vmatprep.subr.bf16.mxu0 0
        %6995 = vmatpush1.bf16.msra.mxu0 0
        %6996 = vmatprep.subr.bf16.mxu0 0
        %6997 = vmatpush1.bf16.msra.mxu0 0
        %6998 = vmatprep.subr.bf16.mxu0 0
        %6999 = vmatpush1.bf16.msra.mxu0 0
        %7000 = vmatprep.subr.bf16.mxu0 0
        %7001 = vmatpush1.bf16.msra.mxu0 0
        %7002 = vmatprep.subr.bf16.mxu0 0
        %7003 = vmatpush1.bf16.msra.mxu0 0
        %7004 = vmatprep.mubr.bf16.mxu0 0
        %7005 = vmatmul.mubr.bf16.gmra.mrb[0].mxu0 %v6967
        %v7006 = vpop.f32.mrb[0].mxu0
        %v7007 = vadd.f32 0.0, %v7006
        %v7008 = vpop.f32.mrb[0].mxu0
        %v7009 = vpop.f32.mrb[0].mxu0
        %v7010 = vpop.f32.mrb[0].mxu0
        %7011 = vdwg.mxu0
        %v7012 = vrcp.pop %v6962
        %v7013 = vmul.f32 %v7007, %v7012
        %7015 = vrot.lane.b32.xlu0 %v6791, 8
        %v7016 = vpop.permute.xlu0 %7015
        %7019 = vrot.lane.b32.xlu0 %v6902, 16
        %v7020 = vpop.permute.xlu0 %7019
        %7023 = vrot.lane.b32.xlu0 %v7013, 24
        %v7024 = vpop.permute.xlu0 %7023
        %v7026 = vsel %vm2090, %v6679, %v7016
        %v7027 = vsel %vm2549, %v7026, %v7020
        %v7028 = vsel %vm2551, %v7027, %v7024
        %v7029 = vpack.c.bf16 %v7028, %v7028
        %s7030 = scalar_lea.vmem [#allocation40], 16
        %v7031 = vld [vmem:[%s7030] sm:$0xf]
        %v7032 = vld [vmem:[%s7030 + $0x4] sm:$0xf]
        %v7033 = vld [vmem:[%s7030 + $0x8] sm:$0xf]
        %v7034 = vld [vmem:[%s7030 + $0xc] sm:$0xf]
        %s7035 = scalar_lea.vmem [#allocation41], 1
        %v7036 = vld [vmem:[%s7035] sm:$0x1]
        %v7038 = vlaneseq
        %v7039 = vshrl.u32 %v7038, 7
        %v7040 = vsub.s32 0, %v7039
        %v7041 = vrot.slane %v7036, %v7040
        %v7047 = vunpack.c.l.b16 %v7031
        %v7048 = vunpack.c.l.b16 %v7032
        %v7049 = vunpack.c.l.b16 %v7033
        %v7050 = vunpack.c.l.b16 %v7034
        %v7051 = vpack.c.b16 %v7048, %v7047
        %v7052 = vpack.c.b16 %v7050, %v7049
        %v7056 = vsel %vm2577, %v7029, 0
        %7058 = vmatprep.subr.bf16.mxu0 0
        %7059 = vmatpush1.bf16.msra.mxu0 %v7051
        %7060 = vmatprep.subr.bf16.mxu0 0
        %7061 = vmatpush1.bf16.msra.mxu0 %v7052
        %7062 = vmatprep.subr.bf16.mxu0 0
        %7063 = vmatpush1.bf16.msra.mxu0 0
        %7064 = vmatprep.subr.bf16.mxu0 0
        %7065 = vmatpush1.bf16.msra.mxu0 0
        %7066 = vmatprep.subr.bf16.mxu0 0
        %7067 = vmatpush1.bf16.msra.mxu0 0
        %7068 = vmatprep.subr.bf16.mxu0 0
        %7069 = vmatpush1.bf16.msra.mxu0 0
        %7070 = vmatprep.subr.bf16.mxu0 0
        %7071 = vmatpush1.bf16.msra.mxu0 0
        %7072 = vmatprep.subr.bf16.mxu0 0
        %7073 = vmatpush1.bf16.msra.mxu0 0
        %7074 = vmatprep.subr.bf16.mxu0 0
        %7075 = vmatpush1.bf16.msra.mxu0 0
        %7076 = vmatprep.subr.bf16.mxu0 0
        %7077 = vmatpush1.bf16.msra.mxu0 0
        %7078 = vmatprep.subr.bf16.mxu0 0
        %7079 = vmatpush1.bf16.msra.mxu0 0
        %7080 = vmatprep.subr.bf16.mxu0 0
        %7081 = vmatpush1.bf16.msra.mxu0 0
        %7082 = vmatprep.subr.bf16.mxu0 0
        %7083 = vmatpush1.bf16.msra.mxu0 0
        %7084 = vmatprep.subr.bf16.mxu0 0
        %7085 = vmatpush1.bf16.msra.mxu0 0
        %7086 = vmatprep.subr.bf16.mxu0 0
        %7087 = vmatpush1.bf16.msra.mxu0 0
        %7088 = vmatprep.subr.bf16.mxu0 0
        %7089 = vmatpush1.bf16.msra.mxu0 0
        %7090 = vmatprep.mubr.bf16.mxu0 0
        %7091 = vmatmul.mubr.bf16.gmra.mrb[0].mxu0 %v7056
        %v7092 = vpop.f32.mrb[0].mxu0
        %v7093 = vadd.f32 %v7041, %v7092
        %v7094 = vpop.f32.mrb[0].mxu0
        %v7095 = vpop.f32.mrb[0].mxu0
        %v7096 = vpop.f32.mrb[0].mxu0
        %7097 = vdwg.mxu0
        %v7098 = vadd.f32 %v6342, %v7093
        %s7099 = scalar_lea.vmem [#allocation46], 1
        %v7100 = vld [vmem:[%s7099] sm:$0x1]
        %s7101 = scalar_lea.vmem [#allocation47], 1
        %v7102 = vld [vmem:[%s7101] sm:$0x1]
        %v7103 = vsel %vm2625, %v7098, 0.0
        %7104 = vadd.xlane.f32.xlu0 %v7103
        %v7105 = vpop.xlane.xlu0 %7104
        %v7106 = vmul.f32 %v7105, 0.03125
        %v7107 = vsub.f32 %v7098, %v7106
        %v7108 = vsel %vm2625, %v7107, 0.0
        %v7109 = vmul.f32 %v7108, %v7108
        %7110 = vadd.xlane.f32.xlu0 %v7109
        %v7111 = vpop.xlane.xlu0 %7110
        %v7112 = vmul.f32 %v7111, 0.03125
        %v7113 = vadd.f32 %v7112, 1e-05
        %v7114 = vrsqrt.pop %v7113
        %v7115 = vmul.f32 %v7107, %v7114
        %v7117 = vlaneseq
        %v7118 = vshrl.u32 %v7117, 7
        %v7119 = vsub.s32 0, %v7118
        %v7120 = vrot.slane %v7100, %v7119
        %v7122 = vmul.f32 %v7115, %v7120
        %v7124 = vlaneseq
        %v7125 = vshrl.u32 %v7124, 7
        %v7126 = vsub.s32 0, %v7125
        %v7127 = vrot.slane %v7102, %v7126
        %v7129 = vadd.f32 %v7122, %v7127
        %v7130 = vpack.c.bf16 %v7129, %v7129
        %s7131 = scalar_lea.vmem [#allocation52], 64
        %v7132 = vld [vmem:[%s7131] sm:$0xf]
        %v7133 = vld [vmem:[%s7131 + $0x4] sm:$0xf]
        %v7134 = vld [vmem:[%s7131 + $0x8] sm:$0xf]
        %v7135 = vld [vmem:[%s7131 + $0xc] sm:$0xf]
        %v7136 = vld [vmem:[%s7131 + $0x10] sm:$0xf]
        %v7137 = vld [vmem:[%s7131 + $0x14] sm:$0xf]
        %v7138 = vld [vmem:[%s7131 + $0x18] sm:$0xf]
        %v7139 = vld [vmem:[%s7131 + $0x1c] sm:$0xf]
        %v7140 = vld [vmem:[%s7131 + $0x20] sm:$0xf]
        %v7141 = vld [vmem:[%s7131 + $0x24] sm:$0xf]
        %v7142 = vld [vmem:[%s7131 + $0x28] sm:$0xf]
        %v7143 = vld [vmem:[%s7131 + $0x2c] sm:$0xf]
        %v7144 = vld [vmem:[%s7131 + $0x30] sm:$0xf]
        %v7145 = vld [vmem:[%s7131 + $0x34] sm:$0xf]
        %v7146 = vld [vmem:[%s7131 + $0x38] sm:$0xf]
        %v7147 = vld [vmem:[%s7131 + $0x3c] sm:$0xf]
        %s7148 = scalar_lea.vmem [#allocation53], 1
        %v7149 = vld [vmem:[%s7148] sm:$0x1]
        %v7151 = vlaneseq
        %v7152 = vshrl.u32 %v7151, 7
        %v7153 = vsub.s32 0, %v7152
        %v7154 = vrot.slane %v7149, %v7153
        %v7172 = vunpack.c.l.b16 %v7132
        %v7173 = vunpack.c.l.b16 %v7133
        %v7174 = vunpack.c.l.b16 %v7134
        %v7175 = vunpack.c.l.b16 %v7135
        %v7176 = vunpack.c.l.b16 %v7136
        %v7177 = vunpack.c.l.b16 %v7137
        %v7178 = vunpack.c.l.b16 %v7138
        %v7179 = vunpack.c.l.b16 %v7139
        %v7180 = vunpack.c.l.b16 %v7140
        %v7181 = vunpack.c.l.b16 %v7141
        %v7182 = vunpack.c.l.b16 %v7142
        %v7183 = vunpack.c.l.b16 %v7143
        %v7184 = vunpack.c.l.b16 %v7144
        %v7185 = vunpack.c.l.b16 %v7145
        %v7186 = vunpack.c.l.b16 %v7146
        %v7187 = vunpack.c.l.b16 %v7147
        %v7188 = vpack.c.b16 %v7173, %v7172
        %v7189 = vpack.c.b16 %v7175, %v7174
        %v7190 = vpack.c.b16 %v7177, %v7176
        %v7191 = vpack.c.b16 %v7179, %v7178
        %v7192 = vpack.c.b16 %v7181, %v7180
        %v7193 = vpack.c.b16 %v7183, %v7182
        %v7194 = vpack.c.b16 %v7185, %v7184
        %v7195 = vpack.c.b16 %v7187, %v7186
        %7204 = vmatprep.subr.bf16.mxu0 0
        %7205 = vmatpush1.bf16.msra.mxu0 %v7188
        %7206 = vmatprep.subr.bf16.mxu0 0
        %7207 = vmatpush1.bf16.msra.mxu0 %v7189
        %7208 = vmatprep.subr.bf16.mxu0 0
        %7209 = vmatpush1.bf16.msra.mxu0 %v7190
        %7210 = vmatprep.subr.bf16.mxu0 0
        %7211 = vmatpush1.bf16.msra.mxu0 %v7191
        %7212 = vmatprep.subr.bf16.mxu0 0
        %7213 = vmatpush1.bf16.msra.mxu0 %v7192
        %7214 = vmatprep.subr.bf16.mxu0 0
        %7215 = vmatpush1.bf16.msra.mxu0 %v7193
        %7216 = vmatprep.subr.bf16.mxu0 0
        %7217 = vmatpush1.bf16.msra.mxu0 %v7194
        %7218 = vmatprep.subr.bf16.mxu0 0
        %7219 = vmatpush1.bf16.msra.mxu0 %v7195
        %7220 = vmatprep.subr.bf16.mxu0 0
        %7221 = vmatpush1.bf16.msra.mxu0 0
        %7222 = vmatprep.subr.bf16.mxu0 0
        %7223 = vmatpush1.bf16.msra.mxu0 0
        %7224 = vmatprep.subr.bf16.mxu0 0
        %7225 = vmatpush1.bf16.msra.mxu0 0
        %7226 = vmatprep.subr.bf16.mxu0 0
        %7227 = vmatpush1.bf16.msra.mxu0 0
        %7228 = vmatprep.subr.bf16.mxu0 0
        %7229 = vmatpush1.bf16.msra.mxu0 0
        %7230 = vmatprep.subr.bf16.mxu0 0
        %7231 = vmatpush1.bf16.msra.mxu0 0
        %7232 = vmatprep.subr.bf16.mxu0 0
        %7233 = vmatpush1.bf16.msra.mxu0 0
        %7234 = vmatprep.subr.bf16.mxu0 0
        %7235 = vmatpush1.bf16.msra.mxu0 0
        %7236 = vmatprep.mubr.bf16.mxu0 0
        %7237 = vmatmul.mubr.bf16.gmra.mrb[0].mxu0 %v7130
        %v7238 = vpop.f32.mrb[0].mxu0
        %v7239 = vadd.f32 %v7154, %v7238
        %v7240 = vpop.f32.mrb[0].mxu0
        %v7241 = vpop.f32.mrb[0].mxu0
        %v7242 = vpop.f32.mrb[0].mxu0
        %7243 = vdwg.mxu0
        %v7244 = vmax.f32 %v7239, 0.0
        %v7245 = vpack.c.bf16 %v7244, %v7244
        %s7246 = scalar_lea.vmem [#allocation55], 64
        %v7247 = vld [vmem:[%s7246] sm:$0xf]
        %v7248 = vld [vmem:[%s7246 + $0x4] sm:$0xf]
        %v7249 = vld [vmem:[%s7246 + $0x8] sm:$0xf]
        %v7250 = vld [vmem:[%s7246 + $0xc] sm:$0xf]
        %v7251 = vld [vmem:[%s7246 + $0x10] sm:$0xf]
        %v7252 = vld [vmem:[%s7246 + $0x14] sm:$0xf]
        %v7253 = vld [vmem:[%s7246 + $0x18] sm:$0xf]
        %v7254 = vld [vmem:[%s7246 + $0x1c] sm:$0xf]
        %v7255 = vld [vmem:[%s7246 + $0x20] sm:$0xf]
        %v7256 = vld [vmem:[%s7246 + $0x24] sm:$0xf]
        %v7257 = vld [vmem:[%s7246 + $0x28] sm:$0xf]
        %v7258 = vld [vmem:[%s7246 + $0x2c] sm:$0xf]
        %v7259 = vld [vmem:[%s7246 + $0x30] sm:$0xf]
        %v7260 = vld [vmem:[%s7246 + $0x34] sm:$0xf]
        %v7261 = vld [vmem:[%s7246 + $0x38] sm:$0xf]
        %v7262 = vld [vmem:[%s7246 + $0x3c] sm:$0xf]
        %s7263 = scalar_lea.vmem [#allocation56], 1
        %v7264 = vld [vmem:[%s7263] sm:$0x1]
        %v7266 = vlaneseq
        %v7267 = vshrl.u32 %v7266, 7
        %v7268 = vsub.s32 0, %v7267
        %v7269 = vrot.slane %v7264, %v7268
        %v7287 = vunpack.c.l.b16 %v7247
        %v7288 = vunpack.c.l.b16 %v7248
        %v7289 = vunpack.c.l.b16 %v7249
        %v7290 = vunpack.c.l.b16 %v7250
        %v7291 = vunpack.c.l.b16 %v7251
        %v7292 = vunpack.c.l.b16 %v7252
        %v7293 = vunpack.c.l.b16 %v7253
        %v7294 = vunpack.c.l.b16 %v7254
        %v7295 = vunpack.c.l.b16 %v7255
        %v7296 = vunpack.c.l.b16 %v7256
        %v7297 = vunpack.c.l.b16 %v7257
        %v7298 = vunpack.c.l.b16 %v7258
        %v7299 = vunpack.c.l.b16 %v7259
        %v7300 = vunpack.c.l.b16 %v7260
        %v7301 = vunpack.c.l.b16 %v7261
        %v7302 = vunpack.c.l.b16 %v7262
        %v7303 = vpack.c.b16 %v7288, %v7287
        %v7304 = vpack.c.b16 %v7290, %v7289
        %v7305 = vpack.c.b16 %v7292, %v7291
        %v7306 = vpack.c.b16 %v7294, %v7293
        %v7307 = vpack.c.b16 %v7296, %v7295
        %v7308 = vpack.c.b16 %v7298, %v7297
        %v7309 = vpack.c.b16 %v7300, %v7299
        %v7310 = vpack.c.b16 %v7302, %v7301
        %7319 = vmatprep.subr.bf16.mxu0 0
        %7320 = vmatpush1.bf16.msra.mxu0 %v7303
        %7321 = vmatprep.subr.bf16.mxu0 0
        %7322 = vmatpush1.bf16.msra.mxu0 %v7304
        %7323 = vmatprep.subr.bf16.mxu0 0
        %7324 = vmatpush1.bf16.msra.mxu0 %v7305
        %7325 = vmatprep.subr.bf16.mxu0 0
        %7326 = vmatpush1.bf16.msra.mxu0 %v7306
        %7327 = vmatprep.subr.bf16.mxu0 0
        %7328 = vmatpush1.bf16.msra.mxu0 %v7307
        %7329 = vmatprep.subr.bf16.mxu0 0
        %7330 = vmatpush1.bf16.msra.mxu0 %v7308
        %7331 = vmatprep.subr.bf16.mxu0 0
        %7332 = vmatpush1.bf16.msra.mxu0 %v7309
        %7333 = vmatprep.subr.bf16.mxu0 0
        %7334 = vmatpush1.bf16.msra.mxu0 %v7310
        %7335 = vmatprep.subr.bf16.mxu0 0
        %7336 = vmatpush1.bf16.msra.mxu0 0
        %7337 = vmatprep.subr.bf16.mxu0 0
        %7338 = vmatpush1.bf16.msra.mxu0 0
        %7339 = vmatprep.subr.bf16.mxu0 0
        %7340 = vmatpush1.bf16.msra.mxu0 0
        %7341 = vmatprep.subr.bf16.mxu0 0
        %7342 = vmatpush1.bf16.msra.mxu0 0
        %7343 = vmatprep.subr.bf16.mxu0 0
        %7344 = vmatpush1.bf16.msra.mxu0 0
        %7345 = vmatprep.subr.bf16.mxu0 0
        %7346 = vmatpush1.bf16.msra.mxu0 0
        %7347 = vmatprep.subr.bf16.mxu0 0
        %7348 = vmatpush1.bf16.msra.mxu0 0
        %7349 = vmatprep.subr.bf16.mxu0 0
        %7350 = vmatpush1.bf16.msra.mxu0 0
        %7351 = vmatprep.mubr.bf16.mxu0 0
        %7352 = vmatmul.mubr.bf16.gmra.mrb[0].mxu0 %v7245
        %v7353 = vpop.f32.mrb[0].mxu0
        %v7354 = vadd.f32 %v7269, %v7353
        %v7355 = vpop.f32.mrb[0].mxu0
        %v7356 = vpop.f32.mrb[0].mxu0
        %v7357 = vpop.f32.mrb[0].mxu0
        %7358 = vdwg.mxu0
        %v7359 = vadd.f32 %v7129, %v7354
        %s7360 = scalar_lea.vmem [#allocation49], 1
        %v7361 = vld [vmem:[%s7360] sm:$0x1]
        %s7362 = scalar_lea.vmem [#allocation50], 1
        %v7363 = vld [vmem:[%s7362] sm:$0x1]
        %v7364 = vsel %vm2625, %v7359, 0.0
        %7365 = vadd.xlane.f32.xlu0 %v7364
        %v7366 = vpop.xlane.xlu0 %7365
        %v7367 = vmul.f32 %v7366, 0.03125
        %v7368 = vsub.f32 %v7359, %v7367
        %v7369 = vsel %vm2625, %v7368, 0.0
        %v7370 = vmul.f32 %v7369, %v7369
        %7371 = vadd.xlane.f32.xlu0 %v7370
        %v7372 = vpop.xlane.xlu0 %7371
        %v7373 = vmul.f32 %v7372, 0.03125
        %v7374 = vadd.f32 %v7373, 1e-05
        %v7375 = vrsqrt.pop %v7374
        %v7376 = vmul.f32 %v7368, %v7375
        %v7378 = vlaneseq
        %v7379 = vshrl.u32 %v7378, 7
        %v7380 = vsub.s32 0, %v7379
        %v7381 = vrot.slane %v7361, %v7380
        %v7383 = vmul.f32 %v7376, %v7381
        %v7385 = vlaneseq
        %v7386 = vshrl.u32 %v7385, 7
        %v7387 = vsub.s32 0, %v7386
        %v7388 = vrot.slane %v7363, %v7387
        %v7390 = vadd.f32 %v7383, %v7388
        %v7391 = vld [vmem:[#allocation58] sm:$0x1]
        %v7392 = vld [vmem:[#allocation59] sm:$0x1]
        %v7393 = vsel %vm2625, %v7390, 0.0
        %7394 = vadd.xlane.f32.xlu0 %v7393
        %v7395 = vpop.xlane.xlu0 %7394
        %v7396 = vmul.f32 %v7395, 0.03125
        %v7397 = vsub.f32 %v7390, %v7396
        %v7398 = vsel %vm2625, %v7397, 0.0
        %v7399 = vmul.f32 %v7398, %v7398
        %7400 = vadd.xlane.f32.xlu0 %v7399
        %v7401 = vpop.xlane.xlu0 %7400
        %v7402 = vmul.f32 %v7401, 0.03125
        %v7403 = vadd.f32 %v7402, 1e-05
        %v7404 = vrsqrt.pop %v7403
        %v7405 = vmul.f32 %v7397, %v7404
        %v7407 = vlaneseq
        %v7408 = vshrl.u32 %v7407, 7
        %v7409 = vsub.s32 0, %v7408
        %v7410 = vrot.slane %v7391, %v7409
        %v7412 = vmul.f32 %v7405, %v7410
        %v7414 = vlaneseq
        %v7415 = vshrl.u32 %v7414, 7
        %v7416 = vsub.s32 0, %v7415
        %v7417 = vrot.slane %v7392, %v7416
        %v7419 = vadd.f32 %v7412, %v7417
        %v7420 = vpack.c.bf16 %v7419, %v7419
        %v7421 = vld [vmem:[#allocation61] sm:$0xf]
        %v7422 = vld [vmem:[#allocation61 + $0x4] sm:$0xf]
        %v7423 = vld [vmem:[#allocation61 + $0x8] sm:$0xf]
        %v7424 = vld [vmem:[#allocation61 + $0xc] sm:$0xf]
        %v7425 = vld [vmem:[#allocation61 + $0x10] sm:$0xf]
        %v7426 = vld [vmem:[#allocation61 + $0x14] sm:$0xf]
        %v7427 = vld [vmem:[#allocation61 + $0x18] sm:$0xf]
        %v7428 = vld [vmem:[#allocation61 + $0x1c] sm:$0xf]
        %v7429 = vld [vmem:[#allocation61 + $0x20] sm:$0xf]
        %v7430 = vld [vmem:[#allocation61 + $0x24] sm:$0xf]
        %v7431 = vld [vmem:[#allocation61 + $0x28] sm:$0xf]
        %v7432 = vld [vmem:[#allocation61 + $0x2c] sm:$0xf]
        %v7433 = vld [vmem:[#allocation61 + $0x30] sm:$0xf]
        %v7434 = vld [vmem:[#allocation61 + $0x34] sm:$0xf]
        %v7435 = vld [vmem:[#allocation61 + $0x38] sm:$0xf]
        %v7436 = vld [vmem:[#allocation61 + $0x3c] sm:$0xf]
        %v7437 = vld [vmem:[#allocation62] sm:$0x1]
        %v7439 = vlaneseq
        %v7440 = vshrl.u32 %v7439, 7
        %v7441 = vsub.s32 0, %v7440
        %v7442 = vrot.slane %v7437, %v7441
        %v7460 = vunpack.c.l.b16 %v7421
        %v7461 = vunpack.c.l.b16 %v7422
        %v7462 = vunpack.c.l.b16 %v7423
        %v7463 = vunpack.c.l.b16 %v7424
        %v7464 = vunpack.c.l.b16 %v7425
        %v7465 = vunpack.c.l.b16 %v7426
        %v7466 = vunpack.c.l.b16 %v7427
        %v7467 = vunpack.c.l.b16 %v7428
        %v7468 = vunpack.c.l.b16 %v7429
        %v7469 = vunpack.c.l.b16 %v7430
        %v7470 = vunpack.c.l.b16 %v7431
        %v7471 = vunpack.c.l.b16 %v7432
        %v7472 = vunpack.c.l.b16 %v7433
        %v7473 = vunpack.c.l.b16 %v7434
        %v7474 = vunpack.c.l.b16 %v7435
        %v7475 = vunpack.c.l.b16 %v7436
        %v7476 = vpack.c.b16 %v7461, %v7460
        %v7477 = vpack.c.b16 %v7463, %v7462
        %v7478 = vpack.c.b16 %v7465, %v7464
        %v7479 = vpack.c.b16 %v7467, %v7466
        %v7480 = vpack.c.b16 %v7469, %v7468
        %v7481 = vpack.c.b16 %v7471, %v7470
        %v7482 = vpack.c.b16 %v7473, %v7472
        %v7483 = vpack.c.b16 %v7475, %v7474
        %7492 = vmatprep.subr.bf16.mxu0 0
        %7493 = vmatpush1.bf16.msra.mxu0 %v7476
        %7494 = vmatprep.subr.bf16.mxu0 0
        %7495 = vmatpush1.bf16.msra.mxu0 %v7477
        %7496 = vmatprep.subr.bf16.mxu0 0
        %7497 = vmatpush1.bf16.msra.mxu0 %v7478
        %7498 = vmatprep.subr.bf16.mxu0 0
        %7499 = vmatpush1.bf16.msra.mxu0 %v7479
        %7500 = vmatprep.subr.bf16.mxu0 0
        %7501 = vmatpush1.bf16.msra.mxu0 %v7480
        %7502 = vmatprep.subr.bf16.mxu0 0
        %7503 = vmatpush1.bf16.msra.mxu0 %v7481
        %7504 = vmatprep.subr.bf16.mxu0 0
        %7505 = vmatpush1.bf16.msra.mxu0 %v7482
        %7506 = vmatprep.subr.bf16.mxu0 0
        %7507 = vmatpush1.bf16.msra.mxu0 %v7483
        %7508 = vmatprep.subr.bf16.mxu0 0
        %7509 = vmatpush1.bf16.msra.mxu0 0
        %7510 = vmatprep.subr.bf16.mxu0 0
        %7511 = vmatpush1.bf16.msra.mxu0 0
        %7512 = vmatprep.subr.bf16.mxu0 0
        %7513 = vmatpush1.bf16.msra.mxu0 0
        %7514 = vmatprep.subr.bf16.mxu0 0
        %7515 = vmatpush1.bf16.msra.mxu0 0
        %7516 = vmatprep.subr.bf16.mxu0 0
        %7517 = vmatpush1.bf16.msra.mxu0 0
        %7518 = vmatprep.subr.bf16.mxu0 0
        %7519 = vmatpush1.bf16.msra.mxu0 0
        %7520 = vmatprep.subr.bf16.mxu0 0
        %7521 = vmatpush1.bf16.msra.mxu0 0
        %7522 = vmatprep.subr.bf16.mxu0 0
        %7523 = vmatpush1.bf16.msra.mxu0 0
        %7524 = vmatprep.mubr.bf16.mxu0 0
        %7525 = vmatmul.mubr.bf16.gmra.mrb[0].mxu0 %v7420
        %v7526 = vpop.f32.mrb[0].mxu0
        %v7527 = vadd.f32 %v7442, %v7526
        %v7528 = vpop.f32.mrb[0].mxu0
        %v7529 = vpop.f32.mrb[0].mxu0
        %v7530 = vpop.f32.mrb[0].mxu0
        %7531 = vdwg.mxu0
        %7532 = vst [vmem:[%s1860] sm:$0xff] %v7527
        %s7533 = sand.u32 %s1027, 1
        %s7534 = scalar_lea.sflag [#allocation4], %s7533
        %s7535 = sand.u32 %s1027, 1
        %s7536 = smul.addr %s7535, 8
        %s7537 = scalar_lea.vmem [#allocation64], %s7536
        // Predicated region
        $region349: #{forward.1} parent=187 // pred_check
          %p7538 = pneg %p1037
        $region350: #{forward.1} parent=187 // pred_check_branch
          %7540 = sbr.rel (%p7538) target = $region352
        $region351: #{forward.1} parent=187 // pred_region
          %s7542 = ssub.s32 128, 128
          %7543 = vsyncadd %s7534, %s7542
          %s7544 = smul.addr %s122, 128
          %s7545 = scalar_lea.hbm %s85, %s7544
          %s7547 = sshll.u32 %s7537, 4
          %s7548 = int_to_ptr.vmem [resolvable:$true] %s7547
          %7550 = dma.vmem_to_hbm [thread:$0]  %s7548, 128, %s7545, %s7534
        $region352: #{forward.1} parent=187 // pred_fallthru
          _
      $region188: #{forward.1} parent=5 // pred_fallthru
        _
      %p7551 = scmp.le.s32.totalorder 2, %s117
      // Predicated region
      $region353: #{forward.1} parent=5 // pred_check
        %p7552 = pneg %p7551
      $region354: #{forward.1} parent=5 // pred_check_branch
        %7554 = sbr.rel (%p7552) target = $region356
      $region355: #{forward.1} parent=5 // pred_region
        %s7555 = ssub.s32 %s117, 2
        // Predicated region
        $region357: #{forward.1} parent=355 // pred_check
          %p7556 = pneg %p1043
        $region358: #{forward.1} parent=355 // pred_check_branch
          %7558 = sbr.rel (%p7556) target = $region360
        $region359: #{forward.1} parent=355 // pred_region
          %s7559 = sand.u32 %s1028, 1
          %s7560 = scalar_lea.sflag [#allocation4], %s7559
          %s7561 = sand.u32 %s1028, 1
          %s7562 = smul.addr %s7561, 8
          %s7563 = scalar_lea.vmem [#allocation64], %s7562
          %7564 = dma.done %s7560, 128
        $region360: #{forward.1} parent=355 // pred_fallthru
          _
      $region356: #{forward.1} parent=5 // pred_fallthru
        _
    $region6: #{forward.1} parent=1 // loop_footer
      %s121 = sadd.s32 1, %s117
    $region7: #{forward.1} parent=1 // loop_footer_branch
      %116 = sbr.rel target = $region3
    $region8: #{forward.1} parent=1 // loop_exit
      _
    %7565 = vsyncpa [#allocation3], 1
    %s7566 = scalar_lea.sflag [#allocation3], 1
    %7567 = vsyncpa %s7566, 1
    %7568 = vsyncpa [#allocation6], 1
    %7569 = vsyncpa [#allocation9], 1
    %7570 = vsyncpa [#allocation12], 1
    %7571 = vsyncpa [#allocation15], 1
    %7572 = vsyncpa [#allocation18], 1
    %7573 = vsyncpa [#allocation21], 1
    %7574 = vsyncpa [#allocation24], 1
    %7575 = vsyncpa [#allocation27], 1
    %7576 = vsyncpa [#allocation30], 1
    %7577 = vsyncpa [#allocation33], 1
    %7578 = vsyncpa [#allocation36], 1
    %7579 = vsyncpa [#allocation39], 1
    %7580 = vsyncpa [#allocation42], 1
    %7581 = vsyncpa [#allocation45], 1
    %7582 = vsyncpa [#allocation48], 1
    %7583 = vsyncpa [#allocation51], 1
    %7584 = vsyncpa [#allocation54], 1
    %7585 = vsyncpa [#allocation57], 1
    %7586 = vsyncpa [#allocation60], 1
    %7587 = vsyncpa [#allocation63], 1
    %7588 = vsyncpa [#allocation4], 1
    %s7589 = scalar_lea.sflag [#allocation4], 1
    %7590 = vsyncpa %s7589, 1

</llo_original>
